<compile_context>
chip_gen: v7x
topology: tpu7x:2x2x1
jax: 0.10.0
libtpu: 0.0.40
codegen_flags: <defaults>
</compile_context>

<pallas_src>
import functools
import math

import jax
import jax.numpy as jnp
from jax import lax
from jax.experimental import pallas as pl
from jax.experimental.pallas import tpu as pltpu


# ----------------------------------------------------------------------------
# In-kernel helpers (traced inside Pallas kernel bodies, all data in VMEM)
# ----------------------------------------------------------------------------

def _ln2d(x, g, b, eps=1e-5):
    """LayerNorm over *all* elements of x (PyTorch LayerNorm([S, D]) per batch)."""
    mean = jnp.mean(x)
    var = jnp.mean(jnp.square(x - mean))
    return (x - mean) * lax.rsqrt(var + eps) * g + b


def _mha(xq, xkv, w_qkv, b_qkv, w_o, b_o, *, num_heads, self_attention):
    """Fused multi-head attention on VMEM-resident values.

    xq: (Lq, D), xkv: (Lk, D); w_qkv: (D, 3D), b_qkv: (1, 3D);
    w_o: (D, D), b_o: (1, D).
    Packed QKV matmul (single MXU pass for self-attention), per-head softmax
    with lax.dot_general (no transpose materialized), output projection folded
    in as a sum of per-head row-slices of w_o (avoids in-kernel concatenate).
    """
    d = xq.shape[-1]
    dh = d // num_heads
    scale = 1.0 / math.sqrt(dh)

    if self_attention:
        qkv = jnp.dot(xq, w_qkv, preferred_element_type=jnp.float32) + b_qkv
        q = qkv[:, 0:d]
        k = qkv[:, d:2 * d]
        v = qkv[:, 2 * d:3 * d]
    else:
        q = jnp.dot(xq, w_qkv[:, 0:d],
                    preferred_element_type=jnp.float32) + b_qkv[:, 0:d]
        kv = jnp.dot(xkv, w_qkv[:, d:3 * d],
                     preferred_element_type=jnp.float32) + b_qkv[:, d:3 * d]
        k = kv[:, 0:d]
        v = kv[:, d:2 * d]

    acc = None
    for h in range(num_heads):
        sl = slice(h * dh, (h + 1) * dh)
        # scores = q_h @ k_h^T  (contract last dims; no explicit transpose)
        s = lax.dot_general(q[:, sl], k[:, sl], (((1,), (1,)), ((), ())),
                            preferred_element_type=jnp.float32) * scale
        m = jnp.max(s, axis=-1, keepdims=True)
        p = jnp.exp(s - m)
        p = p * pl.reciprocal(jnp.sum(p, axis=-1, keepdims=True), approx=True)
        oh = jnp.dot(p, v[:, sl], preferred_element_type=jnp.float32)
        contrib = jnp.dot(oh, w_o[sl, :], preferred_element_type=jnp.float32)
        acc = contrib if acc is None else acc + contrib
    return acc + b_o


# ----------------------------------------------------------------------------
# Fused Pallas kernels (one grid step = one batch element, fully in VMEM)
# ----------------------------------------------------------------------------

def _stem_kernel(xt_ref, w1_ref, b1_ref, lng_ref, lnb_ref, w2_ref, b2_ref,
                 root_ref, enc_ref):
    xt = xt_ref[0].astype(jnp.float32)                               # (S, Dm)
    h = jnp.dot(xt, w1_ref[...], preferred_element_type=jnp.float32) + b1_ref[...]
    h = jnp.maximum(_ln2d(h, lng_ref[...], lnb_ref[...]), 0.0)       # relu(normalize(.))
    r = jnp.dot(h, w2_ref[...], preferred_element_type=jnp.float32) + b2_ref[...]
    r = jnp.maximum(r, 0.0)                                          # x_root
    root_ref[0] = r.astype(root_ref.dtype)
    # gate fused in: x_test * (x_root / (x_root + 1e-6))
    enc_ref[0] = (xt * r * pl.reciprocal(r + 1e-6, approx=True)).astype(enc_ref.dtype)


def _featureformer_kernel(x_ref, wqkv_ref, bqkv_ref, wo_ref, bo_ref,
                          ln1g_ref, ln1b_ref, lw_ref, lb_ref,
                          ln2g_ref, ln2b_ref, o_ref, *, num_heads):
    x = x_ref[0].astype(jnp.float32)                                 # (Sw, D)
    a = _mha(x, x, wqkv_ref[...], bqkv_ref[...], wo_ref[...], bo_ref[...],
             num_heads=num_heads, self_attention=True)
    xn = _ln2d(x + a, ln1g_ref[...], ln1b_ref[...])
    xl = jnp.dot(xn, lw_ref[...], preferred_element_type=jnp.float32) + lb_ref[...]
    o_ref[0] = _ln2d(xn + xl, ln2g_ref[...], ln2b_ref[...]).astype(o_ref.dtype)


def _decoderformer_kernel(x_ref, y_ref,
                          wqkv1_ref, bqkv1_ref, wo1_ref, bo1_ref,
                          ln1g_ref, ln1b_ref,
                          wqkv2_ref, bqkv2_ref, wo2_ref, bo2_ref,
                          ln2g_ref, ln2b_ref,
                          lw_ref, lb_ref, ln3g_ref, ln3b_ref,
                          o_ref, *, num_heads):
    x = x_ref[0].astype(jnp.float32)                                 # (Ss, D)
    y = y_ref[0].astype(jnp.float32)                                 # (Sw, D)
    a1 = _mha(x, x, wqkv1_ref[...], bqkv1_ref[...], wo1_ref[...], bo1_ref[...],
              num_heads=num_heads, self_attention=True)
    xn = _ln2d(x + a1, ln1g_ref[...], ln1b_ref[...])
    a2 = _mha(xn, y, wqkv2_ref[...], bqkv2_ref[...], wo2_ref[...], bo2_ref[...],
              num_heads=num_heads, self_attention=False)
    xn1 = _ln2d(xn + a2, ln2g_ref[...], ln2b_ref[...])
    xl = jnp.dot(xn1, lw_ref[...], preferred_element_type=jnp.float32) + lb_ref[...]
    o_ref[0] = _ln2d(xn1 + xl, ln3g_ref[...], ln3b_ref[...]).astype(o_ref.dtype)


# ----------------------------------------------------------------------------
# pallas_call wrappers
# ----------------------------------------------------------------------------

_PARALLEL_BATCH = pltpu.CompilerParams(dimension_semantics=("parallel",))


def _act_spec(seq, dim):
    # one batch element per grid step
    return pl.BlockSpec((1, seq, dim), lambda b: (b, 0, 0))


def _w_spec(arr):
    # weights / biases / LN params: constant block index -> stays resident
    return pl.BlockSpec(arr.shape, lambda b: (0, 0))


def stem_fwd(x_test, params):
    B, S, Dm = x_test.shape
    weights = (params["w1"], params["b1"], params["ln_g"], params["ln_b"],
               params["w2"], params["b2"])
    return pl.pallas_call(
        _stem_kernel,
        out_shape=(jax.ShapeDtypeStruct((B, S, Dm), jnp.float32),
                   jax.ShapeDtypeStruct((B, S, Dm), jnp.float32)),
        grid=(B,),
        in_specs=[_act_spec(S, Dm)] + [_w_spec(w) for w in weights],
        out_specs=(_act_spec(S, Dm), _act_spec(S, Dm)),
        compiler_params=_PARALLEL_BATCH,
    )(x_test, *weights)


def featureformer_fwd(x, p, num_heads):
    B, S, D = x.shape
    weights = (p["attn"]["w_qkv"], p["attn"]["b_qkv"],
               p["attn"]["w_o"], p["attn"]["b_o"],
               p["ln1_g"], p["ln1_b"], p["lin_w"], p["lin_b"],
               p["ln2_g"], p["ln2_b"])
    return pl.pallas_call(
        functools.partial(_featureformer_kernel, num_heads=num_heads),
        out_shape=jax.ShapeDtypeStruct((B, S, D), jnp.float32),
        grid=(B,),
        in_specs=[_act_spec(S, D)] + [_w_spec(w) for w in weights],
        out_specs=_act_spec(S, D),
        compiler_params=_PARALLEL_BATCH,
    )(x, *weights)


def decoderformer_fwd(x, y, p, num_heads):
    B, Ss, D = x.shape
    Sw = y.shape[1]
    weights = (p["attn1"]["w_qkv"], p["attn1"]["b_qkv"],
               p["attn1"]["w_o"], p["attn1"]["b_o"],
               p["ln1_g"], p["ln1_b"],
               p["attn2"]["w_qkv"], p["attn2"]["b_qkv"],
               p["attn2"]["w_o"], p["attn2"]["b_o"],
               p["ln2_g"], p["ln2_b"],
               p["lin_w"], p["lin_b"], p["ln3_g"], p["ln3_b"])
    return pl.pallas_call(
        functools.partial(_decoderformer_kernel, num_heads=num_heads),
        out_shape=jax.ShapeDtypeStruct((B, Ss, D), jnp.float32),
        grid=(B,),
        in_specs=[_act_spec(Ss, D), _act_spec(Sw, D)] + [_w_spec(w) for w in weights],
        out_specs=_act_spec(Ss, D),
        compiler_params=_PARALLEL_BATCH,
    )(x, y, *weights)


def liner_ae_fwd(params, x, x_test, num_heads):
    x_root, x_encoder = stem_fwd(x_test, params)
    for blk in params["feature_blocks"]:
        x = featureformer_fwd(x, blk, num_heads)
    for blk in params["decoder_blocks"]:
        x_encoder = decoderformer_fwd(x_encoder, x, blk, num_heads)
    return x_encoder, x_root


# ----------------------------------------------------------------------------
# Deterministic parameter init (synthetic, matches the module's shape contract)
# ----------------------------------------------------------------------------

def _key_stream(key):
    while True:
        key, sub = jax.random.split(key)
        yield sub


def _init_mha(ks, dim):
    s = 0.05
    return {
        "w_qkv": jax.random.normal(next(ks), (dim, 3 * dim), jnp.float32) * s,
        "b_qkv": jnp.zeros((1, 3 * dim), jnp.float32),
        "w_o": jax.random.normal(next(ks), (dim, dim), jnp.float32) * s,
        "b_o": jnp.zeros((1, dim), jnp.float32),
    }


def init_params(key, num_blocks_encoder, num_blocks_decoder,
                sample_dim, hidden_dim, window_size, step_size):
    ks = _key_stream(key)
    s = 0.05
    params = {
        "w1": jax.random.normal(next(ks), (sample_dim, hidden_dim), jnp.float32) * s,
        "b1": jnp.zeros((1, hidden_dim), jnp.float32),
        "ln_g": jnp.ones((step_size, hidden_dim), jnp.float32),
        "ln_b": jnp.zeros((step_size, hidden_dim), jnp.float32),
        "w2": jax.random.normal(next(ks), (hidden_dim, sample_dim), jnp.float32) * s,
        "b2": jnp.zeros((1, sample_dim), jnp.float32),
        "feature_blocks": [],
        "decoder_blocks": [],
    }
    for _ in range(num_blocks_encoder):
        params["feature_blocks"].append({
            "attn": _init_mha(ks, sample_dim),
            "ln1_g": jnp.ones((window_size, sample_dim), jnp.float32),
            "ln1_b": jnp.zeros((window_size, sample_dim), jnp.float32),
            "lin_w": jax.random.normal(next(ks), (sample_dim, sample_dim), jnp.float32) * s,
            "lin_b": jnp.zeros((1, sample_dim), jnp.float32),
            "ln2_g": jnp.ones((window_size, sample_dim), jnp.float32),
            "ln2_b": jnp.zeros((window_size, sample_dim), jnp.float32),
        })
    for _ in range(num_blocks_decoder):
        params["decoder_blocks"].append({
            "attn1": _init_mha(ks, sample_dim),
            "attn2": _init_mha(ks, sample_dim),
            "ln1_g": jnp.ones((step_size, sample_dim), jnp.float32),
            "ln1_b": jnp.zeros((step_size, sample_dim), jnp.float32),
            "ln2_g": jnp.ones((step_size, sample_dim), jnp.float32),
            "ln2_b": jnp.zeros((step_size, sample_dim), jnp.float32),
            "lin_w": jax.random.normal(next(ks), (sample_dim, sample_dim), jnp.float32) * s,
            "lin_b": jnp.zeros((1, sample_dim), jnp.float32),
            "ln3_g": jnp.ones((step_size, sample_dim), jnp.float32),
            "ln3_b": jnp.zeros((step_size, sample_dim), jnp.float32),
        })
    return params


# ----------------------------------------------------------------------------
# Main
# ----------------------------------------------------------------------------

if __name__ == "__main__":
    # Small, self-consistent configuration.
    batch = 2
    window_size = 8      # seq length of x (feature/encoder path)
    step_size = 8        # seq length of x_test (decoder path)
    sample_dim = 16
    hidden_dim = 32
    head = 2
    num_blocks_encoder = 2
    num_blocks_decoder = 2

    root = jax.random.PRNGKey(0)
    k_param, k_x, k_xt = jax.random.split(root, 3)

    params = init_params(k_param, num_blocks_encoder, num_blocks_decoder,
                         sample_dim, hidden_dim, window_size, step_size)

    x = jax.random.normal(k_x, (batch, window_size, sample_dim), jnp.float32)
    x_test = jax.random.normal(k_xt, (batch, step_size, sample_dim), jnp.float32)

    fwd = jax.jit(functools.partial(liner_ae_fwd, num_heads=head))
    x_encoder, x_root = fwd(params, x, x_test)
    jax.block_until_ready((x_encoder, x_root))

    assert x_encoder.shape == (batch, step_size, sample_dim)
    assert x_root.shape == (batch, step_size, sample_dim)
    assert bool(jnp.all(jnp.isfinite(x_encoder))) and bool(jnp.all(jnp.isfinite(x_root)))

    print("KERNEL_OK")
</pallas_src>

<mosaic_0001>
module attributes {stable_mosaic.version = 11 : i64} {
  func.func @_stem_kernel(%arg0: i32, %arg1: memref<1x8x16xf32, #tpu.memory_space<vmem>>, %arg2: memref<16x32xf32, #tpu.memory_space<vmem>>, %arg3: memref<1x32xf32, #tpu.memory_space<vmem>>, %arg4: memref<8x32xf32, #tpu.memory_space<vmem>>, %arg5: memref<8x32xf32, #tpu.memory_space<vmem>>, %arg6: memref<32x16xf32, #tpu.memory_space<vmem>>, %arg7: memref<1x16xf32, #tpu.memory_space<vmem>>, %arg8: memref<1x8x16xf32, #tpu.memory_space<vmem>>, %arg9: memref<1x8x16xf32, #tpu.memory_space<vmem>>) attributes {dimension_semantics = [#tpu.dimension_semantics<parallel>], iteration_bounds = array<i64: 2>, scalar_prefetch = 0 : i64, scratch_operands = 0 : i64, tpu.core_type = #tpu.core_type<tc>, window_params = [{transform_indices = @transform_0, window_bounds = array<i64: 1, 8, 16>}, {pipeline_mode = #tpu.pipeline_mode<synchronous>, transform_indices = @transform_1, window_bounds = array<i64: 16, 32>}, {pipeline_mode = #tpu.pipeline_mode<synchronous>, transform_indices = @transform_2, window_bounds = array<i64: 1, 32>}, {pipeline_mode = #tpu.pipeline_mode<synchronous>, transform_indices = @transform_3, window_bounds = array<i64: 8, 32>}, {pipeline_mode = #tpu.pipeline_mode<synchronous>, transform_indices = @transform_4, window_bounds = array<i64: 8, 32>}, {pipeline_mode = #tpu.pipeline_mode<synchronous>, transform_indices = @transform_5, window_bounds = array<i64: 32, 16>}, {pipeline_mode = #tpu.pipeline_mode<synchronous>, transform_indices = @transform_6, window_bounds = array<i64: 1, 16>}, {transform_indices = @transform_7, window_bounds = array<i64: 1, 8, 16>}, {transform_indices = @transform_8, window_bounds = array<i64: 1, 8, 16>}]} {
    %c0 = arith.constant 0 : index
    %c0_0 = arith.constant 0 : index
    %c0_1 = arith.constant 0 : index
    %0 = vector.load %arg1[%c0, %c0_0, %c0_1] : memref<1x8x16xf32, #tpu.memory_space<vmem>>, vector<1x8x16xf32>
    %1 = vector.shape_cast %0 : vector<1x8x16xf32> to vector<8x16xf32>
    %c0_2 = arith.constant 0 : index
    %c0_3 = arith.constant 0 : index
    %2 = vector.load %arg2[%c0_2, %c0_3] : memref<16x32xf32, #tpu.memory_space<vmem>>, vector<16x32xf32>
    %cst = arith.constant dense<0.000000e+00> : vector<8x32xf32>
    %3 = tpu.matmul %1, %2, %cst {dimension_numbers = #tpu.dot_dimension_numbers<[1], [0], [0], [1], [0, 0, 1, 1], [], []>} : vector<8x16xf32>, vector<16x32xf32>, vector<8x32xf32> -> vector<8x32xf32>
    %c0_4 = arith.constant 0 : index
    %c0_5 = arith.constant 0 : index
    %4 = vector.load %arg3[%c0_4, %c0_5] : memref<1x32xf32, #tpu.memory_space<vmem>>, vector<1x32xf32>
    %5 = vector.broadcast %4 : vector<1x32xf32> to vector<8x32xf32>
    %6 = arith.addf %3, %5 : vector<8x32xf32>
    %c0_6 = arith.constant 0 : index
    %c0_7 = arith.constant 0 : index
    %7 = vector.load %arg4[%c0_6, %c0_7] : memref<8x32xf32, #tpu.memory_space<vmem>>, vector<8x32xf32>
    %c0_8 = arith.constant 0 : index
    %c0_9 = arith.constant 0 : index
    %8 = vector.load %arg5[%c0_8, %c0_9] : memref<8x32xf32, #tpu.memory_space<vmem>>, vector<8x32xf32>
    %9 = vector.shape_cast %6 : vector<8x32xf32> to vector<1x8x32xf32>
    %cst_10 = arith.constant dense<0.000000e+00> : vector<1xf32>
    %10 = vector.multi_reduction <add>, %9, %cst_10 [1, 2] : vector<1x8x32xf32> to vector<1xf32>
    %11 = vector.shape_cast %10 : vector<1xf32> to vector<1x1x1xf32>
    %12 = vector.extract %11[0, 0, 0] : f32 from vector<1x1x1xf32>
    %cst_11 = arith.constant 2.560000e+02 : f32
    %13 = arith.divf %12, %cst_11 : f32
    %14 = vector.broadcast %13 : f32 to vector<8x32xf32>
    %15 = arith.subf %6, %14 : vector<8x32xf32>
    %16 = arith.mulf %15, %15 : vector<8x32xf32>
    %17 = vector.shape_cast %16 : vector<8x32xf32> to vector<1x8x32xf32>
    %cst_12 = arith.constant dense<0.000000e+00> : vector<1xf32>
    %18 = vector.multi_reduction <add>, %17, %cst_12 [1, 2] : vector<1x8x32xf32> to vector<1xf32>
    %19 = vector.shape_cast %18 : vector<1xf32> to vector<1x1x1xf32>
    %20 = vector.extract %19[0, 0, 0] : f32 from vector<1x1x1xf32>
    %cst_13 = arith.constant 2.560000e+02 : f32
    %21 = arith.divf %20, %cst_13 : f32
    %22 = vector.broadcast %13 : f32 to vector<8x32xf32>
    %23 = arith.subf %6, %22 : vector<8x32xf32>
    %cst_14 = arith.constant 9.99999974E-6 : f32
    %24 = arith.addf %21, %cst_14 : f32
    %25 = math.rsqrt %24 : f32
    %26 = vector.broadcast %25 : f32 to vector<8x32xf32>
    %27 = arith.mulf %23, %26 : vector<8x32xf32>
    %28 = arith.mulf %27, %7 : vector<8x32xf32>
    %29 = arith.addf %28, %8 : vector<8x32xf32>
    %cst_15 = arith.constant 0.000000e+00 : f32
    %30 = vector.broadcast %cst_15 : f32 to vector<8x32xf32>
    %31 = arith.maximumf %29, %30 : vector<8x32xf32>
    %c0_16 = arith.constant 0 : index
    %c0_17 = arith.constant 0 : index
    %32 = vector.load %arg6[%c0_16, %c0_17] : memref<32x16xf32, #tpu.memory_space<vmem>>, vector<32x16xf32>
    %cst_18 = arith.constant dense<0.000000e+00> : vector<8x16xf32>
    %33 = tpu.matmul %31, %32, %cst_18 {dimension_numbers = #tpu.dot_dimension_numbers<[1], [0], [0], [1], [0, 0, 1, 1], [], []>} : vector<8x32xf32>, vector<32x16xf32>, vector<8x16xf32> -> vector<8x16xf32>
    %c0_19 = arith.constant 0 : index
    %c0_20 = arith.constant 0 : index
    %34 = vector.load %arg7[%c0_19, %c0_20] : memref<1x16xf32, #tpu.memory_space<vmem>>, vector<1x16xf32>
    %35 = vector.broadcast %34 : vector<1x16xf32> to vector<8x16xf32>
    %36 = arith.addf %33, %35 : vector<8x16xf32>
    %cst_21 = arith.constant 0.000000e+00 : f32
    %37 = vector.broadcast %cst_21 : f32 to vector<8x16xf32>
    %38 = arith.maximumf %36, %37 : vector<8x16xf32>
    %c0_22 = arith.constant 0 : index
    %c0_23 = arith.constant 0 : index
    %c0_24 = arith.constant 0 : index
    %39 = vector.load %arg8[%c0_22, %c0_23, %c0_24] : memref<1x8x16xf32, #tpu.memory_space<vmem>>, vector<1x8x16xf32>
    %40 = vector.shape_cast %39 : vector<1x8x16xf32> to vector<8x16xf32>
    %41 = vector.shape_cast %38 : vector<8x16xf32> to vector<1x8x16xf32>
    tpu.vector_store %arg8[%c0_22, %c0_23, %c0_24], %41 {strides = array<i32>} : memref<1x8x16xf32, #tpu.memory_space<vmem>>, vector<1x8x16xf32>,
    %42 = arith.mulf %1, %38 : vector<8x16xf32>
    %cst_25 = arith.constant 9.99999997E-7 : f32
    %43 = vector.broadcast %cst_25 : f32 to vector<8x16xf32>
    %44 = arith.addf %38, %43 : vector<8x16xf32>
    %45 = tpu.reciprocal %44 {approx = true} : vector<8x16xf32> -> vector<8x16xf32>
    %46 = arith.mulf %42, %45 : vector<8x16xf32>
    %c0_26 = arith.constant 0 : index
    %c0_27 = arith.constant 0 : index
    %c0_28 = arith.constant 0 : index
    %47 = vector.load %arg9[%c0_26, %c0_27, %c0_28] : memref<1x8x16xf32, #tpu.memory_space<vmem>>, vector<1x8x16xf32>
    %48 = vector.shape_cast %47 : vector<1x8x16xf32> to vector<8x16xf32>
    %49 = vector.shape_cast %46 : vector<8x16xf32> to vector<1x8x16xf32>
    tpu.vector_store %arg9[%c0_26, %c0_27, %c0_28], %49 {strides = array<i32>} : memref<1x8x16xf32, #tpu.memory_space<vmem>>, vector<1x8x16xf32>,
    return
  }
  func.func @transform_0(%arg0: i32) -> (i32, i32, i32) {
    %c0_i32 = arith.constant 0 : i32
    %c0_i32_0 = arith.constant 0 : i32
    %c0_i32_1 = arith.constant 0 : i32
    return %arg0, %c0_i32, %c0_i32_0 : i32, i32, i32
  }
  func.func @transform_1(%arg0: i32) -> (i32, i32) {
    %c0_i32 = arith.constant 0 : i32
    %c0_i32_0 = arith.constant 0 : i32
    %c0_i32_1 = arith.constant 0 : i32
    return %c0_i32, %c0_i32_0 : i32, i32
  }
  func.func @transform_2(%arg0: i32) -> (i32, i32) {
    %c0_i32 = arith.constant 0 : i32
    %c0_i32_0 = arith.constant 0 : i32
    %c0_i32_1 = arith.constant 0 : i32
    return %c0_i32, %c0_i32_0 : i32, i32
  }
  func.func @transform_3(%arg0: i32) -> (i32, i32) {
    %c0_i32 = arith.constant 0 : i32
    %c0_i32_0 = arith.constant 0 : i32
    %c0_i32_1 = arith.constant 0 : i32
    return %c0_i32, %c0_i32_0 : i32, i32
  }
  func.func @transform_4(%arg0: i32) -> (i32, i32) {
    %c0_i32 = arith.constant 0 : i32
    %c0_i32_0 = arith.constant 0 : i32
    %c0_i32_1 = arith.constant 0 : i32
    return %c0_i32, %c0_i32_0 : i32, i32
  }
  func.func @transform_5(%arg0: i32) -> (i32, i32) {
    %c0_i32 = arith.constant 0 : i32
    %c0_i32_0 = arith.constant 0 : i32
    %c0_i32_1 = arith.constant 0 : i32
    return %c0_i32, %c0_i32_0 : i32, i32
  }
  func.func @transform_6(%arg0: i32) -> (i32, i32) {
    %c0_i32 = arith.constant 0 : i32
    %c0_i32_0 = arith.constant 0 : i32
    %c0_i32_1 = arith.constant 0 : i32
    return %c0_i32, %c0_i32_0 : i32, i32
  }
  func.func @transform_7(%arg0: i32) -> (i32, i32, i32) {
    %c0_i32 = arith.constant 0 : i32
    %c0_i32_0 = arith.constant 0 : i32
    %c0_i32_1 = arith.constant 0 : i32
    return %arg0, %c0_i32, %c0_i32_0 : i32, i32, i32
  }
  func.func @transform_8(%arg0: i32) -> (i32, i32, i32) {
    %c0_i32 = arith.constant 0 : i32
    %c0_i32_0 = arith.constant 0 : i32
    %c0_i32_1 = arith.constant 0 : i32
    return %arg0, %c0_i32, %c0_i32_0 : i32, i32, i32
  }
}

module attributes {stable_mosaic.version = 11 : i64} {
  func.func @_featureformer_kernel(%arg0: i32, %arg1: memref<1x8x16xf32, #tpu.memory_space<vmem>>, %arg2: memref<16x48xf32, #tpu.memory_space<vmem>>, %arg3: memref<1x48xf32, #tpu.memory_space<vmem>>, %arg4: memref<16x16xf32, #tpu.memory_space<vmem>>, %arg5: memref<1x16xf32, #tpu.memory_space<vmem>>, %arg6: memref<8x16xf32, #tpu.memory_space<vmem>>, %arg7: memref<8x16xf32, #tpu.memory_space<vmem>>, %arg8: memref<16x16xf32, #tpu.memory_space<vmem>>, %arg9: memref<1x16xf32, #tpu.memory_space<vmem>>, %arg10: memref<8x16xf32, #tpu.memory_space<vmem>>, %arg11: memref<8x16xf32, #tpu.memory_space<vmem>>, %arg12: memref<1x8x16xf32, #tpu.memory_space<vmem>>) attributes {dimension_semantics = [#tpu.dimension_semantics<parallel>], iteration_bounds = array<i64: 2>, scalar_prefetch = 0 : i64, scratch_operands = 0 : i64, tpu.core_type = #tpu.core_type<tc>, window_params = [{transform_indices = @transform_0, window_bounds = array<i64: 1, 8, 16>}, {pipeline_mode = #tpu.pipeline_mode<synchronous>, transform_indices = @transform_1, window_bounds = array<i64: 16, 48>}, {pipeline_mode = #tpu.pipeline_mode<synchronous>, transform_indices = @transform_2, window_bounds = array<i64: 1, 48>}, {pipeline_mode = #tpu.pipeline_mode<synchronous>, transform_indices = @transform_3, window_bounds = array<i64: 16, 16>}, {pipeline_mode = #tpu.pipeline_mode<synchronous>, transform_indices = @transform_4, window_bounds = array<i64: 1, 16>}, {pipeline_mode = #tpu.pipeline_mode<synchronous>, transform_indices = @transform_5, window_bounds = array<i64: 8, 16>}, {pipeline_mode = #tpu.pipeline_mode<synchronous>, transform_indices = @transform_6, window_bounds = array<i64: 8, 16>}, {pipeline_mode = #tpu.pipeline_mode<synchronous>, transform_indices = @transform_7, window_bounds = array<i64: 16, 16>}, {pipeline_mode = #tpu.pipeline_mode<synchronous>, transform_indices = @transform_8, window_bounds = array<i64: 1, 16>}, {pipeline_mode = #tpu.pipeline_mode<synchronous>, transform_indices = @transform_9, window_bounds = array<i64: 8, 16>}, {pipeline_mode = #tpu.pipeline_mode<synchronous>, transform_indices = @transform_10, window_bounds = array<i64: 8, 16>}, {transform_indices = @transform_11, window_bounds = array<i64: 1, 8, 16>}]} {
    %c0 = arith.constant 0 : index
    %c0_0 = arith.constant 0 : index
    %c0_1 = arith.constant 0 : index
    %0 = vector.load %arg1[%c0, %c0_0, %c0_1] : memref<1x8x16xf32, #tpu.memory_space<vmem>>, vector<1x8x16xf32>
    %1 = vector.shape_cast %0 : vector<1x8x16xf32> to vector<8x16xf32>
    %c0_2 = arith.constant 0 : index
    %c0_3 = arith.constant 0 : index
    %2 = vector.load %arg2[%c0_2, %c0_3] : memref<16x48xf32, #tpu.memory_space<vmem>>, vector<16x48xf32>
    %c0_4 = arith.constant 0 : index
    %c0_5 = arith.constant 0 : index
    %3 = vector.load %arg3[%c0_4, %c0_5] : memref<1x48xf32, #tpu.memory_space<vmem>>, vector<1x48xf32>
    %c0_6 = arith.constant 0 : index
    %c0_7 = arith.constant 0 : index
    %4 = vector.load %arg4[%c0_6, %c0_7] : memref<16x16xf32, #tpu.memory_space<vmem>>, vector<16x16xf32>
    %c0_8 = arith.constant 0 : index
    %c0_9 = arith.constant 0 : index
    %5 = vector.load %arg5[%c0_8, %c0_9] : memref<1x16xf32, #tpu.memory_space<vmem>>, vector<1x16xf32>
    %cst = arith.constant dense<0.000000e+00> : vector<8x48xf32>
    %6 = tpu.matmul %1, %2, %cst {dimension_numbers = #tpu.dot_dimension_numbers<[1], [0], [0], [1], [0, 0, 1, 1], [], []>} : vector<8x16xf32>, vector<16x48xf32>, vector<8x48xf32> -> vector<8x48xf32>
    %7 = vector.broadcast %3 : vector<1x48xf32> to vector<8x48xf32>
    %8 = arith.addf %6, %7 : vector<8x48xf32>
    %9 = vector.extract_strided_slice %8 {offsets = [0, 0], sizes = [8, 16], strides = [1, 1]} : vector<8x48xf32> to vector<8x16xf32>
    %10 = vector.extract_strided_slice %8 {offsets = [0, 16], sizes = [8, 16], strides = [1, 1]} : vector<8x48xf32> to vector<8x16xf32>
    %11 = vector.extract_strided_slice %8 {offsets = [0, 32], sizes = [8, 16], strides = [1, 1]} : vector<8x48xf32> to vector<8x16xf32>
    %12 = vector.extract_strided_slice %9 {offsets = [0, 0], sizes = [8, 8], strides = [1, 1]} : vector<8x16xf32> to vector<8x8xf32>
    %13 = vector.extract_strided_slice %10 {offsets = [0, 0], sizes = [8, 8], strides = [1, 1]} : vector<8x16xf32> to vector<8x8xf32>
    %cst_10 = arith.constant dense<0.000000e+00> : vector<8x8xf32>
    %14 = tpu.matmul %12, %13, %cst_10 {dimension_numbers = #tpu.dot_dimension_numbers<[1], [1], [0], [0], [0, 0, 1, 0], [], []>} : vector<8x8xf32>, vector<8x8xf32>, vector<8x8xf32> -> vector<8x8xf32>
    %cst_11 = arith.constant 0.353553385 : f32
    %15 = vector.broadcast %cst_11 : f32 to vector<8x8xf32>
    %16 = arith.mulf %14, %15 : vector<8x8xf32>
    %cst_12 = arith.constant dense<0xFF800000> : vector<8xf32>
    %17 = vector.multi_reduction <maximumf>, %16, %cst_12 [1] : vector<8x8xf32> to vector<8xf32>
    %18 = vector.shape_cast %17 : vector<8xf32> to vector<8x1xf32>
    %19 = vector.broadcast %18 : vector<8x1xf32> to vector<8x8xf32>
    %20 = arith.subf %16, %19 : vector<8x8xf32>
    %21 = math.exp %20 : vector<8x8xf32>
    %cst_13 = arith.constant dense<0.000000e+00> : vector<8xf32>
    %22 = vector.multi_reduction <add>, %21, %cst_13 [1] : vector<8x8xf32> to vector<8xf32>
    %23 = vector.shape_cast %22 : vector<8xf32> to vector<8x1xf32>
    %24 = tpu.reciprocal %23 {approx = true} : vector<8x1xf32> -> vector<8x1xf32>
    %25 = vector.broadcast %24 : vector<8x1xf32> to vector<8x8xf32>
    %26 = arith.mulf %21, %25 : vector<8x8xf32>
    %27 = vector.extract_strided_slice %11 {offsets = [0, 0], sizes = [8, 8], strides = [1, 1]} : vector<8x16xf32> to vector<8x8xf32>
    %cst_14 = arith.constant dense<0.000000e+00> : vector<8x8xf32>
    %28 = tpu.matmul %26, %27, %cst_14 {dimension_numbers = #tpu.dot_dimension_numbers<[1], [0], [0], [1], [0, 0, 1, 1], [], []>} : vector<8x8xf32>, vector<8x8xf32>, vector<8x8xf32> -> vector<8x8xf32>
    %29 = vector.extract_strided_slice %4 {offsets = [0, 0], sizes = [8, 16], strides = [1, 1]} : vector<16x16xf32> to vector<8x16xf32>
    %cst_15 = arith.constant dense<0.000000e+00> : vector<8x16xf32>
    %30 = tpu.matmul %28, %29, %cst_15 {dimension_numbers = #tpu.dot_dimension_numbers<[1], [0], [0], [1], [0, 0, 1, 1], [], []>} : vector<8x8xf32>, vector<8x16xf32>, vector<8x16xf32> -> vector<8x16xf32>
    %31 = vector.extract_strided_slice %9 {offsets = [0, 8], sizes = [8, 8], strides = [1, 1]} : vector<8x16xf32> to vector<8x8xf32>
    %32 = vector.extract_strided_slice %10 {offsets = [0, 8], sizes = [8, 8], strides = [1, 1]} : vector<8x16xf32> to vector<8x8xf32>
    %cst_16 = arith.constant dense<0.000000e+00> : vector<8x8xf32>
    %33 = tpu.matmul %31, %32, %cst_16 {dimension_numbers = #tpu.dot_dimension_numbers<[1], [1], [0], [0], [0, 0, 1, 0], [], []>} : vector<8x8xf32>, vector<8x8xf32>, vector<8x8xf32> -> vector<8x8xf32>
    %cst_17 = arith.constant 0.353553385 : f32
    %34 = vector.broadcast %cst_17 : f32 to vector<8x8xf32>
    %35 = arith.mulf %33, %34 : vector<8x8xf32>
    %cst_18 = arith.constant dense<0xFF800000> : vector<8xf32>
    %36 = vector.multi_reduction <maximumf>, %35, %cst_18 [1] : vector<8x8xf32> to vector<8xf32>
    %37 = vector.shape_cast %36 : vector<8xf32> to vector<8x1xf32>
    %38 = vector.broadcast %37 : vector<8x1xf32> to vector<8x8xf32>
    %39 = arith.subf %35, %38 : vector<8x8xf32>
    %40 = math.exp %39 : vector<8x8xf32>
    %cst_19 = arith.constant dense<0.000000e+00> : vector<8xf32>
    %41 = vector.multi_reduction <add>, %40, %cst_19 [1] : vector<8x8xf32> to vector<8xf32>
    %42 = vector.shape_cast %41 : vector<8xf32> to vector<8x1xf32>
    %43 = tpu.reciprocal %42 {approx = true} : vector<8x1xf32> -> vector<8x1xf32>
    %44 = vector.broadcast %43 : vector<8x1xf32> to vector<8x8xf32>
    %45 = arith.mulf %40, %44 : vector<8x8xf32>
    %46 = vector.extract_strided_slice %11 {offsets = [0, 8], sizes = [8, 8], strides = [1, 1]} : vector<8x16xf32> to vector<8x8xf32>
    %cst_20 = arith.constant dense<0.000000e+00> : vector<8x8xf32>
    %47 = tpu.matmul %45, %46, %cst_20 {dimension_numbers = #tpu.dot_dimension_numbers<[1], [0], [0], [1], [0, 0, 1, 1], [], []>} : vector<8x8xf32>, vector<8x8xf32>, vector<8x8xf32> -> vector<8x8xf32>
    %48 = vector.extract_strided_slice %4 {offsets = [8, 0], sizes = [8, 16], strides = [1, 1]} : vector<16x16xf32> to vector<8x16xf32>
    %cst_21 = arith.constant dense<0.000000e+00> : vector<8x16xf32>
    %49 = tpu.matmul %47, %48, %cst_21 {dimension_numbers = #tpu.dot_dimension_numbers<[1], [0], [0], [1], [0, 0, 1, 1], [], []>} : vector<8x8xf32>, vector<8x16xf32>, vector<8x16xf32> -> vector<8x16xf32>
    %50 = arith.addf %30, %49 : vector<8x16xf32>
    %51 = vector.broadcast %5 : vector<1x16xf32> to vector<8x16xf32>
    %52 = arith.addf %50, %51 : vector<8x16xf32>
    %53 = arith.addf %1, %52 : vector<8x16xf32>
    %c0_22 = arith.constant 0 : index
    %c0_23 = arith.constant 0 : index
    %54 = vector.load %arg6[%c0_22, %c0_23] : memref<8x16xf32, #tpu.memory_space<vmem>>, vector<8x16xf32>
    %c0_24 = arith.constant 0 : index
    %c0_25 = arith.constant 0 : index
    %55 = vector.load %arg7[%c0_24, %c0_25] : memref<8x16xf32, #tpu.memory_space<vmem>>, vector<8x16xf32>
    %56 = vector.shape_cast %53 : vector<8x16xf32> to vector<1x8x16xf32>
    %cst_26 = arith.constant dense<0.000000e+00> : vector<1xf32>
    %57 = vector.multi_reduction <add>, %56, %cst_26 [1, 2] : vector<1x8x16xf32> to vector<1xf32>
    %58 = vector.shape_cast %57 : vector<1xf32> to vector<1x1x1xf32>
    %59 = vector.extract %58[0, 0, 0] : f32 from vector<1x1x1xf32>
    %cst_27 = arith.constant 1.280000e+02 : f32
    %60 = arith.divf %59, %cst_27 : f32
    %61 = vector.broadcast %60 : f32 to vector<8x16xf32>
    %62 = arith.subf %53, %61 : vector<8x16xf32>
    %63 = arith.mulf %62, %62 : vector<8x16xf32>
    %64 = vector.shape_cast %63 : vector<8x16xf32> to vector<1x8x16xf32>
    %cst_28 = arith.constant dense<0.000000e+00> : vector<1xf32>
    %65 = vector.multi_reduction <add>, %64, %cst_28 [1, 2] : vector<1x8x16xf32> to vector<1xf32>
    %66 = vector.shape_cast %65 : vector<1xf32> to vector<1x1x1xf32>
    %67 = vector.extract %66[0, 0, 0] : f32 from vector<1x1x1xf32>
    %cst_29 = arith.constant 1.280000e+02 : f32
    %68 = arith.divf %67, %cst_29 : f32
    %69 = vector.broadcast %60 : f32 to vector<8x16xf32>
    %70 = arith.subf %53, %69 : vector<8x16xf32>
    %cst_30 = arith.constant 9.99999974E-6 : f32
    %71 = arith.addf %68, %cst_30 : f32
    %72 = math.rsqrt %71 : f32
    %73 = vector.broadcast %72 : f32 to vector<8x16xf32>
    %74 = arith.mulf %70, %73 : vector<8x16xf32>
    %75 = arith.mulf %74, %54 : vector<8x16xf32>
    %76 = arith.addf %75, %55 : vector<8x16xf32>
    %c0_31 = arith.constant 0 : index
    %c0_32 = arith.constant 0 : index
    %77 = vector.load %arg8[%c0_31, %c0_32] : memref<16x16xf32, #tpu.memory_space<vmem>>, vector<16x16xf32>
    %cst_33 = arith.constant dense<0.000000e+00> : vector<8x16xf32>
    %78 = tpu.matmul %76, %77, %cst_33 {dimension_numbers = #tpu.dot_dimension_numbers<[1], [0], [0], [1], [0, 0, 1, 1], [], []>} : vector<8x16xf32>, vector<16x16xf32>, vector<8x16xf32> -> vector<8x16xf32>
    %c0_34 = arith.constant 0 : index
    %c0_35 = arith.constant 0 : index
    %79 = vector.load %arg9[%c0_34, %c0_35] : memref<1x16xf32, #tpu.memory_space<vmem>>, vector<1x16xf32>
    %80 = vector.broadcast %79 : vector<1x16xf32> to vector<8x16xf32>
    %81 = arith.addf %78, %80 : vector<8x16xf32>
    %82 = arith.addf %76, %81 : vector<8x16xf32>
    %c0_36 = arith.constant 0 : index
    %c0_37 = arith.constant 0 : index
    %83 = vector.load %arg10[%c0_36, %c0_37] : memref<8x16xf32, #tpu.memory_space<vmem>>, vector<8x16xf32>
    %c0_38 = arith.constant 0 : index
    %c0_39 = arith.constant 0 : index
    %84 = vector.load %arg11[%c0_38, %c0_39] : memref<8x16xf32, #tpu.memory_space<vmem>>, vector<8x16xf32>
    %85 = vector.shape_cast %82 : vector<8x16xf32> to vector<1x8x16xf32>
    %cst_40 = arith.constant dense<0.000000e+00> : vector<1xf32>
    %86 = vector.multi_reduction <add>, %85, %cst_40 [1, 2] : vector<1x8x16xf32> to vector<1xf32>
    %87 = vector.shape_cast %86 : vector<1xf32> to vector<1x1x1xf32>
    %88 = vector.extract %87[0, 0, 0] : f32 from vector<1x1x1xf32>
    %cst_41 = arith.constant 1.280000e+02 : f32
    %89 = arith.divf %88, %cst_41 : f32
    %90 = vector.broadcast %89 : f32 to vector<8x16xf32>
    %91 = arith.subf %82, %90 : vector<8x16xf32>
    %92 = arith.mulf %91, %91 : vector<8x16xf32>
    %93 = vector.shape_cast %92 : vector<8x16xf32> to vector<1x8x16xf32>
    %cst_42 = arith.constant dense<0.000000e+00> : vector<1xf32>
    %94 = vector.multi_reduction <add>, %93, %cst_42 [1, 2] : vector<1x8x16xf32> to vector<1xf32>
    %95 = vector.shape_cast %94 : vector<1xf32> to vector<1x1x1xf32>
    %96 = vector.extract %95[0, 0, 0] : f32 from vector<1x1x1xf32>
    %cst_43 = arith.constant 1.280000e+02 : f32
    %97 = arith.divf %96, %cst_43 : f32
    %98 = vector.broadcast %89 : f32 to vector<8x16xf32>
    %99 = arith.subf %82, %98 : vector<8x16xf32>
    %cst_44 = arith.constant 9.99999974E-6 : f32
    %100 = arith.addf %97, %cst_44 : f32
    %101 = math.rsqrt %100 : f32
    %102 = vector.broadcast %101 : f32 to vector<8x16xf32>
    %103 = arith.mulf %99, %102 : vector<8x16xf32>
    %104 = arith.mulf %103, %83 : vector<8x16xf32>
    %105 = arith.addf %104, %84 : vector<8x16xf32>
    %c0_45 = arith.constant 0 : index
    %c0_46 = arith.constant 0 : index
    %c0_47 = arith.constant 0 : index
    %106 = vector.load %arg12[%c0_45, %c0_46, %c0_47] : memref<1x8x16xf32, #tpu.memory_space<vmem>>, vector<1x8x16xf32>
    %107 = vector.shape_cast %106 : vector<1x8x16xf32> to vector<8x16xf32>
    %108 = vector.shape_cast %105 : vector<8x16xf32> to vector<1x8x16xf32>
    tpu.vector_store %arg12[%c0_45, %c0_46, %c0_47], %108 {strides = array<i32>} : memref<1x8x16xf32, #tpu.memory_space<vmem>>, vector<1x8x16xf32>,
    return
  }
  func.func @transform_0(%arg0: i32) -> (i32, i32, i32) {
    %c0_i32 = arith.constant 0 : i32
    %c0_i32_0 = arith.constant 0 : i32
    %c0_i32_1 = arith.constant 0 : i32
    return %arg0, %c0_i32, %c0_i32_0 : i32, i32, i32
  }
  func.func @transform_1(%arg0: i32) -> (i32, i32) {
    %c0_i32 = arith.constant 0 : i32
    %c0_i32_0 = arith.constant 0 : i32
    %c0_i32_1 = arith.constant 0 : i32
    return %c0_i32, %c0_i32_0 : i32, i32
  }
  func.func @transform_2(%arg0: i32) -> (i32, i32) {
    %c0_i32 = arith.constant 0 : i32
    %c0_i32_0 = arith.constant 0 : i32
    %c0_i32_1 = arith.constant 0 : i32
    return %c0_i32, %c0_i32_0 : i32, i32
  }
  func.func @transform_3(%arg0: i32) -> (i32, i32) {
    %c0_i32 = arith.constant 0 : i32
    %c0_i32_0 = arith.constant 0 : i32
    %c0_i32_1 = arith.constant 0 : i32
    return %c0_i32, %c0_i32_0 : i32, i32
  }
  func.func @transform_4(%arg0: i32) -> (i32, i32) {
    %c0_i32 = arith.constant 0 : i32
    %c0_i32_0 = arith.constant 0 : i32
    %c0_i32_1 = arith.constant 0 : i32
    return %c0_i32, %c0_i32_0 : i32, i32
  }
  func.func @transform_5(%arg0: i32) -> (i32, i32) {
    %c0_i32 = arith.constant 0 : i32
    %c0_i32_0 = arith.constant 0 : i32
    %c0_i32_1 = arith.constant 0 : i32
    return %c0_i32, %c0_i32_0 : i32, i32
  }
  func.func @transform_6(%arg0: i32) -> (i32, i32) {
    %c0_i32 = arith.constant 0 : i32
    %c0_i32_0 = arith.constant 0 : i32
    %c0_i32_1 = arith.constant 0 : i32
    return %c0_i32, %c0_i32_0 : i32, i32
  }
  func.func @transform_7(%arg0: i32) -> (i32, i32) {
    %c0_i32 = arith.constant 0 : i32
    %c0_i32_0 = arith.constant 0 : i32
    %c0_i32_1 = arith.constant 0 : i32
    return %c0_i32, %c0_i32_0 : i32, i32
  }
  func.func @transform_8(%arg0: i32) -> (i32, i32) {
    %c0_i32 = arith.constant 0 : i32
    %c0_i32_0 = arith.constant 0 : i32
    %c0_i32_1 = arith.constant 0 : i32
    return %c0_i32, %c0_i32_0 : i32, i32
  }
  func.func @transform_9(%arg0: i32) -> (i32, i32) {
    %c0_i32 = arith.constant 0 : i32
    %c0_i32_0 = arith.constant 0 : i32
    %c0_i32_1 = arith.constant 0 : i32
    return %c0_i32, %c0_i32_0 : i32, i32
  }
  func.func @transform_10(%arg0: i32) -> (i32, i32) {
    %c0_i32 = arith.constant 0 : i32
    %c0_i32_0 = arith.constant 0 : i32
    %c0_i32_1 = arith.constant 0 : i32
    return %c0_i32, %c0_i32_0 : i32, i32
  }
  func.func @transform_11(%arg0: i32) -> (i32, i32, i32) {
    %c0_i32 = arith.constant 0 : i32
    %c0_i32_0 = arith.constant 0 : i32
    %c0_i32_1 = arith.constant 0 : i32
    return %arg0, %c0_i32, %c0_i32_0 : i32, i32, i32
  }
}

module attributes {stable_mosaic.version = 11 : i64} {
  func.func @_decoderformer_kernel(%arg0: i32, %arg1: memref<1x8x16xf32, #tpu.memory_space<vmem>>, %arg2: memref<1x8x16xf32, #tpu.memory_space<vmem>>, %arg3: memref<16x48xf32, #tpu.memory_space<vmem>>, %arg4: memref<1x48xf32, #tpu.memory_space<vmem>>, %arg5: memref<16x16xf32, #tpu.memory_space<vmem>>, %arg6: memref<1x16xf32, #tpu.memory_space<vmem>>, %arg7: memref<8x16xf32, #tpu.memory_space<vmem>>, %arg8: memref<8x16xf32, #tpu.memory_space<vmem>>, %arg9: memref<16x48xf32, #tpu.memory_space<vmem>>, %arg10: memref<1x48xf32, #tpu.memory_space<vmem>>, %arg11: memref<16x16xf32, #tpu.memory_space<vmem>>, %arg12: memref<1x16xf32, #tpu.memory_space<vmem>>, %arg13: memref<8x16xf32, #tpu.memory_space<vmem>>, %arg14: memref<8x16xf32, #tpu.memory_space<vmem>>, %arg15: memref<16x16xf32, #tpu.memory_space<vmem>>, %arg16: memref<1x16xf32, #tpu.memory_space<vmem>>, %arg17: memref<8x16xf32, #tpu.memory_space<vmem>>, %arg18: memref<8x16xf32, #tpu.memory_space<vmem>>, %arg19: memref<1x8x16xf32, #tpu.memory_space<vmem>>) attributes {dimension_semantics = [#tpu.dimension_semantics<parallel>], iteration_bounds = array<i64: 2>, scalar_prefetch = 0 : i64, scratch_operands = 0 : i64, tpu.core_type = #tpu.core_type<tc>, window_params = [{transform_indices = @transform_0, window_bounds = array<i64: 1, 8, 16>}, {transform_indices = @transform_1, window_bounds = array<i64: 1, 8, 16>}, {pipeline_mode = #tpu.pipeline_mode<synchronous>, transform_indices = @transform_2, window_bounds = array<i64: 16, 48>}, {pipeline_mode = #tpu.pipeline_mode<synchronous>, transform_indices = @transform_3, window_bounds = array<i64: 1, 48>}, {pipeline_mode = #tpu.pipeline_mode<synchronous>, transform_indices = @transform_4, window_bounds = array<i64: 16, 16>}, {pipeline_mode = #tpu.pipeline_mode<synchronous>, transform_indices = @transform_5, window_bounds = array<i64: 1, 16>}, {pipeline_mode = #tpu.pipeline_mode<synchronous>, transform_indices = @transform_6, window_bounds = array<i64: 8, 16>}, {pipeline_mode = #tpu.pipeline_mode<synchronous>, transform_indices = @transform_7, window_bounds = array<i64: 8, 16>}, {pipeline_mode = #tpu.pipeline_mode<synchronous>, transform_indices = @transform_8, window_bounds = array<i64: 16, 48>}, {pipeline_mode = #tpu.pipeline_mode<synchronous>, transform_indices = @transform_9, window_bounds = array<i64: 1, 48>}, {pipeline_mode = #tpu.pipeline_mode<synchronous>, transform_indices = @transform_10, window_bounds = array<i64: 16, 16>}, {pipeline_mode = #tpu.pipeline_mode<synchronous>, transform_indices = @transform_11, window_bounds = array<i64: 1, 16>}, {pipeline_mode = #tpu.pipeline_mode<synchronous>, transform_indices = @transform_12, window_bounds = array<i64: 8, 16>}, {pipeline_mode = #tpu.pipeline_mode<synchronous>, transform_indices = @transform_13, window_bounds = array<i64: 8, 16>}, {pipeline_mode = #tpu.pipeline_mode<synchronous>, transform_indices = @transform_14, window_bounds = array<i64: 16, 16>}, {pipeline_mode = #tpu.pipeline_mode<synchronous>, transform_indices = @transform_15, window_bounds = array<i64: 1, 16>}, {pipeline_mode = #tpu.pipeline_mode<synchronous>, transform_indices = @transform_16, window_bounds = array<i64: 8, 16>}, {pipeline_mode = #tpu.pipeline_mode<synchronous>, transform_indices = @transform_17, window_bounds = array<i64: 8, 16>}, {transform_indices = @transform_18, window_bounds = array<i64: 1, 8, 16>}]} {
    %c0 = arith.constant 0 : index
    %c0_0 = arith.constant 0 : index
    %c0_1 = arith.constant 0 : index
    %0 = vector.load %arg1[%c0, %c0_0, %c0_1] : memref<1x8x16xf32, #tpu.memory_space<vmem>>, vector<1x8x16xf32>
    %1 = vector.shape_cast %0 : vector<1x8x16xf32> to vector<8x16xf32>
    %c0_2 = arith.constant 0 : index
    %c0_3 = arith.constant 0 : index
    %c0_4 = arith.constant 0 : index
    %2 = vector.load %arg2[%c0_2, %c0_3, %c0_4] : memref<1x8x16xf32, #tpu.memory_space<vmem>>, vector<1x8x16xf32>
    %3 = vector.shape_cast %2 : vector<1x8x16xf32> to vector<8x16xf32>
    %c0_5 = arith.constant 0 : index
    %c0_6 = arith.constant 0 : index
    %4 = vector.load %arg3[%c0_5, %c0_6] : memref<16x48xf32, #tpu.memory_space<vmem>>, vector<16x48xf32>
    %c0_7 = arith.constant 0 : index
    %c0_8 = arith.constant 0 : index
    %5 = vector.load %arg4[%c0_7, %c0_8] : memref<1x48xf32, #tpu.memory_space<vmem>>, vector<1x48xf32>
    %c0_9 = arith.constant 0 : index
    %c0_10 = arith.constant 0 : index
    %6 = vector.load %arg5[%c0_9, %c0_10] : memref<16x16xf32, #tpu.memory_space<vmem>>, vector<16x16xf32>
    %c0_11 = arith.constant 0 : index
    %c0_12 = arith.constant 0 : index
    %7 = vector.load %arg6[%c0_11, %c0_12] : memref<1x16xf32, #tpu.memory_space<vmem>>, vector<1x16xf32>
    %cst = arith.constant dense<0.000000e+00> : vector<8x48xf32>
    %8 = tpu.matmul %1, %4, %cst {dimension_numbers = #tpu.dot_dimension_numbers<[1], [0], [0], [1], [0, 0, 1, 1], [], []>} : vector<8x16xf32>, vector<16x48xf32>, vector<8x48xf32> -> vector<8x48xf32>
    %9 = vector.broadcast %5 : vector<1x48xf32> to vector<8x48xf32>
    %10 = arith.addf %8, %9 : vector<8x48xf32>
    %11 = vector.extract_strided_slice %10 {offsets = [0, 0], sizes = [8, 16], strides = [1, 1]} : vector<8x48xf32> to vector<8x16xf32>
    %12 = vector.extract_strided_slice %10 {offsets = [0, 16], sizes = [8, 16], strides = [1, 1]} : vector<8x48xf32> to vector<8x16xf32>
    %13 = vector.extract_strided_slice %10 {offsets = [0, 32], sizes = [8, 16], strides = [1, 1]} : vector<8x48xf32> to vector<8x16xf32>
    %14 = vector.extract_strided_slice %11 {offsets = [0, 0], sizes = [8, 8], strides = [1, 1]} : vector<8x16xf32> to vector<8x8xf32>
    %15 = vector.extract_strided_slice %12 {offsets = [0, 0], sizes = [8, 8], strides = [1, 1]} : vector<8x16xf32> to vector<8x8xf32>
    %cst_13 = arith.constant dense<0.000000e+00> : vector<8x8xf32>
    %16 = tpu.matmul %14, %15, %cst_13 {dimension_numbers = #tpu.dot_dimension_numbers<[1], [1], [0], [0], [0, 0, 1, 0], [], []>} : vector<8x8xf32>, vector<8x8xf32>, vector<8x8xf32> -> vector<8x8xf32>
    %cst_14 = arith.constant 0.353553385 : f32
    %17 = vector.broadcast %cst_14 : f32 to vector<8x8xf32>
    %18 = arith.mulf %16, %17 : vector<8x8xf32>
    %cst_15 = arith.constant dense<0xFF800000> : vector<8xf32>
    %19 = vector.multi_reduction <maximumf>, %18, %cst_15 [1] : vector<8x8xf32> to vector<8xf32>
    %20 = vector.shape_cast %19 : vector<8xf32> to vector<8x1xf32>
    %21 = vector.broadcast %20 : vector<8x1xf32> to vector<8x8xf32>
    %22 = arith.subf %18, %21 : vector<8x8xf32>
    %23 = math.exp %22 : vector<8x8xf32>
    %cst_16 = arith.constant dense<0.000000e+00> : vector<8xf32>
    %24 = vector.multi_reduction <add>, %23, %cst_16 [1] : vector<8x8xf32> to vector<8xf32>
    %25 = vector.shape_cast %24 : vector<8xf32> to vector<8x1xf32>
    %26 = tpu.reciprocal %25 {approx = true} : vector<8x1xf32> -> vector<8x1xf32>
    %27 = vector.broadcast %26 : vector<8x1xf32> to vector<8x8xf32>
    %28 = arith.mulf %23, %27 : vector<8x8xf32>
    %29 = vector.extract_strided_slice %13 {offsets = [0, 0], sizes = [8, 8], strides = [1, 1]} : vector<8x16xf32> to vector<8x8xf32>
    %cst_17 = arith.constant dense<0.000000e+00> : vector<8x8xf32>
    %30 = tpu.matmul %28, %29, %cst_17 {dimension_numbers = #tpu.dot_dimension_numbers<[1], [0], [0], [1], [0, 0, 1, 1], [], []>} : vector<8x8xf32>, vector<8x8xf32>, vector<8x8xf32> -> vector<8x8xf32>
    %31 = vector.extract_strided_slice %6 {offsets = [0, 0], sizes = [8, 16], strides = [1, 1]} : vector<16x16xf32> to vector<8x16xf32>
    %cst_18 = arith.constant dense<0.000000e+00> : vector<8x16xf32>
    %32 = tpu.matmul %30, %31, %cst_18 {dimension_numbers = #tpu.dot_dimension_numbers<[1], [0], [0], [1], [0, 0, 1, 1], [], []>} : vector<8x8xf32>, vector<8x16xf32>, vector<8x16xf32> -> vector<8x16xf32>
    %33 = vector.extract_strided_slice %11 {offsets = [0, 8], sizes = [8, 8], strides = [1, 1]} : vector<8x16xf32> to vector<8x8xf32>
    %34 = vector.extract_strided_slice %12 {offsets = [0, 8], sizes = [8, 8], strides = [1, 1]} : vector<8x16xf32> to vector<8x8xf32>
    %cst_19 = arith.constant dense<0.000000e+00> : vector<8x8xf32>
    %35 = tpu.matmul %33, %34, %cst_19 {dimension_numbers = #tpu.dot_dimension_numbers<[1], [1], [0], [0], [0, 0, 1, 0], [], []>} : vector<8x8xf32>, vector<8x8xf32>, vector<8x8xf32> -> vector<8x8xf32>
    %cst_20 = arith.constant 0.353553385 : f32
    %36 = vector.broadcast %cst_20 : f32 to vector<8x8xf32>
    %37 = arith.mulf %35, %36 : vector<8x8xf32>
    %cst_21 = arith.constant dense<0xFF800000> : vector<8xf32>
    %38 = vector.multi_reduction <maximumf>, %37, %cst_21 [1] : vector<8x8xf32> to vector<8xf32>
    %39 = vector.shape_cast %38 : vector<8xf32> to vector<8x1xf32>
    %40 = vector.broadcast %39 : vector<8x1xf32> to vector<8x8xf32>
    %41 = arith.subf %37, %40 : vector<8x8xf32>
    %42 = math.exp %41 : vector<8x8xf32>
    %cst_22 = arith.constant dense<0.000000e+00> : vector<8xf32>
    %43 = vector.multi_reduction <add>, %42, %cst_22 [1] : vector<8x8xf32> to vector<8xf32>
    %44 = vector.shape_cast %43 : vector<8xf32> to vector<8x1xf32>
    %45 = tpu.reciprocal %44 {approx = true} : vector<8x1xf32> -> vector<8x1xf32>
    %46 = vector.broadcast %45 : vector<8x1xf32> to vector<8x8xf32>
    %47 = arith.mulf %42, %46 : vector<8x8xf32>
    %48 = vector.extract_strided_slice %13 {offsets = [0, 8], sizes = [8, 8], strides = [1, 1]} : vector<8x16xf32> to vector<8x8xf32>
    %cst_23 = arith.constant dense<0.000000e+00> : vector<8x8xf32>
    %49 = tpu.matmul %47, %48, %cst_23 {dimension_numbers = #tpu.dot_dimension_numbers<[1], [0], [0], [1], [0, 0, 1, 1], [], []>} : vector<8x8xf32>, vector<8x8xf32>, vector<8x8xf32> -> vector<8x8xf32>
    %50 = vector.extract_strided_slice %6 {offsets = [8, 0], sizes = [8, 16], strides = [1, 1]} : vector<16x16xf32> to vector<8x16xf32>
    %cst_24 = arith.constant dense<0.000000e+00> : vector<8x16xf32>
    %51 = tpu.matmul %49, %50, %cst_24 {dimension_numbers = #tpu.dot_dimension_numbers<[1], [0], [0], [1], [0, 0, 1, 1], [], []>} : vector<8x8xf32>, vector<8x16xf32>, vector<8x16xf32> -> vector<8x16xf32>
    %52 = arith.addf %32, %51 : vector<8x16xf32>
    %53 = vector.broadcast %7 : vector<1x16xf32> to vector<8x16xf32>
    %54 = arith.addf %52, %53 : vector<8x16xf32>
    %55 = arith.addf %1, %54 : vector<8x16xf32>
    %c0_25 = arith.constant 0 : index
    %c0_26 = arith.constant 0 : index
    %56 = vector.load %arg7[%c0_25, %c0_26] : memref<8x16xf32, #tpu.memory_space<vmem>>, vector<8x16xf32>
    %c0_27 = arith.constant 0 : index
    %c0_28 = arith.constant 0 : index
    %57 = vector.load %arg8[%c0_27, %c0_28] : memref<8x16xf32, #tpu.memory_space<vmem>>, vector<8x16xf32>
    %58 = vector.shape_cast %55 : vector<8x16xf32> to vector<1x8x16xf32>
    %cst_29 = arith.constant dense<0.000000e+00> : vector<1xf32>
    %59 = vector.multi_reduction <add>, %58, %cst_29 [1, 2] : vector<1x8x16xf32> to vector<1xf32>
    %60 = vector.shape_cast %59 : vector<1xf32> to vector<1x1x1xf32>
    %61 = vector.extract %60[0, 0, 0] : f32 from vector<1x1x1xf32>
    %cst_30 = arith.constant 1.280000e+02 : f32
    %62 = arith.divf %61, %cst_30 : f32
    %63 = vector.broadcast %62 : f32 to vector<8x16xf32>
    %64 = arith.subf %55, %63 : vector<8x16xf32>
    %65 = arith.mulf %64, %64 : vector<8x16xf32>
    %66 = vector.shape_cast %65 : vector<8x16xf32> to vector<1x8x16xf32>
    %cst_31 = arith.constant dense<0.000000e+00> : vector<1xf32>
    %67 = vector.multi_reduction <add>, %66, %cst_31 [1, 2] : vector<1x8x16xf32> to vector<1xf32>
    %68 = vector.shape_cast %67 : vector<1xf32> to vector<1x1x1xf32>
    %69 = vector.extract %68[0, 0, 0] : f32 from vector<1x1x1xf32>
    %cst_32 = arith.constant 1.280000e+02 : f32
    %70 = arith.divf %69, %cst_32 : f32
    %71 = vector.broadcast %62 : f32 to vector<8x16xf32>
    %72 = arith.subf %55, %71 : vector<8x16xf32>
    %cst_33 = arith.constant 9.99999974E-6 : f32
    %73 = arith.addf %70, %cst_33 : f32
    %74 = math.rsqrt %73 : f32
    %75 = vector.broadcast %74 : f32 to vector<8x16xf32>
    %76 = arith.mulf %72, %75 : vector<8x16xf32>
    %77 = arith.mulf %76, %56 : vector<8x16xf32>
    %78 = arith.addf %77, %57 : vector<8x16xf32>
    %c0_34 = arith.constant 0 : index
    %c0_35 = arith.constant 0 : index
    %79 = vector.load %arg9[%c0_34, %c0_35] : memref<16x48xf32, #tpu.memory_space<vmem>>, vector<16x48xf32>
    %c0_36 = arith.constant 0 : index
    %c0_37 = arith.constant 0 : index
    %80 = vector.load %arg10[%c0_36, %c0_37] : memref<1x48xf32, #tpu.memory_space<vmem>>, vector<1x48xf32>
    %c0_38 = arith.constant 0 : index
    %c0_39 = arith.constant 0 : index
    %81 = vector.load %arg11[%c0_38, %c0_39] : memref<16x16xf32, #tpu.memory_space<vmem>>, vector<16x16xf32>
    %c0_40 = arith.constant 0 : index
    %c0_41 = arith.constant 0 : index
    %82 = vector.load %arg12[%c0_40, %c0_41] : memref<1x16xf32, #tpu.memory_space<vmem>>, vector<1x16xf32>
    %83 = vector.extract_strided_slice %79 {offsets = [0, 0], sizes = [16, 16], strides = [1, 1]} : vector<16x48xf32> to vector<16x16xf32>
    %cst_42 = arith.constant dense<0.000000e+00> : vector<8x16xf32>
    %84 = tpu.matmul %78, %83, %cst_42 {dimension_numbers = #tpu.dot_dimension_numbers<[1], [0], [0], [1], [0, 0, 1, 1], [], []>} : vector<8x16xf32>, vector<16x16xf32>, vector<8x16xf32> -> vector<8x16xf32>
    %85 = vector.extract_strided_slice %80 {offsets = [0, 0], sizes = [1, 16], strides = [1, 1]} : vector<1x48xf32> to vector<1x16xf32>
    %86 = vector.broadcast %85 : vector<1x16xf32> to vector<8x16xf32>
    %87 = arith.addf %84, %86 : vector<8x16xf32>
    %88 = vector.extract_strided_slice %79 {offsets = [0, 16], sizes = [16, 32], strides = [1, 1]} : vector<16x48xf32> to vector<16x32xf32>
    %cst_43 = arith.constant dense<0.000000e+00> : vector<8x32xf32>
    %89 = tpu.matmul %3, %88, %cst_43 {dimension_numbers = #tpu.dot_dimension_numbers<[1], [0], [0], [1], [0, 0, 1, 1], [], []>} : vector<8x16xf32>, vector<16x32xf32>, vector<8x32xf32> -> vector<8x32xf32>
    %90 = vector.extract_strided_slice %80 {offsets = [0, 16], sizes = [1, 32], strides = [1, 1]} : vector<1x48xf32> to vector<1x32xf32>
    %91 = vector.broadcast %90 : vector<1x32xf32> to vector<8x32xf32>
    %92 = arith.addf %89, %91 : vector<8x32xf32>
    %93 = vector.extract_strided_slice %92 {offsets = [0, 0], sizes = [8, 16], strides = [1, 1]} : vector<8x32xf32> to vector<8x16xf32>
    %94 = vector.extract_strided_slice %92 {offsets = [0, 16], sizes = [8, 16], strides = [1, 1]} : vector<8x32xf32> to vector<8x16xf32>
    %95 = vector.extract_strided_slice %87 {offsets = [0, 0], sizes = [8, 8], strides = [1, 1]} : vector<8x16xf32> to vector<8x8xf32>
    %96 = vector.extract_strided_slice %93 {offsets = [0, 0], sizes = [8, 8], strides = [1, 1]} : vector<8x16xf32> to vector<8x8xf32>
    %cst_44 = arith.constant dense<0.000000e+00> : vector<8x8xf32>
    %97 = tpu.matmul %95, %96, %cst_44 {dimension_numbers = #tpu.dot_dimension_numbers<[1], [1], [0], [0], [0, 0, 1, 0], [], []>} : vector<8x8xf32>, vector<8x8xf32>, vector<8x8xf32> -> vector<8x8xf32>
    %cst_45 = arith.constant 0.353553385 : f32
    %98 = vector.broadcast %cst_45 : f32 to vector<8x8xf32>
    %99 = arith.mulf %97, %98 : vector<8x8xf32>
    %cst_46 = arith.constant dense<0xFF800000> : vector<8xf32>
    %100 = vector.multi_reduction <maximumf>, %99, %cst_46 [1] : vector<8x8xf32> to vector<8xf32>
    %101 = vector.shape_cast %100 : vector<8xf32> to vector<8x1xf32>
    %102 = vector.broadcast %101 : vector<8x1xf32> to vector<8x8xf32>
    %103 = arith.subf %99, %102 : vector<8x8xf32>
    %104 = math.exp %103 : vector<8x8xf32>
    %cst_47 = arith.constant dense<0.000000e+00> : vector<8xf32>
    %105 = vector.multi_reduction <add>, %104, %cst_47 [1] : vector<8x8xf32> to vector<8xf32>
    %106 = vector.shape_cast %105 : vector<8xf32> to vector<8x1xf32>
    %107 = tpu.reciprocal %106 {approx = true} : vector<8x1xf32> -> vector<8x1xf32>
    %108 = vector.broadcast %107 : vector<8x1xf32> to vector<8x8xf32>
    %109 = arith.mulf %104, %108 : vector<8x8xf32>
    %110 = vector.extract_strided_slice %94 {offsets = [0, 0], sizes = [8, 8], strides = [1, 1]} : vector<8x16xf32> to vector<8x8xf32>
    %cst_48 = arith.constant dense<0.000000e+00> : vector<8x8xf32>
    %111 = tpu.matmul %109, %110, %cst_48 {dimension_numbers = #tpu.dot_dimension_numbers<[1], [0], [0], [1], [0, 0, 1, 1], [], []>} : vector<8x8xf32>, vector<8x8xf32>, vector<8x8xf32> -> vector<8x8xf32>
    %112 = vector.extract_strided_slice %81 {offsets = [0, 0], sizes = [8, 16], strides = [1, 1]} : vector<16x16xf32> to vector<8x16xf32>
    %cst_49 = arith.constant dense<0.000000e+00> : vector<8x16xf32>
    %113 = tpu.matmul %111, %112, %cst_49 {dimension_numbers = #tpu.dot_dimension_numbers<[1], [0], [0], [1], [0, 0, 1, 1], [], []>} : vector<8x8xf32>, vector<8x16xf32>, vector<8x16xf32> -> vector<8x16xf32>
    %114 = vector.extract_strided_slice %87 {offsets = [0, 8], sizes = [8, 8], strides = [1, 1]} : vector<8x16xf32> to vector<8x8xf32>
    %115 = vector.extract_strided_slice %93 {offsets = [0, 8], sizes = [8, 8], strides = [1, 1]} : vector<8x16xf32> to vector<8x8xf32>
    %cst_50 = arith.constant dense<0.000000e+00> : vector<8x8xf32>
    %116 = tpu.matmul %114, %115, %cst_50 {dimension_numbers = #tpu.dot_dimension_numbers<[1], [1], [0], [0], [0, 0, 1, 0], [], []>} : vector<8x8xf32>, vector<8x8xf32>, vector<8x8xf32> -> vector<8x8xf32>
    %cst_51 = arith.constant 0.353553385 : f32
    %117 = vector.broadcast %cst_51 : f32 to vector<8x8xf32>
    %118 = arith.mulf %116, %117 : vector<8x8xf32>
    %cst_52 = arith.constant dense<0xFF800000> : vector<8xf32>
    %119 = vector.multi_reduction <maximumf>, %118, %cst_52 [1] : vector<8x8xf32> to vector<8xf32>
    %120 = vector.shape_cast %119 : vector<8xf32> to vector<8x1xf32>
    %121 = vector.broadcast %120 : vector<8x1xf32> to vector<8x8xf32>
    %122 = arith.subf %118, %121 : vector<8x8xf32>
    %123 = math.exp %122 : vector<8x8xf32>
    %cst_53 = arith.constant dense<0.000000e+00> : vector<8xf32>
    %124 = vector.multi_reduction <add>, %123, %cst_53 [1] : vector<8x8xf32> to vector<8xf32>
    %125 = vector.shape_cast %124 : vector<8xf32> to vector<8x1xf32>
    %126 = tpu.reciprocal %125 {approx = true} : vector<8x1xf32> -> vector<8x1xf32>
    %127 = vector.broadcast %126 : vector<8x1xf32> to vector<8x8xf32>
    %128 = arith.mulf %123, %127 : vector<8x8xf32>
    %129 = vector.extract_strided_slice %94 {offsets = [0, 8], sizes = [8, 8], strides = [1, 1]} : vector<8x16xf32> to vector<8x8xf32>
    %cst_54 = arith.constant dense<0.000000e+00> : vector<8x8xf32>
    %130 = tpu.matmul %128, %129, %cst_54 {dimension_numbers = #tpu.dot_dimension_numbers<[1], [0], [0], [1], [0, 0, 1, 1], [], []>} : vector<8x8xf32>, vector<8x8xf32>, vector<8x8xf32> -> vector<8x8xf32>
    %131 = vector.extract_strided_slice %81 {offsets = [8, 0], sizes = [8, 16], strides = [1, 1]} : vector<16x16xf32> to vector<8x16xf32>
    %cst_55 = arith.constant dense<0.000000e+00> : vector<8x16xf32>
    %132 = tpu.matmul %130, %131, %cst_55 {dimension_numbers = #tpu.dot_dimension_numbers<[1], [0], [0], [1], [0, 0, 1, 1], [], []>} : vector<8x8xf32>, vector<8x16xf32>, vector<8x16xf32> -> vector<8x16xf32>
    %133 = arith.addf %113, %132 : vector<8x16xf32>
    %134 = vector.broadcast %82 : vector<1x16xf32> to vector<8x16xf32>
    %135 = arith.addf %133, %134 : vector<8x16xf32>
    %136 = arith.addf %78, %135 : vector<8x16xf32>
    %c0_56 = arith.constant 0 : index
    %c0_57 = arith.constant 0 : index
    %137 = vector.load %arg13[%c0_56, %c0_57] : memref<8x16xf32, #tpu.memory_space<vmem>>, vector<8x16xf32>
    %c0_58 = arith.constant 0 : index
    %c0_59 = arith.constant 0 : index
    %138 = vector.load %arg14[%c0_58, %c0_59] : memref<8x16xf32, #tpu.memory_space<vmem>>, vector<8x16xf32>
    %139 = vector.shape_cast %136 : vector<8x16xf32> to vector<1x8x16xf32>
    %cst_60 = arith.constant dense<0.000000e+00> : vector<1xf32>
    %140 = vector.multi_reduction <add>, %139, %cst_60 [1, 2] : vector<1x8x16xf32> to vector<1xf32>
    %141 = vector.shape_cast %140 : vector<1xf32> to vector<1x1x1xf32>
    %142 = vector.extract %141[0, 0, 0] : f32 from vector<1x1x1xf32>
    %cst_61 = arith.constant 1.280000e+02 : f32
    %143 = arith.divf %142, %cst_61 : f32
    %144 = vector.broadcast %143 : f32 to vector<8x16xf32>
    %145 = arith.subf %136, %144 : vector<8x16xf32>
    %146 = arith.mulf %145, %145 : vector<8x16xf32>
    %147 = vector.shape_cast %146 : vector<8x16xf32> to vector<1x8x16xf32>
    %cst_62 = arith.constant dense<0.000000e+00> : vector<1xf32>
    %148 = vector.multi_reduction <add>, %147, %cst_62 [1, 2] : vector<1x8x16xf32> to vector<1xf32>
    %149 = vector.shape_cast %148 : vector<1xf32> to vector<1x1x1xf32>
    %150 = vector.extract %149[0, 0, 0] : f32 from vector<1x1x1xf32>
    %cst_63 = arith.constant 1.280000e+02 : f32
    %151 = arith.divf %150, %cst_63 : f32
    %152 = vector.broadcast %143 : f32 to vector<8x16xf32>
    %153 = arith.subf %136, %152 : vector<8x16xf32>
    %cst_64 = arith.constant 9.99999974E-6 : f32
    %154 = arith.addf %151, %cst_64 : f32
    %155 = math.rsqrt %154 : f32
    %156 = vector.broadcast %155 : f32 to vector<8x16xf32>
    %157 = arith.mulf %153, %156 : vector<8x16xf32>
    %158 = arith.mulf %157, %137 : vector<8x16xf32>
    %159 = arith.addf %158, %138 : vector<8x16xf32>
    %c0_65 = arith.constant 0 : index
    %c0_66 = arith.constant 0 : index
    %160 = vector.load %arg15[%c0_65, %c0_66] : memref<16x16xf32, #tpu.memory_space<vmem>>, vector<16x16xf32>
    %cst_67 = arith.constant dense<0.000000e+00> : vector<8x16xf32>
    %161 = tpu.matmul %159, %160, %cst_67 {dimension_numbers = #tpu.dot_dimension_numbers<[1], [0], [0], [1], [0, 0, 1, 1], [], []>} : vector<8x16xf32>, vector<16x16xf32>, vector<8x16xf32> -> vector<8x16xf32>
    %c0_68 = arith.constant 0 : index
    %c0_69 = arith.constant 0 : index
    %162 = vector.load %arg16[%c0_68, %c0_69] : memref<1x16xf32, #tpu.memory_space<vmem>>, vector<1x16xf32>
    %163 = vector.broadcast %162 : vector<1x16xf32> to vector<8x16xf32>
    %164 = arith.addf %161, %163 : vector<8x16xf32>
    %165 = arith.addf %159, %164 : vector<8x16xf32>
    %c0_70 = arith.constant 0 : index
    %c0_71 = arith.constant 0 : index
    %166 = vector.load %arg17[%c0_70, %c0_71] : memref<8x16xf32, #tpu.memory_space<vmem>>, vector<8x16xf32>
    %c0_72 = arith.constant 0 : index
    %c0_73 = arith.constant 0 : index
    %167 = vector.load %arg18[%c0_72, %c0_73] : memref<8x16xf32, #tpu.memory_space<vmem>>, vector<8x16xf32>
    %168 = vector.shape_cast %165 : vector<8x16xf32> to vector<1x8x16xf32>
    %cst_74 = arith.constant dense<0.000000e+00> : vector<1xf32>
    %169 = vector.multi_reduction <add>, %168, %cst_74 [1, 2] : vector<1x8x16xf32> to vector<1xf32>
    %170 = vector.shape_cast %169 : vector<1xf32> to vector<1x1x1xf32>
    %171 = vector.extract %170[0, 0, 0] : f32 from vector<1x1x1xf32>
    %cst_75 = arith.constant 1.280000e+02 : f32
    %172 = arith.divf %171, %cst_75 : f32
    %173 = vector.broadcast %172 : f32 to vector<8x16xf32>
    %174 = arith.subf %165, %173 : vector<8x16xf32>
    %175 = arith.mulf %174, %174 : vector<8x16xf32>
    %176 = vector.shape_cast %175 : vector<8x16xf32> to vector<1x8x16xf32>
    %cst_76 = arith.constant dense<0.000000e+00> : vector<1xf32>
    %177 = vector.multi_reduction <add>, %176, %cst_76 [1, 2] : vector<1x8x16xf32> to vector<1xf32>
    %178 = vector.shape_cast %177 : vector<1xf32> to vector<1x1x1xf32>
    %179 = vector.extract %178[0, 0, 0] : f32 from vector<1x1x1xf32>
    %cst_77 = arith.constant 1.280000e+02 : f32
    %180 = arith.divf %179, %cst_77 : f32
    %181 = vector.broadcast %172 : f32 to vector<8x16xf32>
    %182 = arith.subf %165, %181 : vector<8x16xf32>
    %cst_78 = arith.constant 9.99999974E-6 : f32
    %183 = arith.addf %180, %cst_78 : f32
    %184 = math.rsqrt %183 : f32
    %185 = vector.broadcast %184 : f32 to vector<8x16xf32>
    %186 = arith.mulf %182, %185 : vector<8x16xf32>
    %187 = arith.mulf %186, %166 : vector<8x16xf32>
    %188 = arith.addf %187, %167 : vector<8x16xf32>
    %c0_79 = arith.constant 0 : index
    %c0_80 = arith.constant 0 : index
    %c0_81 = arith.constant 0 : index
    %189 = vector.load %arg19[%c0_79, %c0_80, %c0_81] : memref<1x8x16xf32, #tpu.memory_space<vmem>>, vector<1x8x16xf32>
    %190 = vector.shape_cast %189 : vector<1x8x16xf32> to vector<8x16xf32>
    %191 = vector.shape_cast %188 : vector<8x16xf32> to vector<1x8x16xf32>
    tpu.vector_store %arg19[%c0_79, %c0_80, %c0_81], %191 {strides = array<i32>} : memref<1x8x16xf32, #tpu.memory_space<vmem>>, vector<1x8x16xf32>,
    return
  }
  func.func @transform_0(%arg0: i32) -> (i32, i32, i32) {
    %c0_i32 = arith.constant 0 : i32
    %c0_i32_0 = arith.constant 0 : i32
    %c0_i32_1 = arith.constant 0 : i32
    return %arg0, %c0_i32, %c0_i32_0 : i32, i32, i32
  }
  func.func @transform_1(%arg0: i32) -> (i32, i32, i32) {
    %c0_i32 = arith.constant 0 : i32
    %c0_i32_0 = arith.constant 0 : i32
    %c0_i32_1 = arith.constant 0 : i32
    return %arg0, %c0_i32, %c0_i32_0 : i32, i32, i32
  }
  func.func @transform_2(%arg0: i32) -> (i32, i32) {
    %c0_i32 = arith.constant 0 : i32
    %c0_i32_0 = arith.constant 0 : i32
    %c0_i32_1 = arith.constant 0 : i32
    return %c0_i32, %c0_i32_0 : i32, i32
  }
  func.func @transform_3(%arg0: i32) -> (i32, i32) {
    %c0_i32 = arith.constant 0 : i32
    %c0_i32_0 = arith.constant 0 : i32
    %c0_i32_1 = arith.constant 0 : i32
    return %c0_i32, %c0_i32_0 : i32, i32
  }
  func.func @transform_4(%arg0: i32) -> (i32, i32) {
    %c0_i32 = arith.constant 0 : i32
    %c0_i32_0 = arith.constant 0 : i32
    %c0_i32_1 = arith.constant 0 : i32
    return %c0_i32, %c0_i32_0 : i32, i32
  }
  func.func @transform_5(%arg0: i32) -> (i32, i32) {
    %c0_i32 = arith.constant 0 : i32
    %c0_i32_0 = arith.constant 0 : i32
    %c0_i32_1 = arith.constant 0 : i32
    return %c0_i32, %c0_i32_0 : i32, i32
  }
  func.func @transform_6(%arg0: i32) -> (i32, i32) {
    %c0_i32 = arith.constant 0 : i32
    %c0_i32_0 = arith.constant 0 : i32
    %c0_i32_1 = arith.constant 0 : i32
    return %c0_i32, %c0_i32_0 : i32, i32
  }
  func.func @transform_7(%arg0: i32) -> (i32, i32) {
    %c0_i32 = arith.constant 0 : i32
    %c0_i32_0 = arith.constant 0 : i32
    %c0_i32_1 = arith.constant 0 : i32
    return %c0_i32, %c0_i32_0 : i32, i32
  }
  func.func @transform_8(%arg0: i32) -> (i32, i32) {
    %c0_i32 = arith.constant 0 : i32
    %c0_i32_0 = arith.constant 0 : i32
    %c0_i32_1 = arith.constant 0 : i32
    return %c0_i32, %c0_i32_0 : i32, i32
  }
  func.func @transform_9(%arg0: i32) -> (i32, i32) {
    %c0_i32 = arith.constant 0 : i32
    %c0_i32_0 = arith.constant 0 : i32
    %c0_i32_1 = arith.constant 0 : i32
    return %c0_i32, %c0_i32_0 : i32, i32
  }
  func.func @transform_10(%arg0: i32) -> (i32, i32) {
    %c0_i32 = arith.constant 0 : i32
    %c0_i32_0 = arith.constant 0 : i32
    %c0_i32_1 = arith.constant 0 : i32
    return %c0_i32, %c0_i32_0 : i32, i32
  }
  func.func @transform_11(%arg0: i32) -> (i32, i32) {
    %c0_i32 = arith.constant 0 : i32
    %c0_i32_0 = arith.constant 0 : i32
    %c0_i32_1 = arith.constant 0 : i32
    return %c0_i32, %c0_i32_0 : i32, i32
  }
  func.func @transform_12(%arg0: i32) -> (i32, i32) {
    %c0_i32 = arith.constant 0 : i32
    %c0_i32_0 = arith.constant 0 : i32
    %c0_i32_1 = arith.constant 0 : i32
    return %c0_i32, %c0_i32_0 : i32, i32
  }
  func.func @transform_13(%arg0: i32) -> (i32, i32) {
    %c0_i32 = arith.constant 0 : i32
    %c0_i32_0 = arith.constant 0 : i32
    %c0_i32_1 = arith.constant 0 : i32
    return %c0_i32, %c0_i32_0 : i32, i32
  }
  func.func @transform_14(%arg0: i32) -> (i32, i32) {
    %c0_i32 = arith.constant 0 : i32
    %c0_i32_0 = arith.constant 0 : i32
    %c0_i32_1 = arith.constant 0 : i32
    return %c0_i32, %c0_i32_0 : i32, i32
  }
  func.func @transform_15(%arg0: i32) -> (i32, i32) {
    %c0_i32 = arith.constant 0 : i32
    %c0_i32_0 = arith.constant 0 : i32
    %c0_i32_1 = arith.constant 0 : i32
    return %c0_i32, %c0_i32_0 : i32, i32
  }
  func.func @transform_16(%arg0: i32) -> (i32, i32) {
    %c0_i32 = arith.constant 0 : i32
    %c0_i32_0 = arith.constant 0 : i32
    %c0_i32_1 = arith.constant 0 : i32
    return %c0_i32, %c0_i32_0 : i32, i32
  }
  func.func @transform_17(%arg0: i32) -> (i32, i32) {
    %c0_i32 = arith.constant 0 : i32
    %c0_i32_0 = arith.constant 0 : i32
    %c0_i32_1 = arith.constant 0 : i32
    return %c0_i32, %c0_i32_0 : i32, i32
  }
  func.func @transform_18(%arg0: i32) -> (i32, i32, i32) {
    %c0_i32 = arith.constant 0 : i32
    %c0_i32_0 = arith.constant 0 : i32
    %c0_i32_1 = arith.constant 0 : i32
    return %arg0, %c0_i32, %c0_i32_0 : i32, i32, i32
  }
}

module attributes {stable_mosaic.version = 11 : i64} {
  func.func @_decoderformer_kernel(%arg0: i32, %arg1: memref<1x8x16xf32, #tpu.memory_space<vmem>>, %arg2: memref<1x8x16xf32, #tpu.memory_space<vmem>>, %arg3: memref<16x48xf32, #tpu.memory_space<vmem>>, %arg4: memref<1x48xf32, #tpu.memory_space<vmem>>, %arg5: memref<16x16xf32, #tpu.memory_space<vmem>>, %arg6: memref<1x16xf32, #tpu.memory_space<vmem>>, %arg7: memref<8x16xf32, #tpu.memory_space<vmem>>, %arg8: memref<8x16xf32, #tpu.memory_space<vmem>>, %arg9: memref<16x48xf32, #tpu.memory_space<vmem>>, %arg10: memref<1x48xf32, #tpu.memory_space<vmem>>, %arg11: memref<16x16xf32, #tpu.memory_space<vmem>>, %arg12: memref<1x16xf32, #tpu.memory_space<vmem>>, %arg13: memref<8x16xf32, #tpu.memory_space<vmem>>, %arg14: memref<8x16xf32, #tpu.memory_space<vmem>>, %arg15: memref<16x16xf32, #tpu.memory_space<vmem>>, %arg16: memref<1x16xf32, #tpu.memory_space<vmem>>, %arg17: memref<8x16xf32, #tpu.memory_space<vmem>>, %arg18: memref<8x16xf32, #tpu.memory_space<vmem>>, %arg19: memref<1x8x16xf32, #tpu.memory_space<vmem>>) attributes {dimension_semantics = [#tpu.dimension_semantics<parallel>], iteration_bounds = array<i64: 2>, scalar_prefetch = 0 : i64, scratch_operands = 0 : i64, tpu.core_type = #tpu.core_type<tc>, window_params = [{transform_indices = @transform_0, window_bounds = array<i64: 1, 8, 16>}, {transform_indices = @transform_1, window_bounds = array<i64: 1, 8, 16>}, {pipeline_mode = #tpu.pipeline_mode<synchronous>, transform_indices = @transform_2, window_bounds = array<i64: 16, 48>}, {pipeline_mode = #tpu.pipeline_mode<synchronous>, transform_indices = @transform_3, window_bounds = array<i64: 1, 48>}, {pipeline_mode = #tpu.pipeline_mode<synchronous>, transform_indices = @transform_4, window_bounds = array<i64: 16, 16>}, {pipeline_mode = #tpu.pipeline_mode<synchronous>, transform_indices = @transform_5, window_bounds = array<i64: 1, 16>}, {pipeline_mode = #tpu.pipeline_mode<synchronous>, transform_indices = @transform_6, window_bounds = array<i64: 8, 16>}, {pipeline_mode = #tpu.pipeline_mode<synchronous>, transform_indices = @transform_7, window_bounds = array<i64: 8, 16>}, {pipeline_mode = #tpu.pipeline_mode<synchronous>, transform_indices = @transform_8, window_bounds = array<i64: 16, 48>}, {pipeline_mode = #tpu.pipeline_mode<synchronous>, transform_indices = @transform_9, window_bounds = array<i64: 1, 48>}, {pipeline_mode = #tpu.pipeline_mode<synchronous>, transform_indices = @transform_10, window_bounds = array<i64: 16, 16>}, {pipeline_mode = #tpu.pipeline_mode<synchronous>, transform_indices = @transform_11, window_bounds = array<i64: 1, 16>}, {pipeline_mode = #tpu.pipeline_mode<synchronous>, transform_indices = @transform_12, window_bounds = array<i64: 8, 16>}, {pipeline_mode = #tpu.pipeline_mode<synchronous>, transform_indices = @transform_13, window_bounds = array<i64: 8, 16>}, {pipeline_mode = #tpu.pipeline_mode<synchronous>, transform_indices = @transform_14, window_bounds = array<i64: 16, 16>}, {pipeline_mode = #tpu.pipeline_mode<synchronous>, transform_indices = @transform_15, window_bounds = array<i64: 1, 16>}, {pipeline_mode = #tpu.pipeline_mode<synchronous>, transform_indices = @transform_16, window_bounds = array<i64: 8, 16>}, {pipeline_mode = #tpu.pipeline_mode<synchronous>, transform_indices = @transform_17, window_bounds = array<i64: 8, 16>}, {transform_indices = @transform_18, window_bounds = array<i64: 1, 8, 16>}]} {
    %c0 = arith.constant 0 : index
    %c0_0 = arith.constant 0 : index
    %c0_1 = arith.constant 0 : index
    %0 = vector.load %arg1[%c0, %c0_0, %c0_1] : memref<1x8x16xf32, #tpu.memory_space<vmem>>, vector<1x8x16xf32>
    %1 = vector.shape_cast %0 : vector<1x8x16xf32> to vector<8x16xf32>
    %c0_2 = arith.constant 0 : index
    %c0_3 = arith.constant 0 : index
    %c0_4 = arith.constant 0 : index
    %2 = vector.load %arg2[%c0_2, %c0_3, %c0_4] : memref<1x8x16xf32, #tpu.memory_space<vmem>>, vector<1x8x16xf32>
    %3 = vector.shape_cast %2 : vector<1x8x16xf32> to vector<8x16xf32>
    %c0_5 = arith.constant 0 : index
    %c0_6 = arith.constant 0 : index
    %4 = vector.load %arg3[%c0_5, %c0_6] : memref<16x48xf32, #tpu.memory_space<vmem>>, vector<16x48xf32>
    %c0_7 = arith.constant 0 : index
    %c0_8 = arith.constant 0 : index
    %5 = vector.load %arg4[%c0_7, %c0_8] : memref<1x48xf32, #tpu.memory_space<vmem>>, vector<1x48xf32>
    %c0_9 = arith.constant 0 : index
    %c0_10 = arith.constant 0 : index
    %6 = vector.load %arg5[%c0_9, %c0_10] : memref<16x16xf32, #tpu.memory_space<vmem>>, vector<16x16xf32>
    %c0_11 = arith.constant 0 : index
    %c0_12 = arith.constant 0 : index
    %7 = vector.load %arg6[%c0_11, %c0_12] : memref<1x16xf32, #tpu.memory_space<vmem>>, vector<1x16xf32>
    %cst = arith.constant dense<0.000000e+00> : vector<8x48xf32>
    %8 = tpu.matmul %1, %4, %cst {dimension_numbers = #tpu.dot_dimension_numbers<[1], [0], [0], [1], [0, 0, 1, 1], [], []>} : vector<8x16xf32>, vector<16x48xf32>, vector<8x48xf32> -> vector<8x48xf32>
    %9 = vector.broadcast %5 : vector<1x48xf32> to vector<8x48xf32>
    %10 = arith.addf %8, %9 : vector<8x48xf32>
    %11 = vector.extract_strided_slice %10 {offsets = [0, 0], sizes = [8, 16], strides = [1, 1]} : vector<8x48xf32> to vector<8x16xf32>
    %12 = vector.extract_strided_slice %10 {offsets = [0, 16], sizes = [8, 16], strides = [1, 1]} : vector<8x48xf32> to vector<8x16xf32>
    %13 = vector.extract_strided_slice %10 {offsets = [0, 32], sizes = [8, 16], strides = [1, 1]} : vector<8x48xf32> to vector<8x16xf32>
    %14 = vector.extract_strided_slice %11 {offsets = [0, 0], sizes = [8, 8], strides = [1, 1]} : vector<8x16xf32> to vector<8x8xf32>
    %15 = vector.extract_strided_slice %12 {offsets = [0, 0], sizes = [8, 8], strides = [1, 1]} : vector<8x16xf32> to vector<8x8xf32>
    %cst_13 = arith.constant dense<0.000000e+00> : vector<8x8xf32>
    %16 = tpu.matmul %14, %15, %cst_13 {dimension_numbers = #tpu.dot_dimension_numbers<[1], [1], [0], [0], [0, 0, 1, 0], [], []>} : vector<8x8xf32>, vector<8x8xf32>, vector<8x8xf32> -> vector<8x8xf32>
    %cst_14 = arith.constant 0.353553385 : f32
    %17 = vector.broadcast %cst_14 : f32 to vector<8x8xf32>
    %18 = arith.mulf %16, %17 : vector<8x8xf32>
    %cst_15 = arith.constant dense<0xFF800000> : vector<8xf32>
    %19 = vector.multi_reduction <maximumf>, %18, %cst_15 [1] : vector<8x8xf32> to vector<8xf32>
    %20 = vector.shape_cast %19 : vector<8xf32> to vector<8x1xf32>
    %21 = vector.broadcast %20 : vector<8x1xf32> to vector<8x8xf32>
    %22 = arith.subf %18, %21 : vector<8x8xf32>
    %23 = math.exp %22 : vector<8x8xf32>
    %cst_16 = arith.constant dense<0.000000e+00> : vector<8xf32>
    %24 = vector.multi_reduction <add>, %23, %cst_16 [1] : vector<8x8xf32> to vector<8xf32>
    %25 = vector.shape_cast %24 : vector<8xf32> to vector<8x1xf32>
    %26 = tpu.reciprocal %25 {approx = true} : vector<8x1xf32> -> vector<8x1xf32>
    %27 = vector.broadcast %26 : vector<8x1xf32> to vector<8x8xf32>
    %28 = arith.mulf %23, %27 : vector<8x8xf32>
    %29 = vector.extract_strided_slice %13 {offsets = [0, 0], sizes = [8, 8], strides = [1, 1]} : vector<8x16xf32> to vector<8x8xf32>
    %cst_17 = arith.constant dense<0.000000e+00> : vector<8x8xf32>
    %30 = tpu.matmul %28, %29, %cst_17 {dimension_numbers = #tpu.dot_dimension_numbers<[1], [0], [0], [1], [0, 0, 1, 1], [], []>} : vector<8x8xf32>, vector<8x8xf32>, vector<8x8xf32> -> vector<8x8xf32>
    %31 = vector.extract_strided_slice %6 {offsets = [0, 0], sizes = [8, 16], strides = [1, 1]} : vector<16x16xf32> to vector<8x16xf32>
    %cst_18 = arith.constant dense<0.000000e+00> : vector<8x16xf32>
    %32 = tpu.matmul %30, %31, %cst_18 {dimension_numbers = #tpu.dot_dimension_numbers<[1], [0], [0], [1], [0, 0, 1, 1], [], []>} : vector<8x8xf32>, vector<8x16xf32>, vector<8x16xf32> -> vector<8x16xf32>
    %33 = vector.extract_strided_slice %11 {offsets = [0, 8], sizes = [8, 8], strides = [1, 1]} : vector<8x16xf32> to vector<8x8xf32>
    %34 = vector.extract_strided_slice %12 {offsets = [0, 8], sizes = [8, 8], strides = [1, 1]} : vector<8x16xf32> to vector<8x8xf32>
    %cst_19 = arith.constant dense<0.000000e+00> : vector<8x8xf32>
    %35 = tpu.matmul %33, %34, %cst_19 {dimension_numbers = #tpu.dot_dimension_numbers<[1], [1], [0], [0], [0, 0, 1, 0], [], []>} : vector<8x8xf32>, vector<8x8xf32>, vector<8x8xf32> -> vector<8x8xf32>
    %cst_20 = arith.constant 0.353553385 : f32
    %36 = vector.broadcast %cst_20 : f32 to vector<8x8xf32>
    %37 = arith.mulf %35, %36 : vector<8x8xf32>
    %cst_21 = arith.constant dense<0xFF800000> : vector<8xf32>
    %38 = vector.multi_reduction <maximumf>, %37, %cst_21 [1] : vector<8x8xf32> to vector<8xf32>
    %39 = vector.shape_cast %38 : vector<8xf32> to vector<8x1xf32>
    %40 = vector.broadcast %39 : vector<8x1xf32> to vector<8x8xf32>
    %41 = arith.subf %37, %40 : vector<8x8xf32>
    %42 = math.exp %41 : vector<8x8xf32>
    %cst_22 = arith.constant dense<0.000000e+00> : vector<8xf32>
    %43 = vector.multi_reduction <add>, %42, %cst_22 [1] : vector<8x8xf32> to vector<8xf32>
    %44 = vector.shape_cast %43 : vector<8xf32> to vector<8x1xf32>
    %45 = tpu.reciprocal %44 {approx = true} : vector<8x1xf32> -> vector<8x1xf32>
    %46 = vector.broadcast %45 : vector<8x1xf32> to vector<8x8xf32>
    %47 = arith.mulf %42, %46 : vector<8x8xf32>
    %48 = vector.extract_strided_slice %13 {offsets = [0, 8], sizes = [8, 8], strides = [1, 1]} : vector<8x16xf32> to vector<8x8xf32>
    %cst_23 = arith.constant dense<0.000000e+00> : vector<8x8xf32>
    %49 = tpu.matmul %47, %48, %cst_23 {dimension_numbers = #tpu.dot_dimension_numbers<[1], [0], [0], [1], [0, 0, 1, 1], [], []>} : vector<8x8xf32>, vector<8x8xf32>, vector<8x8xf32> -> vector<8x8xf32>
    %50 = vector.extract_strided_slice %6 {offsets = [8, 0], sizes = [8, 16], strides = [1, 1]} : vector<16x16xf32> to vector<8x16xf32>
    %cst_24 = arith.constant dense<0.000000e+00> : vector<8x16xf32>
    %51 = tpu.matmul %49, %50, %cst_24 {dimension_numbers = #tpu.dot_dimension_numbers<[1], [0], [0], [1], [0, 0, 1, 1], [], []>} : vector<8x8xf32>, vector<8x16xf32>, vector<8x16xf32> -> vector<8x16xf32>
    %52 = arith.addf %32, %51 : vector<8x16xf32>
    %53 = vector.broadcast %7 : vector<1x16xf32> to vector<8x16xf32>
    %54 = arith.addf %52, %53 : vector<8x16xf32>
    %55 = arith.addf %1, %54 : vector<8x16xf32>
    %c0_25 = arith.constant 0 : index
    %c0_26 = arith.constant 0 : index
    %56 = vector.load %arg7[%c0_25, %c0_26] : memref<8x16xf32, #tpu.memory_space<vmem>>, vector<8x16xf32>
    %c0_27 = arith.constant 0 : index
    %c0_28 = arith.constant 0 : index
    %57 = vector.load %arg8[%c0_27, %c0_28] : memref<8x16xf32, #tpu.memory_space<vmem>>, vector<8x16xf32>
    %58 = vector.shape_cast %55 : vector<8x16xf32> to vector<1x8x16xf32>
    %cst_29 = arith.constant dense<0.000000e+00> : vector<1xf32>
    %59 = vector.multi_reduction <add>, %58, %cst_29 [1, 2] : vector<1x8x16xf32> to vector<1xf32>
    %60 = vector.shape_cast %59 : vector<1xf32> to vector<1x1x1xf32>
    %61 = vector.extract %60[0, 0, 0] : f32 from vector<1x1x1xf32>
    %cst_30 = arith.constant 1.280000e+02 : f32
    %62 = arith.divf %61, %cst_30 : f32
    %63 = vector.broadcast %62 : f32 to vector<8x16xf32>
    %64 = arith.subf %55, %63 : vector<8x16xf32>
    %65 = arith.mulf %64, %64 : vector<8x16xf32>
    %66 = vector.shape_cast %65 : vector<8x16xf32> to vector<1x8x16xf32>
    %cst_31 = arith.constant dense<0.000000e+00> : vector<1xf32>
    %67 = vector.multi_reduction <add>, %66, %cst_31 [1, 2] : vector<1x8x16xf32> to vector<1xf32>
    %68 = vector.shape_cast %67 : vector<1xf32> to vector<1x1x1xf32>
    %69 = vector.extract %68[0, 0, 0] : f32 from vector<1x1x1xf32>
    %cst_32 = arith.constant 1.280000e+02 : f32
    %70 = arith.divf %69, %cst_32 : f32
    %71 = vector.broadcast %62 : f32 to vector<8x16xf32>
    %72 = arith.subf %55, %71 : vector<8x16xf32>
    %cst_33 = arith.constant 9.99999974E-6 : f32
    %73 = arith.addf %70, %cst_33 : f32
    %74 = math.rsqrt %73 : f32
    %75 = vector.broadcast %74 : f32 to vector<8x16xf32>
    %76 = arith.mulf %72, %75 : vector<8x16xf32>
    %77 = arith.mulf %76, %56 : vector<8x16xf32>
    %78 = arith.addf %77, %57 : vector<8x16xf32>
    %c0_34 = arith.constant 0 : index
    %c0_35 = arith.constant 0 : index
    %79 = vector.load %arg9[%c0_34, %c0_35] : memref<16x48xf32, #tpu.memory_space<vmem>>, vector<16x48xf32>
    %c0_36 = arith.constant 0 : index
    %c0_37 = arith.constant 0 : index
    %80 = vector.load %arg10[%c0_36, %c0_37] : memref<1x48xf32, #tpu.memory_space<vmem>>, vector<1x48xf32>
    %c0_38 = arith.constant 0 : index
    %c0_39 = arith.constant 0 : index
    %81 = vector.load %arg11[%c0_38, %c0_39] : memref<16x16xf32, #tpu.memory_space<vmem>>, vector<16x16xf32>
    %c0_40 = arith.constant 0 : index
    %c0_41 = arith.constant 0 : index
    %82 = vector.load %arg12[%c0_40, %c0_41] : memref<1x16xf32, #tpu.memory_space<vmem>>, vector<1x16xf32>
    %83 = vector.extract_strided_slice %79 {offsets = [0, 0], sizes = [16, 16], strides = [1, 1]} : vector<16x48xf32> to vector<16x16xf32>
    %cst_42 = arith.constant dense<0.000000e+00> : vector<8x16xf32>
    %84 = tpu.matmul %78, %83, %cst_42 {dimension_numbers = #tpu.dot_dimension_numbers<[1], [0], [0], [1], [0, 0, 1, 1], [], []>} : vector<8x16xf32>, vector<16x16xf32>, vector<8x16xf32> -> vector<8x16xf32>
    %85 = vector.extract_strided_slice %80 {offsets = [0, 0], sizes = [1, 16], strides = [1, 1]} : vector<1x48xf32> to vector<1x16xf32>
    %86 = vector.broadcast %85 : vector<1x16xf32> to vector<8x16xf32>
    %87 = arith.addf %84, %86 : vector<8x16xf32>
    %88 = vector.extract_strided_slice %79 {offsets = [0, 16], sizes = [16, 32], strides = [1, 1]} : vector<16x48xf32> to vector<16x32xf32>
    %cst_43 = arith.constant dense<0.000000e+00> : vector<8x32xf32>
    %89 = tpu.matmul %3, %88, %cst_43 {dimension_numbers = #tpu.dot_dimension_numbers<[1], [0], [0], [1], [0, 0, 1, 1], [], []>} : vector<8x16xf32>, vector<16x32xf32>, vector<8x32xf32> -> vector<8x32xf32>
    %90 = vector.extract_strided_slice %80 {offsets = [0, 16], sizes = [1, 32], strides = [1, 1]} : vector<1x48xf32> to vector<1x32xf32>
    %91 = vector.broadcast %90 : vector<1x32xf32> to vector<8x32xf32>
    %92 = arith.addf %89, %91 : vector<8x32xf32>
    %93 = vector.extract_strided_slice %92 {offsets = [0, 0], sizes = [8, 16], strides = [1, 1]} : vector<8x32xf32> to vector<8x16xf32>
    %94 = vector.extract_strided_slice %92 {offsets = [0, 16], sizes = [8, 16], strides = [1, 1]} : vector<8x32xf32> to vector<8x16xf32>
    %95 = vector.extract_strided_slice %87 {offsets = [0, 0], sizes = [8, 8], strides = [1, 1]} : vector<8x16xf32> to vector<8x8xf32>
    %96 = vector.extract_strided_slice %93 {offsets = [0, 0], sizes = [8, 8], strides = [1, 1]} : vector<8x16xf32> to vector<8x8xf32>
    %cst_44 = arith.constant dense<0.000000e+00> : vector<8x8xf32>
    %97 = tpu.matmul %95, %96, %cst_44 {dimension_numbers = #tpu.dot_dimension_numbers<[1], [1], [0], [0], [0, 0, 1, 0], [], []>} : vector<8x8xf32>, vector<8x8xf32>, vector<8x8xf32> -> vector<8x8xf32>
    %cst_45 = arith.constant 0.353553385 : f32
    %98 = vector.broadcast %cst_45 : f32 to vector<8x8xf32>
    %99 = arith.mulf %97, %98 : vector<8x8xf32>
    %cst_46 = arith.constant dense<0xFF800000> : vector<8xf32>
    %100 = vector.multi_reduction <maximumf>, %99, %cst_46 [1] : vector<8x8xf32> to vector<8xf32>
    %101 = vector.shape_cast %100 : vector<8xf32> to vector<8x1xf32>
    %102 = vector.broadcast %101 : vector<8x1xf32> to vector<8x8xf32>
    %103 = arith.subf %99, %102 : vector<8x8xf32>
    %104 = math.exp %103 : vector<8x8xf32>
    %cst_47 = arith.constant dense<0.000000e+00> : vector<8xf32>
    %105 = vector.multi_reduction <add>, %104, %cst_47 [1] : vector<8x8xf32> to vector<8xf32>
    %106 = vector.shape_cast %105 : vector<8xf32> to vector<8x1xf32>
    %107 = tpu.reciprocal %106 {approx = true} : vector<8x1xf32> -> vector<8x1xf32>
    %108 = vector.broadcast %107 : vector<8x1xf32> to vector<8x8xf32>
    %109 = arith.mulf %104, %108 : vector<8x8xf32>
    %110 = vector.extract_strided_slice %94 {offsets = [0, 0], sizes = [8, 8], strides = [1, 1]} : vector<8x16xf32> to vector<8x8xf32>
    %cst_48 = arith.constant dense<0.000000e+00> : vector<8x8xf32>
    %111 = tpu.matmul %109, %110, %cst_48 {dimension_numbers = #tpu.dot_dimension_numbers<[1], [0], [0], [1], [0, 0, 1, 1], [], []>} : vector<8x8xf32>, vector<8x8xf32>, vector<8x8xf32> -> vector<8x8xf32>
    %112 = vector.extract_strided_slice %81 {offsets = [0, 0], sizes = [8, 16], strides = [1, 1]} : vector<16x16xf32> to vector<8x16xf32>
    %cst_49 = arith.constant dense<0.000000e+00> : vector<8x16xf32>
    %113 = tpu.matmul %111, %112, %cst_49 {dimension_numbers = #tpu.dot_dimension_numbers<[1], [0], [0], [1], [0, 0, 1, 1], [], []>} : vector<8x8xf32>, vector<8x16xf32>, vector<8x16xf32> -> vector<8x16xf32>
    %114 = vector.extract_strided_slice %87 {offsets = [0, 8], sizes = [8, 8], strides = [1, 1]} : vector<8x16xf32> to vector<8x8xf32>
    %115 = vector.extract_strided_slice %93 {offsets = [0, 8], sizes = [8, 8], strides = [1, 1]} : vector<8x16xf32> to vector<8x8xf32>
    %cst_50 = arith.constant dense<0.000000e+00> : vector<8x8xf32>
    %116 = tpu.matmul %114, %115, %cst_50 {dimension_numbers = #tpu.dot_dimension_numbers<[1], [1], [0], [0], [0, 0, 1, 0], [], []>} : vector<8x8xf32>, vector<8x8xf32>, vector<8x8xf32> -> vector<8x8xf32>
    %cst_51 = arith.constant 0.353553385 : f32
    %117 = vector.broadcast %cst_51 : f32 to vector<8x8xf32>
    %118 = arith.mulf %116, %117 : vector<8x8xf32>
    %cst_52 = arith.constant dense<0xFF800000> : vector<8xf32>
    %119 = vector.multi_reduction <maximumf>, %118, %cst_52 [1] : vector<8x8xf32> to vector<8xf32>
    %120 = vector.shape_cast %119 : vector<8xf32> to vector<8x1xf32>
    %121 = vector.broadcast %120 : vector<8x1xf32> to vector<8x8xf32>
    %122 = arith.subf %118, %121 : vector<8x8xf32>
    %123 = math.exp %122 : vector<8x8xf32>
    %cst_53 = arith.constant dense<0.000000e+00> : vector<8xf32>
    %124 = vector.multi_reduction <add>, %123, %cst_53 [1] : vector<8x8xf32> to vector<8xf32>
    %125 = vector.shape_cast %124 : vector<8xf32> to vector<8x1xf32>
    %126 = tpu.reciprocal %125 {approx = true} : vector<8x1xf32> -> vector<8x1xf32>
    %127 = vector.broadcast %126 : vector<8x1xf32> to vector<8x8xf32>
    %128 = arith.mulf %123, %127 : vector<8x8xf32>
    %129 = vector.extract_strided_slice %94 {offsets = [0, 8], sizes = [8, 8], strides = [1, 1]} : vector<8x16xf32> to vector<8x8xf32>
    %cst_54 = arith.constant dense<0.000000e+00> : vector<8x8xf32>
    %130 = tpu.matmul %128, %129, %cst_54 {dimension_numbers = #tpu.dot_dimension_numbers<[1], [0], [0], [1], [0, 0, 1, 1], [], []>} : vector<8x8xf32>, vector<8x8xf32>, vector<8x8xf32> -> vector<8x8xf32>
    %131 = vector.extract_strided_slice %81 {offsets = [8, 0], sizes = [8, 16], strides = [1, 1]} : vector<16x16xf32> to vector<8x16xf32>
    %cst_55 = arith.constant dense<0.000000e+00> : vector<8x16xf32>
    %132 = tpu.matmul %130, %131, %cst_55 {dimension_numbers = #tpu.dot_dimension_numbers<[1], [0], [0], [1], [0, 0, 1, 1], [], []>} : vector<8x8xf32>, vector<8x16xf32>, vector<8x16xf32> -> vector<8x16xf32>
    %133 = arith.addf %113, %132 : vector<8x16xf32>
    %134 = vector.broadcast %82 : vector<1x16xf32> to vector<8x16xf32>
    %135 = arith.addf %133, %134 : vector<8x16xf32>
    %136 = arith.addf %78, %135 : vector<8x16xf32>
    %c0_56 = arith.constant 0 : index
    %c0_57 = arith.constant 0 : index
    %137 = vector.load %arg13[%c0_56, %c0_57] : memref<8x16xf32, #tpu.memory_space<vmem>>, vector<8x16xf32>
    %c0_58 = arith.constant 0 : index
    %c0_59 = arith.constant 0 : index
    %138 = vector.load %arg14[%c0_58, %c0_59] : memref<8x16xf32, #tpu.memory_space<vmem>>, vector<8x16xf32>
    %139 = vector.shape_cast %136 : vector<8x16xf32> to vector<1x8x16xf32>
    %cst_60 = arith.constant dense<0.000000e+00> : vector<1xf32>
    %140 = vector.multi_reduction <add>, %139, %cst_60 [1, 2] : vector<1x8x16xf32> to vector<1xf32>
    %141 = vector.shape_cast %140 : vector<1xf32> to vector<1x1x1xf32>
    %142 = vector.extract %141[0, 0, 0] : f32 from vector<1x1x1xf32>
    %cst_61 = arith.constant 1.280000e+02 : f32
    %143 = arith.divf %142, %cst_61 : f32
    %144 = vector.broadcast %143 : f32 to vector<8x16xf32>
    %145 = arith.subf %136, %144 : vector<8x16xf32>
    %146 = arith.mulf %145, %145 : vector<8x16xf32>
    %147 = vector.shape_cast %146 : vector<8x16xf32> to vector<1x8x16xf32>
    %cst_62 = arith.constant dense<0.000000e+00> : vector<1xf32>
    %148 = vector.multi_reduction <add>, %147, %cst_62 [1, 2] : vector<1x8x16xf32> to vector<1xf32>
    %149 = vector.shape_cast %148 : vector<1xf32> to vector<1x1x1xf32>
    %150 = vector.extract %149[0, 0, 0] : f32 from vector<1x1x1xf32>
    %cst_63 = arith.constant 1.280000e+02 : f32
    %151 = arith.divf %150, %cst_63 : f32
    %152 = vector.broadcast %143 : f32 to vector<8x16xf32>
    %153 = arith.subf %136, %152 : vector<8x16xf32>
    %cst_64 = arith.constant 9.99999974E-6 : f32
    %154 = arith.addf %151, %cst_64 : f32
    %155 = math.rsqrt %154 : f32
    %156 = vector.broadcast %155 : f32 to vector<8x16xf32>
    %157 = arith.mulf %153, %156 : vector<8x16xf32>
    %158 = arith.mulf %157, %137 : vector<8x16xf32>
    %159 = arith.addf %158, %138 : vector<8x16xf32>
    %c0_65 = arith.constant 0 : index
    %c0_66 = arith.constant 0 : index
    %160 = vector.load %arg15[%c0_65, %c0_66] : memref<16x16xf32, #tpu.memory_space<vmem>>, vector<16x16xf32>
    %cst_67 = arith.constant dense<0.000000e+00> : vector<8x16xf32>
    %161 = tpu.matmul %159, %160, %cst_67 {dimension_numbers = #tpu.dot_dimension_numbers<[1], [0], [0], [1], [0, 0, 1, 1], [], []>} : vector<8x16xf32>, vector<16x16xf32>, vector<8x16xf32> -> vector<8x16xf32>
    %c0_68 = arith.constant 0 : index
    %c0_69 = arith.constant 0 : index
    %162 = vector.load %arg16[%c0_68, %c0_69] : memref<1x16xf32, #tpu.memory_space<vmem>>, vector<1x16xf32>
    %163 = vector.broadcast %162 : vector<1x16xf32> to vector<8x16xf32>
    %164 = arith.addf %161, %163 : vector<8x16xf32>
    %165 = arith.addf %159, %164 : vector<8x16xf32>
    %c0_70 = arith.constant 0 : index
    %c0_71 = arith.constant 0 : index
    %166 = vector.load %arg17[%c0_70, %c0_71] : memref<8x16xf32, #tpu.memory_space<vmem>>, vector<8x16xf32>
    %c0_72 = arith.constant 0 : index
    %c0_73 = arith.constant 0 : index
    %167 = vector.load %arg18[%c0_72, %c0_73] : memref<8x16xf32, #tpu.memory_space<vmem>>, vector<8x16xf32>
    %168 = vector.shape_cast %165 : vector<8x16xf32> to vector<1x8x16xf32>
    %cst_74 = arith.constant dense<0.000000e+00> : vector<1xf32>
    %169 = vector.multi_reduction <add>, %168, %cst_74 [1, 2] : vector<1x8x16xf32> to vector<1xf32>
    %170 = vector.shape_cast %169 : vector<1xf32> to vector<1x1x1xf32>
    %171 = vector.extract %170[0, 0, 0] : f32 from vector<1x1x1xf32>
    %cst_75 = arith.constant 1.280000e+02 : f32
    %172 = arith.divf %171, %cst_75 : f32
    %173 = vector.broadcast %172 : f32 to vector<8x16xf32>
    %174 = arith.subf %165, %173 : vector<8x16xf32>
    %175 = arith.mulf %174, %174 : vector<8x16xf32>
    %176 = vector.shape_cast %175 : vector<8x16xf32> to vector<1x8x16xf32>
    %cst_76 = arith.constant dense<0.000000e+00> : vector<1xf32>
    %177 = vector.multi_reduction <add>, %176, %cst_76 [1, 2] : vector<1x8x16xf32> to vector<1xf32>
    %178 = vector.shape_cast %177 : vector<1xf32> to vector<1x1x1xf32>
    %179 = vector.extract %178[0, 0, 0] : f32 from vector<1x1x1xf32>
    %cst_77 = arith.constant 1.280000e+02 : f32
    %180 = arith.divf %179, %cst_77 : f32
    %181 = vector.broadcast %172 : f32 to vector<8x16xf32>
    %182 = arith.subf %165, %181 : vector<8x16xf32>
    %cst_78 = arith.constant 9.99999974E-6 : f32
    %183 = arith.addf %180, %cst_78 : f32
    %184 = math.rsqrt %183 : f32
    %185 = vector.broadcast %184 : f32 to vector<8x16xf32>
    %186 = arith.mulf %182, %185 : vector<8x16xf32>
    %187 = arith.mulf %186, %166 : vector<8x16xf32>
    %188 = arith.addf %187, %167 : vector<8x16xf32>
    %c0_79 = arith.constant 0 : index
    %c0_80 = arith.constant 0 : index
    %c0_81 = arith.constant 0 : index
    %189 = vector.load %arg19[%c0_79, %c0_80, %c0_81] : memref<1x8x16xf32, #tpu.memory_space<vmem>>, vector<1x8x16xf32>
    %190 = vector.shape_cast %189 : vector<1x8x16xf32> to vector<8x16xf32>
    %191 = vector.shape_cast %188 : vector<8x16xf32> to vector<1x8x16xf32>
    tpu.vector_store %arg19[%c0_79, %c0_80, %c0_81], %191 {strides = array<i32>} : memref<1x8x16xf32, #tpu.memory_space<vmem>>, vector<1x8x16xf32>,
    return
  }
  func.func @transform_0(%arg0: i32) -> (i32, i32, i32) {
    %c0_i32 = arith.constant 0 : i32
    %c0_i32_0 = arith.constant 0 : i32
    %c0_i32_1 = arith.constant 0 : i32
    return %arg0, %c0_i32, %c0_i32_0 : i32, i32, i32
  }
  func.func @transform_1(%arg0: i32) -> (i32, i32, i32) {
    %c0_i32 = arith.constant 0 : i32
    %c0_i32_0 = arith.constant 0 : i32
    %c0_i32_1 = arith.constant 0 : i32
    return %arg0, %c0_i32, %c0_i32_0 : i32, i32, i32
  }
  func.func @transform_2(%arg0: i32) -> (i32, i32) {
    %c0_i32 = arith.constant 0 : i32
    %c0_i32_0 = arith.constant 0 : i32
    %c0_i32_1 = arith.constant 0 : i32
    return %c0_i32, %c0_i32_0 : i32, i32
  }
  func.func @transform_3(%arg0: i32) -> (i32, i32) {
    %c0_i32 = arith.constant 0 : i32
    %c0_i32_0 = arith.constant 0 : i32
    %c0_i32_1 = arith.constant 0 : i32
    return %c0_i32, %c0_i32_0 : i32, i32
  }
  func.func @transform_4(%arg0: i32) -> (i32, i32) {
    %c0_i32 = arith.constant 0 : i32
    %c0_i32_0 = arith.constant 0 : i32
    %c0_i32_1 = arith.constant 0 : i32
    return %c0_i32, %c0_i32_0 : i32, i32
  }
  func.func @transform_5(%arg0: i32) -> (i32, i32) {
    %c0_i32 = arith.constant 0 : i32
    %c0_i32_0 = arith.constant 0 : i32
    %c0_i32_1 = arith.constant 0 : i32
    return %c0_i32, %c0_i32_0 : i32, i32
  }
  func.func @transform_6(%arg0: i32) -> (i32, i32) {
    %c0_i32 = arith.constant 0 : i32
    %c0_i32_0 = arith.constant 0 : i32
    %c0_i32_1 = arith.constant 0 : i32
    return %c0_i32, %c0_i32_0 : i32, i32
  }
  func.func @transform_7(%arg0: i32) -> (i32, i32) {
    %c0_i32 = arith.constant 0 : i32
    %c0_i32_0 = arith.constant 0 : i32
    %c0_i32_1 = arith.constant 0 : i32
    return %c0_i32, %c0_i32_0 : i32, i32
  }
  func.func @transform_8(%arg0: i32) -> (i32, i32) {
    %c0_i32 = arith.constant 0 : i32
    %c0_i32_0 = arith.constant 0 : i32
    %c0_i32_1 = arith.constant 0 : i32
    return %c0_i32, %c0_i32_0 : i32, i32
  }
  func.func @transform_9(%arg0: i32) -> (i32, i32) {
    %c0_i32 = arith.constant 0 : i32
    %c0_i32_0 = arith.constant 0 : i32
    %c0_i32_1 = arith.constant 0 : i32
    return %c0_i32, %c0_i32_0 : i32, i32
  }
  func.func @transform_10(%arg0: i32) -> (i32, i32) {
    %c0_i32 = arith.constant 0 : i32
    %c0_i32_0 = arith.constant 0 : i32
    %c0_i32_1 = arith.constant 0 : i32
    return %c0_i32, %c0_i32_0 : i32, i32
  }
  func.func @transform_11(%arg0: i32) -> (i32, i32) {
    %c0_i32 = arith.constant 0 : i32
    %c0_i32_0 = arith.constant 0 : i32
    %c0_i32_1 = arith.constant 0 : i32
    return %c0_i32, %c0_i32_0 : i32, i32
  }
  func.func @transform_12(%arg0: i32) -> (i32, i32) {
    %c0_i32 = arith.constant 0 : i32
    %c0_i32_0 = arith.constant 0 : i32
    %c0_i32_1 = arith.constant 0 : i32
    return %c0_i32, %c0_i32_0 : i32, i32
  }
  func.func @transform_13(%arg0: i32) -> (i32, i32) {
    %c0_i32 = arith.constant 0 : i32
    %c0_i32_0 = arith.constant 0 : i32
    %c0_i32_1 = arith.constant 0 : i32
    return %c0_i32, %c0_i32_0 : i32, i32
  }
  func.func @transform_14(%arg0: i32) -> (i32, i32) {
    %c0_i32 = arith.constant 0 : i32
    %c0_i32_0 = arith.constant 0 : i32
    %c0_i32_1 = arith.constant 0 : i32
    return %c0_i32, %c0_i32_0 : i32, i32
  }
  func.func @transform_15(%arg0: i32) -> (i32, i32) {
    %c0_i32 = arith.constant 0 : i32
    %c0_i32_0 = arith.constant 0 : i32
    %c0_i32_1 = arith.constant 0 : i32
    return %c0_i32, %c0_i32_0 : i32, i32
  }
  func.func @transform_16(%arg0: i32) -> (i32, i32) {
    %c0_i32 = arith.constant 0 : i32
    %c0_i32_0 = arith.constant 0 : i32
    %c0_i32_1 = arith.constant 0 : i32
    return %c0_i32, %c0_i32_0 : i32, i32
  }
  func.func @transform_17(%arg0: i32) -> (i32, i32) {
    %c0_i32 = arith.constant 0 : i32
    %c0_i32_0 = arith.constant 0 : i32
    %c0_i32_1 = arith.constant 0 : i32
    return %c0_i32, %c0_i32_0 : i32, i32
  }
  func.func @transform_18(%arg0: i32) -> (i32, i32, i32) {
    %c0_i32 = arith.constant 0 : i32
    %c0_i32_0 = arith.constant 0 : i32
    %c0_i32_1 = arith.constant 0 : i32
    return %arg0, %c0_i32, %c0_i32_0 : i32, i32, i32
  }
}

</mosaic_0001>

<llo_original>
// kernel: liner_ae_fwd.5
$region0: #{liner_ae_fwd.5}
  #allocation0 [shape = 'u32[]', space=smem, size = 0x4, offset = 0x4, fixed_abs, tag = 'smem constant byte address 0x4 - core index']
  #allocation1 [shape = 'u32[144,128]{1,0:T(1,128)}', space=vmem, size = 0x12000, scoped, tag = 'internal scratch']
  %s0 = inlined_call_operand.vmem [shape: f32[2,8,16], index: 0, kind: input, shape index: {}]
  %s1 = inlined_call_operand.vmem [shape: f32[16,32], index: 1, kind: input, shape index: {}]
  %s2 = inlined_call_operand.vmem [shape: f32[1,32], index: 2, kind: input, shape index: {}]
  %s3 = inlined_call_operand.vmem [shape: f32[8,32], index: 3, kind: input, shape index: {}]
  %s4 = inlined_call_operand.vmem [shape: f32[8,32], index: 4, kind: input, shape index: {}]
  %s5 = inlined_call_operand.vmem [shape: f32[32,16], index: 5, kind: input, shape index: {}]
  %s6 = inlined_call_operand.vmem [shape: f32[1,16], index: 6, kind: input, shape index: {}]
  %s7 = inlined_call_operand.hbm [shape: f32[2,8,16], index: 7, kind: output, shape index: {0}]
  %s8 = inlined_call_operand.vmem [shape: f32[2,8,16], index: 8, kind: output, shape index: {1}]
  %9 = xla_tuple %s7, %s8
  %s10 = sld [smem:[#allocation0]]
  $region69: #{liner_ae_fwd.5} parent=0
    _
  %s12 = ssub.s32 1, %s10
  %s13 = scalar_select 0, %s12, %s10
  $region1: #{liner_ae_fwd.5} parent=0
    #allocation2 [shape = 'u8[8192]{0}', space=vmem, size = 0x2000, scoped, tag = 'output window, operand 0']
    #allocation3 [shape = 's32[2]{0}', space=sflag, size = 0x8, scoped, tag = 'scoped memory for liner_ae_fwd.5']
    %14 = vsyncpa [#allocation3], 0
    %s15 = scalar_lea.sflag [#allocation3], 1
    %16 = vsyncpa %s15, 0
    loop: start=0, step=1, limit=4
    $region2: #{liner_ae_fwd.5} parent=1 // loop_pre_header
      _
    $region3: #{liner_ae_fwd.5} parent=1 // loop_header
      %s18 = sphi 0, %s22
      %p19 = scmp.ge.s32.totalorder %s18, 4
      %s28 = sphi 0, %s30
      %s31 = sphi 0, %s28
      %s32 = sphi 0, %s31
      %s48 = sphi 0, %s32
      %s52 = sphi 0, %s52
      %s54 = sphi 0, %s52
      %s55 = sphi 0, %s54
      %s69 = sphi 0, %s55
      %s73 = sphi 0, %s73
      %s75 = sphi 0, %s73
      %s76 = sphi 0, %s75
      %s90 = sphi 0, %s76
      %s94 = sphi 0, %s94
      %s96 = sphi 0, %s94
      %s97 = sphi 0, %s96
      %s111 = sphi 0, %s97
      %s115 = sphi 0, %s115
      %s117 = sphi 0, %s115
      %s118 = sphi 0, %s117
      %s132 = sphi 0, %s118
      %s136 = sphi 0, %s136
      %s138 = sphi 0, %s136
      %s139 = sphi 0, %s138
      %s153 = sphi 0, %s139
      %s157 = sphi 0, %s157
      %s159 = sphi 0, %s157
      %s160 = sphi 0, %s159
      %s174 = sphi 0, %s160
      %s180 = sphi 0, %s182
      %s183 = sphi 0, %s180
      %s184 = sphi 0, %s183
      %s200 = sphi 0, %s184
      %s206 = sphi 0, %s208
      %s209 = sphi 0, %s206
      %s210 = sphi 0, %s209
      %s226 = sphi 0, %s210
    $region4: #{liner_ae_fwd.5} parent=1 // loop_header_branch
      %21 = sbr.rel (%p19) target = $region8
    $region5: #{liner_ae_fwd.5} parent=1 // loop_body
      %s23 = ssub.s32 %s18, 1
      %s24 = ssub.s32 %s18, 2
      %s25 = sadd.s32 %s18, 1
      %s26 = ssub.s32 %s18, %s25
      %p27 = scmp.eq.s32.totalorder %s26, 0
      %s29 = sadd.s32 %s28, 1
      %s30 = scalar_select %p27, %s28, %s29
      %p33 = pneg %p27
      %p34 = scmp.eq.s32.totalorder %s18, 1
      %p35 = por %p33, %p34
      %p36 = scmp.ne.s32.totalorder %s28, %s31
      %p37 = scmp.eq.s32.totalorder %s18, 0
      %p38 = por %p36, %p37
      %p39 = scmp.ne.s32.totalorder %s28, %s31
      %p40 = scmp.eq.s32.totalorder %s23, 1
      %p41 = por %p39, %p40
      %p42 = scmp.ne.s32.totalorder %s31, %s32
      %p43 = scmp.eq.s32.totalorder %s23, 0
      %p44 = por %p42, %p43
      %p45 = scmp.ne.s32.totalorder %s31, %s32
      %p46 = scmp.eq.s32.totalorder %s24, 1
      %p47 = por %p45, %p46
      %p49 = scmp.ne.s32.totalorder %s32, %s48
      %p50 = scmp.eq.s32.totalorder %s24, 0
      %p51 = por %p49, %p50
      %s53 = sadd.s32 %s52, 1
      %p56 = scmp.eq.s32.totalorder %s18, 1
      %p57 = scmp.ne.s32.totalorder %s52, %s54
      %p58 = scmp.eq.s32.totalorder %s18, 0
      %p59 = por %p57, %p58
      %p60 = scmp.ne.s32.totalorder %s52, %s54
      %p61 = scmp.eq.s32.totalorder %s23, 1
      %p62 = por %p60, %p61
      %p63 = scmp.ne.s32.totalorder %s54, %s55
      %p64 = scmp.eq.s32.totalorder %s23, 0
      %p65 = por %p63, %p64
      %p66 = scmp.ne.s32.totalorder %s54, %s55
      %p67 = scmp.eq.s32.totalorder %s24, 1
      %p68 = por %p66, %p67
      %p70 = scmp.ne.s32.totalorder %s55, %s69
      %p71 = scmp.eq.s32.totalorder %s24, 0
      %p72 = por %p70, %p71
      %s74 = sadd.s32 %s73, 1
      %p77 = scmp.eq.s32.totalorder %s18, 1
      %p78 = scmp.ne.s32.totalorder %s73, %s75
      %p79 = scmp.eq.s32.totalorder %s18, 0
      %p80 = por %p78, %p79
      %p81 = scmp.ne.s32.totalorder %s73, %s75
      %p82 = scmp.eq.s32.totalorder %s23, 1
      %p83 = por %p81, %p82
      %p84 = scmp.ne.s32.totalorder %s75, %s76
      %p85 = scmp.eq.s32.totalorder %s23, 0
      %p86 = por %p84, %p85
      %p87 = scmp.ne.s32.totalorder %s75, %s76
      %p88 = scmp.eq.s32.totalorder %s24, 1
      %p89 = por %p87, %p88
      %p91 = scmp.ne.s32.totalorder %s76, %s90
      %p92 = scmp.eq.s32.totalorder %s24, 0
      %p93 = por %p91, %p92
      %s95 = sadd.s32 %s94, 1
      %p98 = scmp.eq.s32.totalorder %s18, 1
      %p99 = scmp.ne.s32.totalorder %s94, %s96
      %p100 = scmp.eq.s32.totalorder %s18, 0
      %p101 = por %p99, %p100
      %p102 = scmp.ne.s32.totalorder %s94, %s96
      %p103 = scmp.eq.s32.totalorder %s23, 1
      %p104 = por %p102, %p103
      %p105 = scmp.ne.s32.totalorder %s96, %s97
      %p106 = scmp.eq.s32.totalorder %s23, 0
      %p107 = por %p105, %p106
      %p108 = scmp.ne.s32.totalorder %s96, %s97
      %p109 = scmp.eq.s32.totalorder %s24, 1
      %p110 = por %p108, %p109
      %p112 = scmp.ne.s32.totalorder %s97, %s111
      %p113 = scmp.eq.s32.totalorder %s24, 0
      %p114 = por %p112, %p113
      %s116 = sadd.s32 %s115, 1
      %p119 = scmp.eq.s32.totalorder %s18, 1
      %p120 = scmp.ne.s32.totalorder %s115, %s117
      %p121 = scmp.eq.s32.totalorder %s18, 0
      %p122 = por %p120, %p121
      %p123 = scmp.ne.s32.totalorder %s115, %s117
      %p124 = scmp.eq.s32.totalorder %s23, 1
      %p125 = por %p123, %p124
      %p126 = scmp.ne.s32.totalorder %s117, %s118
      %p127 = scmp.eq.s32.totalorder %s23, 0
      %p128 = por %p126, %p127
      %p129 = scmp.ne.s32.totalorder %s117, %s118
      %p130 = scmp.eq.s32.totalorder %s24, 1
      %p131 = por %p129, %p130
      %p133 = scmp.ne.s32.totalorder %s118, %s132
      %p134 = scmp.eq.s32.totalorder %s24, 0
      %p135 = por %p133, %p134
      %s137 = sadd.s32 %s136, 1
      %p140 = scmp.eq.s32.totalorder %s18, 1
      %p141 = scmp.ne.s32.totalorder %s136, %s138
      %p142 = scmp.eq.s32.totalorder %s18, 0
      %p143 = por %p141, %p142
      %p144 = scmp.ne.s32.totalorder %s136, %s138
      %p145 = scmp.eq.s32.totalorder %s23, 1
      %p146 = por %p144, %p145
      %p147 = scmp.ne.s32.totalorder %s138, %s139
      %p148 = scmp.eq.s32.totalorder %s23, 0
      %p149 = por %p147, %p148
      %p150 = scmp.ne.s32.totalorder %s138, %s139
      %p151 = scmp.eq.s32.totalorder %s24, 1
      %p152 = por %p150, %p151
      %p154 = scmp.ne.s32.totalorder %s139, %s153
      %p155 = scmp.eq.s32.totalorder %s24, 0
      %p156 = por %p154, %p155
      %s158 = sadd.s32 %s157, 1
      %p161 = scmp.eq.s32.totalorder %s18, 1
      %p162 = scmp.ne.s32.totalorder %s157, %s159
      %p163 = scmp.eq.s32.totalorder %s18, 0
      %p164 = por %p162, %p163
      %p165 = scmp.ne.s32.totalorder %s157, %s159
      %p166 = scmp.eq.s32.totalorder %s23, 1
      %p167 = por %p165, %p166
      %p168 = scmp.ne.s32.totalorder %s159, %s160
      %p169 = scmp.eq.s32.totalorder %s23, 0
      %p170 = por %p168, %p169
      %p171 = scmp.ne.s32.totalorder %s159, %s160
      %p172 = scmp.eq.s32.totalorder %s24, 1
      %p173 = por %p171, %p172
      %p175 = scmp.ne.s32.totalorder %s160, %s174
      %p176 = scmp.eq.s32.totalorder %s24, 0
      %p177 = por %p175, %p176
      %s178 = ssub.s32 %s18, %s25
      %p179 = scmp.eq.s32.totalorder %s178, 0
      %s181 = sadd.s32 %s180, 1
      %s182 = scalar_select %p179, %s180, %s181
      %p185 = pneg %p179
      %p186 = scmp.eq.s32.totalorder %s18, 1
      %p187 = por %p185, %p186
      %p188 = scmp.ne.s32.totalorder %s180, %s183
      %p189 = scmp.eq.s32.totalorder %s18, 0
      %p190 = por %p188, %p189
      %p191 = scmp.ne.s32.totalorder %s180, %s183
      %p192 = scmp.eq.s32.totalorder %s23, 1
      %p193 = por %p191, %p192
      %p194 = scmp.ne.s32.totalorder %s183, %s184
      %p195 = scmp.eq.s32.totalorder %s23, 0
      %p196 = por %p194, %p195
      %p197 = scmp.ne.s32.totalorder %s183, %s184
      %p198 = scmp.eq.s32.totalorder %s24, 1
      %p199 = por %p197, %p198
      %p201 = scmp.ne.s32.totalorder %s184, %s200
      %p202 = scmp.eq.s32.totalorder %s24, 0
      %p203 = por %p201, %p202
      %s204 = ssub.s32 %s18, %s25
      %p205 = scmp.eq.s32.totalorder %s204, 0
      %s207 = sadd.s32 %s206, 1
      %s208 = scalar_select %p205, %s206, %s207
      %p211 = pneg %p205
      %p212 = scmp.eq.s32.totalorder %s18, 1
      %p213 = por %p211, %p212
      %p214 = scmp.ne.s32.totalorder %s206, %s209
      %p215 = scmp.eq.s32.totalorder %s18, 0
      %p216 = por %p214, %p215
      %p217 = scmp.ne.s32.totalorder %s206, %s209
      %p218 = scmp.eq.s32.totalorder %s23, 1
      %p219 = por %p217, %p218
      %p220 = scmp.ne.s32.totalorder %s209, %s210
      %p221 = scmp.eq.s32.totalorder %s23, 0
      %p222 = por %p220, %p221
      %p223 = scmp.ne.s32.totalorder %s209, %s210
      %p224 = scmp.eq.s32.totalorder %s24, 1
      %p225 = por %p223, %p224
      %p227 = scmp.ne.s32.totalorder %s210, %s226
      %p228 = scmp.eq.s32.totalorder %s24, 0
      %p229 = por %p227, %p228
      %p230 = scmp.le.s32.totalorder 1, %s18
      %p231 = scmp.lt.s32.totalorder %s18, 3
      %p232 = pnand %p230, %p231
      %p233 = pneg %p232
      // Predicated region
      $region9: #{liner_ae_fwd.5} parent=5 // pred_check
        _
      $region10: #{liner_ae_fwd.5} parent=5 // pred_check_branch
        %235 = sbr.rel (%p232) target = $region12
      $region11: #{liner_ae_fwd.5} parent=5 // pred_region
        %s236 = ssub.s32 %s18, 1
        // Predicated region
        $region13: #{liner_ae_fwd.5} parent=11 // pred_check
          %p237 = pneg %p65
        $region14: #{liner_ae_fwd.5} parent=11 // pred_check_branch
          %239 = sbr.rel (%p237) target = $region16
        $region15: #{liner_ae_fwd.5} parent=11 // pred_region
          _
        $region16: #{liner_ae_fwd.5} parent=11 // pred_fallthru
          _
        // Predicated region
        $region17: #{liner_ae_fwd.5} parent=11 // pred_check
          %p240 = pneg %p86
        $region18: #{liner_ae_fwd.5} parent=11 // pred_check_branch
          %242 = sbr.rel (%p240) target = $region20
        $region19: #{liner_ae_fwd.5} parent=11 // pred_region
          _
        $region20: #{liner_ae_fwd.5} parent=11 // pred_fallthru
          _
        // Predicated region
        $region21: #{liner_ae_fwd.5} parent=11 // pred_check
          %p243 = pneg %p107
        $region22: #{liner_ae_fwd.5} parent=11 // pred_check_branch
          %245 = sbr.rel (%p243) target = $region24
        $region23: #{liner_ae_fwd.5} parent=11 // pred_region
          _
        $region24: #{liner_ae_fwd.5} parent=11 // pred_fallthru
          _
        // Predicated region
        $region25: #{liner_ae_fwd.5} parent=11 // pred_check
          %p246 = pneg %p128
        $region26: #{liner_ae_fwd.5} parent=11 // pred_check_branch
          %248 = sbr.rel (%p246) target = $region28
        $region27: #{liner_ae_fwd.5} parent=11 // pred_region
          _
        $region28: #{liner_ae_fwd.5} parent=11 // pred_fallthru
          _
        // Predicated region
        $region29: #{liner_ae_fwd.5} parent=11 // pred_check
          %p249 = pneg %p149
        $region30: #{liner_ae_fwd.5} parent=11 // pred_check_branch
          %251 = sbr.rel (%p249) target = $region32
        $region31: #{liner_ae_fwd.5} parent=11 // pred_region
          _
        $region32: #{liner_ae_fwd.5} parent=11 // pred_fallthru
          _
        // Predicated region
        $region33: #{liner_ae_fwd.5} parent=11 // pred_check
          %p252 = pneg %p170
        $region34: #{liner_ae_fwd.5} parent=11 // pred_check_branch
          %254 = sbr.rel (%p252) target = $region36
        $region35: #{liner_ae_fwd.5} parent=11 // pred_region
          _
        $region36: #{liner_ae_fwd.5} parent=11 // pred_fallthru
          _
      $region12: #{liner_ae_fwd.5} parent=5 // pred_fallthru
        _
      %p255 = scmp.lt.s32.totalorder %s18, 2
      // Predicated region
      $region37: #{liner_ae_fwd.5} parent=5 // pred_check
        %p256 = pneg %p255
      $region38: #{liner_ae_fwd.5} parent=5 // pred_check_branch
        %258 = sbr.rel (%p256) target = $region40
      $region39: #{liner_ae_fwd.5} parent=5 // pred_region
        // Predicated region
        $region41: #{liner_ae_fwd.5} parent=39 // pred_check
          %p259 = pneg %p38
        $region42: #{liner_ae_fwd.5} parent=39 // pred_check_branch
          %261 = sbr.rel (%p259) target = $region44
        $region43: #{liner_ae_fwd.5} parent=39 // pred_region
          %p262 = scmp.lt.s32.totalorder %s18, 1
          %s263 = scalar_select %p262, %s18, 1
          %s264 = smul.addr %s263, 8
          %s265 = scalar_lea.vmem %s0, %s264
        $region44: #{liner_ae_fwd.5} parent=39 // pred_fallthru
          _
      $region40: #{liner_ae_fwd.5} parent=5 // pred_fallthru
        _
      %p266 = scmp.le.s32.totalorder 1, %s18
      %p267 = scmp.lt.s32.totalorder %s18, 3
      %p268 = pnand %p266, %p267
      %p269 = pneg %p268
      // Predicated region
      $region45: #{liner_ae_fwd.5} parent=5 // pred_check
        _
      $region46: #{liner_ae_fwd.5} parent=5 // pred_check_branch
        %271 = sbr.rel (%p268) target = $region48
      $region47: #{liner_ae_fwd.5} parent=5 // pred_region
        %s272 = ssub.s32 %s18, 1
        %p273 = scmp.lt.s32.totalorder %s23, 1
        %s274 = scalar_select %p273, %s23, 1
        %s275 = smul.addr %s274, 8
        %s276 = scalar_lea.vmem %s0, %s275
        %p277 = pneg %p44
        %p278 = pneg %p41
        %p279 = pneg %p65
        %p280 = pneg %p62
        %p281 = pneg %p86
        %p282 = pneg %p83
        %p283 = pneg %p107
        %p284 = pneg %p104
        %p285 = pneg %p128
        %p286 = pneg %p125
        %p287 = pneg %p149
        %p288 = pneg %p146
        %p289 = pneg %p170
        %p290 = pneg %p167
        %p291 = pneg %p196
        %p292 = pneg %p193
        %s293 = sand.u32 %s183, 1
        %s294 = scalar_lea.sflag [#allocation3], %s293
        %s295 = sand.u32 %s183, 1
        %s296 = smul.addr %s295, 8
        %s297 = scalar_lea.vmem [#allocation2], %s296
        %p298 = pneg %p222
        %p299 = pneg %p219
        %p300 = scmp.lt.s32.totalorder %s23, 1
        %s301 = scalar_select %p300, %s23, 1
        %s302 = smul.addr %s301, 8
        %s303 = scalar_lea.vmem %s8, %s302
        %p304 = scmp.lt.s32.totalorder %s23, 1
        %s305 = scalar_select %p304, %s23, 1
        %s306 = smul.addr %s305, 8
        %s307 = scalar_lea.vmem %s0, %s306
        %p308 = scmp.lt.s32.totalorder %s23, 1
        %s309 = scalar_select %p308, %s23, 1
        %s310 = smul.addr %s309, 8
        %s311 = scalar_lea.vmem %s8, %s310
        %v312 = vld [vmem:[%s307] sm:$0xff]
        %v313 = vld [vmem:[%s1] sm:$0xff]
        %v314 = vld [vmem:[%s1 + $0x8] sm:$0xff]
        %v315 = vld [vmem:[%s2] sm:$0x1]
        %v317 = vlaneseq
        %v318 = vshrl.u32 %v317, 7
        %v319 = vsub.s32 0, %v318
        %v320 = vrot.slane %v315, %v319
        %vm322 = vcmask 130048
        %v324 = vsel %vm322, %v312, 0
        %326 = vmatprep.subr.mxu0 0.0
        %327 = vmatpush1.msra.mxu0 %v313
        %328 = vmatprep.subr.mxu0 0.0
        %329 = vmatpush1.msra.mxu0 %v314
        %330 = vmatprep.subr.mxu0 0.0
        %331 = vmatpush1.msra.mxu0 0.0
        %332 = vmatprep.subr.mxu0 0.0
        %333 = vmatpush1.msra.mxu0 0.0
        %334 = vmatprep.subr.mxu0 0.0
        %335 = vmatpush1.msra.mxu0 0.0
        %336 = vmatprep.subr.mxu0 0.0
        %337 = vmatpush1.msra.mxu0 0.0
        %338 = vmatprep.subr.mxu0 0.0
        %339 = vmatpush1.msra.mxu0 0.0
        %340 = vmatprep.subr.mxu0 0.0
        %341 = vmatpush1.msra.mxu0 0.0
        %342 = vmatprep.subr.mxu0 0.0
        %343 = vmatpush1.msra.mxu0 0.0
        %344 = vmatprep.subr.mxu0 0.0
        %345 = vmatpush1.msra.mxu0 0.0
        %346 = vmatprep.subr.mxu0 0.0
        %347 = vmatpush1.msra.mxu0 0.0
        %348 = vmatprep.subr.mxu0 0.0
        %349 = vmatpush1.msra.mxu0 0.0
        %350 = vmatprep.subr.mxu0 0.0
        %351 = vmatpush1.msra.mxu0 0.0
        %352 = vmatprep.subr.mxu0 0.0
        %353 = vmatpush1.msra.mxu0 0.0
        %354 = vmatprep.subr.mxu0 0.0
        %355 = vmatpush1.msra.mxu0 0.0
        %356 = vmatprep.subr.mxu0 0.0
        %357 = vmatpush1.msra.mxu0 0.0
        %358 = vmatprep.subr.mxu0 0.0
        %359 = vmatpush1.msra.mxu0 0.0
        %360 = vmatprep.subr.mxu0 0.0
        %361 = vmatpush1.msra.mxu0 0.0
        %362 = vmatprep.subr.mxu0 0.0
        %363 = vmatpush1.msra.mxu0 0.0
        %364 = vmatprep.subr.mxu0 0.0
        %365 = vmatpush1.msra.mxu0 0.0
        %366 = vmatprep.subr.mxu0 0.0
        %367 = vmatpush1.msra.mxu0 0.0
        %368 = vmatprep.subr.mxu0 0.0
        %369 = vmatpush1.msra.mxu0 0.0
        %370 = vmatprep.subr.mxu0 0.0
        %371 = vmatpush1.msra.mxu0 0.0
        %372 = vmatprep.subr.mxu0 0.0
        %373 = vmatpush1.msra.mxu0 0.0
        %374 = vmatprep.subr.mxu0 0.0
        %375 = vmatpush1.msra.mxu0 0.0
        %376 = vmatprep.subr.mxu0 0.0
        %377 = vmatpush1.msra.mxu0 0.0
        %378 = vmatprep.subr.mxu0 0.0
        %379 = vmatpush1.msra.mxu0 0.0
        %380 = vmatprep.subr.mxu0 0.0
        %381 = vmatpush1.msra.mxu0 0.0
        %382 = vmatprep.subr.mxu0 0.0
        %383 = vmatpush1.msra.mxu0 0.0
        %384 = vmatprep.subr.mxu0 0.0
        %385 = vmatpush1.msra.mxu0 0.0
        %386 = vmatprep.subr.mxu0 0.0
        %387 = vmatpush1.msra.mxu0 0.0
        %388 = vmatprep.subr.mxu0 0.0
        %389 = vmatpush1.msra.mxu0 0.0
        %390 = vmatprep.mubr.f32.mxu0 0.0
        %391 = vmatmul.mubr.f32.gmra.mrb[0].mxu0 %v324
        %v392 = vpop.f32.mrb[0].mxu0
        %v393 = vadd.f32 %v320, %v392
        %v394 = vpop.f32.mrb[0].mxu0
        %395 = vdwg.mxu0
        %v396 = vld [vmem:[%s3] sm:$0xff]
        %v397 = vld [vmem:[%s4] sm:$0xff]
        %vm398 = vcmask 261120
        %v399 = vsel %vm398, %v393, 0.0
        %400 = vadd.xlane.f32.xlu0 %v399
        %v401 = vpop.xlane.xlu0 %400
        %v402 = vrot.slane %v401, 4
        %v403 = vadd.f32 %v401, %v402
        %v404 = vrot.slane %v403, 2
        %v405 = vadd.f32 %v403, %v404
        %v406 = vrot.slane %v405, 1
        %v407 = vadd.f32 %v405, %v406
        %s408 = vtos %v407
        %v409 = vrcp.pop 256.0
        %s410 = vtos %v409
        %s411 = smul.f32 %s408, %s410
        %v412 = vstv %s411
        %v413 = vsub.f32 %v393, %v412
        %v414 = vmul.f32 %v413, %v413
        %v415 = vsel %vm398, %v414, 0.0
        %416 = vadd.xlane.f32.xlu0 %v415
        %v417 = vpop.xlane.xlu0 %416
        %v418 = vrot.slane %v417, 4
        %v419 = vadd.f32 %v417, %v418
        %v420 = vrot.slane %v419, 2
        %v421 = vadd.f32 %v419, %v420
        %v422 = vrot.slane %v421, 1
        %v423 = vadd.f32 %v421, %v422
        %s424 = vtos %v423
        %v425 = vrcp.pop 256.0
        %s426 = vtos %v425
        %s427 = smul.f32 %s424, %s426
        %s428 = sadd.f32 %s427, 1e-05
        %v429 = vstv %s428
        %v430 = vrsqrt.pop %v429
        %s431 = vtos %v430
        %v432 = vstv %s431
        %v433 = vmul.f32 %v413, %v432
        %v434 = vmul.f32 %v433, %v396
        %v435 = vadd.f32 %v434, %v397
        %v436 = vmax.f32 %v435, 0.0
        %v437 = vld [vmem:[%s5] sm:$0xff]
        %v438 = vld [vmem:[%s5 + $0x8] sm:$0xff]
        %v439 = vld [vmem:[%s5 + $0x10] sm:$0xff]
        %v440 = vld [vmem:[%s5 + $0x18] sm:$0xff]
        %v441 = vld [vmem:[%s6] sm:$0x1]
        %v443 = vlaneseq
        %v444 = vshrl.u32 %v443, 7
        %v445 = vsub.s32 0, %v444
        %v446 = vrot.slane %v441, %v445
        %v449 = vsel %vm398, %v436, 0
        %451 = vmatprep.subr.mxu0 0.0
        %452 = vmatpush1.msra.mxu0 %v437
        %453 = vmatprep.subr.mxu0 0.0
        %454 = vmatpush1.msra.mxu0 %v438
        %455 = vmatprep.subr.mxu0 0.0
        %456 = vmatpush1.msra.mxu0 %v439
        %457 = vmatprep.subr.mxu0 0.0
        %458 = vmatpush1.msra.mxu0 %v440
        %459 = vmatprep.subr.mxu0 0.0
        %460 = vmatpush1.msra.mxu0 0.0
        %461 = vmatprep.subr.mxu0 0.0
        %462 = vmatpush1.msra.mxu0 0.0
        %463 = vmatprep.subr.mxu0 0.0
        %464 = vmatpush1.msra.mxu0 0.0
        %465 = vmatprep.subr.mxu0 0.0
        %466 = vmatpush1.msra.mxu0 0.0
        %467 = vmatprep.subr.mxu0 0.0
        %468 = vmatpush1.msra.mxu0 0.0
        %469 = vmatprep.subr.mxu0 0.0
        %470 = vmatpush1.msra.mxu0 0.0
        %471 = vmatprep.subr.mxu0 0.0
        %472 = vmatpush1.msra.mxu0 0.0
        %473 = vmatprep.subr.mxu0 0.0
        %474 = vmatpush1.msra.mxu0 0.0
        %475 = vmatprep.subr.mxu0 0.0
        %476 = vmatpush1.msra.mxu0 0.0
        %477 = vmatprep.subr.mxu0 0.0
        %478 = vmatpush1.msra.mxu0 0.0
        %479 = vmatprep.subr.mxu0 0.0
        %480 = vmatpush1.msra.mxu0 0.0
        %481 = vmatprep.subr.mxu0 0.0
        %482 = vmatpush1.msra.mxu0 0.0
        %483 = vmatprep.subr.mxu0 0.0
        %484 = vmatpush1.msra.mxu0 0.0
        %485 = vmatprep.subr.mxu0 0.0
        %486 = vmatpush1.msra.mxu0 0.0
        %487 = vmatprep.subr.mxu0 0.0
        %488 = vmatpush1.msra.mxu0 0.0
        %489 = vmatprep.subr.mxu0 0.0
        %490 = vmatpush1.msra.mxu0 0.0
        %491 = vmatprep.subr.mxu0 0.0
        %492 = vmatpush1.msra.mxu0 0.0
        %493 = vmatprep.subr.mxu0 0.0
        %494 = vmatpush1.msra.mxu0 0.0
        %495 = vmatprep.subr.mxu0 0.0
        %496 = vmatpush1.msra.mxu0 0.0
        %497 = vmatprep.subr.mxu0 0.0
        %498 = vmatpush1.msra.mxu0 0.0
        %499 = vmatprep.subr.mxu0 0.0
        %500 = vmatpush1.msra.mxu0 0.0
        %501 = vmatprep.subr.mxu0 0.0
        %502 = vmatpush1.msra.mxu0 0.0
        %503 = vmatprep.subr.mxu0 0.0
        %504 = vmatpush1.msra.mxu0 0.0
        %505 = vmatprep.subr.mxu0 0.0
        %506 = vmatpush1.msra.mxu0 0.0
        %507 = vmatprep.subr.mxu0 0.0
        %508 = vmatpush1.msra.mxu0 0.0
        %509 = vmatprep.subr.mxu0 0.0
        %510 = vmatpush1.msra.mxu0 0.0
        %511 = vmatprep.subr.mxu0 0.0
        %512 = vmatpush1.msra.mxu0 0.0
        %513 = vmatprep.subr.mxu0 0.0
        %514 = vmatpush1.msra.mxu0 0.0
        %515 = vmatprep.mubr.f32.mxu0 0.0
        %516 = vmatmul.mubr.f32.gmra.mrb[0].mxu0 %v449
        %v517 = vpop.f32.mrb[0].mxu0
        %v518 = vadd.f32 %v446, %v517
        %v519 = vpop.f32.mrb[0].mxu0
        %520 = vdwg.mxu0
        %v521 = vmax.f32 %v518, 0.0
        %522 = vst.msk [vmem:[%s297] sm:$0xff] %vm322, %v521
        %v523 = vmul.f32 %v312, %v521
        %v524 = vadd.f32 %v521, 1e-06
        %v525 = vrcp.pop %v524
        %v526 = vmul.f32 %v523, %v525
        %527 = vst.msk [vmem:[%s311] sm:$0xff] %vm322, %v526
        %s528 = sand.u32 %s183, 1
        %s529 = scalar_lea.sflag [#allocation3], %s528
        %s530 = sand.u32 %s183, 1
        %s531 = smul.addr %s530, 8
        %s532 = scalar_lea.vmem [#allocation2], %s531
        %p533 = scmp.lt.s32.totalorder %s23, 1
        %s534 = scalar_select %p533, %s23, 1
        %s535 = smul.addr %s534, 8
        %s536 = scalar_lea.vmem %s8, %s535
        // Predicated region
        $region49: #{liner_ae_fwd.5} parent=47 // pred_check
          %p537 = pneg %p193
        $region50: #{liner_ae_fwd.5} parent=47 // pred_check_branch
          %539 = sbr.rel (%p537) target = $region52
        $region51: #{liner_ae_fwd.5} parent=47 // pred_region
          %s541 = ssub.s32 128, 128
          %542 = vsyncadd %s529, %s541
          %s543 = smul.addr %s23, 128
          %s544 = scalar_lea.hbm %s7, %s543
          %s546 = sshll.u32 %s532, 4
          %s547 = int_to_ptr.vmem [resolvable:$true] %s546
          %549 = dma.vmem_to_hbm [thread:$0]  %s547, 128, %s544, %s529
        $region52: #{liner_ae_fwd.5} parent=47 // pred_fallthru
          _
        // Predicated region
        $region53: #{liner_ae_fwd.5} parent=47 // pred_check
          %p550 = pneg %p219
        $region54: #{liner_ae_fwd.5} parent=47 // pred_check_branch
          %552 = sbr.rel (%p550) target = $region56
        $region55: #{liner_ae_fwd.5} parent=47 // pred_region
          _
        $region56: #{liner_ae_fwd.5} parent=47 // pred_fallthru
          _
      $region48: #{liner_ae_fwd.5} parent=5 // pred_fallthru
        _
      %p553 = scmp.le.s32.totalorder 2, %s18
      // Predicated region
      $region57: #{liner_ae_fwd.5} parent=5 // pred_check
        %p554 = pneg %p553
      $region58: #{liner_ae_fwd.5} parent=5 // pred_check_branch
        %556 = sbr.rel (%p554) target = $region60
      $region59: #{liner_ae_fwd.5} parent=5 // pred_region
        %s557 = ssub.s32 %s18, 2
        // Predicated region
        $region61: #{liner_ae_fwd.5} parent=59 // pred_check
          %p558 = pneg %p199
        $region62: #{liner_ae_fwd.5} parent=59 // pred_check_branch
          %560 = sbr.rel (%p558) target = $region64
        $region63: #{liner_ae_fwd.5} parent=59 // pred_region
          %s561 = sand.u32 %s184, 1
          %s562 = scalar_lea.sflag [#allocation3], %s561
          %s563 = sand.u32 %s184, 1
          %s564 = smul.addr %s563, 8
          %s565 = scalar_lea.vmem [#allocation2], %s564
          %566 = dma.done %s562, 128
        $region64: #{liner_ae_fwd.5} parent=59 // pred_fallthru
          _
        // Predicated region
        $region65: #{liner_ae_fwd.5} parent=59 // pred_check
          %p567 = pneg %p225
        $region66: #{liner_ae_fwd.5} parent=59 // pred_check_branch
          %569 = sbr.rel (%p567) target = $region68
        $region67: #{liner_ae_fwd.5} parent=59 // pred_region
          %p570 = scmp.lt.s32.totalorder %s24, 1
          %s571 = scalar_select %p570, %s24, 1
          %s572 = smul.addr %s571, 8
          %s573 = scalar_lea.vmem %s8, %s572
        $region68: #{liner_ae_fwd.5} parent=59 // pred_fallthru
          _
      $region60: #{liner_ae_fwd.5} parent=5 // pred_fallthru
        _
    $region6: #{liner_ae_fwd.5} parent=1 // loop_footer
      %s22 = sadd.s32 1, %s18
    $region7: #{liner_ae_fwd.5} parent=1 // loop_footer_branch
      %17 = sbr.rel target = $region3
    $region8: #{liner_ae_fwd.5} parent=1 // loop_exit
      _
    %574 = vsyncpa [#allocation3], 1
    %s575 = scalar_lea.sflag [#allocation3], 1
    %576 = vsyncpa %s575, 1

// kernel: liner_ae_fwd.6
$region0: #{liner_ae_fwd.6}
  #allocation0 [shape = 'u32[]', space=smem, size = 0x4, offset = 0x4, fixed_abs, tag = 'smem constant byte address 0x4 - core index']
  #allocation1 [shape = 'u32[144,128]{1,0:T(1,128)}', space=vmem, size = 0x12000, scoped, tag = 'internal scratch']
  %s0 = inlined_call_operand.vmem [shape: f32[2,8,16], index: 0, kind: input, shape index: {}]
  %s1 = inlined_call_operand.vmem [shape: f32[16,48], index: 1, kind: input, shape index: {}]
  %s2 = inlined_call_operand.vmem [shape: f32[1,48], index: 2, kind: input, shape index: {}]
  %s3 = inlined_call_operand.vmem [shape: f32[16,16], index: 3, kind: input, shape index: {}]
  %s4 = inlined_call_operand.vmem [shape: f32[1,16], index: 4, kind: input, shape index: {}]
  %s5 = inlined_call_operand.vmem [shape: f32[8,16], index: 5, kind: input, shape index: {}]
  %s6 = inlined_call_operand.vmem [shape: f32[8,16], index: 6, kind: input, shape index: {}]
  %s7 = inlined_call_operand.vmem [shape: f32[16,16], index: 7, kind: input, shape index: {}]
  %s8 = inlined_call_operand.vmem [shape: f32[1,16], index: 8, kind: input, shape index: {}]
  %s9 = inlined_call_operand.vmem [shape: f32[8,16], index: 9, kind: input, shape index: {}]
  %s10 = inlined_call_operand.vmem [shape: f32[8,16], index: 10, kind: input, shape index: {}]
  %s11 = inlined_call_operand.vmem [shape: f32[2,8,16], index: 11, kind: output, shape index: {}]
  %s12 = sld [smem:[#allocation0]]
  $region77: #{liner_ae_fwd.6} parent=0
    _
  %s14 = ssub.s32 1, %s12
  %s15 = scalar_select 0, %s14, %s12
  loop: start=0, step=1, limit=4
  $region2: #{liner_ae_fwd.6} parent=0 // loop_pre_header
    _
  $region3: #{liner_ae_fwd.6} parent=0 // loop_header
    %s17 = sphi 0, %s21
    %p18 = scmp.ge.s32.totalorder %s17, 4
    %s27 = sphi 0, %s29
    %s30 = sphi 0, %s27
    %s31 = sphi 0, %s30
    %s47 = sphi 0, %s31
    %s51 = sphi 0, %s51
    %s53 = sphi 0, %s51
    %s54 = sphi 0, %s53
    %s68 = sphi 0, %s54
    %s72 = sphi 0, %s72
    %s74 = sphi 0, %s72
    %s75 = sphi 0, %s74
    %s89 = sphi 0, %s75
    %s93 = sphi 0, %s93
    %s95 = sphi 0, %s93
    %s96 = sphi 0, %s95
    %s110 = sphi 0, %s96
    %s114 = sphi 0, %s114
    %s116 = sphi 0, %s114
    %s117 = sphi 0, %s116
    %s131 = sphi 0, %s117
    %s135 = sphi 0, %s135
    %s137 = sphi 0, %s135
    %s138 = sphi 0, %s137
    %s152 = sphi 0, %s138
    %s156 = sphi 0, %s156
    %s158 = sphi 0, %s156
    %s159 = sphi 0, %s158
    %s173 = sphi 0, %s159
    %s177 = sphi 0, %s177
    %s179 = sphi 0, %s177
    %s180 = sphi 0, %s179
    %s194 = sphi 0, %s180
    %s198 = sphi 0, %s198
    %s200 = sphi 0, %s198
    %s201 = sphi 0, %s200
    %s215 = sphi 0, %s201
    %s219 = sphi 0, %s219
    %s221 = sphi 0, %s219
    %s222 = sphi 0, %s221
    %s236 = sphi 0, %s222
    %s240 = sphi 0, %s240
    %s242 = sphi 0, %s240
    %s243 = sphi 0, %s242
    %s257 = sphi 0, %s243
    %s263 = sphi 0, %s265
    %s266 = sphi 0, %s263
    %s267 = sphi 0, %s266
    %s283 = sphi 0, %s267
  $region4: #{liner_ae_fwd.6} parent=0 // loop_header_branch
    %20 = sbr.rel (%p18) target = $region8
  $region5: #{liner_ae_fwd.6} parent=0 // loop_body
    %s22 = ssub.s32 %s17, 1
    %s23 = ssub.s32 %s17, 2
    %s24 = sadd.s32 %s17, 1
    %s25 = ssub.s32 %s17, %s24
    %p26 = scmp.eq.s32.totalorder %s25, 0
    %s28 = sadd.s32 %s27, 1
    %s29 = scalar_select %p26, %s27, %s28
    %p32 = pneg %p26
    %p33 = scmp.eq.s32.totalorder %s17, 1
    %p34 = por %p32, %p33
    %p35 = scmp.ne.s32.totalorder %s27, %s30
    %p36 = scmp.eq.s32.totalorder %s17, 0
    %p37 = por %p35, %p36
    %p38 = scmp.ne.s32.totalorder %s27, %s30
    %p39 = scmp.eq.s32.totalorder %s22, 1
    %p40 = por %p38, %p39
    %p41 = scmp.ne.s32.totalorder %s30, %s31
    %p42 = scmp.eq.s32.totalorder %s22, 0
    %p43 = por %p41, %p42
    %p44 = scmp.ne.s32.totalorder %s30, %s31
    %p45 = scmp.eq.s32.totalorder %s23, 1
    %p46 = por %p44, %p45
    %p48 = scmp.ne.s32.totalorder %s31, %s47
    %p49 = scmp.eq.s32.totalorder %s23, 0
    %p50 = por %p48, %p49
    %s52 = sadd.s32 %s51, 1
    %p55 = scmp.eq.s32.totalorder %s17, 1
    %p56 = scmp.ne.s32.totalorder %s51, %s53
    %p57 = scmp.eq.s32.totalorder %s17, 0
    %p58 = por %p56, %p57
    %p59 = scmp.ne.s32.totalorder %s51, %s53
    %p60 = scmp.eq.s32.totalorder %s22, 1
    %p61 = por %p59, %p60
    %p62 = scmp.ne.s32.totalorder %s53, %s54
    %p63 = scmp.eq.s32.totalorder %s22, 0
    %p64 = por %p62, %p63
    %p65 = scmp.ne.s32.totalorder %s53, %s54
    %p66 = scmp.eq.s32.totalorder %s23, 1
    %p67 = por %p65, %p66
    %p69 = scmp.ne.s32.totalorder %s54, %s68
    %p70 = scmp.eq.s32.totalorder %s23, 0
    %p71 = por %p69, %p70
    %s73 = sadd.s32 %s72, 1
    %p76 = scmp.eq.s32.totalorder %s17, 1
    %p77 = scmp.ne.s32.totalorder %s72, %s74
    %p78 = scmp.eq.s32.totalorder %s17, 0
    %p79 = por %p77, %p78
    %p80 = scmp.ne.s32.totalorder %s72, %s74
    %p81 = scmp.eq.s32.totalorder %s22, 1
    %p82 = por %p80, %p81
    %p83 = scmp.ne.s32.totalorder %s74, %s75
    %p84 = scmp.eq.s32.totalorder %s22, 0
    %p85 = por %p83, %p84
    %p86 = scmp.ne.s32.totalorder %s74, %s75
    %p87 = scmp.eq.s32.totalorder %s23, 1
    %p88 = por %p86, %p87
    %p90 = scmp.ne.s32.totalorder %s75, %s89
    %p91 = scmp.eq.s32.totalorder %s23, 0
    %p92 = por %p90, %p91
    %s94 = sadd.s32 %s93, 1
    %p97 = scmp.eq.s32.totalorder %s17, 1
    %p98 = scmp.ne.s32.totalorder %s93, %s95
    %p99 = scmp.eq.s32.totalorder %s17, 0
    %p100 = por %p98, %p99
    %p101 = scmp.ne.s32.totalorder %s93, %s95
    %p102 = scmp.eq.s32.totalorder %s22, 1
    %p103 = por %p101, %p102
    %p104 = scmp.ne.s32.totalorder %s95, %s96
    %p105 = scmp.eq.s32.totalorder %s22, 0
    %p106 = por %p104, %p105
    %p107 = scmp.ne.s32.totalorder %s95, %s96
    %p108 = scmp.eq.s32.totalorder %s23, 1
    %p109 = por %p107, %p108
    %p111 = scmp.ne.s32.totalorder %s96, %s110
    %p112 = scmp.eq.s32.totalorder %s23, 0
    %p113 = por %p111, %p112
    %s115 = sadd.s32 %s114, 1
    %p118 = scmp.eq.s32.totalorder %s17, 1
    %p119 = scmp.ne.s32.totalorder %s114, %s116
    %p120 = scmp.eq.s32.totalorder %s17, 0
    %p121 = por %p119, %p120
    %p122 = scmp.ne.s32.totalorder %s114, %s116
    %p123 = scmp.eq.s32.totalorder %s22, 1
    %p124 = por %p122, %p123
    %p125 = scmp.ne.s32.totalorder %s116, %s117
    %p126 = scmp.eq.s32.totalorder %s22, 0
    %p127 = por %p125, %p126
    %p128 = scmp.ne.s32.totalorder %s116, %s117
    %p129 = scmp.eq.s32.totalorder %s23, 1
    %p130 = por %p128, %p129
    %p132 = scmp.ne.s32.totalorder %s117, %s131
    %p133 = scmp.eq.s32.totalorder %s23, 0
    %p134 = por %p132, %p133
    %s136 = sadd.s32 %s135, 1
    %p139 = scmp.eq.s32.totalorder %s17, 1
    %p140 = scmp.ne.s32.totalorder %s135, %s137
    %p141 = scmp.eq.s32.totalorder %s17, 0
    %p142 = por %p140, %p141
    %p143 = scmp.ne.s32.totalorder %s135, %s137
    %p144 = scmp.eq.s32.totalorder %s22, 1
    %p145 = por %p143, %p144
    %p146 = scmp.ne.s32.totalorder %s137, %s138
    %p147 = scmp.eq.s32.totalorder %s22, 0
    %p148 = por %p146, %p147
    %p149 = scmp.ne.s32.totalorder %s137, %s138
    %p150 = scmp.eq.s32.totalorder %s23, 1
    %p151 = por %p149, %p150
    %p153 = scmp.ne.s32.totalorder %s138, %s152
    %p154 = scmp.eq.s32.totalorder %s23, 0
    %p155 = por %p153, %p154
    %s157 = sadd.s32 %s156, 1
    %p160 = scmp.eq.s32.totalorder %s17, 1
    %p161 = scmp.ne.s32.totalorder %s156, %s158
    %p162 = scmp.eq.s32.totalorder %s17, 0
    %p163 = por %p161, %p162
    %p164 = scmp.ne.s32.totalorder %s156, %s158
    %p165 = scmp.eq.s32.totalorder %s22, 1
    %p166 = por %p164, %p165
    %p167 = scmp.ne.s32.totalorder %s158, %s159
    %p168 = scmp.eq.s32.totalorder %s22, 0
    %p169 = por %p167, %p168
    %p170 = scmp.ne.s32.totalorder %s158, %s159
    %p171 = scmp.eq.s32.totalorder %s23, 1
    %p172 = por %p170, %p171
    %p174 = scmp.ne.s32.totalorder %s159, %s173
    %p175 = scmp.eq.s32.totalorder %s23, 0
    %p176 = por %p174, %p175
    %s178 = sadd.s32 %s177, 1
    %p181 = scmp.eq.s32.totalorder %s17, 1
    %p182 = scmp.ne.s32.totalorder %s177, %s179
    %p183 = scmp.eq.s32.totalorder %s17, 0
    %p184 = por %p182, %p183
    %p185 = scmp.ne.s32.totalorder %s177, %s179
    %p186 = scmp.eq.s32.totalorder %s22, 1
    %p187 = por %p185, %p186
    %p188 = scmp.ne.s32.totalorder %s179, %s180
    %p189 = scmp.eq.s32.totalorder %s22, 0
    %p190 = por %p188, %p189
    %p191 = scmp.ne.s32.totalorder %s179, %s180
    %p192 = scmp.eq.s32.totalorder %s23, 1
    %p193 = por %p191, %p192
    %p195 = scmp.ne.s32.totalorder %s180, %s194
    %p196 = scmp.eq.s32.totalorder %s23, 0
    %p197 = por %p195, %p196
    %s199 = sadd.s32 %s198, 1
    %p202 = scmp.eq.s32.totalorder %s17, 1
    %p203 = scmp.ne.s32.totalorder %s198, %s200
    %p204 = scmp.eq.s32.totalorder %s17, 0
    %p205 = por %p203, %p204
    %p206 = scmp.ne.s32.totalorder %s198, %s200
    %p207 = scmp.eq.s32.totalorder %s22, 1
    %p208 = por %p206, %p207
    %p209 = scmp.ne.s32.totalorder %s200, %s201
    %p210 = scmp.eq.s32.totalorder %s22, 0
    %p211 = por %p209, %p210
    %p212 = scmp.ne.s32.totalorder %s200, %s201
    %p213 = scmp.eq.s32.totalorder %s23, 1
    %p214 = por %p212, %p213
    %p216 = scmp.ne.s32.totalorder %s201, %s215
    %p217 = scmp.eq.s32.totalorder %s23, 0
    %p218 = por %p216, %p217
    %s220 = sadd.s32 %s219, 1
    %p223 = scmp.eq.s32.totalorder %s17, 1
    %p224 = scmp.ne.s32.totalorder %s219, %s221
    %p225 = scmp.eq.s32.totalorder %s17, 0
    %p226 = por %p224, %p225
    %p227 = scmp.ne.s32.totalorder %s219, %s221
    %p228 = scmp.eq.s32.totalorder %s22, 1
    %p229 = por %p227, %p228
    %p230 = scmp.ne.s32.totalorder %s221, %s222
    %p231 = scmp.eq.s32.totalorder %s22, 0
    %p232 = por %p230, %p231
    %p233 = scmp.ne.s32.totalorder %s221, %s222
    %p234 = scmp.eq.s32.totalorder %s23, 1
    %p235 = por %p233, %p234
    %p237 = scmp.ne.s32.totalorder %s222, %s236
    %p238 = scmp.eq.s32.totalorder %s23, 0
    %p239 = por %p237, %p238
    %s241 = sadd.s32 %s240, 1
    %p244 = scmp.eq.s32.totalorder %s17, 1
    %p245 = scmp.ne.s32.totalorder %s240, %s242
    %p246 = scmp.eq.s32.totalorder %s17, 0
    %p247 = por %p245, %p246
    %p248 = scmp.ne.s32.totalorder %s240, %s242
    %p249 = scmp.eq.s32.totalorder %s22, 1
    %p250 = por %p248, %p249
    %p251 = scmp.ne.s32.totalorder %s242, %s243
    %p252 = scmp.eq.s32.totalorder %s22, 0
    %p253 = por %p251, %p252
    %p254 = scmp.ne.s32.totalorder %s242, %s243
    %p255 = scmp.eq.s32.totalorder %s23, 1
    %p256 = por %p254, %p255
    %p258 = scmp.ne.s32.totalorder %s243, %s257
    %p259 = scmp.eq.s32.totalorder %s23, 0
    %p260 = por %p258, %p259
    %s261 = ssub.s32 %s17, %s24
    %p262 = scmp.eq.s32.totalorder %s261, 0
    %s264 = sadd.s32 %s263, 1
    %s265 = scalar_select %p262, %s263, %s264
    %p268 = pneg %p262
    %p269 = scmp.eq.s32.totalorder %s17, 1
    %p270 = por %p268, %p269
    %p271 = scmp.ne.s32.totalorder %s263, %s266
    %p272 = scmp.eq.s32.totalorder %s17, 0
    %p273 = por %p271, %p272
    %p274 = scmp.ne.s32.totalorder %s263, %s266
    %p275 = scmp.eq.s32.totalorder %s22, 1
    %p276 = por %p274, %p275
    %p277 = scmp.ne.s32.totalorder %s266, %s267
    %p278 = scmp.eq.s32.totalorder %s22, 0
    %p279 = por %p277, %p278
    %p280 = scmp.ne.s32.totalorder %s266, %s267
    %p281 = scmp.eq.s32.totalorder %s23, 1
    %p282 = por %p280, %p281
    %p284 = scmp.ne.s32.totalorder %s267, %s283
    %p285 = scmp.eq.s32.totalorder %s23, 0
    %p286 = por %p284, %p285
    %p287 = scmp.le.s32.totalorder 1, %s17
    %p288 = scmp.lt.s32.totalorder %s17, 3
    %p289 = pnand %p287, %p288
    %p290 = pneg %p289
    // Predicated region
    $region9: #{liner_ae_fwd.6} parent=5 // pred_check
      _
    $region10: #{liner_ae_fwd.6} parent=5 // pred_check_branch
      %292 = sbr.rel (%p289) target = $region12
    $region11: #{liner_ae_fwd.6} parent=5 // pred_region
      %s293 = ssub.s32 %s17, 1
      // Predicated region
      $region13: #{liner_ae_fwd.6} parent=11 // pred_check
        %p294 = pneg %p64
      $region14: #{liner_ae_fwd.6} parent=11 // pred_check_branch
        %296 = sbr.rel (%p294) target = $region16
      $region15: #{liner_ae_fwd.6} parent=11 // pred_region
        _
      $region16: #{liner_ae_fwd.6} parent=11 // pred_fallthru
        _
      // Predicated region
      $region17: #{liner_ae_fwd.6} parent=11 // pred_check
        %p297 = pneg %p85
      $region18: #{liner_ae_fwd.6} parent=11 // pred_check_branch
        %299 = sbr.rel (%p297) target = $region20
      $region19: #{liner_ae_fwd.6} parent=11 // pred_region
        _
      $region20: #{liner_ae_fwd.6} parent=11 // pred_fallthru
        _
      // Predicated region
      $region21: #{liner_ae_fwd.6} parent=11 // pred_check
        %p300 = pneg %p106
      $region22: #{liner_ae_fwd.6} parent=11 // pred_check_branch
        %302 = sbr.rel (%p300) target = $region24
      $region23: #{liner_ae_fwd.6} parent=11 // pred_region
        _
      $region24: #{liner_ae_fwd.6} parent=11 // pred_fallthru
        _
      // Predicated region
      $region25: #{liner_ae_fwd.6} parent=11 // pred_check
        %p303 = pneg %p127
      $region26: #{liner_ae_fwd.6} parent=11 // pred_check_branch
        %305 = sbr.rel (%p303) target = $region28
      $region27: #{liner_ae_fwd.6} parent=11 // pred_region
        _
      $region28: #{liner_ae_fwd.6} parent=11 // pred_fallthru
        _
      // Predicated region
      $region29: #{liner_ae_fwd.6} parent=11 // pred_check
        %p306 = pneg %p148
      $region30: #{liner_ae_fwd.6} parent=11 // pred_check_branch
        %308 = sbr.rel (%p306) target = $region32
      $region31: #{liner_ae_fwd.6} parent=11 // pred_region
        _
      $region32: #{liner_ae_fwd.6} parent=11 // pred_fallthru
        _
      // Predicated region
      $region33: #{liner_ae_fwd.6} parent=11 // pred_check
        %p309 = pneg %p169
      $region34: #{liner_ae_fwd.6} parent=11 // pred_check_branch
        %311 = sbr.rel (%p309) target = $region36
      $region35: #{liner_ae_fwd.6} parent=11 // pred_region
        _
      $region36: #{liner_ae_fwd.6} parent=11 // pred_fallthru
        _
      // Predicated region
      $region37: #{liner_ae_fwd.6} parent=11 // pred_check
        %p312 = pneg %p190
      $region38: #{liner_ae_fwd.6} parent=11 // pred_check_branch
        %314 = sbr.rel (%p312) target = $region40
      $region39: #{liner_ae_fwd.6} parent=11 // pred_region
        _
      $region40: #{liner_ae_fwd.6} parent=11 // pred_fallthru
        _
      // Predicated region
      $region41: #{liner_ae_fwd.6} parent=11 // pred_check
        %p315 = pneg %p211
      $region42: #{liner_ae_fwd.6} parent=11 // pred_check_branch
        %317 = sbr.rel (%p315) target = $region44
      $region43: #{liner_ae_fwd.6} parent=11 // pred_region
        _
      $region44: #{liner_ae_fwd.6} parent=11 // pred_fallthru
        _
      // Predicated region
      $region45: #{liner_ae_fwd.6} parent=11 // pred_check
        %p318 = pneg %p232
      $region46: #{liner_ae_fwd.6} parent=11 // pred_check_branch
        %320 = sbr.rel (%p318) target = $region48
      $region47: #{liner_ae_fwd.6} parent=11 // pred_region
        _
      $region48: #{liner_ae_fwd.6} parent=11 // pred_fallthru
        _
      // Predicated region
      $region49: #{liner_ae_fwd.6} parent=11 // pred_check
        %p321 = pneg %p253
      $region50: #{liner_ae_fwd.6} parent=11 // pred_check_branch
        %323 = sbr.rel (%p321) target = $region52
      $region51: #{liner_ae_fwd.6} parent=11 // pred_region
        _
      $region52: #{liner_ae_fwd.6} parent=11 // pred_fallthru
        _
    $region12: #{liner_ae_fwd.6} parent=5 // pred_fallthru
      _
    %p324 = scmp.lt.s32.totalorder %s17, 2
    // Predicated region
    $region53: #{liner_ae_fwd.6} parent=5 // pred_check
      %p325 = pneg %p324
    $region54: #{liner_ae_fwd.6} parent=5 // pred_check_branch
      %327 = sbr.rel (%p325) target = $region56
    $region55: #{liner_ae_fwd.6} parent=5 // pred_region
      // Predicated region
      $region57: #{liner_ae_fwd.6} parent=55 // pred_check
        %p328 = pneg %p37
      $region58: #{liner_ae_fwd.6} parent=55 // pred_check_branch
        %330 = sbr.rel (%p328) target = $region60
      $region59: #{liner_ae_fwd.6} parent=55 // pred_region
        %p331 = scmp.lt.s32.totalorder %s17, 1
        %s332 = scalar_select %p331, %s17, 1
        %s333 = smul.addr %s332, 8
        %s334 = scalar_lea.vmem %s0, %s333
      $region60: #{liner_ae_fwd.6} parent=55 // pred_fallthru
        _
    $region56: #{liner_ae_fwd.6} parent=5 // pred_fallthru
      _
    %p335 = scmp.le.s32.totalorder 1, %s17
    %p336 = scmp.lt.s32.totalorder %s17, 3
    %p337 = pnand %p335, %p336
    %p338 = pneg %p337
    // Predicated region
    $region61: #{liner_ae_fwd.6} parent=5 // pred_check
      _
    $region62: #{liner_ae_fwd.6} parent=5 // pred_check_branch
      %340 = sbr.rel (%p337) target = $region64
    $region63: #{liner_ae_fwd.6} parent=5 // pred_region
      %s341 = ssub.s32 %s17, 1
      %p342 = scmp.lt.s32.totalorder %s22, 1
      %s343 = scalar_select %p342, %s22, 1
      %s344 = smul.addr %s343, 8
      %s345 = scalar_lea.vmem %s0, %s344
      %p346 = pneg %p43
      %p347 = pneg %p40
      %p348 = pneg %p64
      %p349 = pneg %p61
      %p350 = pneg %p85
      %p351 = pneg %p82
      %p352 = pneg %p106
      %p353 = pneg %p103
      %p354 = pneg %p127
      %p355 = pneg %p124
      %p356 = pneg %p148
      %p357 = pneg %p145
      %p358 = pneg %p169
      %p359 = pneg %p166
      %p360 = pneg %p190
      %p361 = pneg %p187
      %p362 = pneg %p211
      %p363 = pneg %p208
      %p364 = pneg %p232
      %p365 = pneg %p229
      %p366 = pneg %p253
      %p367 = pneg %p250
      %p368 = pneg %p279
      %p369 = pneg %p276
      %p370 = scmp.lt.s32.totalorder %s22, 1
      %s371 = scalar_select %p370, %s22, 1
      %s372 = smul.addr %s371, 8
      %s373 = scalar_lea.vmem %s11, %s372
      %p374 = scmp.lt.s32.totalorder %s22, 1
      %s375 = scalar_select %p374, %s22, 1
      %s376 = smul.addr %s375, 8
      %s377 = scalar_lea.vmem %s0, %s376
      %p378 = scmp.lt.s32.totalorder %s22, 1
      %s379 = scalar_select %p378, %s22, 1
      %s380 = smul.addr %s379, 8
      %s381 = scalar_lea.vmem %s11, %s380
      %v382 = vld [vmem:[%s377] sm:$0xff]
      %v383 = vld [vmem:[%s1] sm:$0xff]
      %v384 = vld [vmem:[%s1 + $0x8] sm:$0xff]
      %v385 = vld [vmem:[%s2] sm:$0x1]
      %v386 = vld [vmem:[%s3] sm:$0xff]
      %v387 = vld [vmem:[%s3 + $0x8] sm:$0xff]
      %v388 = vld [vmem:[%s4] sm:$0x1]
      %v390 = vlaneseq
      %v391 = vshrl.u32 %v390, 7
      %v392 = vsub.s32 0, %v391
      %v393 = vrot.slane %v385, %v392
      %vm395 = vcmask 130048
      %v397 = vsel %vm395, %v382, 0
      %399 = vmatprep.subr.mxu0 0.0
      %400 = vmatpush1.msra.mxu0 %v383
      %401 = vmatprep.subr.mxu0 0.0
      %402 = vmatpush1.msra.mxu0 %v384
      %403 = vmatprep.subr.mxu0 0.0
      %404 = vmatpush1.msra.mxu0 0.0
      %405 = vmatprep.subr.mxu0 0.0
      %406 = vmatpush1.msra.mxu0 0.0
      %407 = vmatprep.subr.mxu0 0.0
      %408 = vmatpush1.msra.mxu0 0.0
      %409 = vmatprep.subr.mxu0 0.0
      %410 = vmatpush1.msra.mxu0 0.0
      %411 = vmatprep.subr.mxu0 0.0
      %412 = vmatpush1.msra.mxu0 0.0
      %413 = vmatprep.subr.mxu0 0.0
      %414 = vmatpush1.msra.mxu0 0.0
      %415 = vmatprep.subr.mxu0 0.0
      %416 = vmatpush1.msra.mxu0 0.0
      %417 = vmatprep.subr.mxu0 0.0
      %418 = vmatpush1.msra.mxu0 0.0
      %419 = vmatprep.subr.mxu0 0.0
      %420 = vmatpush1.msra.mxu0 0.0
      %421 = vmatprep.subr.mxu0 0.0
      %422 = vmatpush1.msra.mxu0 0.0
      %423 = vmatprep.subr.mxu0 0.0
      %424 = vmatpush1.msra.mxu0 0.0
      %425 = vmatprep.subr.mxu0 0.0
      %426 = vmatpush1.msra.mxu0 0.0
      %427 = vmatprep.subr.mxu0 0.0
      %428 = vmatpush1.msra.mxu0 0.0
      %429 = vmatprep.subr.mxu0 0.0
      %430 = vmatpush1.msra.mxu0 0.0
      %431 = vmatprep.subr.mxu0 0.0
      %432 = vmatpush1.msra.mxu0 0.0
      %433 = vmatprep.subr.mxu0 0.0
      %434 = vmatpush1.msra.mxu0 0.0
      %435 = vmatprep.subr.mxu0 0.0
      %436 = vmatpush1.msra.mxu0 0.0
      %437 = vmatprep.subr.mxu0 0.0
      %438 = vmatpush1.msra.mxu0 0.0
      %439 = vmatprep.subr.mxu0 0.0
      %440 = vmatpush1.msra.mxu0 0.0
      %441 = vmatprep.subr.mxu0 0.0
      %442 = vmatpush1.msra.mxu0 0.0
      %443 = vmatprep.subr.mxu0 0.0
      %444 = vmatpush1.msra.mxu0 0.0
      %445 = vmatprep.subr.mxu0 0.0
      %446 = vmatpush1.msra.mxu0 0.0
      %447 = vmatprep.subr.mxu0 0.0
      %448 = vmatpush1.msra.mxu0 0.0
      %449 = vmatprep.subr.mxu0 0.0
      %450 = vmatpush1.msra.mxu0 0.0
      %451 = vmatprep.subr.mxu0 0.0
      %452 = vmatpush1.msra.mxu0 0.0
      %453 = vmatprep.subr.mxu0 0.0
      %454 = vmatpush1.msra.mxu0 0.0
      %455 = vmatprep.subr.mxu0 0.0
      %456 = vmatpush1.msra.mxu0 0.0
      %457 = vmatprep.subr.mxu0 0.0
      %458 = vmatpush1.msra.mxu0 0.0
      %459 = vmatprep.subr.mxu0 0.0
      %460 = vmatpush1.msra.mxu0 0.0
      %461 = vmatprep.subr.mxu0 0.0
      %462 = vmatpush1.msra.mxu0 0.0
      %463 = vmatprep.mubr.f32.mxu0 0.0
      %464 = vmatmul.mubr.f32.gmra.mrb[0].mxu0 %v397
      %v465 = vpop.f32.mrb[0].mxu0
      %v466 = vadd.f32 %v393, %v465
      %v467 = vpop.f32.mrb[0].mxu0
      %468 = vdwg.mxu0
      %470 = vrot.lane.b32.xlu0 %v466, 112
      %v471 = vpop.permute.xlu0 %470
      %vm472 = vcmask 64512
      %v473 = vsel %vm472, %v466, 0
      %v475 = vsel %vm472, %v471, 0
      %477 = vmatprep.subr.mxu0 0.0
      %478 = vmatpush1.xpose.msra.mxu0 %v475
      %479 = vmatprep.subr.mxu0 0.0
      %480 = vmatpush1.xpose.msra.mxu0 0.0
      %481 = vmatprep.subr.mxu0 0.0
      %482 = vmatpush1.xpose.msra.mxu0 0.0
      %483 = vmatprep.subr.mxu0 0.0
      %484 = vmatpush1.xpose.msra.mxu0 0.0
      %485 = vmatprep.subr.mxu0 0.0
      %486 = vmatpush1.xpose.msra.mxu0 0.0
      %487 = vmatprep.subr.mxu0 0.0
      %488 = vmatpush1.xpose.msra.mxu0 0.0
      %489 = vmatprep.subr.mxu0 0.0
      %490 = vmatpush1.xpose.msra.mxu0 0.0
      %491 = vmatprep.subr.mxu0 0.0
      %492 = vmatpush1.xpose.msra.mxu0 0.0
      %493 = vmatprep.subr.mxu0 0.0
      %494 = vmatpush1.xpose.msra.mxu0 0.0
      %495 = vmatprep.subr.mxu0 0.0
      %496 = vmatpush1.xpose.msra.mxu0 0.0
      %497 = vmatprep.subr.mxu0 0.0
      %498 = vmatpush1.xpose.msra.mxu0 0.0
      %499 = vmatprep.subr.mxu0 0.0
      %500 = vmatpush1.xpose.msra.mxu0 0.0
      %501 = vmatprep.subr.mxu0 0.0
      %502 = vmatpush1.xpose.msra.mxu0 0.0
      %503 = vmatprep.subr.mxu0 0.0
      %504 = vmatpush1.xpose.msra.mxu0 0.0
      %505 = vmatprep.subr.mxu0 0.0
      %506 = vmatpush1.xpose.msra.mxu0 0.0
      %507 = vmatprep.subr.mxu0 0.0
      %508 = vmatpush1.xpose.msra.mxu0 0.0
      %509 = vmatprep.subr.mxu0 0.0
      %510 = vmatpush1.xpose.msra.mxu0 0.0
      %511 = vmatprep.subr.mxu0 0.0
      %512 = vmatpush1.xpose.msra.mxu0 0.0
      %513 = vmatprep.subr.mxu0 0.0
      %514 = vmatpush1.xpose.msra.mxu0 0.0
      %515 = vmatprep.subr.mxu0 0.0
      %516 = vmatpush1.xpose.msra.mxu0 0.0
      %517 = vmatprep.subr.mxu0 0.0
      %518 = vmatpush1.xpose.msra.mxu0 0.0
      %519 = vmatprep.subr.mxu0 0.0
      %520 = vmatpush1.xpose.msra.mxu0 0.0
      %521 = vmatprep.subr.mxu0 0.0
      %522 = vmatpush1.xpose.msra.mxu0 0.0
      %523 = vmatprep.subr.mxu0 0.0
      %524 = vmatpush1.xpose.msra.mxu0 0.0
      %525 = vmatprep.subr.mxu0 0.0
      %526 = vmatpush1.xpose.msra.mxu0 0.0
      %527 = vmatprep.subr.mxu0 0.0
      %528 = vmatpush1.xpose.msra.mxu0 0.0
      %529 = vmatprep.subr.mxu0 0.0
      %530 = vmatpush1.xpose.msra.mxu0 0.0
      %531 = vmatprep.subr.mxu0 0.0
      %532 = vmatpush1.xpose.msra.mxu0 0.0
      %533 = vmatprep.subr.mxu0 0.0
      %534 = vmatpush1.xpose.msra.mxu0 0.0
      %535 = vmatprep.subr.mxu0 0.0
      %536 = vmatpush1.xpose.msra.mxu0 0.0
      %537 = vmatprep.subr.mxu0 0.0
      %538 = vmatpush1.xpose.msra.mxu0 0.0
      %539 = vmatprep.subr.mxu0 0.0
      %540 = vmatpush1.xpose.msra.mxu0 0.0
      %541 = vmatprep.mubr.f32.mxu0 0.0
      %542 = vmatmul.mubr.f32.gmra.mrb[0].mxu0 %v473
      %v543 = vpop.f32.mrb[0].mxu0
      %v544 = vadd.f32 0.0, %v543
      %v545 = vpop.f32.mrb[0].mxu0
      %546 = vdwg.mxu0
      %v547 = vmul.f32 %v544, 0.35355338
      %v548 = vsel %vm472, %v547, -inf
      %549 = vmax.xlane.f32.xlu0 %v548
      %v550 = vpop.xlane.xlu0 %549
      %v551 = vsub.f32 %v547, %v550
      %v552 = vmul.f32 %v551, 1.442695
      %v553 = vpow.pop %v552
      %v554 = vsel %vm472, %v553, 0.0
      %555 = vadd.xlane.f32.xlu0 %v554
      %v556 = vpop.xlane.xlu0 %555
      %v557 = vrcp.pop %v556
      %v558 = vmul.f32 %v553, %v557
      %559 = vrot.lane.b32.xlu0 %v466, 96
      %v560 = vpop.permute.xlu0 %559
      %v563 = vsel %vm472, %v558, 0
      %565 = vmatprep.subr.mxu0 0.0
      %566 = vmatpush1.msra.mxu0 %v560
      %567 = vmatprep.subr.mxu0 0.0
      %568 = vmatpush1.msra.mxu0 0.0
      %569 = vmatprep.subr.mxu0 0.0
      %570 = vmatpush1.msra.mxu0 0.0
      %571 = vmatprep.subr.mxu0 0.0
      %572 = vmatpush1.msra.mxu0 0.0
      %573 = vmatprep.subr.mxu0 0.0
      %574 = vmatpush1.msra.mxu0 0.0
      %575 = vmatprep.subr.mxu0 0.0
      %576 = vmatpush1.msra.mxu0 0.0
      %577 = vmatprep.subr.mxu0 0.0
      %578 = vmatpush1.msra.mxu0 0.0
      %579 = vmatprep.subr.mxu0 0.0
      %580 = vmatpush1.msra.mxu0 0.0
      %581 = vmatprep.subr.mxu0 0.0
      %582 = vmatpush1.msra.mxu0 0.0
      %583 = vmatprep.subr.mxu0 0.0
      %584 = vmatpush1.msra.mxu0 0.0
      %585 = vmatprep.subr.mxu0 0.0
      %586 = vmatpush1.msra.mxu0 0.0
      %587 = vmatprep.subr.mxu0 0.0
      %588 = vmatpush1.msra.mxu0 0.0
      %589 = vmatprep.subr.mxu0 0.0
      %590 = vmatpush1.msra.mxu0 0.0
      %591 = vmatprep.subr.mxu0 0.0
      %592 = vmatpush1.msra.mxu0 0.0
      %593 = vmatprep.subr.mxu0 0.0
      %594 = vmatpush1.msra.mxu0 0.0
      %595 = vmatprep.subr.mxu0 0.0
      %596 = vmatpush1.msra.mxu0 0.0
      %597 = vmatprep.subr.mxu0 0.0
      %598 = vmatpush1.msra.mxu0 0.0
      %599 = vmatprep.subr.mxu0 0.0
      %600 = vmatpush1.msra.mxu0 0.0
      %601 = vmatprep.subr.mxu0 0.0
      %602 = vmatpush1.msra.mxu0 0.0
      %603 = vmatprep.subr.mxu0 0.0
      %604 = vmatpush1.msra.mxu0 0.0
      %605 = vmatprep.subr.mxu0 0.0
      %606 = vmatpush1.msra.mxu0 0.0
      %607 = vmatprep.subr.mxu0 0.0
      %608 = vmatpush1.msra.mxu0 0.0
      %609 = vmatprep.subr.mxu0 0.0
      %610 = vmatpush1.msra.mxu0 0.0
      %611 = vmatprep.subr.mxu0 0.0
      %612 = vmatpush1.msra.mxu0 0.0
      %613 = vmatprep.subr.mxu0 0.0
      %614 = vmatpush1.msra.mxu0 0.0
      %615 = vmatprep.subr.mxu0 0.0
      %616 = vmatpush1.msra.mxu0 0.0
      %617 = vmatprep.subr.mxu0 0.0
      %618 = vmatpush1.msra.mxu0 0.0
      %619 = vmatprep.subr.mxu0 0.0
      %620 = vmatpush1.msra.mxu0 0.0
      %621 = vmatprep.subr.mxu0 0.0
      %622 = vmatpush1.msra.mxu0 0.0
      %623 = vmatprep.subr.mxu0 0.0
      %624 = vmatpush1.msra.mxu0 0.0
      %625 = vmatprep.subr.mxu0 0.0
      %626 = vmatpush1.msra.mxu0 0.0
      %627 = vmatprep.subr.mxu0 0.0
      %628 = vmatpush1.msra.mxu0 0.0
      %629 = vmatprep.mubr.f32.mxu0 0.0
      %630 = vmatmul.mubr.f32.gmra.mrb[0].mxu0 %v563
      %v631 = vpop.f32.mrb[0].mxu0
      %v632 = vadd.f32 0.0, %v631
      %v633 = vpop.f32.mrb[0].mxu0
      %634 = vdwg.mxu0
      %635 = vrot.lane.b32.xlu0 %v466, 120
      %v636 = vpop.permute.xlu0 %635
      %637 = vrot.lane.b32.xlu0 %v466, 104
      %v638 = vpop.permute.xlu0 %637
      %v639 = vsel %vm472, %v636, 0
      %v641 = vsel %vm472, %v638, 0
      %643 = vmatprep.subr.mxu0 0.0
      %644 = vmatpush1.xpose.msra.mxu0 %v641
      %645 = vmatprep.subr.mxu0 0.0
      %646 = vmatpush1.xpose.msra.mxu0 0.0
      %647 = vmatprep.subr.mxu0 0.0
      %648 = vmatpush1.xpose.msra.mxu0 0.0
      %649 = vmatprep.subr.mxu0 0.0
      %650 = vmatpush1.xpose.msra.mxu0 0.0
      %651 = vmatprep.subr.mxu0 0.0
      %652 = vmatpush1.xpose.msra.mxu0 0.0
      %653 = vmatprep.subr.mxu0 0.0
      %654 = vmatpush1.xpose.msra.mxu0 0.0
      %655 = vmatprep.subr.mxu0 0.0
      %656 = vmatpush1.xpose.msra.mxu0 0.0
      %657 = vmatprep.subr.mxu0 0.0
      %658 = vmatpush1.xpose.msra.mxu0 0.0
      %659 = vmatprep.subr.mxu0 0.0
      %660 = vmatpush1.xpose.msra.mxu0 0.0
      %661 = vmatprep.subr.mxu0 0.0
      %662 = vmatpush1.xpose.msra.mxu0 0.0
      %663 = vmatprep.subr.mxu0 0.0
      %664 = vmatpush1.xpose.msra.mxu0 0.0
      %665 = vmatprep.subr.mxu0 0.0
      %666 = vmatpush1.xpose.msra.mxu0 0.0
      %667 = vmatprep.subr.mxu0 0.0
      %668 = vmatpush1.xpose.msra.mxu0 0.0
      %669 = vmatprep.subr.mxu0 0.0
      %670 = vmatpush1.xpose.msra.mxu0 0.0
      %671 = vmatprep.subr.mxu0 0.0
      %672 = vmatpush1.xpose.msra.mxu0 0.0
      %673 = vmatprep.subr.mxu0 0.0
      %674 = vmatpush1.xpose.msra.mxu0 0.0
      %675 = vmatprep.subr.mxu0 0.0
      %676 = vmatpush1.xpose.msra.mxu0 0.0
      %677 = vmatprep.subr.mxu0 0.0
      %678 = vmatpush1.xpose.msra.mxu0 0.0
      %679 = vmatprep.subr.mxu0 0.0
      %680 = vmatpush1.xpose.msra.mxu0 0.0
      %681 = vmatprep.subr.mxu0 0.0
      %682 = vmatpush1.xpose.msra.mxu0 0.0
      %683 = vmatprep.subr.mxu0 0.0
      %684 = vmatpush1.xpose.msra.mxu0 0.0
      %685 = vmatprep.subr.mxu0 0.0
      %686 = vmatpush1.xpose.msra.mxu0 0.0
      %687 = vmatprep.subr.mxu0 0.0
      %688 = vmatpush1.xpose.msra.mxu0 0.0
      %689 = vmatprep.subr.mxu0 0.0
      %690 = vmatpush1.xpose.msra.mxu0 0.0
      %691 = vmatprep.subr.mxu0 0.0
      %692 = vmatpush1.xpose.msra.mxu0 0.0
      %693 = vmatprep.subr.mxu0 0.0
      %694 = vmatpush1.xpose.msra.mxu0 0.0
      %695 = vmatprep.subr.mxu0 0.0
      %696 = vmatpush1.xpose.msra.mxu0 0.0
      %697 = vmatprep.subr.mxu0 0.0
      %698 = vmatpush1.xpose.msra.mxu0 0.0
      %699 = vmatprep.subr.mxu0 0.0
      %700 = vmatpush1.xpose.msra.mxu0 0.0
      %701 = vmatprep.subr.mxu0 0.0
      %702 = vmatpush1.xpose.msra.mxu0 0.0
      %703 = vmatprep.subr.mxu0 0.0
      %704 = vmatpush1.xpose.msra.mxu0 0.0
      %705 = vmatprep.subr.mxu0 0.0
      %706 = vmatpush1.xpose.msra.mxu0 0.0
      %707 = vmatprep.mubr.f32.mxu0 0.0
      %708 = vmatmul.mubr.f32.gmra.mrb[0].mxu0 %v639
      %v709 = vpop.f32.mrb[0].mxu0
      %v710 = vadd.f32 0.0, %v709
      %v711 = vpop.f32.mrb[0].mxu0
      %712 = vdwg.mxu0
      %v713 = vmul.f32 %v710, 0.35355338
      %v714 = vsel %vm472, %v713, -inf
      %715 = vmax.xlane.f32.xlu0 %v714
      %v716 = vpop.xlane.xlu0 %715
      %v717 = vsub.f32 %v713, %v716
      %v718 = vmul.f32 %v717, 1.442695
      %v719 = vpow.pop %v718
      %v720 = vsel %vm472, %v719, 0.0
      %721 = vadd.xlane.f32.xlu0 %v720
      %v722 = vpop.xlane.xlu0 %721
      %v723 = vrcp.pop %v722
      %v724 = vmul.f32 %v719, %v723
      %725 = vrot.lane.b32.xlu0 %v466, 88
      %v726 = vpop.permute.xlu0 %725
      %v729 = vsel %vm472, %v724, 0
      %731 = vmatprep.subr.mxu0 0.0
      %732 = vmatpush1.msra.mxu0 %v726
      %733 = vmatprep.subr.mxu0 0.0
      %734 = vmatpush1.msra.mxu0 0.0
      %735 = vmatprep.subr.mxu0 0.0
      %736 = vmatpush1.msra.mxu0 0.0
      %737 = vmatprep.subr.mxu0 0.0
      %738 = vmatpush1.msra.mxu0 0.0
      %739 = vmatprep.subr.mxu0 0.0
      %740 = vmatpush1.msra.mxu0 0.0
      %741 = vmatprep.subr.mxu0 0.0
      %742 = vmatpush1.msra.mxu0 0.0
      %743 = vmatprep.subr.mxu0 0.0
      %744 = vmatpush1.msra.mxu0 0.0
      %745 = vmatprep.subr.mxu0 0.0
      %746 = vmatpush1.msra.mxu0 0.0
      %747 = vmatprep.subr.mxu0 0.0
      %748 = vmatpush1.msra.mxu0 0.0
      %749 = vmatprep.subr.mxu0 0.0
      %750 = vmatpush1.msra.mxu0 0.0
      %751 = vmatprep.subr.mxu0 0.0
      %752 = vmatpush1.msra.mxu0 0.0
      %753 = vmatprep.subr.mxu0 0.0
      %754 = vmatpush1.msra.mxu0 0.0
      %755 = vmatprep.subr.mxu0 0.0
      %756 = vmatpush1.msra.mxu0 0.0
      %757 = vmatprep.subr.mxu0 0.0
      %758 = vmatpush1.msra.mxu0 0.0
      %759 = vmatprep.subr.mxu0 0.0
      %760 = vmatpush1.msra.mxu0 0.0
      %761 = vmatprep.subr.mxu0 0.0
      %762 = vmatpush1.msra.mxu0 0.0
      %763 = vmatprep.subr.mxu0 0.0
      %764 = vmatpush1.msra.mxu0 0.0
      %765 = vmatprep.subr.mxu0 0.0
      %766 = vmatpush1.msra.mxu0 0.0
      %767 = vmatprep.subr.mxu0 0.0
      %768 = vmatpush1.msra.mxu0 0.0
      %769 = vmatprep.subr.mxu0 0.0
      %770 = vmatpush1.msra.mxu0 0.0
      %771 = vmatprep.subr.mxu0 0.0
      %772 = vmatpush1.msra.mxu0 0.0
      %773 = vmatprep.subr.mxu0 0.0
      %774 = vmatpush1.msra.mxu0 0.0
      %775 = vmatprep.subr.mxu0 0.0
      %776 = vmatpush1.msra.mxu0 0.0
      %777 = vmatprep.subr.mxu0 0.0
      %778 = vmatpush1.msra.mxu0 0.0
      %779 = vmatprep.subr.mxu0 0.0
      %780 = vmatpush1.msra.mxu0 0.0
      %781 = vmatprep.subr.mxu0 0.0
      %782 = vmatpush1.msra.mxu0 0.0
      %783 = vmatprep.subr.mxu0 0.0
      %784 = vmatpush1.msra.mxu0 0.0
      %785 = vmatprep.subr.mxu0 0.0
      %786 = vmatpush1.msra.mxu0 0.0
      %787 = vmatprep.subr.mxu0 0.0
      %788 = vmatpush1.msra.mxu0 0.0
      %789 = vmatprep.subr.mxu0 0.0
      %790 = vmatpush1.msra.mxu0 0.0
      %791 = vmatprep.subr.mxu0 0.0
      %792 = vmatpush1.msra.mxu0 0.0
      %793 = vmatprep.subr.mxu0 0.0
      %794 = vmatpush1.msra.mxu0 0.0
      %795 = vmatprep.mubr.f32.mxu0 0.0
      %796 = vmatmul.mubr.f32.gmra.mrb[0].mxu0 %v729
      %v797 = vpop.f32.mrb[0].mxu0
      %v798 = vadd.f32 0.0, %v797
      %v799 = vpop.f32.mrb[0].mxu0
      %800 = vdwg.mxu0
      %v802 = vsel %vm472, %v798, 0
      %804 = vmatprep.subr.mxu0 0.0
      %805 = vmatpush1.msra.mxu0 %v387
      %806 = vmatprep.subr.mxu0 0.0
      %807 = vmatpush1.msra.mxu0 0.0
      %808 = vmatprep.subr.mxu0 0.0
      %809 = vmatpush1.msra.mxu0 0.0
      %810 = vmatprep.subr.mxu0 0.0
      %811 = vmatpush1.msra.mxu0 0.0
      %812 = vmatprep.subr.mxu0 0.0
      %813 = vmatpush1.msra.mxu0 0.0
      %814 = vmatprep.subr.mxu0 0.0
      %815 = vmatpush1.msra.mxu0 0.0
      %816 = vmatprep.subr.mxu0 0.0
      %817 = vmatpush1.msra.mxu0 0.0
      %818 = vmatprep.subr.mxu0 0.0
      %819 = vmatpush1.msra.mxu0 0.0
      %820 = vmatprep.subr.mxu0 0.0
      %821 = vmatpush1.msra.mxu0 0.0
      %822 = vmatprep.subr.mxu0 0.0
      %823 = vmatpush1.msra.mxu0 0.0
      %824 = vmatprep.subr.mxu0 0.0
      %825 = vmatpush1.msra.mxu0 0.0
      %826 = vmatprep.subr.mxu0 0.0
      %827 = vmatpush1.msra.mxu0 0.0
      %828 = vmatprep.subr.mxu0 0.0
      %829 = vmatpush1.msra.mxu0 0.0
      %830 = vmatprep.subr.mxu0 0.0
      %831 = vmatpush1.msra.mxu0 0.0
      %832 = vmatprep.subr.mxu0 0.0
      %833 = vmatpush1.msra.mxu0 0.0
      %834 = vmatprep.subr.mxu0 0.0
      %835 = vmatpush1.msra.mxu0 0.0
      %836 = vmatprep.subr.mxu0 0.0
      %837 = vmatpush1.msra.mxu0 0.0
      %838 = vmatprep.subr.mxu0 0.0
      %839 = vmatpush1.msra.mxu0 0.0
      %840 = vmatprep.subr.mxu0 0.0
      %841 = vmatpush1.msra.mxu0 0.0
      %842 = vmatprep.subr.mxu0 0.0
      %843 = vmatpush1.msra.mxu0 0.0
      %844 = vmatprep.subr.mxu0 0.0
      %845 = vmatpush1.msra.mxu0 0.0
      %846 = vmatprep.subr.mxu0 0.0
      %847 = vmatpush1.msra.mxu0 0.0
      %848 = vmatprep.subr.mxu0 0.0
      %849 = vmatpush1.msra.mxu0 0.0
      %850 = vmatprep.subr.mxu0 0.0
      %851 = vmatpush1.msra.mxu0 0.0
      %852 = vmatprep.subr.mxu0 0.0
      %853 = vmatpush1.msra.mxu0 0.0
      %854 = vmatprep.subr.mxu0 0.0
      %855 = vmatpush1.msra.mxu0 0.0
      %856 = vmatprep.subr.mxu0 0.0
      %857 = vmatpush1.msra.mxu0 0.0
      %858 = vmatprep.subr.mxu0 0.0
      %859 = vmatpush1.msra.mxu0 0.0
      %860 = vmatprep.subr.mxu0 0.0
      %861 = vmatpush1.msra.mxu0 0.0
      %862 = vmatprep.subr.mxu0 0.0
      %863 = vmatpush1.msra.mxu0 0.0
      %864 = vmatprep.subr.mxu0 0.0
      %865 = vmatpush1.msra.mxu0 0.0
      %866 = vmatprep.subr.mxu0 0.0
      %867 = vmatpush1.msra.mxu0 0.0
      %868 = vmatprep.mubr.f32.mxu0 0.0
      %869 = vmatmul.mubr.f32.gmra.mrb[0].mxu0 %v802
      %v870 = vpop.f32.mrb[0].mxu0
      %v871 = vadd.f32 0.0, %v870
      %v872 = vpop.f32.mrb[0].mxu0
      %873 = vdwg.mxu0
      %v875 = vsel %vm472, %v632, 0
      %877 = vmatprep.subr.mxu0 0.0
      %878 = vmatpush1.msra.mxu0 %v386
      %879 = vmatprep.subr.mxu0 0.0
      %880 = vmatpush1.msra.mxu0 0.0
      %881 = vmatprep.subr.mxu0 0.0
      %882 = vmatpush1.msra.mxu0 0.0
      %883 = vmatprep.subr.mxu0 0.0
      %884 = vmatpush1.msra.mxu0 0.0
      %885 = vmatprep.subr.mxu0 0.0
      %886 = vmatpush1.msra.mxu0 0.0
      %887 = vmatprep.subr.mxu0 0.0
      %888 = vmatpush1.msra.mxu0 0.0
      %889 = vmatprep.subr.mxu0 0.0
      %890 = vmatpush1.msra.mxu0 0.0
      %891 = vmatprep.subr.mxu0 0.0
      %892 = vmatpush1.msra.mxu0 0.0
      %893 = vmatprep.subr.mxu0 0.0
      %894 = vmatpush1.msra.mxu0 0.0
      %895 = vmatprep.subr.mxu0 0.0
      %896 = vmatpush1.msra.mxu0 0.0
      %897 = vmatprep.subr.mxu0 0.0
      %898 = vmatpush1.msra.mxu0 0.0
      %899 = vmatprep.subr.mxu0 0.0
      %900 = vmatpush1.msra.mxu0 0.0
      %901 = vmatprep.subr.mxu0 0.0
      %902 = vmatpush1.msra.mxu0 0.0
      %903 = vmatprep.subr.mxu0 0.0
      %904 = vmatpush1.msra.mxu0 0.0
      %905 = vmatprep.subr.mxu0 0.0
      %906 = vmatpush1.msra.mxu0 0.0
      %907 = vmatprep.subr.mxu0 0.0
      %908 = vmatpush1.msra.mxu0 0.0
      %909 = vmatprep.subr.mxu0 0.0
      %910 = vmatpush1.msra.mxu0 0.0
      %911 = vmatprep.subr.mxu0 0.0
      %912 = vmatpush1.msra.mxu0 0.0
      %913 = vmatprep.subr.mxu0 0.0
      %914 = vmatpush1.msra.mxu0 0.0
      %915 = vmatprep.subr.mxu0 0.0
      %916 = vmatpush1.msra.mxu0 0.0
      %917 = vmatprep.subr.mxu0 0.0
      %918 = vmatpush1.msra.mxu0 0.0
      %919 = vmatprep.subr.mxu0 0.0
      %920 = vmatpush1.msra.mxu0 0.0
      %921 = vmatprep.subr.mxu0 0.0
      %922 = vmatpush1.msra.mxu0 0.0
      %923 = vmatprep.subr.mxu0 0.0
      %924 = vmatpush1.msra.mxu0 0.0
      %925 = vmatprep.subr.mxu0 0.0
      %926 = vmatpush1.msra.mxu0 0.0
      %927 = vmatprep.subr.mxu0 0.0
      %928 = vmatpush1.msra.mxu0 0.0
      %929 = vmatprep.subr.mxu0 0.0
      %930 = vmatpush1.msra.mxu0 0.0
      %931 = vmatprep.subr.mxu0 0.0
      %932 = vmatpush1.msra.mxu0 0.0
      %933 = vmatprep.subr.mxu0 0.0
      %934 = vmatpush1.msra.mxu0 0.0
      %935 = vmatprep.subr.mxu0 0.0
      %936 = vmatpush1.msra.mxu0 0.0
      %937 = vmatprep.subr.mxu0 0.0
      %938 = vmatpush1.msra.mxu0 0.0
      %939 = vmatprep.subr.mxu0 0.0
      %940 = vmatpush1.msra.mxu0 0.0
      %941 = vmatprep.mubr.f32.mxu0 0.0
      %942 = vmatmul.mubr.f32.gmra.mrb[0].mxu0 %v875
      %v943 = vpop.f32.mrb[0].mxu0
      %v944 = vadd.f32 %v871, %v943
      %v945 = vpop.f32.mrb[0].mxu0
      %946 = vdwg.mxu0
      %v948 = vlaneseq
      %v949 = vshrl.u32 %v948, 7
      %v950 = vsub.s32 0, %v949
      %v951 = vrot.slane %v388, %v950
      %v953 = vadd.f32 %v944, %v951
      %v954 = vadd.f32 %v382, %v953
      %v955 = vld [vmem:[%s5] sm:$0xff]
      %v956 = vld [vmem:[%s6] sm:$0xff]
      %v957 = vsel %vm395, %v954, 0.0
      %958 = vadd.xlane.f32.xlu0 %v957
      %v959 = vpop.xlane.xlu0 %958
      %v960 = vrot.slane %v959, 4
      %v961 = vadd.f32 %v959, %v960
      %v962 = vrot.slane %v961, 2
      %v963 = vadd.f32 %v961, %v962
      %v964 = vrot.slane %v963, 1
      %v965 = vadd.f32 %v963, %v964
      %s966 = vtos %v965
      %v967 = vrcp.pop 128.0
      %s968 = vtos %v967
      %s969 = smul.f32 %s966, %s968
      %v970 = vstv %s969
      %v971 = vsub.f32 %v954, %v970
      %v972 = vmul.f32 %v971, %v971
      %v973 = vsel %vm395, %v972, 0.0
      %974 = vadd.xlane.f32.xlu0 %v973
      %v975 = vpop.xlane.xlu0 %974
      %v976 = vrot.slane %v975, 4
      %v977 = vadd.f32 %v975, %v976
      %v978 = vrot.slane %v977, 2
      %v979 = vadd.f32 %v977, %v978
      %v980 = vrot.slane %v979, 1
      %v981 = vadd.f32 %v979, %v980
      %s982 = vtos %v981
      %v983 = vrcp.pop 128.0
      %s984 = vtos %v983
      %s985 = smul.f32 %s982, %s984
      %s986 = sadd.f32 %s985, 1e-05
      %v987 = vstv %s986
      %v988 = vrsqrt.pop %v987
      %s989 = vtos %v988
      %v990 = vstv %s989
      %v991 = vmul.f32 %v971, %v990
      %v992 = vmul.f32 %v991, %v955
      %v993 = vadd.f32 %v992, %v956
      %v994 = vld [vmem:[%s7] sm:$0xff]
      %v995 = vld [vmem:[%s7 + $0x8] sm:$0xff]
      %v996 = vld [vmem:[%s8] sm:$0x1]
      %v998 = vlaneseq
      %v999 = vshrl.u32 %v998, 7
      %v1000 = vsub.s32 0, %v999
      %v1001 = vrot.slane %v996, %v1000
      %v1004 = vsel %vm395, %v993, 0
      %1006 = vmatprep.subr.mxu0 0.0
      %1007 = vmatpush1.msra.mxu0 %v994
      %1008 = vmatprep.subr.mxu0 0.0
      %1009 = vmatpush1.msra.mxu0 %v995
      %1010 = vmatprep.subr.mxu0 0.0
      %1011 = vmatpush1.msra.mxu0 0.0
      %1012 = vmatprep.subr.mxu0 0.0
      %1013 = vmatpush1.msra.mxu0 0.0
      %1014 = vmatprep.subr.mxu0 0.0
      %1015 = vmatpush1.msra.mxu0 0.0
      %1016 = vmatprep.subr.mxu0 0.0
      %1017 = vmatpush1.msra.mxu0 0.0
      %1018 = vmatprep.subr.mxu0 0.0
      %1019 = vmatpush1.msra.mxu0 0.0
      %1020 = vmatprep.subr.mxu0 0.0
      %1021 = vmatpush1.msra.mxu0 0.0
      %1022 = vmatprep.subr.mxu0 0.0
      %1023 = vmatpush1.msra.mxu0 0.0
      %1024 = vmatprep.subr.mxu0 0.0
      %1025 = vmatpush1.msra.mxu0 0.0
      %1026 = vmatprep.subr.mxu0 0.0
      %1027 = vmatpush1.msra.mxu0 0.0
      %1028 = vmatprep.subr.mxu0 0.0
      %1029 = vmatpush1.msra.mxu0 0.0
      %1030 = vmatprep.subr.mxu0 0.0
      %1031 = vmatpush1.msra.mxu0 0.0
      %1032 = vmatprep.subr.mxu0 0.0
      %1033 = vmatpush1.msra.mxu0 0.0
      %1034 = vmatprep.subr.mxu0 0.0
      %1035 = vmatpush1.msra.mxu0 0.0
      %1036 = vmatprep.subr.mxu0 0.0
      %1037 = vmatpush1.msra.mxu0 0.0
      %1038 = vmatprep.subr.mxu0 0.0
      %1039 = vmatpush1.msra.mxu0 0.0
      %1040 = vmatprep.subr.mxu0 0.0
      %1041 = vmatpush1.msra.mxu0 0.0
      %1042 = vmatprep.subr.mxu0 0.0
      %1043 = vmatpush1.msra.mxu0 0.0
      %1044 = vmatprep.subr.mxu0 0.0
      %1045 = vmatpush1.msra.mxu0 0.0
      %1046 = vmatprep.subr.mxu0 0.0
      %1047 = vmatpush1.msra.mxu0 0.0
      %1048 = vmatprep.subr.mxu0 0.0
      %1049 = vmatpush1.msra.mxu0 0.0
      %1050 = vmatprep.subr.mxu0 0.0
      %1051 = vmatpush1.msra.mxu0 0.0
      %1052 = vmatprep.subr.mxu0 0.0
      %1053 = vmatpush1.msra.mxu0 0.0
      %1054 = vmatprep.subr.mxu0 0.0
      %1055 = vmatpush1.msra.mxu0 0.0
      %1056 = vmatprep.subr.mxu0 0.0
      %1057 = vmatpush1.msra.mxu0 0.0
      %1058 = vmatprep.subr.mxu0 0.0
      %1059 = vmatpush1.msra.mxu0 0.0
      %1060 = vmatprep.subr.mxu0 0.0
      %1061 = vmatpush1.msra.mxu0 0.0
      %1062 = vmatprep.subr.mxu0 0.0
      %1063 = vmatpush1.msra.mxu0 0.0
      %1064 = vmatprep.subr.mxu0 0.0
      %1065 = vmatpush1.msra.mxu0 0.0
      %1066 = vmatprep.subr.mxu0 0.0
      %1067 = vmatpush1.msra.mxu0 0.0
      %1068 = vmatprep.subr.mxu0 0.0
      %1069 = vmatpush1.msra.mxu0 0.0
      %1070 = vmatprep.mubr.f32.mxu0 0.0
      %1071 = vmatmul.mubr.f32.gmra.mrb[0].mxu0 %v1004
      %v1072 = vpop.f32.mrb[0].mxu0
      %v1073 = vadd.f32 %v1001, %v1072
      %v1074 = vpop.f32.mrb[0].mxu0
      %1075 = vdwg.mxu0
      %v1076 = vadd.f32 %v993, %v1073
      %v1077 = vld [vmem:[%s9] sm:$0xff]
      %v1078 = vld [vmem:[%s10] sm:$0xff]
      %v1079 = vsel %vm395, %v1076, 0.0
      %1080 = vadd.xlane.f32.xlu0 %v1079
      %v1081 = vpop.xlane.xlu0 %1080
      %v1082 = vrot.slane %v1081, 4
      %v1083 = vadd.f32 %v1081, %v1082
      %v1084 = vrot.slane %v1083, 2
      %v1085 = vadd.f32 %v1083, %v1084
      %v1086 = vrot.slane %v1085, 1
      %v1087 = vadd.f32 %v1085, %v1086
      %s1088 = vtos %v1087
      %v1089 = vrcp.pop 128.0
      %s1090 = vtos %v1089
      %s1091 = smul.f32 %s1088, %s1090
      %v1092 = vstv %s1091
      %v1093 = vsub.f32 %v1076, %v1092
      %v1094 = vmul.f32 %v1093, %v1093
      %v1095 = vsel %vm395, %v1094, 0.0
      %1096 = vadd.xlane.f32.xlu0 %v1095
      %v1097 = vpop.xlane.xlu0 %1096
      %v1098 = vrot.slane %v1097, 4
      %v1099 = vadd.f32 %v1097, %v1098
      %v1100 = vrot.slane %v1099, 2
      %v1101 = vadd.f32 %v1099, %v1100
      %v1102 = vrot.slane %v1101, 1
      %v1103 = vadd.f32 %v1101, %v1102
      %s1104 = vtos %v1103
      %v1105 = vrcp.pop 128.0
      %s1106 = vtos %v1105
      %s1107 = smul.f32 %s1104, %s1106
      %s1108 = sadd.f32 %s1107, 1e-05
      %v1109 = vstv %s1108
      %v1110 = vrsqrt.pop %v1109
      %s1111 = vtos %v1110
      %v1112 = vstv %s1111
      %v1113 = vmul.f32 %v1093, %v1112
      %v1114 = vmul.f32 %v1113, %v1077
      %v1115 = vadd.f32 %v1114, %v1078
      %1116 = vst.msk [vmem:[%s381] sm:$0xff] %vm395, %v1115
      %p1117 = scmp.lt.s32.totalorder %s22, 1
      %s1118 = scalar_select %p1117, %s22, 1
      %s1119 = smul.addr %s1118, 8
      %s1120 = scalar_lea.vmem %s11, %s1119
      // Predicated region
      $region65: #{liner_ae_fwd.6} parent=63 // pred_check
        %p1121 = pneg %p276
      $region66: #{liner_ae_fwd.6} parent=63 // pred_check_branch
        %1123 = sbr.rel (%p1121) target = $region68
      $region67: #{liner_ae_fwd.6} parent=63 // pred_region
        _
      $region68: #{liner_ae_fwd.6} parent=63 // pred_fallthru
        _
    $region64: #{liner_ae_fwd.6} parent=5 // pred_fallthru
      _
    %p1124 = scmp.le.s32.totalorder 2, %s17
    // Predicated region
    $region69: #{liner_ae_fwd.6} parent=5 // pred_check
      %p1125 = pneg %p1124
    $region70: #{liner_ae_fwd.6} parent=5 // pred_check_branch
      %1127 = sbr.rel (%p1125) target = $region72
    $region71: #{liner_ae_fwd.6} parent=5 // pred_region
      %s1128 = ssub.s32 %s17, 2
      // Predicated region
      $region73: #{liner_ae_fwd.6} parent=71 // pred_check
        %p1129 = pneg %p282
      $region74: #{liner_ae_fwd.6} parent=71 // pred_check_branch
        %1131 = sbr.rel (%p1129) target = $region76
      $region75: #{liner_ae_fwd.6} parent=71 // pred_region
        %p1132 = scmp.lt.s32.totalorder %s23, 1
        %s1133 = scalar_select %p1132, %s23, 1
        %s1134 = smul.addr %s1133, 8
        %s1135 = scalar_lea.vmem %s11, %s1134
      $region76: #{liner_ae_fwd.6} parent=71 // pred_fallthru
        _
    $region72: #{liner_ae_fwd.6} parent=5 // pred_fallthru
      _
  $region6: #{liner_ae_fwd.6} parent=0 // loop_footer
    %s21 = sadd.s32 1, %s17
  $region7: #{liner_ae_fwd.6} parent=0 // loop_footer_branch
    %16 = sbr.rel target = $region3
  $region8: #{liner_ae_fwd.6} parent=0 // loop_exit
    _

// kernel: liner_ae_fwd.8
$region0: #{liner_ae_fwd.8}
  #allocation0 [shape = 'u32[]', space=smem, size = 0x4, offset = 0x4, fixed_abs, tag = 'smem constant byte address 0x4 - core index']
  #allocation1 [shape = 'u32[144,128]{1,0:T(1,128)}', space=vmem, size = 0x12000, scoped, tag = 'internal scratch']
  %s0 = inlined_call_operand.vmem [shape: f32[2,8,16], index: 0, kind: input, shape index: {}]
  %s1 = inlined_call_operand.vmem [shape: f32[2,8,16], index: 1, kind: input, shape index: {}]
  %s2 = inlined_call_operand.vmem [shape: f32[16,48], index: 2, kind: input, shape index: {}]
  %s3 = inlined_call_operand.hbm [shape: f32[1,48], index: 3, kind: input, shape index: {}]
  %s4 = inlined_call_operand.vmem [shape: f32[16,16], index: 4, kind: input, shape index: {}]
  %s5 = inlined_call_operand.hbm [shape: f32[1,16], index: 5, kind: input, shape index: {}]
  %s6 = inlined_call_operand.vmem [shape: f32[8,16], index: 6, kind: input, shape index: {}]
  %s7 = inlined_call_operand.vmem [shape: f32[8,16], index: 7, kind: input, shape index: {}]
  %s8 = inlined_call_operand.vmem [shape: f32[16,48], index: 8, kind: input, shape index: {}]
  %s9 = inlined_call_operand.hbm [shape: f32[1,48], index: 9, kind: input, shape index: {}]
  %s10 = inlined_call_operand.vmem [shape: f32[16,16], index: 10, kind: input, shape index: {}]
  %s11 = inlined_call_operand.hbm [shape: f32[1,16], index: 11, kind: input, shape index: {}]
  %s12 = inlined_call_operand.vmem [shape: f32[8,16], index: 12, kind: input, shape index: {}]
  %s13 = inlined_call_operand.vmem [shape: f32[8,16], index: 13, kind: input, shape index: {}]
  %s14 = inlined_call_operand.vmem [shape: f32[16,16], index: 14, kind: input, shape index: {}]
  %s15 = inlined_call_operand.hbm [shape: f32[1,16], index: 15, kind: input, shape index: {}]
  %s16 = inlined_call_operand.vmem [shape: f32[8,16], index: 16, kind: input, shape index: {}]
  %s17 = inlined_call_operand.vmem [shape: f32[8,16], index: 17, kind: input, shape index: {}]
  %s18 = inlined_call_operand.vmem [shape: f32[2,8,16], index: 18, kind: output, shape index: {}]
  %s19 = sld [smem:[#allocation0]]
  $region125: #{liner_ae_fwd.8} parent=0
    _
  %s21 = ssub.s32 1, %s19
  %s22 = scalar_select 0, %s21, %s19
  $region1: #{liner_ae_fwd.8} parent=0
    #allocation2 [shape = 'u8[512]{0}', space=vmem, size = 0x400, scoped, tag = 'input window, operand 3, single buffered']
    #allocation3 [shape = 's32[2]{0}', space=sflag, size = 0x8, scoped, tag = 'scoped memory for liner_ae_fwd.8']
    #allocation4 [shape = 'u8[512]{0}', space=vmem, size = 0x400, scoped, tag = 'input window, operand 5, single buffered']
    #allocation5 [shape = 's32[1]{0}', space=sflag, size = 0x4, scoped, tag = 'scoped memory for liner_ae_fwd.8']
    #allocation6 [shape = 'u8[512]{0}', space=vmem, size = 0x400, scoped, tag = 'input window, operand 9, single buffered']
    #allocation7 [shape = 'u8[512]{0}', space=vmem, size = 0x400, scoped, tag = 'input window, operand 11, single buffered']
    #allocation8 [shape = 's32[1]{0}', space=sflag, size = 0x4, scoped, tag = 'scoped memory for liner_ae_fwd.8']
    #allocation9 [shape = 'u8[512]{0}', space=vmem, size = 0x400, scoped, tag = 'input window, operand 15, single buffered']
    %23 = vsyncpa [#allocation3], 0
    %24 = vsyncpa [#allocation5], 0
    %25 = vsyncpa [#allocation8], 0
    loop: start=0, step=1, limit=4
    $region2: #{liner_ae_fwd.8} parent=1 // loop_pre_header
      _
    $region3: #{liner_ae_fwd.8} parent=1 // loop_header
      %s27 = sphi 0, %s31
      %p28 = scmp.ge.s32.totalorder %s27, 4
      %s37 = sphi 0, %s39
      %s40 = sphi 0, %s37
      %s41 = sphi 0, %s40
      %s57 = sphi 0, %s41
      %s63 = sphi 0, %s65
      %s66 = sphi 0, %s63
      %s67 = sphi 0, %s66
      %s83 = sphi 0, %s67
      %s87 = sphi 0, %s87
      %s89 = sphi 0, %s87
      %s90 = sphi 0, %s89
      %s104 = sphi 0, %s90
      %s108 = sphi 0, %s108
      %s110 = sphi 0, %s108
      %s111 = sphi 0, %s110
      %s125 = sphi 0, %s111
      %s129 = sphi 0, %s129
      %s131 = sphi 0, %s129
      %s132 = sphi 0, %s131
      %s146 = sphi 0, %s132
      %s150 = sphi 0, %s150
      %s152 = sphi 0, %s150
      %s153 = sphi 0, %s152
      %s167 = sphi 0, %s153
      %s171 = sphi 0, %s171
      %s173 = sphi 0, %s171
      %s174 = sphi 0, %s173
      %s188 = sphi 0, %s174
      %s192 = sphi 0, %s192
      %s194 = sphi 0, %s192
      %s195 = sphi 0, %s194
      %s209 = sphi 0, %s195
      %s213 = sphi 0, %s213
      %s215 = sphi 0, %s213
      %s216 = sphi 0, %s215
      %s230 = sphi 0, %s216
      %s234 = sphi 0, %s234
      %s236 = sphi 0, %s234
      %s237 = sphi 0, %s236
      %s251 = sphi 0, %s237
      %s255 = sphi 0, %s255
      %s257 = sphi 0, %s255
      %s258 = sphi 0, %s257
      %s272 = sphi 0, %s258
      %s276 = sphi 0, %s276
      %s278 = sphi 0, %s276
      %s279 = sphi 0, %s278
      %s293 = sphi 0, %s279
      %s297 = sphi 0, %s297
      %s299 = sphi 0, %s297
      %s300 = sphi 0, %s299
      %s314 = sphi 0, %s300
      %s318 = sphi 0, %s318
      %s320 = sphi 0, %s318
      %s321 = sphi 0, %s320
      %s335 = sphi 0, %s321
      %s339 = sphi 0, %s339
      %s341 = sphi 0, %s339
      %s342 = sphi 0, %s341
      %s356 = sphi 0, %s342
      %s360 = sphi 0, %s360
      %s362 = sphi 0, %s360
      %s363 = sphi 0, %s362
      %s377 = sphi 0, %s363
      %s381 = sphi 0, %s381
      %s383 = sphi 0, %s381
      %s384 = sphi 0, %s383
      %s398 = sphi 0, %s384
      %s402 = sphi 0, %s402
      %s404 = sphi 0, %s402
      %s405 = sphi 0, %s404
      %s419 = sphi 0, %s405
      %s425 = sphi 0, %s427
      %s428 = sphi 0, %s425
      %s429 = sphi 0, %s428
      %s445 = sphi 0, %s429
    $region4: #{liner_ae_fwd.8} parent=1 // loop_header_branch
      %30 = sbr.rel (%p28) target = $region8
    $region5: #{liner_ae_fwd.8} parent=1 // loop_body
      %s32 = ssub.s32 %s27, 1
      %s33 = ssub.s32 %s27, 2
      %s34 = sadd.s32 %s27, 1
      %s35 = ssub.s32 %s27, %s34
      %p36 = scmp.eq.s32.totalorder %s35, 0
      %s38 = sadd.s32 %s37, 1
      %s39 = scalar_select %p36, %s37, %s38
      %p42 = pneg %p36
      %p43 = scmp.eq.s32.totalorder %s27, 1
      %p44 = por %p42, %p43
      %p45 = scmp.ne.s32.totalorder %s37, %s40
      %p46 = scmp.eq.s32.totalorder %s27, 0
      %p47 = por %p45, %p46
      %p48 = scmp.ne.s32.totalorder %s37, %s40
      %p49 = scmp.eq.s32.totalorder %s32, 1
      %p50 = por %p48, %p49
      %p51 = scmp.ne.s32.totalorder %s40, %s41
      %p52 = scmp.eq.s32.totalorder %s32, 0
      %p53 = por %p51, %p52
      %p54 = scmp.ne.s32.totalorder %s40, %s41
      %p55 = scmp.eq.s32.totalorder %s33, 1
      %p56 = por %p54, %p55
      %p58 = scmp.ne.s32.totalorder %s41, %s57
      %p59 = scmp.eq.s32.totalorder %s33, 0
      %p60 = por %p58, %p59
      %s61 = ssub.s32 %s27, %s34
      %p62 = scmp.eq.s32.totalorder %s61, 0
      %s64 = sadd.s32 %s63, 1
      %s65 = scalar_select %p62, %s63, %s64
      %p68 = pneg %p62
      %p69 = scmp.eq.s32.totalorder %s27, 1
      %p70 = por %p68, %p69
      %p71 = scmp.ne.s32.totalorder %s63, %s66
      %p72 = scmp.eq.s32.totalorder %s27, 0
      %p73 = por %p71, %p72
      %p74 = scmp.ne.s32.totalorder %s63, %s66
      %p75 = scmp.eq.s32.totalorder %s32, 1
      %p76 = por %p74, %p75
      %p77 = scmp.ne.s32.totalorder %s66, %s67
      %p78 = scmp.eq.s32.totalorder %s32, 0
      %p79 = por %p77, %p78
      %p80 = scmp.ne.s32.totalorder %s66, %s67
      %p81 = scmp.eq.s32.totalorder %s33, 1
      %p82 = por %p80, %p81
      %p84 = scmp.ne.s32.totalorder %s67, %s83
      %p85 = scmp.eq.s32.totalorder %s33, 0
      %p86 = por %p84, %p85
      %s88 = sadd.s32 %s87, 1
      %p91 = scmp.eq.s32.totalorder %s27, 1
      %p92 = scmp.ne.s32.totalorder %s87, %s89
      %p93 = scmp.eq.s32.totalorder %s27, 0
      %p94 = por %p92, %p93
      %p95 = scmp.ne.s32.totalorder %s87, %s89
      %p96 = scmp.eq.s32.totalorder %s32, 1
      %p97 = por %p95, %p96
      %p98 = scmp.ne.s32.totalorder %s89, %s90
      %p99 = scmp.eq.s32.totalorder %s32, 0
      %p100 = por %p98, %p99
      %p101 = scmp.ne.s32.totalorder %s89, %s90
      %p102 = scmp.eq.s32.totalorder %s33, 1
      %p103 = por %p101, %p102
      %p105 = scmp.ne.s32.totalorder %s90, %s104
      %p106 = scmp.eq.s32.totalorder %s33, 0
      %p107 = por %p105, %p106
      %s109 = sadd.s32 %s108, 1
      %p112 = scmp.eq.s32.totalorder %s27, 1
      %p113 = scmp.ne.s32.totalorder %s108, %s110
      %p114 = scmp.eq.s32.totalorder %s27, 0
      %p115 = por %p113, %p114
      %p116 = scmp.ne.s32.totalorder %s108, %s110
      %p117 = scmp.eq.s32.totalorder %s32, 1
      %p118 = por %p116, %p117
      %p119 = scmp.ne.s32.totalorder %s110, %s111
      %p120 = scmp.eq.s32.totalorder %s32, 0
      %p121 = por %p119, %p120
      %p122 = scmp.ne.s32.totalorder %s110, %s111
      %p123 = scmp.eq.s32.totalorder %s33, 1
      %p124 = por %p122, %p123
      %p126 = scmp.ne.s32.totalorder %s111, %s125
      %p127 = scmp.eq.s32.totalorder %s33, 0
      %p128 = por %p126, %p127
      %s130 = sadd.s32 %s129, 1
      %p133 = scmp.eq.s32.totalorder %s27, 1
      %p134 = scmp.ne.s32.totalorder %s129, %s131
      %p135 = scmp.eq.s32.totalorder %s27, 0
      %p136 = por %p134, %p135
      %p137 = scmp.ne.s32.totalorder %s129, %s131
      %p138 = scmp.eq.s32.totalorder %s32, 1
      %p139 = por %p137, %p138
      %p140 = scmp.ne.s32.totalorder %s131, %s132
      %p141 = scmp.eq.s32.totalorder %s32, 0
      %p142 = por %p140, %p141
      %p143 = scmp.ne.s32.totalorder %s131, %s132
      %p144 = scmp.eq.s32.totalorder %s33, 1
      %p145 = por %p143, %p144
      %p147 = scmp.ne.s32.totalorder %s132, %s146
      %p148 = scmp.eq.s32.totalorder %s33, 0
      %p149 = por %p147, %p148
      %s151 = sadd.s32 %s150, 1
      %p154 = scmp.eq.s32.totalorder %s27, 1
      %p155 = scmp.ne.s32.totalorder %s150, %s152
      %p156 = scmp.eq.s32.totalorder %s27, 0
      %p157 = por %p155, %p156
      %p158 = scmp.ne.s32.totalorder %s150, %s152
      %p159 = scmp.eq.s32.totalorder %s32, 1
      %p160 = por %p158, %p159
      %p161 = scmp.ne.s32.totalorder %s152, %s153
      %p162 = scmp.eq.s32.totalorder %s32, 0
      %p163 = por %p161, %p162
      %p164 = scmp.ne.s32.totalorder %s152, %s153
      %p165 = scmp.eq.s32.totalorder %s33, 1
      %p166 = por %p164, %p165
      %p168 = scmp.ne.s32.totalorder %s153, %s167
      %p169 = scmp.eq.s32.totalorder %s33, 0
      %p170 = por %p168, %p169
      %s172 = sadd.s32 %s171, 1
      %p175 = scmp.eq.s32.totalorder %s27, 1
      %p176 = scmp.ne.s32.totalorder %s171, %s173
      %p177 = scmp.eq.s32.totalorder %s27, 0
      %p178 = por %p176, %p177
      %p179 = scmp.ne.s32.totalorder %s171, %s173
      %p180 = scmp.eq.s32.totalorder %s32, 1
      %p181 = por %p179, %p180
      %p182 = scmp.ne.s32.totalorder %s173, %s174
      %p183 = scmp.eq.s32.totalorder %s32, 0
      %p184 = por %p182, %p183
      %p185 = scmp.ne.s32.totalorder %s173, %s174
      %p186 = scmp.eq.s32.totalorder %s33, 1
      %p187 = por %p185, %p186
      %p189 = scmp.ne.s32.totalorder %s174, %s188
      %p190 = scmp.eq.s32.totalorder %s33, 0
      %p191 = por %p189, %p190
      %s193 = sadd.s32 %s192, 1
      %p196 = scmp.eq.s32.totalorder %s27, 1
      %p197 = scmp.ne.s32.totalorder %s192, %s194
      %p198 = scmp.eq.s32.totalorder %s27, 0
      %p199 = por %p197, %p198
      %p200 = scmp.ne.s32.totalorder %s192, %s194
      %p201 = scmp.eq.s32.totalorder %s32, 1
      %p202 = por %p200, %p201
      %p203 = scmp.ne.s32.totalorder %s194, %s195
      %p204 = scmp.eq.s32.totalorder %s32, 0
      %p205 = por %p203, %p204
      %p206 = scmp.ne.s32.totalorder %s194, %s195
      %p207 = scmp.eq.s32.totalorder %s33, 1
      %p208 = por %p206, %p207
      %p210 = scmp.ne.s32.totalorder %s195, %s209
      %p211 = scmp.eq.s32.totalorder %s33, 0
      %p212 = por %p210, %p211
      %s214 = sadd.s32 %s213, 1
      %p217 = scmp.eq.s32.totalorder %s27, 1
      %p218 = scmp.ne.s32.totalorder %s213, %s215
      %p219 = scmp.eq.s32.totalorder %s27, 0
      %p220 = por %p218, %p219
      %p221 = scmp.ne.s32.totalorder %s213, %s215
      %p222 = scmp.eq.s32.totalorder %s32, 1
      %p223 = por %p221, %p222
      %p224 = scmp.ne.s32.totalorder %s215, %s216
      %p225 = scmp.eq.s32.totalorder %s32, 0
      %p226 = por %p224, %p225
      %p227 = scmp.ne.s32.totalorder %s215, %s216
      %p228 = scmp.eq.s32.totalorder %s33, 1
      %p229 = por %p227, %p228
      %p231 = scmp.ne.s32.totalorder %s216, %s230
      %p232 = scmp.eq.s32.totalorder %s33, 0
      %p233 = por %p231, %p232
      %s235 = sadd.s32 %s234, 1
      %p238 = scmp.eq.s32.totalorder %s27, 1
      %p239 = scmp.ne.s32.totalorder %s234, %s236
      %p240 = scmp.eq.s32.totalorder %s27, 0
      %p241 = por %p239, %p240
      %p242 = scmp.ne.s32.totalorder %s234, %s236
      %p243 = scmp.eq.s32.totalorder %s32, 1
      %p244 = por %p242, %p243
      %p245 = scmp.ne.s32.totalorder %s236, %s237
      %p246 = scmp.eq.s32.totalorder %s32, 0
      %p247 = por %p245, %p246
      %p248 = scmp.ne.s32.totalorder %s236, %s237
      %p249 = scmp.eq.s32.totalorder %s33, 1
      %p250 = por %p248, %p249
      %p252 = scmp.ne.s32.totalorder %s237, %s251
      %p253 = scmp.eq.s32.totalorder %s33, 0
      %p254 = por %p252, %p253
      %s256 = sadd.s32 %s255, 1
      %p259 = scmp.eq.s32.totalorder %s27, 1
      %p260 = scmp.ne.s32.totalorder %s255, %s257
      %p261 = scmp.eq.s32.totalorder %s27, 0
      %p262 = por %p260, %p261
      %p263 = scmp.ne.s32.totalorder %s255, %s257
      %p264 = scmp.eq.s32.totalorder %s32, 1
      %p265 = por %p263, %p264
      %p266 = scmp.ne.s32.totalorder %s257, %s258
      %p267 = scmp.eq.s32.totalorder %s32, 0
      %p268 = por %p266, %p267
      %p269 = scmp.ne.s32.totalorder %s257, %s258
      %p270 = scmp.eq.s32.totalorder %s33, 1
      %p271 = por %p269, %p270
      %p273 = scmp.ne.s32.totalorder %s258, %s272
      %p274 = scmp.eq.s32.totalorder %s33, 0
      %p275 = por %p273, %p274
      %s277 = sadd.s32 %s276, 1
      %p280 = scmp.eq.s32.totalorder %s27, 1
      %p281 = scmp.ne.s32.totalorder %s276, %s278
      %p282 = scmp.eq.s32.totalorder %s27, 0
      %p283 = por %p281, %p282
      %p284 = scmp.ne.s32.totalorder %s276, %s278
      %p285 = scmp.eq.s32.totalorder %s32, 1
      %p286 = por %p284, %p285
      %p287 = scmp.ne.s32.totalorder %s278, %s279
      %p288 = scmp.eq.s32.totalorder %s32, 0
      %p289 = por %p287, %p288
      %p290 = scmp.ne.s32.totalorder %s278, %s279
      %p291 = scmp.eq.s32.totalorder %s33, 1
      %p292 = por %p290, %p291
      %p294 = scmp.ne.s32.totalorder %s279, %s293
      %p295 = scmp.eq.s32.totalorder %s33, 0
      %p296 = por %p294, %p295
      %s298 = sadd.s32 %s297, 1
      %p301 = scmp.eq.s32.totalorder %s27, 1
      %p302 = scmp.ne.s32.totalorder %s297, %s299
      %p303 = scmp.eq.s32.totalorder %s27, 0
      %p304 = por %p302, %p303
      %p305 = scmp.ne.s32.totalorder %s297, %s299
      %p306 = scmp.eq.s32.totalorder %s32, 1
      %p307 = por %p305, %p306
      %p308 = scmp.ne.s32.totalorder %s299, %s300
      %p309 = scmp.eq.s32.totalorder %s32, 0
      %p310 = por %p308, %p309
      %p311 = scmp.ne.s32.totalorder %s299, %s300
      %p312 = scmp.eq.s32.totalorder %s33, 1
      %p313 = por %p311, %p312
      %p315 = scmp.ne.s32.totalorder %s300, %s314
      %p316 = scmp.eq.s32.totalorder %s33, 0
      %p317 = por %p315, %p316
      %s319 = sadd.s32 %s318, 1
      %p322 = scmp.eq.s32.totalorder %s27, 1
      %p323 = scmp.ne.s32.totalorder %s318, %s320
      %p324 = scmp.eq.s32.totalorder %s27, 0
      %p325 = por %p323, %p324
      %p326 = scmp.ne.s32.totalorder %s318, %s320
      %p327 = scmp.eq.s32.totalorder %s32, 1
      %p328 = por %p326, %p327
      %p329 = scmp.ne.s32.totalorder %s320, %s321
      %p330 = scmp.eq.s32.totalorder %s32, 0
      %p331 = por %p329, %p330
      %p332 = scmp.ne.s32.totalorder %s320, %s321
      %p333 = scmp.eq.s32.totalorder %s33, 1
      %p334 = por %p332, %p333
      %p336 = scmp.ne.s32.totalorder %s321, %s335
      %p337 = scmp.eq.s32.totalorder %s33, 0
      %p338 = por %p336, %p337
      %s340 = sadd.s32 %s339, 1
      %p343 = scmp.eq.s32.totalorder %s27, 1
      %p344 = scmp.ne.s32.totalorder %s339, %s341
      %p345 = scmp.eq.s32.totalorder %s27, 0
      %p346 = por %p344, %p345
      %p347 = scmp.ne.s32.totalorder %s339, %s341
      %p348 = scmp.eq.s32.totalorder %s32, 1
      %p349 = por %p347, %p348
      %p350 = scmp.ne.s32.totalorder %s341, %s342
      %p351 = scmp.eq.s32.totalorder %s32, 0
      %p352 = por %p350, %p351
      %p353 = scmp.ne.s32.totalorder %s341, %s342
      %p354 = scmp.eq.s32.totalorder %s33, 1
      %p355 = por %p353, %p354
      %p357 = scmp.ne.s32.totalorder %s342, %s356
      %p358 = scmp.eq.s32.totalorder %s33, 0
      %p359 = por %p357, %p358
      %s361 = sadd.s32 %s360, 1
      %p364 = scmp.eq.s32.totalorder %s27, 1
      %p365 = scmp.ne.s32.totalorder %s360, %s362
      %p366 = scmp.eq.s32.totalorder %s27, 0
      %p367 = por %p365, %p366
      %p368 = scmp.ne.s32.totalorder %s360, %s362
      %p369 = scmp.eq.s32.totalorder %s32, 1
      %p370 = por %p368, %p369
      %p371 = scmp.ne.s32.totalorder %s362, %s363
      %p372 = scmp.eq.s32.totalorder %s32, 0
      %p373 = por %p371, %p372
      %p374 = scmp.ne.s32.totalorder %s362, %s363
      %p375 = scmp.eq.s32.totalorder %s33, 1
      %p376 = por %p374, %p375
      %p378 = scmp.ne.s32.totalorder %s363, %s377
      %p379 = scmp.eq.s32.totalorder %s33, 0
      %p380 = por %p378, %p379
      %s382 = sadd.s32 %s381, 1
      %p385 = scmp.eq.s32.totalorder %s27, 1
      %p386 = scmp.ne.s32.totalorder %s381, %s383
      %p387 = scmp.eq.s32.totalorder %s27, 0
      %p388 = por %p386, %p387
      %p389 = scmp.ne.s32.totalorder %s381, %s383
      %p390 = scmp.eq.s32.totalorder %s32, 1
      %p391 = por %p389, %p390
      %p392 = scmp.ne.s32.totalorder %s383, %s384
      %p393 = scmp.eq.s32.totalorder %s32, 0
      %p394 = por %p392, %p393
      %p395 = scmp.ne.s32.totalorder %s383, %s384
      %p396 = scmp.eq.s32.totalorder %s33, 1
      %p397 = por %p395, %p396
      %p399 = scmp.ne.s32.totalorder %s384, %s398
      %p400 = scmp.eq.s32.totalorder %s33, 0
      %p401 = por %p399, %p400
      %s403 = sadd.s32 %s402, 1
      %p406 = scmp.eq.s32.totalorder %s27, 1
      %p407 = scmp.ne.s32.totalorder %s402, %s404
      %p408 = scmp.eq.s32.totalorder %s27, 0
      %p409 = por %p407, %p408
      %p410 = scmp.ne.s32.totalorder %s402, %s404
      %p411 = scmp.eq.s32.totalorder %s32, 1
      %p412 = por %p410, %p411
      %p413 = scmp.ne.s32.totalorder %s404, %s405
      %p414 = scmp.eq.s32.totalorder %s32, 0
      %p415 = por %p413, %p414
      %p416 = scmp.ne.s32.totalorder %s404, %s405
      %p417 = scmp.eq.s32.totalorder %s33, 1
      %p418 = por %p416, %p417
      %p420 = scmp.ne.s32.totalorder %s405, %s419
      %p421 = scmp.eq.s32.totalorder %s33, 0
      %p422 = por %p420, %p421
      %s423 = ssub.s32 %s27, %s34
      %p424 = scmp.eq.s32.totalorder %s423, 0
      %s426 = sadd.s32 %s425, 1
      %s427 = scalar_select %p424, %s425, %s426
      %p430 = pneg %p424
      %p431 = scmp.eq.s32.totalorder %s27, 1
      %p432 = por %p430, %p431
      %p433 = scmp.ne.s32.totalorder %s425, %s428
      %p434 = scmp.eq.s32.totalorder %s27, 0
      %p435 = por %p433, %p434
      %p436 = scmp.ne.s32.totalorder %s425, %s428
      %p437 = scmp.eq.s32.totalorder %s32, 1
      %p438 = por %p436, %p437
      %p439 = scmp.ne.s32.totalorder %s428, %s429
      %p440 = scmp.eq.s32.totalorder %s32, 0
      %p441 = por %p439, %p440
      %p442 = scmp.ne.s32.totalorder %s428, %s429
      %p443 = scmp.eq.s32.totalorder %s33, 1
      %p444 = por %p442, %p443
      %p446 = scmp.ne.s32.totalorder %s429, %s445
      %p447 = scmp.eq.s32.totalorder %s33, 0
      %p448 = por %p446, %p447
      %p449 = scmp.le.s32.totalorder 1, %s27
      %p450 = scmp.lt.s32.totalorder %s27, 3
      %p451 = pnand %p449, %p450
      %p452 = pneg %p451
      // Predicated region
      $region9: #{liner_ae_fwd.8} parent=5 // pred_check
        _
      $region10: #{liner_ae_fwd.8} parent=5 // pred_check_branch
        %454 = sbr.rel (%p451) target = $region12
      $region11: #{liner_ae_fwd.8} parent=5 // pred_region
        %s455 = ssub.s32 %s27, 1
        // Predicated region
        $region13: #{liner_ae_fwd.8} parent=11 // pred_check
          %p456 = pneg %p100
        $region14: #{liner_ae_fwd.8} parent=11 // pred_check_branch
          %458 = sbr.rel (%p456) target = $region16
        $region15: #{liner_ae_fwd.8} parent=11 // pred_region
          _
        $region16: #{liner_ae_fwd.8} parent=11 // pred_fallthru
          _
        // Predicated region
        $region17: #{liner_ae_fwd.8} parent=11 // pred_check
          %p459 = pneg %p121
        $region18: #{liner_ae_fwd.8} parent=11 // pred_check_branch
          %461 = sbr.rel (%p459) target = $region20
        $region19: #{liner_ae_fwd.8} parent=11 // pred_region
          %s463 = ssub.s32 16, 16
          %464 = vsyncadd [#allocation3], %s463
          %s466 = sshll.u32 [#allocation2], 4
          %s467 = int_to_ptr.vmem [resolvable:$true] %s466
          %469 = dma.hbm_to_vmem [thread:$0]  %s3, 16, %s467, [#allocation3]
        $region20: #{liner_ae_fwd.8} parent=11 // pred_fallthru
          _
        // Predicated region
        $region21: #{liner_ae_fwd.8} parent=11 // pred_check
          %p470 = pneg %p142
        $region22: #{liner_ae_fwd.8} parent=11 // pred_check_branch
          %472 = sbr.rel (%p470) target = $region24
        $region23: #{liner_ae_fwd.8} parent=11 // pred_region
          _
        $region24: #{liner_ae_fwd.8} parent=11 // pred_fallthru
          _
        // Predicated region
        $region25: #{liner_ae_fwd.8} parent=11 // pred_check
          %p473 = pneg %p163
        $region26: #{liner_ae_fwd.8} parent=11 // pred_check_branch
          %475 = sbr.rel (%p473) target = $region28
        $region27: #{liner_ae_fwd.8} parent=11 // pred_region
          %s477 = ssub.s32 16, 16
          %478 = vsyncadd [#allocation5], %s477
          %s480 = sshll.u32 [#allocation4], 4
          %s481 = int_to_ptr.vmem [resolvable:$true] %s480
          %483 = dma.hbm_to_vmem [thread:$0]  %s5, 16, %s481, [#allocation5]
        $region28: #{liner_ae_fwd.8} parent=11 // pred_fallthru
          _
        // Predicated region
        $region29: #{liner_ae_fwd.8} parent=11 // pred_check
          %p484 = pneg %p184
        $region30: #{liner_ae_fwd.8} parent=11 // pred_check_branch
          %486 = sbr.rel (%p484) target = $region32
        $region31: #{liner_ae_fwd.8} parent=11 // pred_region
          _
        $region32: #{liner_ae_fwd.8} parent=11 // pred_fallthru
          _
        // Predicated region
        $region33: #{liner_ae_fwd.8} parent=11 // pred_check
          %p487 = pneg %p205
        $region34: #{liner_ae_fwd.8} parent=11 // pred_check_branch
          %489 = sbr.rel (%p487) target = $region36
        $region35: #{liner_ae_fwd.8} parent=11 // pred_region
          _
        $region36: #{liner_ae_fwd.8} parent=11 // pred_fallthru
          _
        // Predicated region
        $region37: #{liner_ae_fwd.8} parent=11 // pred_check
          %p490 = pneg %p226
        $region38: #{liner_ae_fwd.8} parent=11 // pred_check_branch
          %492 = sbr.rel (%p490) target = $region40
        $region39: #{liner_ae_fwd.8} parent=11 // pred_region
          _
        $region40: #{liner_ae_fwd.8} parent=11 // pred_fallthru
          _
        // Predicated region
        $region41: #{liner_ae_fwd.8} parent=11 // pred_check
          %p493 = pneg %p247
        $region42: #{liner_ae_fwd.8} parent=11 // pred_check_branch
          %495 = sbr.rel (%p493) target = $region44
        $region43: #{liner_ae_fwd.8} parent=11 // pred_region
          %s497 = ssub.s32 16, 16
          %498 = vsyncadd [#allocation5], %s497
          %s500 = sshll.u32 [#allocation6], 4
          %s501 = int_to_ptr.vmem [resolvable:$true] %s500
          %503 = dma.hbm_to_vmem [thread:$0]  %s9, 16, %s501, [#allocation5]
        $region44: #{liner_ae_fwd.8} parent=11 // pred_fallthru
          _
        // Predicated region
        $region45: #{liner_ae_fwd.8} parent=11 // pred_check
          %p504 = pneg %p268
        $region46: #{liner_ae_fwd.8} parent=11 // pred_check_branch
          %506 = sbr.rel (%p504) target = $region48
        $region47: #{liner_ae_fwd.8} parent=11 // pred_region
          _
        $region48: #{liner_ae_fwd.8} parent=11 // pred_fallthru
          _
        // Predicated region
        $region49: #{liner_ae_fwd.8} parent=11 // pred_check
          %p507 = pneg %p289
        $region50: #{liner_ae_fwd.8} parent=11 // pred_check_branch
          %509 = sbr.rel (%p507) target = $region52
        $region51: #{liner_ae_fwd.8} parent=11 // pred_region
          %s511 = ssub.s32 16, 16
          %512 = vsyncadd [#allocation8], %s511
          %s514 = sshll.u32 [#allocation7], 4
          %s515 = int_to_ptr.vmem [resolvable:$true] %s514
          %517 = dma.hbm_to_vmem [thread:$0]  %s11, 16, %s515, [#allocation8]
        $region52: #{liner_ae_fwd.8} parent=11 // pred_fallthru
          _
        // Predicated region
        $region53: #{liner_ae_fwd.8} parent=11 // pred_check
          %p518 = pneg %p310
        $region54: #{liner_ae_fwd.8} parent=11 // pred_check_branch
          %520 = sbr.rel (%p518) target = $region56
        $region55: #{liner_ae_fwd.8} parent=11 // pred_region
          _
        $region56: #{liner_ae_fwd.8} parent=11 // pred_fallthru
          _
        // Predicated region
        $region57: #{liner_ae_fwd.8} parent=11 // pred_check
          %p521 = pneg %p331
        $region58: #{liner_ae_fwd.8} parent=11 // pred_check_branch
          %523 = sbr.rel (%p521) target = $region60
        $region59: #{liner_ae_fwd.8} parent=11 // pred_region
          _
        $region60: #{liner_ae_fwd.8} parent=11 // pred_fallthru
          _
        // Predicated region
        $region61: #{liner_ae_fwd.8} parent=11 // pred_check
          %p524 = pneg %p352
        $region62: #{liner_ae_fwd.8} parent=11 // pred_check_branch
          %526 = sbr.rel (%p524) target = $region64
        $region63: #{liner_ae_fwd.8} parent=11 // pred_region
          _
        $region64: #{liner_ae_fwd.8} parent=11 // pred_fallthru
          _
        // Predicated region
        $region65: #{liner_ae_fwd.8} parent=11 // pred_check
          %p527 = pneg %p373
        $region66: #{liner_ae_fwd.8} parent=11 // pred_check_branch
          %529 = sbr.rel (%p527) target = $region68
        $region67: #{liner_ae_fwd.8} parent=11 // pred_region
          %s531 = ssub.s32 16, 16
          %532 = vsyncadd [#allocation8], %s531
          %s534 = sshll.u32 [#allocation9], 4
          %s535 = int_to_ptr.vmem [resolvable:$true] %s534
          %537 = dma.hbm_to_vmem [thread:$0]  %s15, 16, %s535, [#allocation8]
        $region68: #{liner_ae_fwd.8} parent=11 // pred_fallthru
          _
        // Predicated region
        $region69: #{liner_ae_fwd.8} parent=11 // pred_check
          %p538 = pneg %p394
        $region70: #{liner_ae_fwd.8} parent=11 // pred_check_branch
          %540 = sbr.rel (%p538) target = $region72
        $region71: #{liner_ae_fwd.8} parent=11 // pred_region
          _
        $region72: #{liner_ae_fwd.8} parent=11 // pred_fallthru
          _
        // Predicated region
        $region73: #{liner_ae_fwd.8} parent=11 // pred_check
          %p541 = pneg %p415
        $region74: #{liner_ae_fwd.8} parent=11 // pred_check_branch
          %543 = sbr.rel (%p541) target = $region76
        $region75: #{liner_ae_fwd.8} parent=11 // pred_region
          _
        $region76: #{liner_ae_fwd.8} parent=11 // pred_fallthru
          _
      $region12: #{liner_ae_fwd.8} parent=5 // pred_fallthru
        _
      %p544 = scmp.lt.s32.totalorder %s27, 2
      // Predicated region
      $region77: #{liner_ae_fwd.8} parent=5 // pred_check
        %p545 = pneg %p544
      $region78: #{liner_ae_fwd.8} parent=5 // pred_check_branch
        %547 = sbr.rel (%p545) target = $region80
      $region79: #{liner_ae_fwd.8} parent=5 // pred_region
        // Predicated region
        $region81: #{liner_ae_fwd.8} parent=79 // pred_check
          %p548 = pneg %p47
        $region82: #{liner_ae_fwd.8} parent=79 // pred_check_branch
          %550 = sbr.rel (%p548) target = $region84
        $region83: #{liner_ae_fwd.8} parent=79 // pred_region
          %p551 = scmp.lt.s32.totalorder %s27, 1
          %s552 = scalar_select %p551, %s27, 1
          %s553 = smul.addr %s552, 8
          %s554 = scalar_lea.vmem %s0, %s553
        $region84: #{liner_ae_fwd.8} parent=79 // pred_fallthru
          _
        // Predicated region
        $region85: #{liner_ae_fwd.8} parent=79 // pred_check
          %p555 = pneg %p73
        $region86: #{liner_ae_fwd.8} parent=79 // pred_check_branch
          %557 = sbr.rel (%p555) target = $region88
        $region87: #{liner_ae_fwd.8} parent=79 // pred_region
          %p558 = scmp.lt.s32.totalorder %s27, 1
          %s559 = scalar_select %p558, %s27, 1
          %s560 = smul.addr %s559, 8
          %s561 = scalar_lea.vmem %s1, %s560
        $region88: #{liner_ae_fwd.8} parent=79 // pred_fallthru
          _
      $region80: #{liner_ae_fwd.8} parent=5 // pred_fallthru
        _
      %p562 = scmp.le.s32.totalorder 1, %s27
      %p563 = scmp.lt.s32.totalorder %s27, 3
      %p564 = pnand %p562, %p563
      %p565 = pneg %p564
      // Predicated region
      $region89: #{liner_ae_fwd.8} parent=5 // pred_check
        _
      $region90: #{liner_ae_fwd.8} parent=5 // pred_check_branch
        %567 = sbr.rel (%p564) target = $region92
      $region91: #{liner_ae_fwd.8} parent=5 // pred_region
        %s568 = ssub.s32 %s27, 1
        // Predicated region
        $region93: #{liner_ae_fwd.8} parent=91 // pred_check
          %p569 = pneg %p121
        $region94: #{liner_ae_fwd.8} parent=91 // pred_check_branch
          %571 = sbr.rel (%p569) target = $region96
        $region95: #{liner_ae_fwd.8} parent=91 // pred_region
          %572 = dma.done [#allocation3], 16
        $region96: #{liner_ae_fwd.8} parent=91 // pred_fallthru
          _
        // Predicated region
        $region97: #{liner_ae_fwd.8} parent=91 // pred_check
          %p573 = pneg %p163
        $region98: #{liner_ae_fwd.8} parent=91 // pred_check_branch
          %575 = sbr.rel (%p573) target = $region100
        $region99: #{liner_ae_fwd.8} parent=91 // pred_region
          %576 = dma.done [#allocation5], 16
        $region100: #{liner_ae_fwd.8} parent=91 // pred_fallthru
          _
        // Predicated region
        $region101: #{liner_ae_fwd.8} parent=91 // pred_check
          %p577 = pneg %p247
        $region102: #{liner_ae_fwd.8} parent=91 // pred_check_branch
          %579 = sbr.rel (%p577) target = $region104
        $region103: #{liner_ae_fwd.8} parent=91 // pred_region
          %580 = dma.done [#allocation5], 16
        $region104: #{liner_ae_fwd.8} parent=91 // pred_fallthru
          _
        // Predicated region
        $region105: #{liner_ae_fwd.8} parent=91 // pred_check
          %p581 = pneg %p289
        $region106: #{liner_ae_fwd.8} parent=91 // pred_check_branch
          %583 = sbr.rel (%p581) target = $region108
        $region107: #{liner_ae_fwd.8} parent=91 // pred_region
          %584 = dma.done [#allocation8], 16
        $region108: #{liner_ae_fwd.8} parent=91 // pred_fallthru
          _
        // Predicated region
        $region109: #{liner_ae_fwd.8} parent=91 // pred_check
          %p585 = pneg %p373
        $region110: #{liner_ae_fwd.8} parent=91 // pred_check_branch
          %587 = sbr.rel (%p585) target = $region112
        $region111: #{liner_ae_fwd.8} parent=91 // pred_region
          %588 = dma.done [#allocation8], 16
        $region112: #{liner_ae_fwd.8} parent=91 // pred_fallthru
          _
        %p589 = scmp.lt.s32.totalorder %s32, 1
        %s590 = scalar_select %p589, %s32, 1
        %s591 = smul.addr %s590, 8
        %s592 = scalar_lea.vmem %s0, %s591
        %p593 = pneg %p53
        %p594 = pneg %p50
        %p595 = scmp.lt.s32.totalorder %s32, 1
        %s596 = scalar_select %p595, %s32, 1
        %s597 = smul.addr %s596, 8
        %s598 = scalar_lea.vmem %s1, %s597
        %p599 = pneg %p79
        %p600 = pneg %p76
        %p601 = pneg %p100
        %p602 = pneg %p97
        %p603 = pneg %p121
        %p604 = pneg %p118
        %p605 = pneg %p142
        %p606 = pneg %p139
        %p607 = pneg %p163
        %p608 = pneg %p160
        %p609 = pneg %p184
        %p610 = pneg %p181
        %p611 = pneg %p205
        %p612 = pneg %p202
        %p613 = pneg %p226
        %p614 = pneg %p223
        %p615 = pneg %p247
        %p616 = pneg %p244
        %p617 = pneg %p268
        %p618 = pneg %p265
        %p619 = pneg %p289
        %p620 = pneg %p286
        %p621 = pneg %p310
        %p622 = pneg %p307
        %p623 = pneg %p331
        %p624 = pneg %p328
        %p625 = pneg %p352
        %p626 = pneg %p349
        %p627 = pneg %p373
        %p628 = pneg %p370
        %p629 = pneg %p394
        %p630 = pneg %p391
        %p631 = pneg %p415
        %p632 = pneg %p412
        %p633 = pneg %p441
        %p634 = pneg %p438
        %p635 = scmp.lt.s32.totalorder %s32, 1
        %s636 = scalar_select %p635, %s32, 1
        %s637 = smul.addr %s636, 8
        %s638 = scalar_lea.vmem %s18, %s637
        %p639 = scmp.lt.s32.totalorder %s32, 1
        %s640 = scalar_select %p639, %s32, 1
        %s641 = smul.addr %s640, 8
        %s642 = scalar_lea.vmem %s0, %s641
        %p643 = scmp.lt.s32.totalorder %s32, 1
        %s644 = scalar_select %p643, %s32, 1
        %s645 = smul.addr %s644, 8
        %s646 = scalar_lea.vmem %s1, %s645
        %p647 = scmp.lt.s32.totalorder %s32, 1
        %s648 = scalar_select %p647, %s32, 1
        %s649 = smul.addr %s648, 8
        %s650 = scalar_lea.vmem %s18, %s649
        %v651 = vld [vmem:[%s642] sm:$0xff]
        %v652 = vld [vmem:[%s646] sm:$0xff]
        %v653 = vld [vmem:[%s2] sm:$0xff]
        %v654 = vld [vmem:[%s2 + $0x8] sm:$0xff]
        %v655 = vld [vmem:[#allocation2] sm:$0x1]
        %v656 = vld [vmem:[%s4] sm:$0xff]
        %v657 = vld [vmem:[%s4 + $0x8] sm:$0xff]
        %v658 = vld [vmem:[#allocation4] sm:$0x1]
        %v660 = vlaneseq
        %v661 = vshrl.u32 %v660, 7
        %v662 = vsub.s32 0, %v661
        %v663 = vrot.slane %v655, %v662
        %vm665 = vcmask 130048
        %v667 = vsel %vm665, %v651, 0
        %669 = vmatprep.subr.mxu0 0.0
        %670 = vmatpush1.msra.mxu0 %v653
        %671 = vmatprep.subr.mxu0 0.0
        %672 = vmatpush1.msra.mxu0 %v654
        %673 = vmatprep.subr.mxu0 0.0
        %674 = vmatpush1.msra.mxu0 0.0
        %675 = vmatprep.subr.mxu0 0.0
        %676 = vmatpush1.msra.mxu0 0.0
        %677 = vmatprep.subr.mxu0 0.0
        %678 = vmatpush1.msra.mxu0 0.0
        %679 = vmatprep.subr.mxu0 0.0
        %680 = vmatpush1.msra.mxu0 0.0
        %681 = vmatprep.subr.mxu0 0.0
        %682 = vmatpush1.msra.mxu0 0.0
        %683 = vmatprep.subr.mxu0 0.0
        %684 = vmatpush1.msra.mxu0 0.0
        %685 = vmatprep.subr.mxu0 0.0
        %686 = vmatpush1.msra.mxu0 0.0
        %687 = vmatprep.subr.mxu0 0.0
        %688 = vmatpush1.msra.mxu0 0.0
        %689 = vmatprep.subr.mxu0 0.0
        %690 = vmatpush1.msra.mxu0 0.0
        %691 = vmatprep.subr.mxu0 0.0
        %692 = vmatpush1.msra.mxu0 0.0
        %693 = vmatprep.subr.mxu0 0.0
        %694 = vmatpush1.msra.mxu0 0.0
        %695 = vmatprep.subr.mxu0 0.0
        %696 = vmatpush1.msra.mxu0 0.0
        %697 = vmatprep.subr.mxu0 0.0
        %698 = vmatpush1.msra.mxu0 0.0
        %699 = vmatprep.subr.mxu0 0.0
        %700 = vmatpush1.msra.mxu0 0.0
        %701 = vmatprep.subr.mxu0 0.0
        %702 = vmatpush1.msra.mxu0 0.0
        %703 = vmatprep.subr.mxu0 0.0
        %704 = vmatpush1.msra.mxu0 0.0
        %705 = vmatprep.subr.mxu0 0.0
        %706 = vmatpush1.msra.mxu0 0.0
        %707 = vmatprep.subr.mxu0 0.0
        %708 = vmatpush1.msra.mxu0 0.0
        %709 = vmatprep.subr.mxu0 0.0
        %710 = vmatpush1.msra.mxu0 0.0
        %711 = vmatprep.subr.mxu0 0.0
        %712 = vmatpush1.msra.mxu0 0.0
        %713 = vmatprep.subr.mxu0 0.0
        %714 = vmatpush1.msra.mxu0 0.0
        %715 = vmatprep.subr.mxu0 0.0
        %716 = vmatpush1.msra.mxu0 0.0
        %717 = vmatprep.subr.mxu0 0.0
        %718 = vmatpush1.msra.mxu0 0.0
        %719 = vmatprep.subr.mxu0 0.0
        %720 = vmatpush1.msra.mxu0 0.0
        %721 = vmatprep.subr.mxu0 0.0
        %722 = vmatpush1.msra.mxu0 0.0
        %723 = vmatprep.subr.mxu0 0.0
        %724 = vmatpush1.msra.mxu0 0.0
        %725 = vmatprep.subr.mxu0 0.0
        %726 = vmatpush1.msra.mxu0 0.0
        %727 = vmatprep.subr.mxu0 0.0
        %728 = vmatpush1.msra.mxu0 0.0
        %729 = vmatprep.subr.mxu0 0.0
        %730 = vmatpush1.msra.mxu0 0.0
        %731 = vmatprep.subr.mxu0 0.0
        %732 = vmatpush1.msra.mxu0 0.0
        %733 = vmatprep.mubr.f32.mxu0 0.0
        %734 = vmatmul.mubr.f32.gmra.mrb[0].mxu0 %v667
        %v735 = vpop.f32.mrb[0].mxu0
        %v736 = vadd.f32 %v663, %v735
        %v737 = vpop.f32.mrb[0].mxu0
        %738 = vdwg.mxu0
        %740 = vrot.lane.b32.xlu0 %v736, 112
        %v741 = vpop.permute.xlu0 %740
        %vm742 = vcmask 64512
        %v743 = vsel %vm742, %v736, 0
        %v745 = vsel %vm742, %v741, 0
        %747 = vmatprep.subr.mxu0 0.0
        %748 = vmatpush1.xpose.msra.mxu0 %v745
        %749 = vmatprep.subr.mxu0 0.0
        %750 = vmatpush1.xpose.msra.mxu0 0.0
        %751 = vmatprep.subr.mxu0 0.0
        %752 = vmatpush1.xpose.msra.mxu0 0.0
        %753 = vmatprep.subr.mxu0 0.0
        %754 = vmatpush1.xpose.msra.mxu0 0.0
        %755 = vmatprep.subr.mxu0 0.0
        %756 = vmatpush1.xpose.msra.mxu0 0.0
        %757 = vmatprep.subr.mxu0 0.0
        %758 = vmatpush1.xpose.msra.mxu0 0.0
        %759 = vmatprep.subr.mxu0 0.0
        %760 = vmatpush1.xpose.msra.mxu0 0.0
        %761 = vmatprep.subr.mxu0 0.0
        %762 = vmatpush1.xpose.msra.mxu0 0.0
        %763 = vmatprep.subr.mxu0 0.0
        %764 = vmatpush1.xpose.msra.mxu0 0.0
        %765 = vmatprep.subr.mxu0 0.0
        %766 = vmatpush1.xpose.msra.mxu0 0.0
        %767 = vmatprep.subr.mxu0 0.0
        %768 = vmatpush1.xpose.msra.mxu0 0.0
        %769 = vmatprep.subr.mxu0 0.0
        %770 = vmatpush1.xpose.msra.mxu0 0.0
        %771 = vmatprep.subr.mxu0 0.0
        %772 = vmatpush1.xpose.msra.mxu0 0.0
        %773 = vmatprep.subr.mxu0 0.0
        %774 = vmatpush1.xpose.msra.mxu0 0.0
        %775 = vmatprep.subr.mxu0 0.0
        %776 = vmatpush1.xpose.msra.mxu0 0.0
        %777 = vmatprep.subr.mxu0 0.0
        %778 = vmatpush1.xpose.msra.mxu0 0.0
        %779 = vmatprep.subr.mxu0 0.0
        %780 = vmatpush1.xpose.msra.mxu0 0.0
        %781 = vmatprep.subr.mxu0 0.0
        %782 = vmatpush1.xpose.msra.mxu0 0.0
        %783 = vmatprep.subr.mxu0 0.0
        %784 = vmatpush1.xpose.msra.mxu0 0.0
        %785 = vmatprep.subr.mxu0 0.0
        %786 = vmatpush1.xpose.msra.mxu0 0.0
        %787 = vmatprep.subr.mxu0 0.0
        %788 = vmatpush1.xpose.msra.mxu0 0.0
        %789 = vmatprep.subr.mxu0 0.0
        %790 = vmatpush1.xpose.msra.mxu0 0.0
        %791 = vmatprep.subr.mxu0 0.0
        %792 = vmatpush1.xpose.msra.mxu0 0.0
        %793 = vmatprep.subr.mxu0 0.0
        %794 = vmatpush1.xpose.msra.mxu0 0.0
        %795 = vmatprep.subr.mxu0 0.0
        %796 = vmatpush1.xpose.msra.mxu0 0.0
        %797 = vmatprep.subr.mxu0 0.0
        %798 = vmatpush1.xpose.msra.mxu0 0.0
        %799 = vmatprep.subr.mxu0 0.0
        %800 = vmatpush1.xpose.msra.mxu0 0.0
        %801 = vmatprep.subr.mxu0 0.0
        %802 = vmatpush1.xpose.msra.mxu0 0.0
        %803 = vmatprep.subr.mxu0 0.0
        %804 = vmatpush1.xpose.msra.mxu0 0.0
        %805 = vmatprep.subr.mxu0 0.0
        %806 = vmatpush1.xpose.msra.mxu0 0.0
        %807 = vmatprep.subr.mxu0 0.0
        %808 = vmatpush1.xpose.msra.mxu0 0.0
        %809 = vmatprep.subr.mxu0 0.0
        %810 = vmatpush1.xpose.msra.mxu0 0.0
        %811 = vmatprep.mubr.f32.mxu0 0.0
        %812 = vmatmul.mubr.f32.gmra.mrb[0].mxu0 %v743
        %v813 = vpop.f32.mrb[0].mxu0
        %v814 = vadd.f32 0.0, %v813
        %v815 = vpop.f32.mrb[0].mxu0
        %816 = vdwg.mxu0
        %v817 = vmul.f32 %v814, 0.35355338
        %v818 = vsel %vm742, %v817, -inf
        %819 = vmax.xlane.f32.xlu0 %v818
        %v820 = vpop.xlane.xlu0 %819
        %v821 = vsub.f32 %v817, %v820
        %v822 = vmul.f32 %v821, 1.442695
        %v823 = vpow.pop %v822
        %v824 = vsel %vm742, %v823, 0.0
        %825 = vadd.xlane.f32.xlu0 %v824
        %v826 = vpop.xlane.xlu0 %825
        %v827 = vrcp.pop %v826
        %v828 = vmul.f32 %v823, %v827
        %829 = vrot.lane.b32.xlu0 %v736, 96
        %v830 = vpop.permute.xlu0 %829
        %v833 = vsel %vm742, %v828, 0
        %835 = vmatprep.subr.mxu0 0.0
        %836 = vmatpush1.msra.mxu0 %v830
        %837 = vmatprep.subr.mxu0 0.0
        %838 = vmatpush1.msra.mxu0 0.0
        %839 = vmatprep.subr.mxu0 0.0
        %840 = vmatpush1.msra.mxu0 0.0
        %841 = vmatprep.subr.mxu0 0.0
        %842 = vmatpush1.msra.mxu0 0.0
        %843 = vmatprep.subr.mxu0 0.0
        %844 = vmatpush1.msra.mxu0 0.0
        %845 = vmatprep.subr.mxu0 0.0
        %846 = vmatpush1.msra.mxu0 0.0
        %847 = vmatprep.subr.mxu0 0.0
        %848 = vmatpush1.msra.mxu0 0.0
        %849 = vmatprep.subr.mxu0 0.0
        %850 = vmatpush1.msra.mxu0 0.0
        %851 = vmatprep.subr.mxu0 0.0
        %852 = vmatpush1.msra.mxu0 0.0
        %853 = vmatprep.subr.mxu0 0.0
        %854 = vmatpush1.msra.mxu0 0.0
        %855 = vmatprep.subr.mxu0 0.0
        %856 = vmatpush1.msra.mxu0 0.0
        %857 = vmatprep.subr.mxu0 0.0
        %858 = vmatpush1.msra.mxu0 0.0
        %859 = vmatprep.subr.mxu0 0.0
        %860 = vmatpush1.msra.mxu0 0.0
        %861 = vmatprep.subr.mxu0 0.0
        %862 = vmatpush1.msra.mxu0 0.0
        %863 = vmatprep.subr.mxu0 0.0
        %864 = vmatpush1.msra.mxu0 0.0
        %865 = vmatprep.subr.mxu0 0.0
        %866 = vmatpush1.msra.mxu0 0.0
        %867 = vmatprep.subr.mxu0 0.0
        %868 = vmatpush1.msra.mxu0 0.0
        %869 = vmatprep.subr.mxu0 0.0
        %870 = vmatpush1.msra.mxu0 0.0
        %871 = vmatprep.subr.mxu0 0.0
        %872 = vmatpush1.msra.mxu0 0.0
        %873 = vmatprep.subr.mxu0 0.0
        %874 = vmatpush1.msra.mxu0 0.0
        %875 = vmatprep.subr.mxu0 0.0
        %876 = vmatpush1.msra.mxu0 0.0
        %877 = vmatprep.subr.mxu0 0.0
        %878 = vmatpush1.msra.mxu0 0.0
        %879 = vmatprep.subr.mxu0 0.0
        %880 = vmatpush1.msra.mxu0 0.0
        %881 = vmatprep.subr.mxu0 0.0
        %882 = vmatpush1.msra.mxu0 0.0
        %883 = vmatprep.subr.mxu0 0.0
        %884 = vmatpush1.msra.mxu0 0.0
        %885 = vmatprep.subr.mxu0 0.0
        %886 = vmatpush1.msra.mxu0 0.0
        %887 = vmatprep.subr.mxu0 0.0
        %888 = vmatpush1.msra.mxu0 0.0
        %889 = vmatprep.subr.mxu0 0.0
        %890 = vmatpush1.msra.mxu0 0.0
        %891 = vmatprep.subr.mxu0 0.0
        %892 = vmatpush1.msra.mxu0 0.0
        %893 = vmatprep.subr.mxu0 0.0
        %894 = vmatpush1.msra.mxu0 0.0
        %895 = vmatprep.subr.mxu0 0.0
        %896 = vmatpush1.msra.mxu0 0.0
        %897 = vmatprep.subr.mxu0 0.0
        %898 = vmatpush1.msra.mxu0 0.0
        %899 = vmatprep.mubr.f32.mxu0 0.0
        %900 = vmatmul.mubr.f32.gmra.mrb[0].mxu0 %v833
        %v901 = vpop.f32.mrb[0].mxu0
        %v902 = vadd.f32 0.0, %v901
        %v903 = vpop.f32.mrb[0].mxu0
        %904 = vdwg.mxu0
        %905 = vrot.lane.b32.xlu0 %v736, 120
        %v906 = vpop.permute.xlu0 %905
        %907 = vrot.lane.b32.xlu0 %v736, 104
        %v908 = vpop.permute.xlu0 %907
        %v909 = vsel %vm742, %v906, 0
        %v911 = vsel %vm742, %v908, 0
        %913 = vmatprep.subr.mxu0 0.0
        %914 = vmatpush1.xpose.msra.mxu0 %v911
        %915 = vmatprep.subr.mxu0 0.0
        %916 = vmatpush1.xpose.msra.mxu0 0.0
        %917 = vmatprep.subr.mxu0 0.0
        %918 = vmatpush1.xpose.msra.mxu0 0.0
        %919 = vmatprep.subr.mxu0 0.0
        %920 = vmatpush1.xpose.msra.mxu0 0.0
        %921 = vmatprep.subr.mxu0 0.0
        %922 = vmatpush1.xpose.msra.mxu0 0.0
        %923 = vmatprep.subr.mxu0 0.0
        %924 = vmatpush1.xpose.msra.mxu0 0.0
        %925 = vmatprep.subr.mxu0 0.0
        %926 = vmatpush1.xpose.msra.mxu0 0.0
        %927 = vmatprep.subr.mxu0 0.0
        %928 = vmatpush1.xpose.msra.mxu0 0.0
        %929 = vmatprep.subr.mxu0 0.0
        %930 = vmatpush1.xpose.msra.mxu0 0.0
        %931 = vmatprep.subr.mxu0 0.0
        %932 = vmatpush1.xpose.msra.mxu0 0.0
        %933 = vmatprep.subr.mxu0 0.0
        %934 = vmatpush1.xpose.msra.mxu0 0.0
        %935 = vmatprep.subr.mxu0 0.0
        %936 = vmatpush1.xpose.msra.mxu0 0.0
        %937 = vmatprep.subr.mxu0 0.0
        %938 = vmatpush1.xpose.msra.mxu0 0.0
        %939 = vmatprep.subr.mxu0 0.0
        %940 = vmatpush1.xpose.msra.mxu0 0.0
        %941 = vmatprep.subr.mxu0 0.0
        %942 = vmatpush1.xpose.msra.mxu0 0.0
        %943 = vmatprep.subr.mxu0 0.0
        %944 = vmatpush1.xpose.msra.mxu0 0.0
        %945 = vmatprep.subr.mxu0 0.0
        %946 = vmatpush1.xpose.msra.mxu0 0.0
        %947 = vmatprep.subr.mxu0 0.0
        %948 = vmatpush1.xpose.msra.mxu0 0.0
        %949 = vmatprep.subr.mxu0 0.0
        %950 = vmatpush1.xpose.msra.mxu0 0.0
        %951 = vmatprep.subr.mxu0 0.0
        %952 = vmatpush1.xpose.msra.mxu0 0.0
        %953 = vmatprep.subr.mxu0 0.0
        %954 = vmatpush1.xpose.msra.mxu0 0.0
        %955 = vmatprep.subr.mxu0 0.0
        %956 = vmatpush1.xpose.msra.mxu0 0.0
        %957 = vmatprep.subr.mxu0 0.0
        %958 = vmatpush1.xpose.msra.mxu0 0.0
        %959 = vmatprep.subr.mxu0 0.0
        %960 = vmatpush1.xpose.msra.mxu0 0.0
        %961 = vmatprep.subr.mxu0 0.0
        %962 = vmatpush1.xpose.msra.mxu0 0.0
        %963 = vmatprep.subr.mxu0 0.0
        %964 = vmatpush1.xpose.msra.mxu0 0.0
        %965 = vmatprep.subr.mxu0 0.0
        %966 = vmatpush1.xpose.msra.mxu0 0.0
        %967 = vmatprep.subr.mxu0 0.0
        %968 = vmatpush1.xpose.msra.mxu0 0.0
        %969 = vmatprep.subr.mxu0 0.0
        %970 = vmatpush1.xpose.msra.mxu0 0.0
        %971 = vmatprep.subr.mxu0 0.0
        %972 = vmatpush1.xpose.msra.mxu0 0.0
        %973 = vmatprep.subr.mxu0 0.0
        %974 = vmatpush1.xpose.msra.mxu0 0.0
        %975 = vmatprep.subr.mxu0 0.0
        %976 = vmatpush1.xpose.msra.mxu0 0.0
        %977 = vmatprep.mubr.f32.mxu0 0.0
        %978 = vmatmul.mubr.f32.gmra.mrb[0].mxu0 %v909
        %v979 = vpop.f32.mrb[0].mxu0
        %v980 = vadd.f32 0.0, %v979
        %v981 = vpop.f32.mrb[0].mxu0
        %982 = vdwg.mxu0
        %v983 = vmul.f32 %v980, 0.35355338
        %v984 = vsel %vm742, %v983, -inf
        %985 = vmax.xlane.f32.xlu0 %v984
        %v986 = vpop.xlane.xlu0 %985
        %v987 = vsub.f32 %v983, %v986
        %v988 = vmul.f32 %v987, 1.442695
        %v989 = vpow.pop %v988
        %v990 = vsel %vm742, %v989, 0.0
        %991 = vadd.xlane.f32.xlu0 %v990
        %v992 = vpop.xlane.xlu0 %991
        %v993 = vrcp.pop %v992
        %v994 = vmul.f32 %v989, %v993
        %995 = vrot.lane.b32.xlu0 %v736, 88
        %v996 = vpop.permute.xlu0 %995
        %v999 = vsel %vm742, %v994, 0
        %1001 = vmatprep.subr.mxu0 0.0
        %1002 = vmatpush1.msra.mxu0 %v996
        %1003 = vmatprep.subr.mxu0 0.0
        %1004 = vmatpush1.msra.mxu0 0.0
        %1005 = vmatprep.subr.mxu0 0.0
        %1006 = vmatpush1.msra.mxu0 0.0
        %1007 = vmatprep.subr.mxu0 0.0
        %1008 = vmatpush1.msra.mxu0 0.0
        %1009 = vmatprep.subr.mxu0 0.0
        %1010 = vmatpush1.msra.mxu0 0.0
        %1011 = vmatprep.subr.mxu0 0.0
        %1012 = vmatpush1.msra.mxu0 0.0
        %1013 = vmatprep.subr.mxu0 0.0
        %1014 = vmatpush1.msra.mxu0 0.0
        %1015 = vmatprep.subr.mxu0 0.0
        %1016 = vmatpush1.msra.mxu0 0.0
        %1017 = vmatprep.subr.mxu0 0.0
        %1018 = vmatpush1.msra.mxu0 0.0
        %1019 = vmatprep.subr.mxu0 0.0
        %1020 = vmatpush1.msra.mxu0 0.0
        %1021 = vmatprep.subr.mxu0 0.0
        %1022 = vmatpush1.msra.mxu0 0.0
        %1023 = vmatprep.subr.mxu0 0.0
        %1024 = vmatpush1.msra.mxu0 0.0
        %1025 = vmatprep.subr.mxu0 0.0
        %1026 = vmatpush1.msra.mxu0 0.0
        %1027 = vmatprep.subr.mxu0 0.0
        %1028 = vmatpush1.msra.mxu0 0.0
        %1029 = vmatprep.subr.mxu0 0.0
        %1030 = vmatpush1.msra.mxu0 0.0
        %1031 = vmatprep.subr.mxu0 0.0
        %1032 = vmatpush1.msra.mxu0 0.0
        %1033 = vmatprep.subr.mxu0 0.0
        %1034 = vmatpush1.msra.mxu0 0.0
        %1035 = vmatprep.subr.mxu0 0.0
        %1036 = vmatpush1.msra.mxu0 0.0
        %1037 = vmatprep.subr.mxu0 0.0
        %1038 = vmatpush1.msra.mxu0 0.0
        %1039 = vmatprep.subr.mxu0 0.0
        %1040 = vmatpush1.msra.mxu0 0.0
        %1041 = vmatprep.subr.mxu0 0.0
        %1042 = vmatpush1.msra.mxu0 0.0
        %1043 = vmatprep.subr.mxu0 0.0
        %1044 = vmatpush1.msra.mxu0 0.0
        %1045 = vmatprep.subr.mxu0 0.0
        %1046 = vmatpush1.msra.mxu0 0.0
        %1047 = vmatprep.subr.mxu0 0.0
        %1048 = vmatpush1.msra.mxu0 0.0
        %1049 = vmatprep.subr.mxu0 0.0
        %1050 = vmatpush1.msra.mxu0 0.0
        %1051 = vmatprep.subr.mxu0 0.0
        %1052 = vmatpush1.msra.mxu0 0.0
        %1053 = vmatprep.subr.mxu0 0.0
        %1054 = vmatpush1.msra.mxu0 0.0
        %1055 = vmatprep.subr.mxu0 0.0
        %1056 = vmatpush1.msra.mxu0 0.0
        %1057 = vmatprep.subr.mxu0 0.0
        %1058 = vmatpush1.msra.mxu0 0.0
        %1059 = vmatprep.subr.mxu0 0.0
        %1060 = vmatpush1.msra.mxu0 0.0
        %1061 = vmatprep.subr.mxu0 0.0
        %1062 = vmatpush1.msra.mxu0 0.0
        %1063 = vmatprep.subr.mxu0 0.0
        %1064 = vmatpush1.msra.mxu0 0.0
        %1065 = vmatprep.mubr.f32.mxu0 0.0
        %1066 = vmatmul.mubr.f32.gmra.mrb[0].mxu0 %v999
        %v1067 = vpop.f32.mrb[0].mxu0
        %v1068 = vadd.f32 0.0, %v1067
        %v1069 = vpop.f32.mrb[0].mxu0
        %1070 = vdwg.mxu0
        %v1072 = vsel %vm742, %v1068, 0
        %1074 = vmatprep.subr.mxu0 0.0
        %1075 = vmatpush1.msra.mxu0 %v657
        %1076 = vmatprep.subr.mxu0 0.0
        %1077 = vmatpush1.msra.mxu0 0.0
        %1078 = vmatprep.subr.mxu0 0.0
        %1079 = vmatpush1.msra.mxu0 0.0
        %1080 = vmatprep.subr.mxu0 0.0
        %1081 = vmatpush1.msra.mxu0 0.0
        %1082 = vmatprep.subr.mxu0 0.0
        %1083 = vmatpush1.msra.mxu0 0.0
        %1084 = vmatprep.subr.mxu0 0.0
        %1085 = vmatpush1.msra.mxu0 0.0
        %1086 = vmatprep.subr.mxu0 0.0
        %1087 = vmatpush1.msra.mxu0 0.0
        %1088 = vmatprep.subr.mxu0 0.0
        %1089 = vmatpush1.msra.mxu0 0.0
        %1090 = vmatprep.subr.mxu0 0.0
        %1091 = vmatpush1.msra.mxu0 0.0
        %1092 = vmatprep.subr.mxu0 0.0
        %1093 = vmatpush1.msra.mxu0 0.0
        %1094 = vmatprep.subr.mxu0 0.0
        %1095 = vmatpush1.msra.mxu0 0.0
        %1096 = vmatprep.subr.mxu0 0.0
        %1097 = vmatpush1.msra.mxu0 0.0
        %1098 = vmatprep.subr.mxu0 0.0
        %1099 = vmatpush1.msra.mxu0 0.0
        %1100 = vmatprep.subr.mxu0 0.0
        %1101 = vmatpush1.msra.mxu0 0.0
        %1102 = vmatprep.subr.mxu0 0.0
        %1103 = vmatpush1.msra.mxu0 0.0
        %1104 = vmatprep.subr.mxu0 0.0
        %1105 = vmatpush1.msra.mxu0 0.0
        %1106 = vmatprep.subr.mxu0 0.0
        %1107 = vmatpush1.msra.mxu0 0.0
        %1108 = vmatprep.subr.mxu0 0.0
        %1109 = vmatpush1.msra.mxu0 0.0
        %1110 = vmatprep.subr.mxu0 0.0
        %1111 = vmatpush1.msra.mxu0 0.0
        %1112 = vmatprep.subr.mxu0 0.0
        %1113 = vmatpush1.msra.mxu0 0.0
        %1114 = vmatprep.subr.mxu0 0.0
        %1115 = vmatpush1.msra.mxu0 0.0
        %1116 = vmatprep.subr.mxu0 0.0
        %1117 = vmatpush1.msra.mxu0 0.0
        %1118 = vmatprep.subr.mxu0 0.0
        %1119 = vmatpush1.msra.mxu0 0.0
        %1120 = vmatprep.subr.mxu0 0.0
        %1121 = vmatpush1.msra.mxu0 0.0
        %1122 = vmatprep.subr.mxu0 0.0
        %1123 = vmatpush1.msra.mxu0 0.0
        %1124 = vmatprep.subr.mxu0 0.0
        %1125 = vmatpush1.msra.mxu0 0.0
        %1126 = vmatprep.subr.mxu0 0.0
        %1127 = vmatpush1.msra.mxu0 0.0
        %1128 = vmatprep.subr.mxu0 0.0
        %1129 = vmatpush1.msra.mxu0 0.0
        %1130 = vmatprep.subr.mxu0 0.0
        %1131 = vmatpush1.msra.mxu0 0.0
        %1132 = vmatprep.subr.mxu0 0.0
        %1133 = vmatpush1.msra.mxu0 0.0
        %1134 = vmatprep.subr.mxu0 0.0
        %1135 = vmatpush1.msra.mxu0 0.0
        %1136 = vmatprep.subr.mxu0 0.0
        %1137 = vmatpush1.msra.mxu0 0.0
        %1138 = vmatprep.mubr.f32.mxu0 0.0
        %1139 = vmatmul.mubr.f32.gmra.mrb[0].mxu0 %v1072
        %v1140 = vpop.f32.mrb[0].mxu0
        %v1141 = vadd.f32 0.0, %v1140
        %v1142 = vpop.f32.mrb[0].mxu0
        %1143 = vdwg.mxu0
        %v1145 = vsel %vm742, %v902, 0
        %1147 = vmatprep.subr.mxu0 0.0
        %1148 = vmatpush1.msra.mxu0 %v656
        %1149 = vmatprep.subr.mxu0 0.0
        %1150 = vmatpush1.msra.mxu0 0.0
        %1151 = vmatprep.subr.mxu0 0.0
        %1152 = vmatpush1.msra.mxu0 0.0
        %1153 = vmatprep.subr.mxu0 0.0
        %1154 = vmatpush1.msra.mxu0 0.0
        %1155 = vmatprep.subr.mxu0 0.0
        %1156 = vmatpush1.msra.mxu0 0.0
        %1157 = vmatprep.subr.mxu0 0.0
        %1158 = vmatpush1.msra.mxu0 0.0
        %1159 = vmatprep.subr.mxu0 0.0
        %1160 = vmatpush1.msra.mxu0 0.0
        %1161 = vmatprep.subr.mxu0 0.0
        %1162 = vmatpush1.msra.mxu0 0.0
        %1163 = vmatprep.subr.mxu0 0.0
        %1164 = vmatpush1.msra.mxu0 0.0
        %1165 = vmatprep.subr.mxu0 0.0
        %1166 = vmatpush1.msra.mxu0 0.0
        %1167 = vmatprep.subr.mxu0 0.0
        %1168 = vmatpush1.msra.mxu0 0.0
        %1169 = vmatprep.subr.mxu0 0.0
        %1170 = vmatpush1.msra.mxu0 0.0
        %1171 = vmatprep.subr.mxu0 0.0
        %1172 = vmatpush1.msra.mxu0 0.0
        %1173 = vmatprep.subr.mxu0 0.0
        %1174 = vmatpush1.msra.mxu0 0.0
        %1175 = vmatprep.subr.mxu0 0.0
        %1176 = vmatpush1.msra.mxu0 0.0
        %1177 = vmatprep.subr.mxu0 0.0
        %1178 = vmatpush1.msra.mxu0 0.0
        %1179 = vmatprep.subr.mxu0 0.0
        %1180 = vmatpush1.msra.mxu0 0.0
        %1181 = vmatprep.subr.mxu0 0.0
        %1182 = vmatpush1.msra.mxu0 0.0
        %1183 = vmatprep.subr.mxu0 0.0
        %1184 = vmatpush1.msra.mxu0 0.0
        %1185 = vmatprep.subr.mxu0 0.0
        %1186 = vmatpush1.msra.mxu0 0.0
        %1187 = vmatprep.subr.mxu0 0.0
        %1188 = vmatpush1.msra.mxu0 0.0
        %1189 = vmatprep.subr.mxu0 0.0
        %1190 = vmatpush1.msra.mxu0 0.0
        %1191 = vmatprep.subr.mxu0 0.0
        %1192 = vmatpush1.msra.mxu0 0.0
        %1193 = vmatprep.subr.mxu0 0.0
        %1194 = vmatpush1.msra.mxu0 0.0
        %1195 = vmatprep.subr.mxu0 0.0
        %1196 = vmatpush1.msra.mxu0 0.0
        %1197 = vmatprep.subr.mxu0 0.0
        %1198 = vmatpush1.msra.mxu0 0.0
        %1199 = vmatprep.subr.mxu0 0.0
        %1200 = vmatpush1.msra.mxu0 0.0
        %1201 = vmatprep.subr.mxu0 0.0
        %1202 = vmatpush1.msra.mxu0 0.0
        %1203 = vmatprep.subr.mxu0 0.0
        %1204 = vmatpush1.msra.mxu0 0.0
        %1205 = vmatprep.subr.mxu0 0.0
        %1206 = vmatpush1.msra.mxu0 0.0
        %1207 = vmatprep.subr.mxu0 0.0
        %1208 = vmatpush1.msra.mxu0 0.0
        %1209 = vmatprep.subr.mxu0 0.0
        %1210 = vmatpush1.msra.mxu0 0.0
        %1211 = vmatprep.mubr.f32.mxu0 0.0
        %1212 = vmatmul.mubr.f32.gmra.mrb[0].mxu0 %v1145
        %v1213 = vpop.f32.mrb[0].mxu0
        %v1214 = vadd.f32 %v1141, %v1213
        %v1215 = vpop.f32.mrb[0].mxu0
        %1216 = vdwg.mxu0
        %v1218 = vlaneseq
        %v1219 = vshrl.u32 %v1218, 7
        %v1220 = vsub.s32 0, %v1219
        %v1221 = vrot.slane %v658, %v1220
        %v1223 = vadd.f32 %v1214, %v1221
        %v1224 = vadd.f32 %v651, %v1223
        %v1225 = vld [vmem:[%s6] sm:$0xff]
        %v1226 = vld [vmem:[%s7] sm:$0xff]
        %v1227 = vsel %vm665, %v1224, 0.0
        %1228 = vadd.xlane.f32.xlu0 %v1227
        %v1229 = vpop.xlane.xlu0 %1228
        %v1230 = vrot.slane %v1229, 4
        %v1231 = vadd.f32 %v1229, %v1230
        %v1232 = vrot.slane %v1231, 2
        %v1233 = vadd.f32 %v1231, %v1232
        %v1234 = vrot.slane %v1233, 1
        %v1235 = vadd.f32 %v1233, %v1234
        %s1236 = vtos %v1235
        %v1237 = vrcp.pop 128.0
        %s1238 = vtos %v1237
        %s1239 = smul.f32 %s1236, %s1238
        %v1240 = vstv %s1239
        %v1241 = vsub.f32 %v1224, %v1240
        %v1242 = vmul.f32 %v1241, %v1241
        %v1243 = vsel %vm665, %v1242, 0.0
        %1244 = vadd.xlane.f32.xlu0 %v1243
        %v1245 = vpop.xlane.xlu0 %1244
        %v1246 = vrot.slane %v1245, 4
        %v1247 = vadd.f32 %v1245, %v1246
        %v1248 = vrot.slane %v1247, 2
        %v1249 = vadd.f32 %v1247, %v1248
        %v1250 = vrot.slane %v1249, 1
        %v1251 = vadd.f32 %v1249, %v1250
        %s1252 = vtos %v1251
        %v1253 = vrcp.pop 128.0
        %s1254 = vtos %v1253
        %s1255 = smul.f32 %s1252, %s1254
        %s1256 = sadd.f32 %s1255, 1e-05
        %v1257 = vstv %s1256
        %v1258 = vrsqrt.pop %v1257
        %s1259 = vtos %v1258
        %v1260 = vstv %s1259
        %v1261 = vmul.f32 %v1241, %v1260
        %v1262 = vmul.f32 %v1261, %v1225
        %v1263 = vadd.f32 %v1262, %v1226
        %v1264 = vld [vmem:[%s8] sm:$0xff]
        %v1265 = vld [vmem:[%s8 + $0x8] sm:$0xff]
        %v1266 = vld [vmem:[#allocation6] sm:$0x1]
        %v1267 = vld [vmem:[%s10] sm:$0xff]
        %v1268 = vld [vmem:[%s10 + $0x8] sm:$0xff]
        %v1269 = vld [vmem:[#allocation7] sm:$0x1]
        %v1271 = vlaneseq
        %v1272 = vshrl.u32 %v1271, 7
        %v1273 = vsub.s32 0, %v1272
        %v1274 = vrot.slane %v1266, %v1273
        %v1277 = vsel %vm665, %v1263, 0
        %1279 = vmatprep.subr.mxu0 0.0
        %1280 = vmatpush1.msra.mxu0 %v1264
        %1281 = vmatprep.subr.mxu0 0.0
        %1282 = vmatpush1.msra.mxu0 %v1265
        %1283 = vmatprep.subr.mxu0 0.0
        %1284 = vmatpush1.msra.mxu0 0.0
        %1285 = vmatprep.subr.mxu0 0.0
        %1286 = vmatpush1.msra.mxu0 0.0
        %1287 = vmatprep.subr.mxu0 0.0
        %1288 = vmatpush1.msra.mxu0 0.0
        %1289 = vmatprep.subr.mxu0 0.0
        %1290 = vmatpush1.msra.mxu0 0.0
        %1291 = vmatprep.subr.mxu0 0.0
        %1292 = vmatpush1.msra.mxu0 0.0
        %1293 = vmatprep.subr.mxu0 0.0
        %1294 = vmatpush1.msra.mxu0 0.0
        %1295 = vmatprep.subr.mxu0 0.0
        %1296 = vmatpush1.msra.mxu0 0.0
        %1297 = vmatprep.subr.mxu0 0.0
        %1298 = vmatpush1.msra.mxu0 0.0
        %1299 = vmatprep.subr.mxu0 0.0
        %1300 = vmatpush1.msra.mxu0 0.0
        %1301 = vmatprep.subr.mxu0 0.0
        %1302 = vmatpush1.msra.mxu0 0.0
        %1303 = vmatprep.subr.mxu0 0.0
        %1304 = vmatpush1.msra.mxu0 0.0
        %1305 = vmatprep.subr.mxu0 0.0
        %1306 = vmatpush1.msra.mxu0 0.0
        %1307 = vmatprep.subr.mxu0 0.0
        %1308 = vmatpush1.msra.mxu0 0.0
        %1309 = vmatprep.subr.mxu0 0.0
        %1310 = vmatpush1.msra.mxu0 0.0
        %1311 = vmatprep.subr.mxu0 0.0
        %1312 = vmatpush1.msra.mxu0 0.0
        %1313 = vmatprep.subr.mxu0 0.0
        %1314 = vmatpush1.msra.mxu0 0.0
        %1315 = vmatprep.subr.mxu0 0.0
        %1316 = vmatpush1.msra.mxu0 0.0
        %1317 = vmatprep.subr.mxu0 0.0
        %1318 = vmatpush1.msra.mxu0 0.0
        %1319 = vmatprep.subr.mxu0 0.0
        %1320 = vmatpush1.msra.mxu0 0.0
        %1321 = vmatprep.subr.mxu0 0.0
        %1322 = vmatpush1.msra.mxu0 0.0
        %1323 = vmatprep.subr.mxu0 0.0
        %1324 = vmatpush1.msra.mxu0 0.0
        %1325 = vmatprep.subr.mxu0 0.0
        %1326 = vmatpush1.msra.mxu0 0.0
        %1327 = vmatprep.subr.mxu0 0.0
        %1328 = vmatpush1.msra.mxu0 0.0
        %1329 = vmatprep.subr.mxu0 0.0
        %1330 = vmatpush1.msra.mxu0 0.0
        %1331 = vmatprep.subr.mxu0 0.0
        %1332 = vmatpush1.msra.mxu0 0.0
        %1333 = vmatprep.subr.mxu0 0.0
        %1334 = vmatpush1.msra.mxu0 0.0
        %1335 = vmatprep.subr.mxu0 0.0
        %1336 = vmatpush1.msra.mxu0 0.0
        %1337 = vmatprep.subr.mxu0 0.0
        %1338 = vmatpush1.msra.mxu0 0.0
        %1339 = vmatprep.subr.mxu0 0.0
        %1340 = vmatpush1.msra.mxu0 0.0
        %1341 = vmatprep.subr.mxu0 0.0
        %1342 = vmatpush1.msra.mxu0 0.0
        %1343 = vmatprep.mubr.f32.mxu0 0.0
        %1344 = vmatmul.mubr.f32.gmra.mrb[0].mxu0 %v1277
        %v1345 = vpop.f32.mrb[0].mxu0
        %v1346 = vadd.f32 %v1274, %v1345
        %v1347 = vpop.f32.mrb[0].mxu0
        %1348 = vdwg.mxu0
        %1351 = vrot.lane.b32.xlu0 %v1264, 112
        %v1352 = vpop.permute.xlu0 %1351
        %1353 = vrot.lane.b32.xlu0 %v1265, 112
        %v1354 = vpop.permute.xlu0 %1353
        %1357 = vrot.lane.b32.xlu0 %v1274, 112
        %v1358 = vpop.permute.xlu0 %1357
        %v1361 = vsel %vm665, %v652, 0
        %1363 = vmatprep.subr.mxu0 0.0
        %1364 = vmatpush1.msra.mxu0 %v1352
        %1365 = vmatprep.subr.mxu0 0.0
        %1366 = vmatpush1.msra.mxu0 %v1354
        %1367 = vmatprep.subr.mxu0 0.0
        %1368 = vmatpush1.msra.mxu0 0.0
        %1369 = vmatprep.subr.mxu0 0.0
        %1370 = vmatpush1.msra.mxu0 0.0
        %1371 = vmatprep.subr.mxu0 0.0
        %1372 = vmatpush1.msra.mxu0 0.0
        %1373 = vmatprep.subr.mxu0 0.0
        %1374 = vmatpush1.msra.mxu0 0.0
        %1375 = vmatprep.subr.mxu0 0.0
        %1376 = vmatpush1.msra.mxu0 0.0
        %1377 = vmatprep.subr.mxu0 0.0
        %1378 = vmatpush1.msra.mxu0 0.0
        %1379 = vmatprep.subr.mxu0 0.0
        %1380 = vmatpush1.msra.mxu0 0.0
        %1381 = vmatprep.subr.mxu0 0.0
        %1382 = vmatpush1.msra.mxu0 0.0
        %1383 = vmatprep.subr.mxu0 0.0
        %1384 = vmatpush1.msra.mxu0 0.0
        %1385 = vmatprep.subr.mxu0 0.0
        %1386 = vmatpush1.msra.mxu0 0.0
        %1387 = vmatprep.subr.mxu0 0.0
        %1388 = vmatpush1.msra.mxu0 0.0
        %1389 = vmatprep.subr.mxu0 0.0
        %1390 = vmatpush1.msra.mxu0 0.0
        %1391 = vmatprep.subr.mxu0 0.0
        %1392 = vmatpush1.msra.mxu0 0.0
        %1393 = vmatprep.subr.mxu0 0.0
        %1394 = vmatpush1.msra.mxu0 0.0
        %1395 = vmatprep.subr.mxu0 0.0
        %1396 = vmatpush1.msra.mxu0 0.0
        %1397 = vmatprep.subr.mxu0 0.0
        %1398 = vmatpush1.msra.mxu0 0.0
        %1399 = vmatprep.subr.mxu0 0.0
        %1400 = vmatpush1.msra.mxu0 0.0
        %1401 = vmatprep.subr.mxu0 0.0
        %1402 = vmatpush1.msra.mxu0 0.0
        %1403 = vmatprep.subr.mxu0 0.0
        %1404 = vmatpush1.msra.mxu0 0.0
        %1405 = vmatprep.subr.mxu0 0.0
        %1406 = vmatpush1.msra.mxu0 0.0
        %1407 = vmatprep.subr.mxu0 0.0
        %1408 = vmatpush1.msra.mxu0 0.0
        %1409 = vmatprep.subr.mxu0 0.0
        %1410 = vmatpush1.msra.mxu0 0.0
        %1411 = vmatprep.subr.mxu0 0.0
        %1412 = vmatpush1.msra.mxu0 0.0
        %1413 = vmatprep.subr.mxu0 0.0
        %1414 = vmatpush1.msra.mxu0 0.0
        %1415 = vmatprep.subr.mxu0 0.0
        %1416 = vmatpush1.msra.mxu0 0.0
        %1417 = vmatprep.subr.mxu0 0.0
        %1418 = vmatpush1.msra.mxu0 0.0
        %1419 = vmatprep.subr.mxu0 0.0
        %1420 = vmatpush1.msra.mxu0 0.0
        %1421 = vmatprep.subr.mxu0 0.0
        %1422 = vmatpush1.msra.mxu0 0.0
        %1423 = vmatprep.subr.mxu0 0.0
        %1424 = vmatpush1.msra.mxu0 0.0
        %1425 = vmatprep.subr.mxu0 0.0
        %1426 = vmatpush1.msra.mxu0 0.0
        %1427 = vmatprep.mubr.f32.mxu0 0.0
        %1428 = vmatmul.mubr.f32.gmra.mrb[0].mxu0 %v1361
        %v1429 = vpop.f32.mrb[0].mxu0
        %v1430 = vadd.f32 %v1358, %v1429
        %v1431 = vpop.f32.mrb[0].mxu0
        %1432 = vdwg.mxu0
        %v1434 = vsel %vm742, %v1346, 0
        %v1437 = vsel %vm742, %v1430, 0
        %1439 = vmatprep.subr.mxu0 0.0
        %1440 = vmatpush1.xpose.msra.mxu0 %v1437
        %1441 = vmatprep.subr.mxu0 0.0
        %1442 = vmatpush1.xpose.msra.mxu0 0.0
        %1443 = vmatprep.subr.mxu0 0.0
        %1444 = vmatpush1.xpose.msra.mxu0 0.0
        %1445 = vmatprep.subr.mxu0 0.0
        %1446 = vmatpush1.xpose.msra.mxu0 0.0
        %1447 = vmatprep.subr.mxu0 0.0
        %1448 = vmatpush1.xpose.msra.mxu0 0.0
        %1449 = vmatprep.subr.mxu0 0.0
        %1450 = vmatpush1.xpose.msra.mxu0 0.0
        %1451 = vmatprep.subr.mxu0 0.0
        %1452 = vmatpush1.xpose.msra.mxu0 0.0
        %1453 = vmatprep.subr.mxu0 0.0
        %1454 = vmatpush1.xpose.msra.mxu0 0.0
        %1455 = vmatprep.subr.mxu0 0.0
        %1456 = vmatpush1.xpose.msra.mxu0 0.0
        %1457 = vmatprep.subr.mxu0 0.0
        %1458 = vmatpush1.xpose.msra.mxu0 0.0
        %1459 = vmatprep.subr.mxu0 0.0
        %1460 = vmatpush1.xpose.msra.mxu0 0.0
        %1461 = vmatprep.subr.mxu0 0.0
        %1462 = vmatpush1.xpose.msra.mxu0 0.0
        %1463 = vmatprep.subr.mxu0 0.0
        %1464 = vmatpush1.xpose.msra.mxu0 0.0
        %1465 = vmatprep.subr.mxu0 0.0
        %1466 = vmatpush1.xpose.msra.mxu0 0.0
        %1467 = vmatprep.subr.mxu0 0.0
        %1468 = vmatpush1.xpose.msra.mxu0 0.0
        %1469 = vmatprep.subr.mxu0 0.0
        %1470 = vmatpush1.xpose.msra.mxu0 0.0
        %1471 = vmatprep.subr.mxu0 0.0
        %1472 = vmatpush1.xpose.msra.mxu0 0.0
        %1473 = vmatprep.subr.mxu0 0.0
        %1474 = vmatpush1.xpose.msra.mxu0 0.0
        %1475 = vmatprep.subr.mxu0 0.0
        %1476 = vmatpush1.xpose.msra.mxu0 0.0
        %1477 = vmatprep.subr.mxu0 0.0
        %1478 = vmatpush1.xpose.msra.mxu0 0.0
        %1479 = vmatprep.subr.mxu0 0.0
        %1480 = vmatpush1.xpose.msra.mxu0 0.0
        %1481 = vmatprep.subr.mxu0 0.0
        %1482 = vmatpush1.xpose.msra.mxu0 0.0
        %1483 = vmatprep.subr.mxu0 0.0
        %1484 = vmatpush1.xpose.msra.mxu0 0.0
        %1485 = vmatprep.subr.mxu0 0.0
        %1486 = vmatpush1.xpose.msra.mxu0 0.0
        %1487 = vmatprep.subr.mxu0 0.0
        %1488 = vmatpush1.xpose.msra.mxu0 0.0
        %1489 = vmatprep.subr.mxu0 0.0
        %1490 = vmatpush1.xpose.msra.mxu0 0.0
        %1491 = vmatprep.subr.mxu0 0.0
        %1492 = vmatpush1.xpose.msra.mxu0 0.0
        %1493 = vmatprep.subr.mxu0 0.0
        %1494 = vmatpush1.xpose.msra.mxu0 0.0
        %1495 = vmatprep.subr.mxu0 0.0
        %1496 = vmatpush1.xpose.msra.mxu0 0.0
        %1497 = vmatprep.subr.mxu0 0.0
        %1498 = vmatpush1.xpose.msra.mxu0 0.0
        %1499 = vmatprep.subr.mxu0 0.0
        %1500 = vmatpush1.xpose.msra.mxu0 0.0
        %1501 = vmatprep.subr.mxu0 0.0
        %1502 = vmatpush1.xpose.msra.mxu0 0.0
        %1503 = vmatprep.mubr.f32.mxu0 0.0
        %1504 = vmatmul.mubr.f32.gmra.mrb[0].mxu0 %v1434
        %v1505 = vpop.f32.mrb[0].mxu0
        %v1506 = vadd.f32 0.0, %v1505
        %v1507 = vpop.f32.mrb[0].mxu0
        %1508 = vdwg.mxu0
        %v1509 = vmul.f32 %v1506, 0.35355338
        %v1510 = vsel %vm742, %v1509, -inf
        %1511 = vmax.xlane.f32.xlu0 %v1510
        %v1512 = vpop.xlane.xlu0 %1511
        %v1513 = vsub.f32 %v1509, %v1512
        %v1514 = vmul.f32 %v1513, 1.442695
        %v1515 = vpow.pop %v1514
        %v1516 = vsel %vm742, %v1515, 0.0
        %1517 = vadd.xlane.f32.xlu0 %v1516
        %v1518 = vpop.xlane.xlu0 %1517
        %v1519 = vrcp.pop %v1518
        %v1520 = vmul.f32 %v1515, %v1519
        %1521 = vrot.lane.b32.xlu0 %v1430, 112
        %v1522 = vpop.permute.xlu0 %1521
        %v1525 = vsel %vm742, %v1520, 0
        %1527 = vmatprep.subr.mxu0 0.0
        %1528 = vmatpush1.msra.mxu0 %v1522
        %1529 = vmatprep.subr.mxu0 0.0
        %1530 = vmatpush1.msra.mxu0 0.0
        %1531 = vmatprep.subr.mxu0 0.0
        %1532 = vmatpush1.msra.mxu0 0.0
        %1533 = vmatprep.subr.mxu0 0.0
        %1534 = vmatpush1.msra.mxu0 0.0
        %1535 = vmatprep.subr.mxu0 0.0
        %1536 = vmatpush1.msra.mxu0 0.0
        %1537 = vmatprep.subr.mxu0 0.0
        %1538 = vmatpush1.msra.mxu0 0.0
        %1539 = vmatprep.subr.mxu0 0.0
        %1540 = vmatpush1.msra.mxu0 0.0
        %1541 = vmatprep.subr.mxu0 0.0
        %1542 = vmatpush1.msra.mxu0 0.0
        %1543 = vmatprep.subr.mxu0 0.0
        %1544 = vmatpush1.msra.mxu0 0.0
        %1545 = vmatprep.subr.mxu0 0.0
        %1546 = vmatpush1.msra.mxu0 0.0
        %1547 = vmatprep.subr.mxu0 0.0
        %1548 = vmatpush1.msra.mxu0 0.0
        %1549 = vmatprep.subr.mxu0 0.0
        %1550 = vmatpush1.msra.mxu0 0.0
        %1551 = vmatprep.subr.mxu0 0.0
        %1552 = vmatpush1.msra.mxu0 0.0
        %1553 = vmatprep.subr.mxu0 0.0
        %1554 = vmatpush1.msra.mxu0 0.0
        %1555 = vmatprep.subr.mxu0 0.0
        %1556 = vmatpush1.msra.mxu0 0.0
        %1557 = vmatprep.subr.mxu0 0.0
        %1558 = vmatpush1.msra.mxu0 0.0
        %1559 = vmatprep.subr.mxu0 0.0
        %1560 = vmatpush1.msra.mxu0 0.0
        %1561 = vmatprep.subr.mxu0 0.0
        %1562 = vmatpush1.msra.mxu0 0.0
        %1563 = vmatprep.subr.mxu0 0.0
        %1564 = vmatpush1.msra.mxu0 0.0
        %1565 = vmatprep.subr.mxu0 0.0
        %1566 = vmatpush1.msra.mxu0 0.0
        %1567 = vmatprep.subr.mxu0 0.0
        %1568 = vmatpush1.msra.mxu0 0.0
        %1569 = vmatprep.subr.mxu0 0.0
        %1570 = vmatpush1.msra.mxu0 0.0
        %1571 = vmatprep.subr.mxu0 0.0
        %1572 = vmatpush1.msra.mxu0 0.0
        %1573 = vmatprep.subr.mxu0 0.0
        %1574 = vmatpush1.msra.mxu0 0.0
        %1575 = vmatprep.subr.mxu0 0.0
        %1576 = vmatpush1.msra.mxu0 0.0
        %1577 = vmatprep.subr.mxu0 0.0
        %1578 = vmatpush1.msra.mxu0 0.0
        %1579 = vmatprep.subr.mxu0 0.0
        %1580 = vmatpush1.msra.mxu0 0.0
        %1581 = vmatprep.subr.mxu0 0.0
        %1582 = vmatpush1.msra.mxu0 0.0
        %1583 = vmatprep.subr.mxu0 0.0
        %1584 = vmatpush1.msra.mxu0 0.0
        %1585 = vmatprep.subr.mxu0 0.0
        %1586 = vmatpush1.msra.mxu0 0.0
        %1587 = vmatprep.subr.mxu0 0.0
        %1588 = vmatpush1.msra.mxu0 0.0
        %1589 = vmatprep.subr.mxu0 0.0
        %1590 = vmatpush1.msra.mxu0 0.0
        %1591 = vmatprep.mubr.f32.mxu0 0.0
        %1592 = vmatmul.mubr.f32.gmra.mrb[0].mxu0 %v1525
        %v1593 = vpop.f32.mrb[0].mxu0
        %v1594 = vadd.f32 0.0, %v1593
        %v1595 = vpop.f32.mrb[0].mxu0
        %1596 = vdwg.mxu0
        %1597 = vrot.lane.b32.xlu0 %v1346, 120
        %v1598 = vpop.permute.xlu0 %1597
        %1599 = vrot.lane.b32.xlu0 %v1430, 120
        %v1600 = vpop.permute.xlu0 %1599
        %v1601 = vsel %vm742, %v1598, 0
        %v1603 = vsel %vm742, %v1600, 0
        %1605 = vmatprep.subr.mxu0 0.0
        %1606 = vmatpush1.xpose.msra.mxu0 %v1603
        %1607 = vmatprep.subr.mxu0 0.0
        %1608 = vmatpush1.xpose.msra.mxu0 0.0
        %1609 = vmatprep.subr.mxu0 0.0
        %1610 = vmatpush1.xpose.msra.mxu0 0.0
        %1611 = vmatprep.subr.mxu0 0.0
        %1612 = vmatpush1.xpose.msra.mxu0 0.0
        %1613 = vmatprep.subr.mxu0 0.0
        %1614 = vmatpush1.xpose.msra.mxu0 0.0
        %1615 = vmatprep.subr.mxu0 0.0
        %1616 = vmatpush1.xpose.msra.mxu0 0.0
        %1617 = vmatprep.subr.mxu0 0.0
        %1618 = vmatpush1.xpose.msra.mxu0 0.0
        %1619 = vmatprep.subr.mxu0 0.0
        %1620 = vmatpush1.xpose.msra.mxu0 0.0
        %1621 = vmatprep.subr.mxu0 0.0
        %1622 = vmatpush1.xpose.msra.mxu0 0.0
        %1623 = vmatprep.subr.mxu0 0.0
        %1624 = vmatpush1.xpose.msra.mxu0 0.0
        %1625 = vmatprep.subr.mxu0 0.0
        %1626 = vmatpush1.xpose.msra.mxu0 0.0
        %1627 = vmatprep.subr.mxu0 0.0
        %1628 = vmatpush1.xpose.msra.mxu0 0.0
        %1629 = vmatprep.subr.mxu0 0.0
        %1630 = vmatpush1.xpose.msra.mxu0 0.0
        %1631 = vmatprep.subr.mxu0 0.0
        %1632 = vmatpush1.xpose.msra.mxu0 0.0
        %1633 = vmatprep.subr.mxu0 0.0
        %1634 = vmatpush1.xpose.msra.mxu0 0.0
        %1635 = vmatprep.subr.mxu0 0.0
        %1636 = vmatpush1.xpose.msra.mxu0 0.0
        %1637 = vmatprep.subr.mxu0 0.0
        %1638 = vmatpush1.xpose.msra.mxu0 0.0
        %1639 = vmatprep.subr.mxu0 0.0
        %1640 = vmatpush1.xpose.msra.mxu0 0.0
        %1641 = vmatprep.subr.mxu0 0.0
        %1642 = vmatpush1.xpose.msra.mxu0 0.0
        %1643 = vmatprep.subr.mxu0 0.0
        %1644 = vmatpush1.xpose.msra.mxu0 0.0
        %1645 = vmatprep.subr.mxu0 0.0
        %1646 = vmatpush1.xpose.msra.mxu0 0.0
        %1647 = vmatprep.subr.mxu0 0.0
        %1648 = vmatpush1.xpose.msra.mxu0 0.0
        %1649 = vmatprep.subr.mxu0 0.0
        %1650 = vmatpush1.xpose.msra.mxu0 0.0
        %1651 = vmatprep.subr.mxu0 0.0
        %1652 = vmatpush1.xpose.msra.mxu0 0.0
        %1653 = vmatprep.subr.mxu0 0.0
        %1654 = vmatpush1.xpose.msra.mxu0 0.0
        %1655 = vmatprep.subr.mxu0 0.0
        %1656 = vmatpush1.xpose.msra.mxu0 0.0
        %1657 = vmatprep.subr.mxu0 0.0
        %1658 = vmatpush1.xpose.msra.mxu0 0.0
        %1659 = vmatprep.subr.mxu0 0.0
        %1660 = vmatpush1.xpose.msra.mxu0 0.0
        %1661 = vmatprep.subr.mxu0 0.0
        %1662 = vmatpush1.xpose.msra.mxu0 0.0
        %1663 = vmatprep.subr.mxu0 0.0
        %1664 = vmatpush1.xpose.msra.mxu0 0.0
        %1665 = vmatprep.subr.mxu0 0.0
        %1666 = vmatpush1.xpose.msra.mxu0 0.0
        %1667 = vmatprep.subr.mxu0 0.0
        %1668 = vmatpush1.xpose.msra.mxu0 0.0
        %1669 = vmatprep.mubr.f32.mxu0 0.0
        %1670 = vmatmul.mubr.f32.gmra.mrb[0].mxu0 %v1601
        %v1671 = vpop.f32.mrb[0].mxu0
        %v1672 = vadd.f32 0.0, %v1671
        %v1673 = vpop.f32.mrb[0].mxu0
        %1674 = vdwg.mxu0
        %v1675 = vmul.f32 %v1672, 0.35355338
        %v1676 = vsel %vm742, %v1675, -inf
        %1677 = vmax.xlane.f32.xlu0 %v1676
        %v1678 = vpop.xlane.xlu0 %1677
        %v1679 = vsub.f32 %v1675, %v1678
        %v1680 = vmul.f32 %v1679, 1.442695
        %v1681 = vpow.pop %v1680
        %v1682 = vsel %vm742, %v1681, 0.0
        %1683 = vadd.xlane.f32.xlu0 %v1682
        %v1684 = vpop.xlane.xlu0 %1683
        %v1685 = vrcp.pop %v1684
        %v1686 = vmul.f32 %v1681, %v1685
        %1687 = vrot.lane.b32.xlu0 %v1430, 104
        %v1688 = vpop.permute.xlu0 %1687
        %v1691 = vsel %vm742, %v1686, 0
        %1693 = vmatprep.subr.mxu0 0.0
        %1694 = vmatpush1.msra.mxu0 %v1688
        %1695 = vmatprep.subr.mxu0 0.0
        %1696 = vmatpush1.msra.mxu0 0.0
        %1697 = vmatprep.subr.mxu0 0.0
        %1698 = vmatpush1.msra.mxu0 0.0
        %1699 = vmatprep.subr.mxu0 0.0
        %1700 = vmatpush1.msra.mxu0 0.0
        %1701 = vmatprep.subr.mxu0 0.0
        %1702 = vmatpush1.msra.mxu0 0.0
        %1703 = vmatprep.subr.mxu0 0.0
        %1704 = vmatpush1.msra.mxu0 0.0
        %1705 = vmatprep.subr.mxu0 0.0
        %1706 = vmatpush1.msra.mxu0 0.0
        %1707 = vmatprep.subr.mxu0 0.0
        %1708 = vmatpush1.msra.mxu0 0.0
        %1709 = vmatprep.subr.mxu0 0.0
        %1710 = vmatpush1.msra.mxu0 0.0
        %1711 = vmatprep.subr.mxu0 0.0
        %1712 = vmatpush1.msra.mxu0 0.0
        %1713 = vmatprep.subr.mxu0 0.0
        %1714 = vmatpush1.msra.mxu0 0.0
        %1715 = vmatprep.subr.mxu0 0.0
        %1716 = vmatpush1.msra.mxu0 0.0
        %1717 = vmatprep.subr.mxu0 0.0
        %1718 = vmatpush1.msra.mxu0 0.0
        %1719 = vmatprep.subr.mxu0 0.0
        %1720 = vmatpush1.msra.mxu0 0.0
        %1721 = vmatprep.subr.mxu0 0.0
        %1722 = vmatpush1.msra.mxu0 0.0
        %1723 = vmatprep.subr.mxu0 0.0
        %1724 = vmatpush1.msra.mxu0 0.0
        %1725 = vmatprep.subr.mxu0 0.0
        %1726 = vmatpush1.msra.mxu0 0.0
        %1727 = vmatprep.subr.mxu0 0.0
        %1728 = vmatpush1.msra.mxu0 0.0
        %1729 = vmatprep.subr.mxu0 0.0
        %1730 = vmatpush1.msra.mxu0 0.0
        %1731 = vmatprep.subr.mxu0 0.0
        %1732 = vmatpush1.msra.mxu0 0.0
        %1733 = vmatprep.subr.mxu0 0.0
        %1734 = vmatpush1.msra.mxu0 0.0
        %1735 = vmatprep.subr.mxu0 0.0
        %1736 = vmatpush1.msra.mxu0 0.0
        %1737 = vmatprep.subr.mxu0 0.0
        %1738 = vmatpush1.msra.mxu0 0.0
        %1739 = vmatprep.subr.mxu0 0.0
        %1740 = vmatpush1.msra.mxu0 0.0
        %1741 = vmatprep.subr.mxu0 0.0
        %1742 = vmatpush1.msra.mxu0 0.0
        %1743 = vmatprep.subr.mxu0 0.0
        %1744 = vmatpush1.msra.mxu0 0.0
        %1745 = vmatprep.subr.mxu0 0.0
        %1746 = vmatpush1.msra.mxu0 0.0
        %1747 = vmatprep.subr.mxu0 0.0
        %1748 = vmatpush1.msra.mxu0 0.0
        %1749 = vmatprep.subr.mxu0 0.0
        %1750 = vmatpush1.msra.mxu0 0.0
        %1751 = vmatprep.subr.mxu0 0.0
        %1752 = vmatpush1.msra.mxu0 0.0
        %1753 = vmatprep.subr.mxu0 0.0
        %1754 = vmatpush1.msra.mxu0 0.0
        %1755 = vmatprep.subr.mxu0 0.0
        %1756 = vmatpush1.msra.mxu0 0.0
        %1757 = vmatprep.mubr.f32.mxu0 0.0
        %1758 = vmatmul.mubr.f32.gmra.mrb[0].mxu0 %v1691
        %v1759 = vpop.f32.mrb[0].mxu0
        %v1760 = vadd.f32 0.0, %v1759
        %v1761 = vpop.f32.mrb[0].mxu0
        %1762 = vdwg.mxu0
        %v1764 = vsel %vm742, %v1760, 0
        %1766 = vmatprep.subr.mxu0 0.0
        %1767 = vmatpush1.msra.mxu0 %v1268
        %1768 = vmatprep.subr.mxu0 0.0
        %1769 = vmatpush1.msra.mxu0 0.0
        %1770 = vmatprep.subr.mxu0 0.0
        %1771 = vmatpush1.msra.mxu0 0.0
        %1772 = vmatprep.subr.mxu0 0.0
        %1773 = vmatpush1.msra.mxu0 0.0
        %1774 = vmatprep.subr.mxu0 0.0
        %1775 = vmatpush1.msra.mxu0 0.0
        %1776 = vmatprep.subr.mxu0 0.0
        %1777 = vmatpush1.msra.mxu0 0.0
        %1778 = vmatprep.subr.mxu0 0.0
        %1779 = vmatpush1.msra.mxu0 0.0
        %1780 = vmatprep.subr.mxu0 0.0
        %1781 = vmatpush1.msra.mxu0 0.0
        %1782 = vmatprep.subr.mxu0 0.0
        %1783 = vmatpush1.msra.mxu0 0.0
        %1784 = vmatprep.subr.mxu0 0.0
        %1785 = vmatpush1.msra.mxu0 0.0
        %1786 = vmatprep.subr.mxu0 0.0
        %1787 = vmatpush1.msra.mxu0 0.0
        %1788 = vmatprep.subr.mxu0 0.0
        %1789 = vmatpush1.msra.mxu0 0.0
        %1790 = vmatprep.subr.mxu0 0.0
        %1791 = vmatpush1.msra.mxu0 0.0
        %1792 = vmatprep.subr.mxu0 0.0
        %1793 = vmatpush1.msra.mxu0 0.0
        %1794 = vmatprep.subr.mxu0 0.0
        %1795 = vmatpush1.msra.mxu0 0.0
        %1796 = vmatprep.subr.mxu0 0.0
        %1797 = vmatpush1.msra.mxu0 0.0
        %1798 = vmatprep.subr.mxu0 0.0
        %1799 = vmatpush1.msra.mxu0 0.0
        %1800 = vmatprep.subr.mxu0 0.0
        %1801 = vmatpush1.msra.mxu0 0.0
        %1802 = vmatprep.subr.mxu0 0.0
        %1803 = vmatpush1.msra.mxu0 0.0
        %1804 = vmatprep.subr.mxu0 0.0
        %1805 = vmatpush1.msra.mxu0 0.0
        %1806 = vmatprep.subr.mxu0 0.0
        %1807 = vmatpush1.msra.mxu0 0.0
        %1808 = vmatprep.subr.mxu0 0.0
        %1809 = vmatpush1.msra.mxu0 0.0
        %1810 = vmatprep.subr.mxu0 0.0
        %1811 = vmatpush1.msra.mxu0 0.0
        %1812 = vmatprep.subr.mxu0 0.0
        %1813 = vmatpush1.msra.mxu0 0.0
        %1814 = vmatprep.subr.mxu0 0.0
        %1815 = vmatpush1.msra.mxu0 0.0
        %1816 = vmatprep.subr.mxu0 0.0
        %1817 = vmatpush1.msra.mxu0 0.0
        %1818 = vmatprep.subr.mxu0 0.0
        %1819 = vmatpush1.msra.mxu0 0.0
        %1820 = vmatprep.subr.mxu0 0.0
        %1821 = vmatpush1.msra.mxu0 0.0
        %1822 = vmatprep.subr.mxu0 0.0
        %1823 = vmatpush1.msra.mxu0 0.0
        %1824 = vmatprep.subr.mxu0 0.0
        %1825 = vmatpush1.msra.mxu0 0.0
        %1826 = vmatprep.subr.mxu0 0.0
        %1827 = vmatpush1.msra.mxu0 0.0
        %1828 = vmatprep.subr.mxu0 0.0
        %1829 = vmatpush1.msra.mxu0 0.0
        %1830 = vmatprep.mubr.f32.mxu0 0.0
        %1831 = vmatmul.mubr.f32.gmra.mrb[0].mxu0 %v1764
        %v1832 = vpop.f32.mrb[0].mxu0
        %v1833 = vadd.f32 0.0, %v1832
        %v1834 = vpop.f32.mrb[0].mxu0
        %1835 = vdwg.mxu0
        %v1837 = vsel %vm742, %v1594, 0
        %1839 = vmatprep.subr.mxu0 0.0
        %1840 = vmatpush1.msra.mxu0 %v1267
        %1841 = vmatprep.subr.mxu0 0.0
        %1842 = vmatpush1.msra.mxu0 0.0
        %1843 = vmatprep.subr.mxu0 0.0
        %1844 = vmatpush1.msra.mxu0 0.0
        %1845 = vmatprep.subr.mxu0 0.0
        %1846 = vmatpush1.msra.mxu0 0.0
        %1847 = vmatprep.subr.mxu0 0.0
        %1848 = vmatpush1.msra.mxu0 0.0
        %1849 = vmatprep.subr.mxu0 0.0
        %1850 = vmatpush1.msra.mxu0 0.0
        %1851 = vmatprep.subr.mxu0 0.0
        %1852 = vmatpush1.msra.mxu0 0.0
        %1853 = vmatprep.subr.mxu0 0.0
        %1854 = vmatpush1.msra.mxu0 0.0
        %1855 = vmatprep.subr.mxu0 0.0
        %1856 = vmatpush1.msra.mxu0 0.0
        %1857 = vmatprep.subr.mxu0 0.0
        %1858 = vmatpush1.msra.mxu0 0.0
        %1859 = vmatprep.subr.mxu0 0.0
        %1860 = vmatpush1.msra.mxu0 0.0
        %1861 = vmatprep.subr.mxu0 0.0
        %1862 = vmatpush1.msra.mxu0 0.0
        %1863 = vmatprep.subr.mxu0 0.0
        %1864 = vmatpush1.msra.mxu0 0.0
        %1865 = vmatprep.subr.mxu0 0.0
        %1866 = vmatpush1.msra.mxu0 0.0
        %1867 = vmatprep.subr.mxu0 0.0
        %1868 = vmatpush1.msra.mxu0 0.0
        %1869 = vmatprep.subr.mxu0 0.0
        %1870 = vmatpush1.msra.mxu0 0.0
        %1871 = vmatprep.subr.mxu0 0.0
        %1872 = vmatpush1.msra.mxu0 0.0
        %1873 = vmatprep.subr.mxu0 0.0
        %1874 = vmatpush1.msra.mxu0 0.0
        %1875 = vmatprep.subr.mxu0 0.0
        %1876 = vmatpush1.msra.mxu0 0.0
        %1877 = vmatprep.subr.mxu0 0.0
        %1878 = vmatpush1.msra.mxu0 0.0
        %1879 = vmatprep.subr.mxu0 0.0
        %1880 = vmatpush1.msra.mxu0 0.0
        %1881 = vmatprep.subr.mxu0 0.0
        %1882 = vmatpush1.msra.mxu0 0.0
        %1883 = vmatprep.subr.mxu0 0.0
        %1884 = vmatpush1.msra.mxu0 0.0
        %1885 = vmatprep.subr.mxu0 0.0
        %1886 = vmatpush1.msra.mxu0 0.0
        %1887 = vmatprep.subr.mxu0 0.0
        %1888 = vmatpush1.msra.mxu0 0.0
        %1889 = vmatprep.subr.mxu0 0.0
        %1890 = vmatpush1.msra.mxu0 0.0
        %1891 = vmatprep.subr.mxu0 0.0
        %1892 = vmatpush1.msra.mxu0 0.0
        %1893 = vmatprep.subr.mxu0 0.0
        %1894 = vmatpush1.msra.mxu0 0.0
        %1895 = vmatprep.subr.mxu0 0.0
        %1896 = vmatpush1.msra.mxu0 0.0
        %1897 = vmatprep.subr.mxu0 0.0
        %1898 = vmatpush1.msra.mxu0 0.0
        %1899 = vmatprep.subr.mxu0 0.0
        %1900 = vmatpush1.msra.mxu0 0.0
        %1901 = vmatprep.subr.mxu0 0.0
        %1902 = vmatpush1.msra.mxu0 0.0
        %1903 = vmatprep.mubr.f32.mxu0 0.0
        %1904 = vmatmul.mubr.f32.gmra.mrb[0].mxu0 %v1837
        %v1905 = vpop.f32.mrb[0].mxu0
        %v1906 = vadd.f32 %v1833, %v1905
        %v1907 = vpop.f32.mrb[0].mxu0
        %1908 = vdwg.mxu0
        %v1910 = vlaneseq
        %v1911 = vshrl.u32 %v1910, 7
        %v1912 = vsub.s32 0, %v1911
        %v1913 = vrot.slane %v1269, %v1912
        %v1915 = vadd.f32 %v1906, %v1913
        %v1916 = vadd.f32 %v1263, %v1915
        %v1917 = vld [vmem:[%s12] sm:$0xff]
        %v1918 = vld [vmem:[%s13] sm:$0xff]
        %v1919 = vsel %vm665, %v1916, 0.0
        %1920 = vadd.xlane.f32.xlu0 %v1919
        %v1921 = vpop.xlane.xlu0 %1920
        %v1922 = vrot.slane %v1921, 4
        %v1923 = vadd.f32 %v1921, %v1922
        %v1924 = vrot.slane %v1923, 2
        %v1925 = vadd.f32 %v1923, %v1924
        %v1926 = vrot.slane %v1925, 1
        %v1927 = vadd.f32 %v1925, %v1926
        %s1928 = vtos %v1927
        %v1929 = vrcp.pop 128.0
        %s1930 = vtos %v1929
        %s1931 = smul.f32 %s1928, %s1930
        %v1932 = vstv %s1931
        %v1933 = vsub.f32 %v1916, %v1932
        %v1934 = vmul.f32 %v1933, %v1933
        %v1935 = vsel %vm665, %v1934, 0.0
        %1936 = vadd.xlane.f32.xlu0 %v1935
        %v1937 = vpop.xlane.xlu0 %1936
        %v1938 = vrot.slane %v1937, 4
        %v1939 = vadd.f32 %v1937, %v1938
        %v1940 = vrot.slane %v1939, 2
        %v1941 = vadd.f32 %v1939, %v1940
        %v1942 = vrot.slane %v1941, 1
        %v1943 = vadd.f32 %v1941, %v1942
        %s1944 = vtos %v1943
        %v1945 = vrcp.pop 128.0
        %s1946 = vtos %v1945
        %s1947 = smul.f32 %s1944, %s1946
        %s1948 = sadd.f32 %s1947, 1e-05
        %v1949 = vstv %s1948
        %v1950 = vrsqrt.pop %v1949
        %s1951 = vtos %v1950
        %v1952 = vstv %s1951
        %v1953 = vmul.f32 %v1933, %v1952
        %v1954 = vmul.f32 %v1953, %v1917
        %v1955 = vadd.f32 %v1954, %v1918
        %v1956 = vld [vmem:[%s14] sm:$0xff]
        %v1957 = vld [vmem:[%s14 + $0x8] sm:$0xff]
        %v1958 = vld [vmem:[#allocation9] sm:$0x1]
        %v1960 = vlaneseq
        %v1961 = vshrl.u32 %v1960, 7
        %v1962 = vsub.s32 0, %v1961
        %v1963 = vrot.slane %v1958, %v1962
        %v1966 = vsel %vm665, %v1955, 0
        %1968 = vmatprep.subr.mxu0 0.0
        %1969 = vmatpush1.msra.mxu0 %v1956
        %1970 = vmatprep.subr.mxu0 0.0
        %1971 = vmatpush1.msra.mxu0 %v1957
        %1972 = vmatprep.subr.mxu0 0.0
        %1973 = vmatpush1.msra.mxu0 0.0
        %1974 = vmatprep.subr.mxu0 0.0
        %1975 = vmatpush1.msra.mxu0 0.0
        %1976 = vmatprep.subr.mxu0 0.0
        %1977 = vmatpush1.msra.mxu0 0.0
        %1978 = vmatprep.subr.mxu0 0.0
        %1979 = vmatpush1.msra.mxu0 0.0
        %1980 = vmatprep.subr.mxu0 0.0
        %1981 = vmatpush1.msra.mxu0 0.0
        %1982 = vmatprep.subr.mxu0 0.0
        %1983 = vmatpush1.msra.mxu0 0.0
        %1984 = vmatprep.subr.mxu0 0.0
        %1985 = vmatpush1.msra.mxu0 0.0
        %1986 = vmatprep.subr.mxu0 0.0
        %1987 = vmatpush1.msra.mxu0 0.0
        %1988 = vmatprep.subr.mxu0 0.0
        %1989 = vmatpush1.msra.mxu0 0.0
        %1990 = vmatprep.subr.mxu0 0.0
        %1991 = vmatpush1.msra.mxu0 0.0
        %1992 = vmatprep.subr.mxu0 0.0
        %1993 = vmatpush1.msra.mxu0 0.0
        %1994 = vmatprep.subr.mxu0 0.0
        %1995 = vmatpush1.msra.mxu0 0.0
        %1996 = vmatprep.subr.mxu0 0.0
        %1997 = vmatpush1.msra.mxu0 0.0
        %1998 = vmatprep.subr.mxu0 0.0
        %1999 = vmatpush1.msra.mxu0 0.0
        %2000 = vmatprep.subr.mxu0 0.0
        %2001 = vmatpush1.msra.mxu0 0.0
        %2002 = vmatprep.subr.mxu0 0.0
        %2003 = vmatpush1.msra.mxu0 0.0
        %2004 = vmatprep.subr.mxu0 0.0
        %2005 = vmatpush1.msra.mxu0 0.0
        %2006 = vmatprep.subr.mxu0 0.0
        %2007 = vmatpush1.msra.mxu0 0.0
        %2008 = vmatprep.subr.mxu0 0.0
        %2009 = vmatpush1.msra.mxu0 0.0
        %2010 = vmatprep.subr.mxu0 0.0
        %2011 = vmatpush1.msra.mxu0 0.0
        %2012 = vmatprep.subr.mxu0 0.0
        %2013 = vmatpush1.msra.mxu0 0.0
        %2014 = vmatprep.subr.mxu0 0.0
        %2015 = vmatpush1.msra.mxu0 0.0
        %2016 = vmatprep.subr.mxu0 0.0
        %2017 = vmatpush1.msra.mxu0 0.0
        %2018 = vmatprep.subr.mxu0 0.0
        %2019 = vmatpush1.msra.mxu0 0.0
        %2020 = vmatprep.subr.mxu0 0.0
        %2021 = vmatpush1.msra.mxu0 0.0
        %2022 = vmatprep.subr.mxu0 0.0
        %2023 = vmatpush1.msra.mxu0 0.0
        %2024 = vmatprep.subr.mxu0 0.0
        %2025 = vmatpush1.msra.mxu0 0.0
        %2026 = vmatprep.subr.mxu0 0.0
        %2027 = vmatpush1.msra.mxu0 0.0
        %2028 = vmatprep.subr.mxu0 0.0
        %2029 = vmatpush1.msra.mxu0 0.0
        %2030 = vmatprep.subr.mxu0 0.0
        %2031 = vmatpush1.msra.mxu0 0.0
        %2032 = vmatprep.mubr.f32.mxu0 0.0
        %2033 = vmatmul.mubr.f32.gmra.mrb[0].mxu0 %v1966
        %v2034 = vpop.f32.mrb[0].mxu0
        %v2035 = vadd.f32 %v1963, %v2034
        %v2036 = vpop.f32.mrb[0].mxu0
        %2037 = vdwg.mxu0
        %v2038 = vadd.f32 %v1955, %v2035
        %v2039 = vld [vmem:[%s16] sm:$0xff]
        %v2040 = vld [vmem:[%s17] sm:$0xff]
        %v2041 = vsel %vm665, %v2038, 0.0
        %2042 = vadd.xlane.f32.xlu0 %v2041
        %v2043 = vpop.xlane.xlu0 %2042
        %v2044 = vrot.slane %v2043, 4
        %v2045 = vadd.f32 %v2043, %v2044
        %v2046 = vrot.slane %v2045, 2
        %v2047 = vadd.f32 %v2045, %v2046
        %v2048 = vrot.slane %v2047, 1
        %v2049 = vadd.f32 %v2047, %v2048
        %s2050 = vtos %v2049
        %v2051 = vrcp.pop 128.0
        %s2052 = vtos %v2051
        %s2053 = smul.f32 %s2050, %s2052
        %v2054 = vstv %s2053
        %v2055 = vsub.f32 %v2038, %v2054
        %v2056 = vmul.f32 %v2055, %v2055
        %v2057 = vsel %vm665, %v2056, 0.0
        %2058 = vadd.xlane.f32.xlu0 %v2057
        %v2059 = vpop.xlane.xlu0 %2058
        %v2060 = vrot.slane %v2059, 4
        %v2061 = vadd.f32 %v2059, %v2060
        %v2062 = vrot.slane %v2061, 2
        %v2063 = vadd.f32 %v2061, %v2062
        %v2064 = vrot.slane %v2063, 1
        %v2065 = vadd.f32 %v2063, %v2064
        %s2066 = vtos %v2065
        %v2067 = vrcp.pop 128.0
        %s2068 = vtos %v2067
        %s2069 = smul.f32 %s2066, %s2068
        %s2070 = sadd.f32 %s2069, 1e-05
        %v2071 = vstv %s2070
        %v2072 = vrsqrt.pop %v2071
        %s2073 = vtos %v2072
        %v2074 = vstv %s2073
        %v2075 = vmul.f32 %v2055, %v2074
        %v2076 = vmul.f32 %v2075, %v2039
        %v2077 = vadd.f32 %v2076, %v2040
        %2078 = vst.msk [vmem:[%s650] sm:$0xff] %vm665, %v2077
        %p2079 = scmp.lt.s32.totalorder %s32, 1
        %s2080 = scalar_select %p2079, %s32, 1
        %s2081 = smul.addr %s2080, 8
        %s2082 = scalar_lea.vmem %s18, %s2081
        // Predicated region
        $region113: #{liner_ae_fwd.8} parent=91 // pred_check
          %p2083 = pneg %p438
        $region114: #{liner_ae_fwd.8} parent=91 // pred_check_branch
          %2085 = sbr.rel (%p2083) target = $region116
        $region115: #{liner_ae_fwd.8} parent=91 // pred_region
          _
        $region116: #{liner_ae_fwd.8} parent=91 // pred_fallthru
          _
      $region92: #{liner_ae_fwd.8} parent=5 // pred_fallthru
        _
      %p2086 = scmp.le.s32.totalorder 2, %s27
      // Predicated region
      $region117: #{liner_ae_fwd.8} parent=5 // pred_check
        %p2087 = pneg %p2086
      $region118: #{liner_ae_fwd.8} parent=5 // pred_check_branch
        %2089 = sbr.rel (%p2087) target = $region120
      $region119: #{liner_ae_fwd.8} parent=5 // pred_region
        %s2090 = ssub.s32 %s27, 2
        // Predicated region
        $region121: #{liner_ae_fwd.8} parent=119 // pred_check
          %p2091 = pneg %p444
        $region122: #{liner_ae_fwd.8} parent=119 // pred_check_branch
          %2093 = sbr.rel (%p2091) target = $region124
        $region123: #{liner_ae_fwd.8} parent=119 // pred_region
          %p2094 = scmp.lt.s32.totalorder %s33, 1
          %s2095 = scalar_select %p2094, %s33, 1
          %s2096 = smul.addr %s2095, 8
          %s2097 = scalar_lea.vmem %s18, %s2096
        $region124: #{liner_ae_fwd.8} parent=119 // pred_fallthru
          _
      $region120: #{liner_ae_fwd.8} parent=5 // pred_fallthru
        _
    $region6: #{liner_ae_fwd.8} parent=1 // loop_footer
      %s31 = sadd.s32 1, %s27
    $region7: #{liner_ae_fwd.8} parent=1 // loop_footer_branch
      %26 = sbr.rel target = $region3
    $region8: #{liner_ae_fwd.8} parent=1 // loop_exit
      _
    %2098 = vsyncpa [#allocation3], 1
    %s2099 = scalar_lea.sflag [#allocation3], 1
    %2100 = vsyncpa %s2099, 1
    %2101 = vsyncpa [#allocation5], 1
    %2102 = vsyncpa [#allocation8], 1

// kernel: liner_ae_fwd.9
$region0: #{liner_ae_fwd.9}
  #allocation0 [shape = 'u32[]', space=smem, size = 0x4, offset = 0x4, fixed_abs, tag = 'smem constant byte address 0x4 - core index']
  #allocation1 [shape = 'u32[144,128]{1,0:T(1,128)}', space=vmem, size = 0x12000, scoped, tag = 'internal scratch']
  %s0 = inlined_call_operand.vmem [shape: f32[2,8,16], index: 0, kind: input, shape index: {}]
  %s1 = inlined_call_operand.vmem [shape: f32[2,8,16], index: 1, kind: input, shape index: {}]
  %s2 = inlined_call_operand.vmem [shape: f32[16,48], index: 2, kind: input, shape index: {}]
  %s3 = inlined_call_operand.vmem [shape: f32[1,48], index: 3, kind: input, shape index: {}]
  %s4 = inlined_call_operand.vmem [shape: f32[16,16], index: 4, kind: input, shape index: {}]
  %s5 = inlined_call_operand.vmem [shape: f32[1,16], index: 5, kind: input, shape index: {}]
  %s6 = inlined_call_operand.vmem [shape: f32[8,16], index: 6, kind: input, shape index: {}]
  %s7 = inlined_call_operand.vmem [shape: f32[8,16], index: 7, kind: input, shape index: {}]
  %s8 = inlined_call_operand.vmem [shape: f32[16,48], index: 8, kind: input, shape index: {}]
  %s9 = inlined_call_operand.vmem [shape: f32[1,48], index: 9, kind: input, shape index: {}]
  %s10 = inlined_call_operand.vmem [shape: f32[16,16], index: 10, kind: input, shape index: {}]
  %s11 = inlined_call_operand.vmem [shape: f32[1,16], index: 11, kind: input, shape index: {}]
  %s12 = inlined_call_operand.vmem [shape: f32[8,16], index: 12, kind: input, shape index: {}]
  %s13 = inlined_call_operand.vmem [shape: f32[8,16], index: 13, kind: input, shape index: {}]
  %s14 = inlined_call_operand.vmem [shape: f32[16,16], index: 14, kind: input, shape index: {}]
  %s15 = inlined_call_operand.vmem [shape: f32[1,16], index: 15, kind: input, shape index: {}]
  %s16 = inlined_call_operand.vmem [shape: f32[8,16], index: 16, kind: input, shape index: {}]
  %s17 = inlined_call_operand.vmem [shape: f32[8,16], index: 17, kind: input, shape index: {}]
  %s18 = inlined_call_operand.hbm [shape: f32[2,8,16], index: 18, kind: output, shape index: {}]
  %s19 = sld [smem:[#allocation0]]
  $region105: #{liner_ae_fwd.9} parent=0
    _
  %s21 = ssub.s32 1, %s19
  %s22 = scalar_select 0, %s21, %s19
  $region1: #{liner_ae_fwd.9} parent=0
    #allocation2 [shape = 'u8[8192]{0}', space=vmem, size = 0x2000, scoped, tag = 'output window, operand 0']
    #allocation3 [shape = 's32[2]{0}', space=sflag, size = 0x8, scoped, tag = 'scoped memory for liner_ae_fwd.9']
    %23 = vsyncpa [#allocation3], 0
    %s24 = scalar_lea.sflag [#allocation3], 1
    %25 = vsyncpa %s24, 0
    loop: start=0, step=1, limit=4
    $region2: #{liner_ae_fwd.9} parent=1 // loop_pre_header
      _
    $region3: #{liner_ae_fwd.9} parent=1 // loop_header
      %s27 = sphi 0, %s31
      %p28 = scmp.ge.s32.totalorder %s27, 4
      %s37 = sphi 0, %s39
      %s40 = sphi 0, %s37
      %s41 = sphi 0, %s40
      %s57 = sphi 0, %s41
      %s63 = sphi 0, %s65
      %s66 = sphi 0, %s63
      %s67 = sphi 0, %s66
      %s83 = sphi 0, %s67
      %s87 = sphi 0, %s87
      %s89 = sphi 0, %s87
      %s90 = sphi 0, %s89
      %s104 = sphi 0, %s90
      %s108 = sphi 0, %s108
      %s110 = sphi 0, %s108
      %s111 = sphi 0, %s110
      %s125 = sphi 0, %s111
      %s129 = sphi 0, %s129
      %s131 = sphi 0, %s129
      %s132 = sphi 0, %s131
      %s146 = sphi 0, %s132
      %s150 = sphi 0, %s150
      %s152 = sphi 0, %s150
      %s153 = sphi 0, %s152
      %s167 = sphi 0, %s153
      %s171 = sphi 0, %s171
      %s173 = sphi 0, %s171
      %s174 = sphi 0, %s173
      %s188 = sphi 0, %s174
      %s192 = sphi 0, %s192
      %s194 = sphi 0, %s192
      %s195 = sphi 0, %s194
      %s209 = sphi 0, %s195
      %s213 = sphi 0, %s213
      %s215 = sphi 0, %s213
      %s216 = sphi 0, %s215
      %s230 = sphi 0, %s216
      %s234 = sphi 0, %s234
      %s236 = sphi 0, %s234
      %s237 = sphi 0, %s236
      %s251 = sphi 0, %s237
      %s255 = sphi 0, %s255
      %s257 = sphi 0, %s255
      %s258 = sphi 0, %s257
      %s272 = sphi 0, %s258
      %s276 = sphi 0, %s276
      %s278 = sphi 0, %s276
      %s279 = sphi 0, %s278
      %s293 = sphi 0, %s279
      %s297 = sphi 0, %s297
      %s299 = sphi 0, %s297
      %s300 = sphi 0, %s299
      %s314 = sphi 0, %s300
      %s318 = sphi 0, %s318
      %s320 = sphi 0, %s318
      %s321 = sphi 0, %s320
      %s335 = sphi 0, %s321
      %s339 = sphi 0, %s339
      %s341 = sphi 0, %s339
      %s342 = sphi 0, %s341
      %s356 = sphi 0, %s342
      %s360 = sphi 0, %s360
      %s362 = sphi 0, %s360
      %s363 = sphi 0, %s362
      %s377 = sphi 0, %s363
      %s381 = sphi 0, %s381
      %s383 = sphi 0, %s381
      %s384 = sphi 0, %s383
      %s398 = sphi 0, %s384
      %s402 = sphi 0, %s402
      %s404 = sphi 0, %s402
      %s405 = sphi 0, %s404
      %s419 = sphi 0, %s405
      %s425 = sphi 0, %s427
      %s428 = sphi 0, %s425
      %s429 = sphi 0, %s428
      %s445 = sphi 0, %s429
    $region4: #{liner_ae_fwd.9} parent=1 // loop_header_branch
      %30 = sbr.rel (%p28) target = $region8
    $region5: #{liner_ae_fwd.9} parent=1 // loop_body
      %s32 = ssub.s32 %s27, 1
      %s33 = ssub.s32 %s27, 2
      %s34 = sadd.s32 %s27, 1
      %s35 = ssub.s32 %s27, %s34
      %p36 = scmp.eq.s32.totalorder %s35, 0
      %s38 = sadd.s32 %s37, 1
      %s39 = scalar_select %p36, %s37, %s38
      %p42 = pneg %p36
      %p43 = scmp.eq.s32.totalorder %s27, 1
      %p44 = por %p42, %p43
      %p45 = scmp.ne.s32.totalorder %s37, %s40
      %p46 = scmp.eq.s32.totalorder %s27, 0
      %p47 = por %p45, %p46
      %p48 = scmp.ne.s32.totalorder %s37, %s40
      %p49 = scmp.eq.s32.totalorder %s32, 1
      %p50 = por %p48, %p49
      %p51 = scmp.ne.s32.totalorder %s40, %s41
      %p52 = scmp.eq.s32.totalorder %s32, 0
      %p53 = por %p51, %p52
      %p54 = scmp.ne.s32.totalorder %s40, %s41
      %p55 = scmp.eq.s32.totalorder %s33, 1
      %p56 = por %p54, %p55
      %p58 = scmp.ne.s32.totalorder %s41, %s57
      %p59 = scmp.eq.s32.totalorder %s33, 0
      %p60 = por %p58, %p59
      %s61 = ssub.s32 %s27, %s34
      %p62 = scmp.eq.s32.totalorder %s61, 0
      %s64 = sadd.s32 %s63, 1
      %s65 = scalar_select %p62, %s63, %s64
      %p68 = pneg %p62
      %p69 = scmp.eq.s32.totalorder %s27, 1
      %p70 = por %p68, %p69
      %p71 = scmp.ne.s32.totalorder %s63, %s66
      %p72 = scmp.eq.s32.totalorder %s27, 0
      %p73 = por %p71, %p72
      %p74 = scmp.ne.s32.totalorder %s63, %s66
      %p75 = scmp.eq.s32.totalorder %s32, 1
      %p76 = por %p74, %p75
      %p77 = scmp.ne.s32.totalorder %s66, %s67
      %p78 = scmp.eq.s32.totalorder %s32, 0
      %p79 = por %p77, %p78
      %p80 = scmp.ne.s32.totalorder %s66, %s67
      %p81 = scmp.eq.s32.totalorder %s33, 1
      %p82 = por %p80, %p81
      %p84 = scmp.ne.s32.totalorder %s67, %s83
      %p85 = scmp.eq.s32.totalorder %s33, 0
      %p86 = por %p84, %p85
      %s88 = sadd.s32 %s87, 1
      %p91 = scmp.eq.s32.totalorder %s27, 1
      %p92 = scmp.ne.s32.totalorder %s87, %s89
      %p93 = scmp.eq.s32.totalorder %s27, 0
      %p94 = por %p92, %p93
      %p95 = scmp.ne.s32.totalorder %s87, %s89
      %p96 = scmp.eq.s32.totalorder %s32, 1
      %p97 = por %p95, %p96
      %p98 = scmp.ne.s32.totalorder %s89, %s90
      %p99 = scmp.eq.s32.totalorder %s32, 0
      %p100 = por %p98, %p99
      %p101 = scmp.ne.s32.totalorder %s89, %s90
      %p102 = scmp.eq.s32.totalorder %s33, 1
      %p103 = por %p101, %p102
      %p105 = scmp.ne.s32.totalorder %s90, %s104
      %p106 = scmp.eq.s32.totalorder %s33, 0
      %p107 = por %p105, %p106
      %s109 = sadd.s32 %s108, 1
      %p112 = scmp.eq.s32.totalorder %s27, 1
      %p113 = scmp.ne.s32.totalorder %s108, %s110
      %p114 = scmp.eq.s32.totalorder %s27, 0
      %p115 = por %p113, %p114
      %p116 = scmp.ne.s32.totalorder %s108, %s110
      %p117 = scmp.eq.s32.totalorder %s32, 1
      %p118 = por %p116, %p117
      %p119 = scmp.ne.s32.totalorder %s110, %s111
      %p120 = scmp.eq.s32.totalorder %s32, 0
      %p121 = por %p119, %p120
      %p122 = scmp.ne.s32.totalorder %s110, %s111
      %p123 = scmp.eq.s32.totalorder %s33, 1
      %p124 = por %p122, %p123
      %p126 = scmp.ne.s32.totalorder %s111, %s125
      %p127 = scmp.eq.s32.totalorder %s33, 0
      %p128 = por %p126, %p127
      %s130 = sadd.s32 %s129, 1
      %p133 = scmp.eq.s32.totalorder %s27, 1
      %p134 = scmp.ne.s32.totalorder %s129, %s131
      %p135 = scmp.eq.s32.totalorder %s27, 0
      %p136 = por %p134, %p135
      %p137 = scmp.ne.s32.totalorder %s129, %s131
      %p138 = scmp.eq.s32.totalorder %s32, 1
      %p139 = por %p137, %p138
      %p140 = scmp.ne.s32.totalorder %s131, %s132
      %p141 = scmp.eq.s32.totalorder %s32, 0
      %p142 = por %p140, %p141
      %p143 = scmp.ne.s32.totalorder %s131, %s132
      %p144 = scmp.eq.s32.totalorder %s33, 1
      %p145 = por %p143, %p144
      %p147 = scmp.ne.s32.totalorder %s132, %s146
      %p148 = scmp.eq.s32.totalorder %s33, 0
      %p149 = por %p147, %p148
      %s151 = sadd.s32 %s150, 1
      %p154 = scmp.eq.s32.totalorder %s27, 1
      %p155 = scmp.ne.s32.totalorder %s150, %s152
      %p156 = scmp.eq.s32.totalorder %s27, 0
      %p157 = por %p155, %p156
      %p158 = scmp.ne.s32.totalorder %s150, %s152
      %p159 = scmp.eq.s32.totalorder %s32, 1
      %p160 = por %p158, %p159
      %p161 = scmp.ne.s32.totalorder %s152, %s153
      %p162 = scmp.eq.s32.totalorder %s32, 0
      %p163 = por %p161, %p162
      %p164 = scmp.ne.s32.totalorder %s152, %s153
      %p165 = scmp.eq.s32.totalorder %s33, 1
      %p166 = por %p164, %p165
      %p168 = scmp.ne.s32.totalorder %s153, %s167
      %p169 = scmp.eq.s32.totalorder %s33, 0
      %p170 = por %p168, %p169
      %s172 = sadd.s32 %s171, 1
      %p175 = scmp.eq.s32.totalorder %s27, 1
      %p176 = scmp.ne.s32.totalorder %s171, %s173
      %p177 = scmp.eq.s32.totalorder %s27, 0
      %p178 = por %p176, %p177
      %p179 = scmp.ne.s32.totalorder %s171, %s173
      %p180 = scmp.eq.s32.totalorder %s32, 1
      %p181 = por %p179, %p180
      %p182 = scmp.ne.s32.totalorder %s173, %s174
      %p183 = scmp.eq.s32.totalorder %s32, 0
      %p184 = por %p182, %p183
      %p185 = scmp.ne.s32.totalorder %s173, %s174
      %p186 = scmp.eq.s32.totalorder %s33, 1
      %p187 = por %p185, %p186
      %p189 = scmp.ne.s32.totalorder %s174, %s188
      %p190 = scmp.eq.s32.totalorder %s33, 0
      %p191 = por %p189, %p190
      %s193 = sadd.s32 %s192, 1
      %p196 = scmp.eq.s32.totalorder %s27, 1
      %p197 = scmp.ne.s32.totalorder %s192, %s194
      %p198 = scmp.eq.s32.totalorder %s27, 0
      %p199 = por %p197, %p198
      %p200 = scmp.ne.s32.totalorder %s192, %s194
      %p201 = scmp.eq.s32.totalorder %s32, 1
      %p202 = por %p200, %p201
      %p203 = scmp.ne.s32.totalorder %s194, %s195
      %p204 = scmp.eq.s32.totalorder %s32, 0
      %p205 = por %p203, %p204
      %p206 = scmp.ne.s32.totalorder %s194, %s195
      %p207 = scmp.eq.s32.totalorder %s33, 1
      %p208 = por %p206, %p207
      %p210 = scmp.ne.s32.totalorder %s195, %s209
      %p211 = scmp.eq.s32.totalorder %s33, 0
      %p212 = por %p210, %p211
      %s214 = sadd.s32 %s213, 1
      %p217 = scmp.eq.s32.totalorder %s27, 1
      %p218 = scmp.ne.s32.totalorder %s213, %s215
      %p219 = scmp.eq.s32.totalorder %s27, 0
      %p220 = por %p218, %p219
      %p221 = scmp.ne.s32.totalorder %s213, %s215
      %p222 = scmp.eq.s32.totalorder %s32, 1
      %p223 = por %p221, %p222
      %p224 = scmp.ne.s32.totalorder %s215, %s216
      %p225 = scmp.eq.s32.totalorder %s32, 0
      %p226 = por %p224, %p225
      %p227 = scmp.ne.s32.totalorder %s215, %s216
      %p228 = scmp.eq.s32.totalorder %s33, 1
      %p229 = por %p227, %p228
      %p231 = scmp.ne.s32.totalorder %s216, %s230
      %p232 = scmp.eq.s32.totalorder %s33, 0
      %p233 = por %p231, %p232
      %s235 = sadd.s32 %s234, 1
      %p238 = scmp.eq.s32.totalorder %s27, 1
      %p239 = scmp.ne.s32.totalorder %s234, %s236
      %p240 = scmp.eq.s32.totalorder %s27, 0
      %p241 = por %p239, %p240
      %p242 = scmp.ne.s32.totalorder %s234, %s236
      %p243 = scmp.eq.s32.totalorder %s32, 1
      %p244 = por %p242, %p243
      %p245 = scmp.ne.s32.totalorder %s236, %s237
      %p246 = scmp.eq.s32.totalorder %s32, 0
      %p247 = por %p245, %p246
      %p248 = scmp.ne.s32.totalorder %s236, %s237
      %p249 = scmp.eq.s32.totalorder %s33, 1
      %p250 = por %p248, %p249
      %p252 = scmp.ne.s32.totalorder %s237, %s251
      %p253 = scmp.eq.s32.totalorder %s33, 0
      %p254 = por %p252, %p253
      %s256 = sadd.s32 %s255, 1
      %p259 = scmp.eq.s32.totalorder %s27, 1
      %p260 = scmp.ne.s32.totalorder %s255, %s257
      %p261 = scmp.eq.s32.totalorder %s27, 0
      %p262 = por %p260, %p261
      %p263 = scmp.ne.s32.totalorder %s255, %s257
      %p264 = scmp.eq.s32.totalorder %s32, 1
      %p265 = por %p263, %p264
      %p266 = scmp.ne.s32.totalorder %s257, %s258
      %p267 = scmp.eq.s32.totalorder %s32, 0
      %p268 = por %p266, %p267
      %p269 = scmp.ne.s32.totalorder %s257, %s258
      %p270 = scmp.eq.s32.totalorder %s33, 1
      %p271 = por %p269, %p270
      %p273 = scmp.ne.s32.totalorder %s258, %s272
      %p274 = scmp.eq.s32.totalorder %s33, 0
      %p275 = por %p273, %p274
      %s277 = sadd.s32 %s276, 1
      %p280 = scmp.eq.s32.totalorder %s27, 1
      %p281 = scmp.ne.s32.totalorder %s276, %s278
      %p282 = scmp.eq.s32.totalorder %s27, 0
      %p283 = por %p281, %p282
      %p284 = scmp.ne.s32.totalorder %s276, %s278
      %p285 = scmp.eq.s32.totalorder %s32, 1
      %p286 = por %p284, %p285
      %p287 = scmp.ne.s32.totalorder %s278, %s279
      %p288 = scmp.eq.s32.totalorder %s32, 0
      %p289 = por %p287, %p288
      %p290 = scmp.ne.s32.totalorder %s278, %s279
      %p291 = scmp.eq.s32.totalorder %s33, 1
      %p292 = por %p290, %p291
      %p294 = scmp.ne.s32.totalorder %s279, %s293
      %p295 = scmp.eq.s32.totalorder %s33, 0
      %p296 = por %p294, %p295
      %s298 = sadd.s32 %s297, 1
      %p301 = scmp.eq.s32.totalorder %s27, 1
      %p302 = scmp.ne.s32.totalorder %s297, %s299
      %p303 = scmp.eq.s32.totalorder %s27, 0
      %p304 = por %p302, %p303
      %p305 = scmp.ne.s32.totalorder %s297, %s299
      %p306 = scmp.eq.s32.totalorder %s32, 1
      %p307 = por %p305, %p306
      %p308 = scmp.ne.s32.totalorder %s299, %s300
      %p309 = scmp.eq.s32.totalorder %s32, 0
      %p310 = por %p308, %p309
      %p311 = scmp.ne.s32.totalorder %s299, %s300
      %p312 = scmp.eq.s32.totalorder %s33, 1
      %p313 = por %p311, %p312
      %p315 = scmp.ne.s32.totalorder %s300, %s314
      %p316 = scmp.eq.s32.totalorder %s33, 0
      %p317 = por %p315, %p316
      %s319 = sadd.s32 %s318, 1
      %p322 = scmp.eq.s32.totalorder %s27, 1
      %p323 = scmp.ne.s32.totalorder %s318, %s320
      %p324 = scmp.eq.s32.totalorder %s27, 0
      %p325 = por %p323, %p324
      %p326 = scmp.ne.s32.totalorder %s318, %s320
      %p327 = scmp.eq.s32.totalorder %s32, 1
      %p328 = por %p326, %p327
      %p329 = scmp.ne.s32.totalorder %s320, %s321
      %p330 = scmp.eq.s32.totalorder %s32, 0
      %p331 = por %p329, %p330
      %p332 = scmp.ne.s32.totalorder %s320, %s321
      %p333 = scmp.eq.s32.totalorder %s33, 1
      %p334 = por %p332, %p333
      %p336 = scmp.ne.s32.totalorder %s321, %s335
      %p337 = scmp.eq.s32.totalorder %s33, 0
      %p338 = por %p336, %p337
      %s340 = sadd.s32 %s339, 1
      %p343 = scmp.eq.s32.totalorder %s27, 1
      %p344 = scmp.ne.s32.totalorder %s339, %s341
      %p345 = scmp.eq.s32.totalorder %s27, 0
      %p346 = por %p344, %p345
      %p347 = scmp.ne.s32.totalorder %s339, %s341
      %p348 = scmp.eq.s32.totalorder %s32, 1
      %p349 = por %p347, %p348
      %p350 = scmp.ne.s32.totalorder %s341, %s342
      %p351 = scmp.eq.s32.totalorder %s32, 0
      %p352 = por %p350, %p351
      %p353 = scmp.ne.s32.totalorder %s341, %s342
      %p354 = scmp.eq.s32.totalorder %s33, 1
      %p355 = por %p353, %p354
      %p357 = scmp.ne.s32.totalorder %s342, %s356
      %p358 = scmp.eq.s32.totalorder %s33, 0
      %p359 = por %p357, %p358
      %s361 = sadd.s32 %s360, 1
      %p364 = scmp.eq.s32.totalorder %s27, 1
      %p365 = scmp.ne.s32.totalorder %s360, %s362
      %p366 = scmp.eq.s32.totalorder %s27, 0
      %p367 = por %p365, %p366
      %p368 = scmp.ne.s32.totalorder %s360, %s362
      %p369 = scmp.eq.s32.totalorder %s32, 1
      %p370 = por %p368, %p369
      %p371 = scmp.ne.s32.totalorder %s362, %s363
      %p372 = scmp.eq.s32.totalorder %s32, 0
      %p373 = por %p371, %p372
      %p374 = scmp.ne.s32.totalorder %s362, %s363
      %p375 = scmp.eq.s32.totalorder %s33, 1
      %p376 = por %p374, %p375
      %p378 = scmp.ne.s32.totalorder %s363, %s377
      %p379 = scmp.eq.s32.totalorder %s33, 0
      %p380 = por %p378, %p379
      %s382 = sadd.s32 %s381, 1
      %p385 = scmp.eq.s32.totalorder %s27, 1
      %p386 = scmp.ne.s32.totalorder %s381, %s383
      %p387 = scmp.eq.s32.totalorder %s27, 0
      %p388 = por %p386, %p387
      %p389 = scmp.ne.s32.totalorder %s381, %s383
      %p390 = scmp.eq.s32.totalorder %s32, 1
      %p391 = por %p389, %p390
      %p392 = scmp.ne.s32.totalorder %s383, %s384
      %p393 = scmp.eq.s32.totalorder %s32, 0
      %p394 = por %p392, %p393
      %p395 = scmp.ne.s32.totalorder %s383, %s384
      %p396 = scmp.eq.s32.totalorder %s33, 1
      %p397 = por %p395, %p396
      %p399 = scmp.ne.s32.totalorder %s384, %s398
      %p400 = scmp.eq.s32.totalorder %s33, 0
      %p401 = por %p399, %p400
      %s403 = sadd.s32 %s402, 1
      %p406 = scmp.eq.s32.totalorder %s27, 1
      %p407 = scmp.ne.s32.totalorder %s402, %s404
      %p408 = scmp.eq.s32.totalorder %s27, 0
      %p409 = por %p407, %p408
      %p410 = scmp.ne.s32.totalorder %s402, %s404
      %p411 = scmp.eq.s32.totalorder %s32, 1
      %p412 = por %p410, %p411
      %p413 = scmp.ne.s32.totalorder %s404, %s405
      %p414 = scmp.eq.s32.totalorder %s32, 0
      %p415 = por %p413, %p414
      %p416 = scmp.ne.s32.totalorder %s404, %s405
      %p417 = scmp.eq.s32.totalorder %s33, 1
      %p418 = por %p416, %p417
      %p420 = scmp.ne.s32.totalorder %s405, %s419
      %p421 = scmp.eq.s32.totalorder %s33, 0
      %p422 = por %p420, %p421
      %s423 = ssub.s32 %s27, %s34
      %p424 = scmp.eq.s32.totalorder %s423, 0
      %s426 = sadd.s32 %s425, 1
      %s427 = scalar_select %p424, %s425, %s426
      %p430 = pneg %p424
      %p431 = scmp.eq.s32.totalorder %s27, 1
      %p432 = por %p430, %p431
      %p433 = scmp.ne.s32.totalorder %s425, %s428
      %p434 = scmp.eq.s32.totalorder %s27, 0
      %p435 = por %p433, %p434
      %p436 = scmp.ne.s32.totalorder %s425, %s428
      %p437 = scmp.eq.s32.totalorder %s32, 1
      %p438 = por %p436, %p437
      %p439 = scmp.ne.s32.totalorder %s428, %s429
      %p440 = scmp.eq.s32.totalorder %s32, 0
      %p441 = por %p439, %p440
      %p442 = scmp.ne.s32.totalorder %s428, %s429
      %p443 = scmp.eq.s32.totalorder %s33, 1
      %p444 = por %p442, %p443
      %p446 = scmp.ne.s32.totalorder %s429, %s445
      %p447 = scmp.eq.s32.totalorder %s33, 0
      %p448 = por %p446, %p447
      %p449 = scmp.le.s32.totalorder 1, %s27
      %p450 = scmp.lt.s32.totalorder %s27, 3
      %p451 = pnand %p449, %p450
      %p452 = pneg %p451
      // Predicated region
      $region9: #{liner_ae_fwd.9} parent=5 // pred_check
        _
      $region10: #{liner_ae_fwd.9} parent=5 // pred_check_branch
        %454 = sbr.rel (%p451) target = $region12
      $region11: #{liner_ae_fwd.9} parent=5 // pred_region
        %s455 = ssub.s32 %s27, 1
        // Predicated region
        $region13: #{liner_ae_fwd.9} parent=11 // pred_check
          %p456 = pneg %p100
        $region14: #{liner_ae_fwd.9} parent=11 // pred_check_branch
          %458 = sbr.rel (%p456) target = $region16
        $region15: #{liner_ae_fwd.9} parent=11 // pred_region
          _
        $region16: #{liner_ae_fwd.9} parent=11 // pred_fallthru
          _
        // Predicated region
        $region17: #{liner_ae_fwd.9} parent=11 // pred_check
          %p459 = pneg %p121
        $region18: #{liner_ae_fwd.9} parent=11 // pred_check_branch
          %461 = sbr.rel (%p459) target = $region20
        $region19: #{liner_ae_fwd.9} parent=11 // pred_region
          _
        $region20: #{liner_ae_fwd.9} parent=11 // pred_fallthru
          _
        // Predicated region
        $region21: #{liner_ae_fwd.9} parent=11 // pred_check
          %p462 = pneg %p142
        $region22: #{liner_ae_fwd.9} parent=11 // pred_check_branch
          %464 = sbr.rel (%p462) target = $region24
        $region23: #{liner_ae_fwd.9} parent=11 // pred_region
          _
        $region24: #{liner_ae_fwd.9} parent=11 // pred_fallthru
          _
        // Predicated region
        $region25: #{liner_ae_fwd.9} parent=11 // pred_check
          %p465 = pneg %p163
        $region26: #{liner_ae_fwd.9} parent=11 // pred_check_branch
          %467 = sbr.rel (%p465) target = $region28
        $region27: #{liner_ae_fwd.9} parent=11 // pred_region
          _
        $region28: #{liner_ae_fwd.9} parent=11 // pred_fallthru
          _
        // Predicated region
        $region29: #{liner_ae_fwd.9} parent=11 // pred_check
          %p468 = pneg %p184
        $region30: #{liner_ae_fwd.9} parent=11 // pred_check_branch
          %470 = sbr.rel (%p468) target = $region32
        $region31: #{liner_ae_fwd.9} parent=11 // pred_region
          _
        $region32: #{liner_ae_fwd.9} parent=11 // pred_fallthru
          _
        // Predicated region
        $region33: #{liner_ae_fwd.9} parent=11 // pred_check
          %p471 = pneg %p205
        $region34: #{liner_ae_fwd.9} parent=11 // pred_check_branch
          %473 = sbr.rel (%p471) target = $region36
        $region35: #{liner_ae_fwd.9} parent=11 // pred_region
          _
        $region36: #{liner_ae_fwd.9} parent=11 // pred_fallthru
          _
        // Predicated region
        $region37: #{liner_ae_fwd.9} parent=11 // pred_check
          %p474 = pneg %p226
        $region38: #{liner_ae_fwd.9} parent=11 // pred_check_branch
          %476 = sbr.rel (%p474) target = $region40
        $region39: #{liner_ae_fwd.9} parent=11 // pred_region
          _
        $region40: #{liner_ae_fwd.9} parent=11 // pred_fallthru
          _
        // Predicated region
        $region41: #{liner_ae_fwd.9} parent=11 // pred_check
          %p477 = pneg %p247
        $region42: #{liner_ae_fwd.9} parent=11 // pred_check_branch
          %479 = sbr.rel (%p477) target = $region44
        $region43: #{liner_ae_fwd.9} parent=11 // pred_region
          _
        $region44: #{liner_ae_fwd.9} parent=11 // pred_fallthru
          _
        // Predicated region
        $region45: #{liner_ae_fwd.9} parent=11 // pred_check
          %p480 = pneg %p268
        $region46: #{liner_ae_fwd.9} parent=11 // pred_check_branch
          %482 = sbr.rel (%p480) target = $region48
        $region47: #{liner_ae_fwd.9} parent=11 // pred_region
          _
        $region48: #{liner_ae_fwd.9} parent=11 // pred_fallthru
          _
        // Predicated region
        $region49: #{liner_ae_fwd.9} parent=11 // pred_check
          %p483 = pneg %p289
        $region50: #{liner_ae_fwd.9} parent=11 // pred_check_branch
          %485 = sbr.rel (%p483) target = $region52
        $region51: #{liner_ae_fwd.9} parent=11 // pred_region
          _
        $region52: #{liner_ae_fwd.9} parent=11 // pred_fallthru
          _
        // Predicated region
        $region53: #{liner_ae_fwd.9} parent=11 // pred_check
          %p486 = pneg %p310
        $region54: #{liner_ae_fwd.9} parent=11 // pred_check_branch
          %488 = sbr.rel (%p486) target = $region56
        $region55: #{liner_ae_fwd.9} parent=11 // pred_region
          _
        $region56: #{liner_ae_fwd.9} parent=11 // pred_fallthru
          _
        // Predicated region
        $region57: #{liner_ae_fwd.9} parent=11 // pred_check
          %p489 = pneg %p331
        $region58: #{liner_ae_fwd.9} parent=11 // pred_check_branch
          %491 = sbr.rel (%p489) target = $region60
        $region59: #{liner_ae_fwd.9} parent=11 // pred_region
          _
        $region60: #{liner_ae_fwd.9} parent=11 // pred_fallthru
          _
        // Predicated region
        $region61: #{liner_ae_fwd.9} parent=11 // pred_check
          %p492 = pneg %p352
        $region62: #{liner_ae_fwd.9} parent=11 // pred_check_branch
          %494 = sbr.rel (%p492) target = $region64
        $region63: #{liner_ae_fwd.9} parent=11 // pred_region
          _
        $region64: #{liner_ae_fwd.9} parent=11 // pred_fallthru
          _
        // Predicated region
        $region65: #{liner_ae_fwd.9} parent=11 // pred_check
          %p495 = pneg %p373
        $region66: #{liner_ae_fwd.9} parent=11 // pred_check_branch
          %497 = sbr.rel (%p495) target = $region68
        $region67: #{liner_ae_fwd.9} parent=11 // pred_region
          _
        $region68: #{liner_ae_fwd.9} parent=11 // pred_fallthru
          _
        // Predicated region
        $region69: #{liner_ae_fwd.9} parent=11 // pred_check
          %p498 = pneg %p394
        $region70: #{liner_ae_fwd.9} parent=11 // pred_check_branch
          %500 = sbr.rel (%p498) target = $region72
        $region71: #{liner_ae_fwd.9} parent=11 // pred_region
          _
        $region72: #{liner_ae_fwd.9} parent=11 // pred_fallthru
          _
        // Predicated region
        $region73: #{liner_ae_fwd.9} parent=11 // pred_check
          %p501 = pneg %p415
        $region74: #{liner_ae_fwd.9} parent=11 // pred_check_branch
          %503 = sbr.rel (%p501) target = $region76
        $region75: #{liner_ae_fwd.9} parent=11 // pred_region
          _
        $region76: #{liner_ae_fwd.9} parent=11 // pred_fallthru
          _
      $region12: #{liner_ae_fwd.9} parent=5 // pred_fallthru
        _
      %p504 = scmp.lt.s32.totalorder %s27, 2
      // Predicated region
      $region77: #{liner_ae_fwd.9} parent=5 // pred_check
        %p505 = pneg %p504
      $region78: #{liner_ae_fwd.9} parent=5 // pred_check_branch
        %507 = sbr.rel (%p505) target = $region80
      $region79: #{liner_ae_fwd.9} parent=5 // pred_region
        // Predicated region
        $region81: #{liner_ae_fwd.9} parent=79 // pred_check
          %p508 = pneg %p47
        $region82: #{liner_ae_fwd.9} parent=79 // pred_check_branch
          %510 = sbr.rel (%p508) target = $region84
        $region83: #{liner_ae_fwd.9} parent=79 // pred_region
          %p511 = scmp.lt.s32.totalorder %s27, 1
          %s512 = scalar_select %p511, %s27, 1
          %s513 = smul.addr %s512, 8
          %s514 = scalar_lea.vmem %s0, %s513
        $region84: #{liner_ae_fwd.9} parent=79 // pred_fallthru
          _
        // Predicated region
        $region85: #{liner_ae_fwd.9} parent=79 // pred_check
          %p515 = pneg %p73
        $region86: #{liner_ae_fwd.9} parent=79 // pred_check_branch
          %517 = sbr.rel (%p515) target = $region88
        $region87: #{liner_ae_fwd.9} parent=79 // pred_region
          %p518 = scmp.lt.s32.totalorder %s27, 1
          %s519 = scalar_select %p518, %s27, 1
          %s520 = smul.addr %s519, 8
          %s521 = scalar_lea.vmem %s1, %s520
        $region88: #{liner_ae_fwd.9} parent=79 // pred_fallthru
          _
      $region80: #{liner_ae_fwd.9} parent=5 // pred_fallthru
        _
      %p522 = scmp.le.s32.totalorder 1, %s27
      %p523 = scmp.lt.s32.totalorder %s27, 3
      %p524 = pnand %p522, %p523
      %p525 = pneg %p524
      // Predicated region
      $region89: #{liner_ae_fwd.9} parent=5 // pred_check
        _
      $region90: #{liner_ae_fwd.9} parent=5 // pred_check_branch
        %527 = sbr.rel (%p524) target = $region92
      $region91: #{liner_ae_fwd.9} parent=5 // pred_region
        %s528 = ssub.s32 %s27, 1
        %p529 = scmp.lt.s32.totalorder %s32, 1
        %s530 = scalar_select %p529, %s32, 1
        %s531 = smul.addr %s530, 8
        %s532 = scalar_lea.vmem %s0, %s531
        %p533 = pneg %p53
        %p534 = pneg %p50
        %p535 = scmp.lt.s32.totalorder %s32, 1
        %s536 = scalar_select %p535, %s32, 1
        %s537 = smul.addr %s536, 8
        %s538 = scalar_lea.vmem %s1, %s537
        %p539 = pneg %p79
        %p540 = pneg %p76
        %p541 = pneg %p100
        %p542 = pneg %p97
        %p543 = pneg %p121
        %p544 = pneg %p118
        %p545 = pneg %p142
        %p546 = pneg %p139
        %p547 = pneg %p163
        %p548 = pneg %p160
        %p549 = pneg %p184
        %p550 = pneg %p181
        %p551 = pneg %p205
        %p552 = pneg %p202
        %p553 = pneg %p226
        %p554 = pneg %p223
        %p555 = pneg %p247
        %p556 = pneg %p244
        %p557 = pneg %p268
        %p558 = pneg %p265
        %p559 = pneg %p289
        %p560 = pneg %p286
        %p561 = pneg %p310
        %p562 = pneg %p307
        %p563 = pneg %p331
        %p564 = pneg %p328
        %p565 = pneg %p352
        %p566 = pneg %p349
        %p567 = pneg %p373
        %p568 = pneg %p370
        %p569 = pneg %p394
        %p570 = pneg %p391
        %p571 = pneg %p415
        %p572 = pneg %p412
        %p573 = pneg %p441
        %p574 = pneg %p438
        %s575 = sand.u32 %s428, 1
        %s576 = scalar_lea.sflag [#allocation3], %s575
        %s577 = sand.u32 %s428, 1
        %s578 = smul.addr %s577, 8
        %s579 = scalar_lea.vmem [#allocation2], %s578
        %p580 = scmp.lt.s32.totalorder %s32, 1
        %s581 = scalar_select %p580, %s32, 1
        %s582 = smul.addr %s581, 8
        %s583 = scalar_lea.vmem %s0, %s582
        %p584 = scmp.lt.s32.totalorder %s32, 1
        %s585 = scalar_select %p584, %s32, 1
        %s586 = smul.addr %s585, 8
        %s587 = scalar_lea.vmem %s1, %s586
        %v588 = vld [vmem:[%s583] sm:$0xff]
        %v589 = vld [vmem:[%s587] sm:$0xff]
        %v590 = vld [vmem:[%s2] sm:$0xff]
        %v591 = vld [vmem:[%s2 + $0x8] sm:$0xff]
        %v592 = vld [vmem:[%s3] sm:$0x1]
        %v593 = vld [vmem:[%s4] sm:$0xff]
        %v594 = vld [vmem:[%s4 + $0x8] sm:$0xff]
        %v595 = vld [vmem:[%s5] sm:$0x1]
        %v597 = vlaneseq
        %v598 = vshrl.u32 %v597, 7
        %v599 = vsub.s32 0, %v598
        %v600 = vrot.slane %v592, %v599
        %vm602 = vcmask 130048
        %v604 = vsel %vm602, %v588, 0
        %606 = vmatprep.subr.mxu0 0.0
        %607 = vmatpush1.msra.mxu0 %v590
        %608 = vmatprep.subr.mxu0 0.0
        %609 = vmatpush1.msra.mxu0 %v591
        %610 = vmatprep.subr.mxu0 0.0
        %611 = vmatpush1.msra.mxu0 0.0
        %612 = vmatprep.subr.mxu0 0.0
        %613 = vmatpush1.msra.mxu0 0.0
        %614 = vmatprep.subr.mxu0 0.0
        %615 = vmatpush1.msra.mxu0 0.0
        %616 = vmatprep.subr.mxu0 0.0
        %617 = vmatpush1.msra.mxu0 0.0
        %618 = vmatprep.subr.mxu0 0.0
        %619 = vmatpush1.msra.mxu0 0.0
        %620 = vmatprep.subr.mxu0 0.0
        %621 = vmatpush1.msra.mxu0 0.0
        %622 = vmatprep.subr.mxu0 0.0
        %623 = vmatpush1.msra.mxu0 0.0
        %624 = vmatprep.subr.mxu0 0.0
        %625 = vmatpush1.msra.mxu0 0.0
        %626 = vmatprep.subr.mxu0 0.0
        %627 = vmatpush1.msra.mxu0 0.0
        %628 = vmatprep.subr.mxu0 0.0
        %629 = vmatpush1.msra.mxu0 0.0
        %630 = vmatprep.subr.mxu0 0.0
        %631 = vmatpush1.msra.mxu0 0.0
        %632 = vmatprep.subr.mxu0 0.0
        %633 = vmatpush1.msra.mxu0 0.0
        %634 = vmatprep.subr.mxu0 0.0
        %635 = vmatpush1.msra.mxu0 0.0
        %636 = vmatprep.subr.mxu0 0.0
        %637 = vmatpush1.msra.mxu0 0.0
        %638 = vmatprep.subr.mxu0 0.0
        %639 = vmatpush1.msra.mxu0 0.0
        %640 = vmatprep.subr.mxu0 0.0
        %641 = vmatpush1.msra.mxu0 0.0
        %642 = vmatprep.subr.mxu0 0.0
        %643 = vmatpush1.msra.mxu0 0.0
        %644 = vmatprep.subr.mxu0 0.0
        %645 = vmatpush1.msra.mxu0 0.0
        %646 = vmatprep.subr.mxu0 0.0
        %647 = vmatpush1.msra.mxu0 0.0
        %648 = vmatprep.subr.mxu0 0.0
        %649 = vmatpush1.msra.mxu0 0.0
        %650 = vmatprep.subr.mxu0 0.0
        %651 = vmatpush1.msra.mxu0 0.0
        %652 = vmatprep.subr.mxu0 0.0
        %653 = vmatpush1.msra.mxu0 0.0
        %654 = vmatprep.subr.mxu0 0.0
        %655 = vmatpush1.msra.mxu0 0.0
        %656 = vmatprep.subr.mxu0 0.0
        %657 = vmatpush1.msra.mxu0 0.0
        %658 = vmatprep.subr.mxu0 0.0
        %659 = vmatpush1.msra.mxu0 0.0
        %660 = vmatprep.subr.mxu0 0.0
        %661 = vmatpush1.msra.mxu0 0.0
        %662 = vmatprep.subr.mxu0 0.0
        %663 = vmatpush1.msra.mxu0 0.0
        %664 = vmatprep.subr.mxu0 0.0
        %665 = vmatpush1.msra.mxu0 0.0
        %666 = vmatprep.subr.mxu0 0.0
        %667 = vmatpush1.msra.mxu0 0.0
        %668 = vmatprep.subr.mxu0 0.0
        %669 = vmatpush1.msra.mxu0 0.0
        %670 = vmatprep.mubr.f32.mxu0 0.0
        %671 = vmatmul.mubr.f32.gmra.mrb[0].mxu0 %v604
        %v672 = vpop.f32.mrb[0].mxu0
        %v673 = vadd.f32 %v600, %v672
        %v674 = vpop.f32.mrb[0].mxu0
        %675 = vdwg.mxu0
        %677 = vrot.lane.b32.xlu0 %v673, 112
        %v678 = vpop.permute.xlu0 %677
        %vm679 = vcmask 64512
        %v680 = vsel %vm679, %v673, 0
        %v682 = vsel %vm679, %v678, 0
        %684 = vmatprep.subr.mxu0 0.0
        %685 = vmatpush1.xpose.msra.mxu0 %v682
        %686 = vmatprep.subr.mxu0 0.0
        %687 = vmatpush1.xpose.msra.mxu0 0.0
        %688 = vmatprep.subr.mxu0 0.0
        %689 = vmatpush1.xpose.msra.mxu0 0.0
        %690 = vmatprep.subr.mxu0 0.0
        %691 = vmatpush1.xpose.msra.mxu0 0.0
        %692 = vmatprep.subr.mxu0 0.0
        %693 = vmatpush1.xpose.msra.mxu0 0.0
        %694 = vmatprep.subr.mxu0 0.0
        %695 = vmatpush1.xpose.msra.mxu0 0.0
        %696 = vmatprep.subr.mxu0 0.0
        %697 = vmatpush1.xpose.msra.mxu0 0.0
        %698 = vmatprep.subr.mxu0 0.0
        %699 = vmatpush1.xpose.msra.mxu0 0.0
        %700 = vmatprep.subr.mxu0 0.0
        %701 = vmatpush1.xpose.msra.mxu0 0.0
        %702 = vmatprep.subr.mxu0 0.0
        %703 = vmatpush1.xpose.msra.mxu0 0.0
        %704 = vmatprep.subr.mxu0 0.0
        %705 = vmatpush1.xpose.msra.mxu0 0.0
        %706 = vmatprep.subr.mxu0 0.0
        %707 = vmatpush1.xpose.msra.mxu0 0.0
        %708 = vmatprep.subr.mxu0 0.0
        %709 = vmatpush1.xpose.msra.mxu0 0.0
        %710 = vmatprep.subr.mxu0 0.0
        %711 = vmatpush1.xpose.msra.mxu0 0.0
        %712 = vmatprep.subr.mxu0 0.0
        %713 = vmatpush1.xpose.msra.mxu0 0.0
        %714 = vmatprep.subr.mxu0 0.0
        %715 = vmatpush1.xpose.msra.mxu0 0.0
        %716 = vmatprep.subr.mxu0 0.0
        %717 = vmatpush1.xpose.msra.mxu0 0.0
        %718 = vmatprep.subr.mxu0 0.0
        %719 = vmatpush1.xpose.msra.mxu0 0.0
        %720 = vmatprep.subr.mxu0 0.0
        %721 = vmatpush1.xpose.msra.mxu0 0.0
        %722 = vmatprep.subr.mxu0 0.0
        %723 = vmatpush1.xpose.msra.mxu0 0.0
        %724 = vmatprep.subr.mxu0 0.0
        %725 = vmatpush1.xpose.msra.mxu0 0.0
        %726 = vmatprep.subr.mxu0 0.0
        %727 = vmatpush1.xpose.msra.mxu0 0.0
        %728 = vmatprep.subr.mxu0 0.0
        %729 = vmatpush1.xpose.msra.mxu0 0.0
        %730 = vmatprep.subr.mxu0 0.0
        %731 = vmatpush1.xpose.msra.mxu0 0.0
        %732 = vmatprep.subr.mxu0 0.0
        %733 = vmatpush1.xpose.msra.mxu0 0.0
        %734 = vmatprep.subr.mxu0 0.0
        %735 = vmatpush1.xpose.msra.mxu0 0.0
        %736 = vmatprep.subr.mxu0 0.0
        %737 = vmatpush1.xpose.msra.mxu0 0.0
        %738 = vmatprep.subr.mxu0 0.0
        %739 = vmatpush1.xpose.msra.mxu0 0.0
        %740 = vmatprep.subr.mxu0 0.0
        %741 = vmatpush1.xpose.msra.mxu0 0.0
        %742 = vmatprep.subr.mxu0 0.0
        %743 = vmatpush1.xpose.msra.mxu0 0.0
        %744 = vmatprep.subr.mxu0 0.0
        %745 = vmatpush1.xpose.msra.mxu0 0.0
        %746 = vmatprep.subr.mxu0 0.0
        %747 = vmatpush1.xpose.msra.mxu0 0.0
        %748 = vmatprep.mubr.f32.mxu0 0.0
        %749 = vmatmul.mubr.f32.gmra.mrb[0].mxu0 %v680
        %v750 = vpop.f32.mrb[0].mxu0
        %v751 = vadd.f32 0.0, %v750
        %v752 = vpop.f32.mrb[0].mxu0
        %753 = vdwg.mxu0
        %v754 = vmul.f32 %v751, 0.35355338
        %v755 = vsel %vm679, %v754, -inf
        %756 = vmax.xlane.f32.xlu0 %v755
        %v757 = vpop.xlane.xlu0 %756
        %v758 = vsub.f32 %v754, %v757
        %v759 = vmul.f32 %v758, 1.442695
        %v760 = vpow.pop %v759
        %v761 = vsel %vm679, %v760, 0.0
        %762 = vadd.xlane.f32.xlu0 %v761
        %v763 = vpop.xlane.xlu0 %762
        %v764 = vrcp.pop %v763
        %v765 = vmul.f32 %v760, %v764
        %766 = vrot.lane.b32.xlu0 %v673, 96
        %v767 = vpop.permute.xlu0 %766
        %v770 = vsel %vm679, %v765, 0
        %772 = vmatprep.subr.mxu0 0.0
        %773 = vmatpush1.msra.mxu0 %v767
        %774 = vmatprep.subr.mxu0 0.0
        %775 = vmatpush1.msra.mxu0 0.0
        %776 = vmatprep.subr.mxu0 0.0
        %777 = vmatpush1.msra.mxu0 0.0
        %778 = vmatprep.subr.mxu0 0.0
        %779 = vmatpush1.msra.mxu0 0.0
        %780 = vmatprep.subr.mxu0 0.0
        %781 = vmatpush1.msra.mxu0 0.0
        %782 = vmatprep.subr.mxu0 0.0
        %783 = vmatpush1.msra.mxu0 0.0
        %784 = vmatprep.subr.mxu0 0.0
        %785 = vmatpush1.msra.mxu0 0.0
        %786 = vmatprep.subr.mxu0 0.0
        %787 = vmatpush1.msra.mxu0 0.0
        %788 = vmatprep.subr.mxu0 0.0
        %789 = vmatpush1.msra.mxu0 0.0
        %790 = vmatprep.subr.mxu0 0.0
        %791 = vmatpush1.msra.mxu0 0.0
        %792 = vmatprep.subr.mxu0 0.0
        %793 = vmatpush1.msra.mxu0 0.0
        %794 = vmatprep.subr.mxu0 0.0
        %795 = vmatpush1.msra.mxu0 0.0
        %796 = vmatprep.subr.mxu0 0.0
        %797 = vmatpush1.msra.mxu0 0.0
        %798 = vmatprep.subr.mxu0 0.0
        %799 = vmatpush1.msra.mxu0 0.0
        %800 = vmatprep.subr.mxu0 0.0
        %801 = vmatpush1.msra.mxu0 0.0
        %802 = vmatprep.subr.mxu0 0.0
        %803 = vmatpush1.msra.mxu0 0.0
        %804 = vmatprep.subr.mxu0 0.0
        %805 = vmatpush1.msra.mxu0 0.0
        %806 = vmatprep.subr.mxu0 0.0
        %807 = vmatpush1.msra.mxu0 0.0
        %808 = vmatprep.subr.mxu0 0.0
        %809 = vmatpush1.msra.mxu0 0.0
        %810 = vmatprep.subr.mxu0 0.0
        %811 = vmatpush1.msra.mxu0 0.0
        %812 = vmatprep.subr.mxu0 0.0
        %813 = vmatpush1.msra.mxu0 0.0
        %814 = vmatprep.subr.mxu0 0.0
        %815 = vmatpush1.msra.mxu0 0.0
        %816 = vmatprep.subr.mxu0 0.0
        %817 = vmatpush1.msra.mxu0 0.0
        %818 = vmatprep.subr.mxu0 0.0
        %819 = vmatpush1.msra.mxu0 0.0
        %820 = vmatprep.subr.mxu0 0.0
        %821 = vmatpush1.msra.mxu0 0.0
        %822 = vmatprep.subr.mxu0 0.0
        %823 = vmatpush1.msra.mxu0 0.0
        %824 = vmatprep.subr.mxu0 0.0
        %825 = vmatpush1.msra.mxu0 0.0
        %826 = vmatprep.subr.mxu0 0.0
        %827 = vmatpush1.msra.mxu0 0.0
        %828 = vmatprep.subr.mxu0 0.0
        %829 = vmatpush1.msra.mxu0 0.0
        %830 = vmatprep.subr.mxu0 0.0
        %831 = vmatpush1.msra.mxu0 0.0
        %832 = vmatprep.subr.mxu0 0.0
        %833 = vmatpush1.msra.mxu0 0.0
        %834 = vmatprep.subr.mxu0 0.0
        %835 = vmatpush1.msra.mxu0 0.0
        %836 = vmatprep.mubr.f32.mxu0 0.0
        %837 = vmatmul.mubr.f32.gmra.mrb[0].mxu0 %v770
        %v838 = vpop.f32.mrb[0].mxu0
        %v839 = vadd.f32 0.0, %v838
        %v840 = vpop.f32.mrb[0].mxu0
        %841 = vdwg.mxu0
        %842 = vrot.lane.b32.xlu0 %v673, 120
        %v843 = vpop.permute.xlu0 %842
        %844 = vrot.lane.b32.xlu0 %v673, 104
        %v845 = vpop.permute.xlu0 %844
        %v846 = vsel %vm679, %v843, 0
        %v848 = vsel %vm679, %v845, 0
        %850 = vmatprep.subr.mxu0 0.0
        %851 = vmatpush1.xpose.msra.mxu0 %v848
        %852 = vmatprep.subr.mxu0 0.0
        %853 = vmatpush1.xpose.msra.mxu0 0.0
        %854 = vmatprep.subr.mxu0 0.0
        %855 = vmatpush1.xpose.msra.mxu0 0.0
        %856 = vmatprep.subr.mxu0 0.0
        %857 = vmatpush1.xpose.msra.mxu0 0.0
        %858 = vmatprep.subr.mxu0 0.0
        %859 = vmatpush1.xpose.msra.mxu0 0.0
        %860 = vmatprep.subr.mxu0 0.0
        %861 = vmatpush1.xpose.msra.mxu0 0.0
        %862 = vmatprep.subr.mxu0 0.0
        %863 = vmatpush1.xpose.msra.mxu0 0.0
        %864 = vmatprep.subr.mxu0 0.0
        %865 = vmatpush1.xpose.msra.mxu0 0.0
        %866 = vmatprep.subr.mxu0 0.0
        %867 = vmatpush1.xpose.msra.mxu0 0.0
        %868 = vmatprep.subr.mxu0 0.0
        %869 = vmatpush1.xpose.msra.mxu0 0.0
        %870 = vmatprep.subr.mxu0 0.0
        %871 = vmatpush1.xpose.msra.mxu0 0.0
        %872 = vmatprep.subr.mxu0 0.0
        %873 = vmatpush1.xpose.msra.mxu0 0.0
        %874 = vmatprep.subr.mxu0 0.0
        %875 = vmatpush1.xpose.msra.mxu0 0.0
        %876 = vmatprep.subr.mxu0 0.0
        %877 = vmatpush1.xpose.msra.mxu0 0.0
        %878 = vmatprep.subr.mxu0 0.0
        %879 = vmatpush1.xpose.msra.mxu0 0.0
        %880 = vmatprep.subr.mxu0 0.0
        %881 = vmatpush1.xpose.msra.mxu0 0.0
        %882 = vmatprep.subr.mxu0 0.0
        %883 = vmatpush1.xpose.msra.mxu0 0.0
        %884 = vmatprep.subr.mxu0 0.0
        %885 = vmatpush1.xpose.msra.mxu0 0.0
        %886 = vmatprep.subr.mxu0 0.0
        %887 = vmatpush1.xpose.msra.mxu0 0.0
        %888 = vmatprep.subr.mxu0 0.0
        %889 = vmatpush1.xpose.msra.mxu0 0.0
        %890 = vmatprep.subr.mxu0 0.0
        %891 = vmatpush1.xpose.msra.mxu0 0.0
        %892 = vmatprep.subr.mxu0 0.0
        %893 = vmatpush1.xpose.msra.mxu0 0.0
        %894 = vmatprep.subr.mxu0 0.0
        %895 = vmatpush1.xpose.msra.mxu0 0.0
        %896 = vmatprep.subr.mxu0 0.0
        %897 = vmatpush1.xpose.msra.mxu0 0.0
        %898 = vmatprep.subr.mxu0 0.0
        %899 = vmatpush1.xpose.msra.mxu0 0.0
        %900 = vmatprep.subr.mxu0 0.0
        %901 = vmatpush1.xpose.msra.mxu0 0.0
        %902 = vmatprep.subr.mxu0 0.0
        %903 = vmatpush1.xpose.msra.mxu0 0.0
        %904 = vmatprep.subr.mxu0 0.0
        %905 = vmatpush1.xpose.msra.mxu0 0.0
        %906 = vmatprep.subr.mxu0 0.0
        %907 = vmatpush1.xpose.msra.mxu0 0.0
        %908 = vmatprep.subr.mxu0 0.0
        %909 = vmatpush1.xpose.msra.mxu0 0.0
        %910 = vmatprep.subr.mxu0 0.0
        %911 = vmatpush1.xpose.msra.mxu0 0.0
        %912 = vmatprep.subr.mxu0 0.0
        %913 = vmatpush1.xpose.msra.mxu0 0.0
        %914 = vmatprep.mubr.f32.mxu0 0.0
        %915 = vmatmul.mubr.f32.gmra.mrb[0].mxu0 %v846
        %v916 = vpop.f32.mrb[0].mxu0
        %v917 = vadd.f32 0.0, %v916
        %v918 = vpop.f32.mrb[0].mxu0
        %919 = vdwg.mxu0
        %v920 = vmul.f32 %v917, 0.35355338
        %v921 = vsel %vm679, %v920, -inf
        %922 = vmax.xlane.f32.xlu0 %v921
        %v923 = vpop.xlane.xlu0 %922
        %v924 = vsub.f32 %v920, %v923
        %v925 = vmul.f32 %v924, 1.442695
        %v926 = vpow.pop %v925
        %v927 = vsel %vm679, %v926, 0.0
        %928 = vadd.xlane.f32.xlu0 %v927
        %v929 = vpop.xlane.xlu0 %928
        %v930 = vrcp.pop %v929
        %v931 = vmul.f32 %v926, %v930
        %932 = vrot.lane.b32.xlu0 %v673, 88
        %v933 = vpop.permute.xlu0 %932
        %v936 = vsel %vm679, %v931, 0
        %938 = vmatprep.subr.mxu0 0.0
        %939 = vmatpush1.msra.mxu0 %v933
        %940 = vmatprep.subr.mxu0 0.0
        %941 = vmatpush1.msra.mxu0 0.0
        %942 = vmatprep.subr.mxu0 0.0
        %943 = vmatpush1.msra.mxu0 0.0
        %944 = vmatprep.subr.mxu0 0.0
        %945 = vmatpush1.msra.mxu0 0.0
        %946 = vmatprep.subr.mxu0 0.0
        %947 = vmatpush1.msra.mxu0 0.0
        %948 = vmatprep.subr.mxu0 0.0
        %949 = vmatpush1.msra.mxu0 0.0
        %950 = vmatprep.subr.mxu0 0.0
        %951 = vmatpush1.msra.mxu0 0.0
        %952 = vmatprep.subr.mxu0 0.0
        %953 = vmatpush1.msra.mxu0 0.0
        %954 = vmatprep.subr.mxu0 0.0
        %955 = vmatpush1.msra.mxu0 0.0
        %956 = vmatprep.subr.mxu0 0.0
        %957 = vmatpush1.msra.mxu0 0.0
        %958 = vmatprep.subr.mxu0 0.0
        %959 = vmatpush1.msra.mxu0 0.0
        %960 = vmatprep.subr.mxu0 0.0
        %961 = vmatpush1.msra.mxu0 0.0
        %962 = vmatprep.subr.mxu0 0.0
        %963 = vmatpush1.msra.mxu0 0.0
        %964 = vmatprep.subr.mxu0 0.0
        %965 = vmatpush1.msra.mxu0 0.0
        %966 = vmatprep.subr.mxu0 0.0
        %967 = vmatpush1.msra.mxu0 0.0
        %968 = vmatprep.subr.mxu0 0.0
        %969 = vmatpush1.msra.mxu0 0.0
        %970 = vmatprep.subr.mxu0 0.0
        %971 = vmatpush1.msra.mxu0 0.0
        %972 = vmatprep.subr.mxu0 0.0
        %973 = vmatpush1.msra.mxu0 0.0
        %974 = vmatprep.subr.mxu0 0.0
        %975 = vmatpush1.msra.mxu0 0.0
        %976 = vmatprep.subr.mxu0 0.0
        %977 = vmatpush1.msra.mxu0 0.0
        %978 = vmatprep.subr.mxu0 0.0
        %979 = vmatpush1.msra.mxu0 0.0
        %980 = vmatprep.subr.mxu0 0.0
        %981 = vmatpush1.msra.mxu0 0.0
        %982 = vmatprep.subr.mxu0 0.0
        %983 = vmatpush1.msra.mxu0 0.0
        %984 = vmatprep.subr.mxu0 0.0
        %985 = vmatpush1.msra.mxu0 0.0
        %986 = vmatprep.subr.mxu0 0.0
        %987 = vmatpush1.msra.mxu0 0.0
        %988 = vmatprep.subr.mxu0 0.0
        %989 = vmatpush1.msra.mxu0 0.0
        %990 = vmatprep.subr.mxu0 0.0
        %991 = vmatpush1.msra.mxu0 0.0
        %992 = vmatprep.subr.mxu0 0.0
        %993 = vmatpush1.msra.mxu0 0.0
        %994 = vmatprep.subr.mxu0 0.0
        %995 = vmatpush1.msra.mxu0 0.0
        %996 = vmatprep.subr.mxu0 0.0
        %997 = vmatpush1.msra.mxu0 0.0
        %998 = vmatprep.subr.mxu0 0.0
        %999 = vmatpush1.msra.mxu0 0.0
        %1000 = vmatprep.subr.mxu0 0.0
        %1001 = vmatpush1.msra.mxu0 0.0
        %1002 = vmatprep.mubr.f32.mxu0 0.0
        %1003 = vmatmul.mubr.f32.gmra.mrb[0].mxu0 %v936
        %v1004 = vpop.f32.mrb[0].mxu0
        %v1005 = vadd.f32 0.0, %v1004
        %v1006 = vpop.f32.mrb[0].mxu0
        %1007 = vdwg.mxu0
        %v1009 = vsel %vm679, %v1005, 0
        %1011 = vmatprep.subr.mxu0 0.0
        %1012 = vmatpush1.msra.mxu0 %v594
        %1013 = vmatprep.subr.mxu0 0.0
        %1014 = vmatpush1.msra.mxu0 0.0
        %1015 = vmatprep.subr.mxu0 0.0
        %1016 = vmatpush1.msra.mxu0 0.0
        %1017 = vmatprep.subr.mxu0 0.0
        %1018 = vmatpush1.msra.mxu0 0.0
        %1019 = vmatprep.subr.mxu0 0.0
        %1020 = vmatpush1.msra.mxu0 0.0
        %1021 = vmatprep.subr.mxu0 0.0
        %1022 = vmatpush1.msra.mxu0 0.0
        %1023 = vmatprep.subr.mxu0 0.0
        %1024 = vmatpush1.msra.mxu0 0.0
        %1025 = vmatprep.subr.mxu0 0.0
        %1026 = vmatpush1.msra.mxu0 0.0
        %1027 = vmatprep.subr.mxu0 0.0
        %1028 = vmatpush1.msra.mxu0 0.0
        %1029 = vmatprep.subr.mxu0 0.0
        %1030 = vmatpush1.msra.mxu0 0.0
        %1031 = vmatprep.subr.mxu0 0.0
        %1032 = vmatpush1.msra.mxu0 0.0
        %1033 = vmatprep.subr.mxu0 0.0
        %1034 = vmatpush1.msra.mxu0 0.0
        %1035 = vmatprep.subr.mxu0 0.0
        %1036 = vmatpush1.msra.mxu0 0.0
        %1037 = vmatprep.subr.mxu0 0.0
        %1038 = vmatpush1.msra.mxu0 0.0
        %1039 = vmatprep.subr.mxu0 0.0
        %1040 = vmatpush1.msra.mxu0 0.0
        %1041 = vmatprep.subr.mxu0 0.0
        %1042 = vmatpush1.msra.mxu0 0.0
        %1043 = vmatprep.subr.mxu0 0.0
        %1044 = vmatpush1.msra.mxu0 0.0
        %1045 = vmatprep.subr.mxu0 0.0
        %1046 = vmatpush1.msra.mxu0 0.0
        %1047 = vmatprep.subr.mxu0 0.0
        %1048 = vmatpush1.msra.mxu0 0.0
        %1049 = vmatprep.subr.mxu0 0.0
        %1050 = vmatpush1.msra.mxu0 0.0
        %1051 = vmatprep.subr.mxu0 0.0
        %1052 = vmatpush1.msra.mxu0 0.0
        %1053 = vmatprep.subr.mxu0 0.0
        %1054 = vmatpush1.msra.mxu0 0.0
        %1055 = vmatprep.subr.mxu0 0.0
        %1056 = vmatpush1.msra.mxu0 0.0
        %1057 = vmatprep.subr.mxu0 0.0
        %1058 = vmatpush1.msra.mxu0 0.0
        %1059 = vmatprep.subr.mxu0 0.0
        %1060 = vmatpush1.msra.mxu0 0.0
        %1061 = vmatprep.subr.mxu0 0.0
        %1062 = vmatpush1.msra.mxu0 0.0
        %1063 = vmatprep.subr.mxu0 0.0
        %1064 = vmatpush1.msra.mxu0 0.0
        %1065 = vmatprep.subr.mxu0 0.0
        %1066 = vmatpush1.msra.mxu0 0.0
        %1067 = vmatprep.subr.mxu0 0.0
        %1068 = vmatpush1.msra.mxu0 0.0
        %1069 = vmatprep.subr.mxu0 0.0
        %1070 = vmatpush1.msra.mxu0 0.0
        %1071 = vmatprep.subr.mxu0 0.0
        %1072 = vmatpush1.msra.mxu0 0.0
        %1073 = vmatprep.subr.mxu0 0.0
        %1074 = vmatpush1.msra.mxu0 0.0
        %1075 = vmatprep.mubr.f32.mxu0 0.0
        %1076 = vmatmul.mubr.f32.gmra.mrb[0].mxu0 %v1009
        %v1077 = vpop.f32.mrb[0].mxu0
        %v1078 = vadd.f32 0.0, %v1077
        %v1079 = vpop.f32.mrb[0].mxu0
        %1080 = vdwg.mxu0
        %v1082 = vsel %vm679, %v839, 0
        %1084 = vmatprep.subr.mxu0 0.0
        %1085 = vmatpush1.msra.mxu0 %v593
        %1086 = vmatprep.subr.mxu0 0.0
        %1087 = vmatpush1.msra.mxu0 0.0
        %1088 = vmatprep.subr.mxu0 0.0
        %1089 = vmatpush1.msra.mxu0 0.0
        %1090 = vmatprep.subr.mxu0 0.0
        %1091 = vmatpush1.msra.mxu0 0.0
        %1092 = vmatprep.subr.mxu0 0.0
        %1093 = vmatpush1.msra.mxu0 0.0
        %1094 = vmatprep.subr.mxu0 0.0
        %1095 = vmatpush1.msra.mxu0 0.0
        %1096 = vmatprep.subr.mxu0 0.0
        %1097 = vmatpush1.msra.mxu0 0.0
        %1098 = vmatprep.subr.mxu0 0.0
        %1099 = vmatpush1.msra.mxu0 0.0
        %1100 = vmatprep.subr.mxu0 0.0
        %1101 = vmatpush1.msra.mxu0 0.0
        %1102 = vmatprep.subr.mxu0 0.0
        %1103 = vmatpush1.msra.mxu0 0.0
        %1104 = vmatprep.subr.mxu0 0.0
        %1105 = vmatpush1.msra.mxu0 0.0
        %1106 = vmatprep.subr.mxu0 0.0
        %1107 = vmatpush1.msra.mxu0 0.0
        %1108 = vmatprep.subr.mxu0 0.0
        %1109 = vmatpush1.msra.mxu0 0.0
        %1110 = vmatprep.subr.mxu0 0.0
        %1111 = vmatpush1.msra.mxu0 0.0
        %1112 = vmatprep.subr.mxu0 0.0
        %1113 = vmatpush1.msra.mxu0 0.0
        %1114 = vmatprep.subr.mxu0 0.0
        %1115 = vmatpush1.msra.mxu0 0.0
        %1116 = vmatprep.subr.mxu0 0.0
        %1117 = vmatpush1.msra.mxu0 0.0
        %1118 = vmatprep.subr.mxu0 0.0
        %1119 = vmatpush1.msra.mxu0 0.0
        %1120 = vmatprep.subr.mxu0 0.0
        %1121 = vmatpush1.msra.mxu0 0.0
        %1122 = vmatprep.subr.mxu0 0.0
        %1123 = vmatpush1.msra.mxu0 0.0
        %1124 = vmatprep.subr.mxu0 0.0
        %1125 = vmatpush1.msra.mxu0 0.0
        %1126 = vmatprep.subr.mxu0 0.0
        %1127 = vmatpush1.msra.mxu0 0.0
        %1128 = vmatprep.subr.mxu0 0.0
        %1129 = vmatpush1.msra.mxu0 0.0
        %1130 = vmatprep.subr.mxu0 0.0
        %1131 = vmatpush1.msra.mxu0 0.0
        %1132 = vmatprep.subr.mxu0 0.0
        %1133 = vmatpush1.msra.mxu0 0.0
        %1134 = vmatprep.subr.mxu0 0.0
        %1135 = vmatpush1.msra.mxu0 0.0
        %1136 = vmatprep.subr.mxu0 0.0
        %1137 = vmatpush1.msra.mxu0 0.0
        %1138 = vmatprep.subr.mxu0 0.0
        %1139 = vmatpush1.msra.mxu0 0.0
        %1140 = vmatprep.subr.mxu0 0.0
        %1141 = vmatpush1.msra.mxu0 0.0
        %1142 = vmatprep.subr.mxu0 0.0
        %1143 = vmatpush1.msra.mxu0 0.0
        %1144 = vmatprep.subr.mxu0 0.0
        %1145 = vmatpush1.msra.mxu0 0.0
        %1146 = vmatprep.subr.mxu0 0.0
        %1147 = vmatpush1.msra.mxu0 0.0
        %1148 = vmatprep.mubr.f32.mxu0 0.0
        %1149 = vmatmul.mubr.f32.gmra.mrb[0].mxu0 %v1082
        %v1150 = vpop.f32.mrb[0].mxu0
        %v1151 = vadd.f32 %v1078, %v1150
        %v1152 = vpop.f32.mrb[0].mxu0
        %1153 = vdwg.mxu0
        %v1155 = vlaneseq
        %v1156 = vshrl.u32 %v1155, 7
        %v1157 = vsub.s32 0, %v1156
        %v1158 = vrot.slane %v595, %v1157
        %v1160 = vadd.f32 %v1151, %v1158
        %v1161 = vadd.f32 %v588, %v1160
        %v1162 = vld [vmem:[%s6] sm:$0xff]
        %v1163 = vld [vmem:[%s7] sm:$0xff]
        %v1164 = vsel %vm602, %v1161, 0.0
        %1165 = vadd.xlane.f32.xlu0 %v1164
        %v1166 = vpop.xlane.xlu0 %1165
        %v1167 = vrot.slane %v1166, 4
        %v1168 = vadd.f32 %v1166, %v1167
        %v1169 = vrot.slane %v1168, 2
        %v1170 = vadd.f32 %v1168, %v1169
        %v1171 = vrot.slane %v1170, 1
        %v1172 = vadd.f32 %v1170, %v1171
        %s1173 = vtos %v1172
        %v1174 = vrcp.pop 128.0
        %s1175 = vtos %v1174
        %s1176 = smul.f32 %s1173, %s1175
        %v1177 = vstv %s1176
        %v1178 = vsub.f32 %v1161, %v1177
        %v1179 = vmul.f32 %v1178, %v1178
        %v1180 = vsel %vm602, %v1179, 0.0
        %1181 = vadd.xlane.f32.xlu0 %v1180
        %v1182 = vpop.xlane.xlu0 %1181
        %v1183 = vrot.slane %v1182, 4
        %v1184 = vadd.f32 %v1182, %v1183
        %v1185 = vrot.slane %v1184, 2
        %v1186 = vadd.f32 %v1184, %v1185
        %v1187 = vrot.slane %v1186, 1
        %v1188 = vadd.f32 %v1186, %v1187
        %s1189 = vtos %v1188
        %v1190 = vrcp.pop 128.0
        %s1191 = vtos %v1190
        %s1192 = smul.f32 %s1189, %s1191
        %s1193 = sadd.f32 %s1192, 1e-05
        %v1194 = vstv %s1193
        %v1195 = vrsqrt.pop %v1194
        %s1196 = vtos %v1195
        %v1197 = vstv %s1196
        %v1198 = vmul.f32 %v1178, %v1197
        %v1199 = vmul.f32 %v1198, %v1162
        %v1200 = vadd.f32 %v1199, %v1163
        %v1201 = vld [vmem:[%s8] sm:$0xff]
        %v1202 = vld [vmem:[%s8 + $0x8] sm:$0xff]
        %v1203 = vld [vmem:[%s9] sm:$0x1]
        %v1204 = vld [vmem:[%s10] sm:$0xff]
        %v1205 = vld [vmem:[%s10 + $0x8] sm:$0xff]
        %v1206 = vld [vmem:[%s11] sm:$0x1]
        %v1208 = vlaneseq
        %v1209 = vshrl.u32 %v1208, 7
        %v1210 = vsub.s32 0, %v1209
        %v1211 = vrot.slane %v1203, %v1210
        %v1214 = vsel %vm602, %v1200, 0
        %1216 = vmatprep.subr.mxu0 0.0
        %1217 = vmatpush1.msra.mxu0 %v1201
        %1218 = vmatprep.subr.mxu0 0.0
        %1219 = vmatpush1.msra.mxu0 %v1202
        %1220 = vmatprep.subr.mxu0 0.0
        %1221 = vmatpush1.msra.mxu0 0.0
        %1222 = vmatprep.subr.mxu0 0.0
        %1223 = vmatpush1.msra.mxu0 0.0
        %1224 = vmatprep.subr.mxu0 0.0
        %1225 = vmatpush1.msra.mxu0 0.0
        %1226 = vmatprep.subr.mxu0 0.0
        %1227 = vmatpush1.msra.mxu0 0.0
        %1228 = vmatprep.subr.mxu0 0.0
        %1229 = vmatpush1.msra.mxu0 0.0
        %1230 = vmatprep.subr.mxu0 0.0
        %1231 = vmatpush1.msra.mxu0 0.0
        %1232 = vmatprep.subr.mxu0 0.0
        %1233 = vmatpush1.msra.mxu0 0.0
        %1234 = vmatprep.subr.mxu0 0.0
        %1235 = vmatpush1.msra.mxu0 0.0
        %1236 = vmatprep.subr.mxu0 0.0
        %1237 = vmatpush1.msra.mxu0 0.0
        %1238 = vmatprep.subr.mxu0 0.0
        %1239 = vmatpush1.msra.mxu0 0.0
        %1240 = vmatprep.subr.mxu0 0.0
        %1241 = vmatpush1.msra.mxu0 0.0
        %1242 = vmatprep.subr.mxu0 0.0
        %1243 = vmatpush1.msra.mxu0 0.0
        %1244 = vmatprep.subr.mxu0 0.0
        %1245 = vmatpush1.msra.mxu0 0.0
        %1246 = vmatprep.subr.mxu0 0.0
        %1247 = vmatpush1.msra.mxu0 0.0
        %1248 = vmatprep.subr.mxu0 0.0
        %1249 = vmatpush1.msra.mxu0 0.0
        %1250 = vmatprep.subr.mxu0 0.0
        %1251 = vmatpush1.msra.mxu0 0.0
        %1252 = vmatprep.subr.mxu0 0.0
        %1253 = vmatpush1.msra.mxu0 0.0
        %1254 = vmatprep.subr.mxu0 0.0
        %1255 = vmatpush1.msra.mxu0 0.0
        %1256 = vmatprep.subr.mxu0 0.0
        %1257 = vmatpush1.msra.mxu0 0.0
        %1258 = vmatprep.subr.mxu0 0.0
        %1259 = vmatpush1.msra.mxu0 0.0
        %1260 = vmatprep.subr.mxu0 0.0
        %1261 = vmatpush1.msra.mxu0 0.0
        %1262 = vmatprep.subr.mxu0 0.0
        %1263 = vmatpush1.msra.mxu0 0.0
        %1264 = vmatprep.subr.mxu0 0.0
        %1265 = vmatpush1.msra.mxu0 0.0
        %1266 = vmatprep.subr.mxu0 0.0
        %1267 = vmatpush1.msra.mxu0 0.0
        %1268 = vmatprep.subr.mxu0 0.0
        %1269 = vmatpush1.msra.mxu0 0.0
        %1270 = vmatprep.subr.mxu0 0.0
        %1271 = vmatpush1.msra.mxu0 0.0
        %1272 = vmatprep.subr.mxu0 0.0
        %1273 = vmatpush1.msra.mxu0 0.0
        %1274 = vmatprep.subr.mxu0 0.0
        %1275 = vmatpush1.msra.mxu0 0.0
        %1276 = vmatprep.subr.mxu0 0.0
        %1277 = vmatpush1.msra.mxu0 0.0
        %1278 = vmatprep.subr.mxu0 0.0
        %1279 = vmatpush1.msra.mxu0 0.0
        %1280 = vmatprep.mubr.f32.mxu0 0.0
        %1281 = vmatmul.mubr.f32.gmra.mrb[0].mxu0 %v1214
        %v1282 = vpop.f32.mrb[0].mxu0
        %v1283 = vadd.f32 %v1211, %v1282
        %v1284 = vpop.f32.mrb[0].mxu0
        %1285 = vdwg.mxu0
        %1288 = vrot.lane.b32.xlu0 %v1201, 112
        %v1289 = vpop.permute.xlu0 %1288
        %1290 = vrot.lane.b32.xlu0 %v1202, 112
        %v1291 = vpop.permute.xlu0 %1290
        %1294 = vrot.lane.b32.xlu0 %v1211, 112
        %v1295 = vpop.permute.xlu0 %1294
        %v1298 = vsel %vm602, %v589, 0
        %1300 = vmatprep.subr.mxu0 0.0
        %1301 = vmatpush1.msra.mxu0 %v1289
        %1302 = vmatprep.subr.mxu0 0.0
        %1303 = vmatpush1.msra.mxu0 %v1291
        %1304 = vmatprep.subr.mxu0 0.0
        %1305 = vmatpush1.msra.mxu0 0.0
        %1306 = vmatprep.subr.mxu0 0.0
        %1307 = vmatpush1.msra.mxu0 0.0
        %1308 = vmatprep.subr.mxu0 0.0
        %1309 = vmatpush1.msra.mxu0 0.0
        %1310 = vmatprep.subr.mxu0 0.0
        %1311 = vmatpush1.msra.mxu0 0.0
        %1312 = vmatprep.subr.mxu0 0.0
        %1313 = vmatpush1.msra.mxu0 0.0
        %1314 = vmatprep.subr.mxu0 0.0
        %1315 = vmatpush1.msra.mxu0 0.0
        %1316 = vmatprep.subr.mxu0 0.0
        %1317 = vmatpush1.msra.mxu0 0.0
        %1318 = vmatprep.subr.mxu0 0.0
        %1319 = vmatpush1.msra.mxu0 0.0
        %1320 = vmatprep.subr.mxu0 0.0
        %1321 = vmatpush1.msra.mxu0 0.0
        %1322 = vmatprep.subr.mxu0 0.0
        %1323 = vmatpush1.msra.mxu0 0.0
        %1324 = vmatprep.subr.mxu0 0.0
        %1325 = vmatpush1.msra.mxu0 0.0
        %1326 = vmatprep.subr.mxu0 0.0
        %1327 = vmatpush1.msra.mxu0 0.0
        %1328 = vmatprep.subr.mxu0 0.0
        %1329 = vmatpush1.msra.mxu0 0.0
        %1330 = vmatprep.subr.mxu0 0.0
        %1331 = vmatpush1.msra.mxu0 0.0
        %1332 = vmatprep.subr.mxu0 0.0
        %1333 = vmatpush1.msra.mxu0 0.0
        %1334 = vmatprep.subr.mxu0 0.0
        %1335 = vmatpush1.msra.mxu0 0.0
        %1336 = vmatprep.subr.mxu0 0.0
        %1337 = vmatpush1.msra.mxu0 0.0
        %1338 = vmatprep.subr.mxu0 0.0
        %1339 = vmatpush1.msra.mxu0 0.0
        %1340 = vmatprep.subr.mxu0 0.0
        %1341 = vmatpush1.msra.mxu0 0.0
        %1342 = vmatprep.subr.mxu0 0.0
        %1343 = vmatpush1.msra.mxu0 0.0
        %1344 = vmatprep.subr.mxu0 0.0
        %1345 = vmatpush1.msra.mxu0 0.0
        %1346 = vmatprep.subr.mxu0 0.0
        %1347 = vmatpush1.msra.mxu0 0.0
        %1348 = vmatprep.subr.mxu0 0.0
        %1349 = vmatpush1.msra.mxu0 0.0
        %1350 = vmatprep.subr.mxu0 0.0
        %1351 = vmatpush1.msra.mxu0 0.0
        %1352 = vmatprep.subr.mxu0 0.0
        %1353 = vmatpush1.msra.mxu0 0.0
        %1354 = vmatprep.subr.mxu0 0.0
        %1355 = vmatpush1.msra.mxu0 0.0
        %1356 = vmatprep.subr.mxu0 0.0
        %1357 = vmatpush1.msra.mxu0 0.0
        %1358 = vmatprep.subr.mxu0 0.0
        %1359 = vmatpush1.msra.mxu0 0.0
        %1360 = vmatprep.subr.mxu0 0.0
        %1361 = vmatpush1.msra.mxu0 0.0
        %1362 = vmatprep.subr.mxu0 0.0
        %1363 = vmatpush1.msra.mxu0 0.0
        %1364 = vmatprep.mubr.f32.mxu0 0.0
        %1365 = vmatmul.mubr.f32.gmra.mrb[0].mxu0 %v1298
        %v1366 = vpop.f32.mrb[0].mxu0
        %v1367 = vadd.f32 %v1295, %v1366
        %v1368 = vpop.f32.mrb[0].mxu0
        %1369 = vdwg.mxu0
        %v1371 = vsel %vm679, %v1283, 0
        %v1374 = vsel %vm679, %v1367, 0
        %1376 = vmatprep.subr.mxu0 0.0
        %1377 = vmatpush1.xpose.msra.mxu0 %v1374
        %1378 = vmatprep.subr.mxu0 0.0
        %1379 = vmatpush1.xpose.msra.mxu0 0.0
        %1380 = vmatprep.subr.mxu0 0.0
        %1381 = vmatpush1.xpose.msra.mxu0 0.0
        %1382 = vmatprep.subr.mxu0 0.0
        %1383 = vmatpush1.xpose.msra.mxu0 0.0
        %1384 = vmatprep.subr.mxu0 0.0
        %1385 = vmatpush1.xpose.msra.mxu0 0.0
        %1386 = vmatprep.subr.mxu0 0.0
        %1387 = vmatpush1.xpose.msra.mxu0 0.0
        %1388 = vmatprep.subr.mxu0 0.0
        %1389 = vmatpush1.xpose.msra.mxu0 0.0
        %1390 = vmatprep.subr.mxu0 0.0
        %1391 = vmatpush1.xpose.msra.mxu0 0.0
        %1392 = vmatprep.subr.mxu0 0.0
        %1393 = vmatpush1.xpose.msra.mxu0 0.0
        %1394 = vmatprep.subr.mxu0 0.0
        %1395 = vmatpush1.xpose.msra.mxu0 0.0
        %1396 = vmatprep.subr.mxu0 0.0
        %1397 = vmatpush1.xpose.msra.mxu0 0.0
        %1398 = vmatprep.subr.mxu0 0.0
        %1399 = vmatpush1.xpose.msra.mxu0 0.0
        %1400 = vmatprep.subr.mxu0 0.0
        %1401 = vmatpush1.xpose.msra.mxu0 0.0
        %1402 = vmatprep.subr.mxu0 0.0
        %1403 = vmatpush1.xpose.msra.mxu0 0.0
        %1404 = vmatprep.subr.mxu0 0.0
        %1405 = vmatpush1.xpose.msra.mxu0 0.0
        %1406 = vmatprep.subr.mxu0 0.0
        %1407 = vmatpush1.xpose.msra.mxu0 0.0
        %1408 = vmatprep.subr.mxu0 0.0
        %1409 = vmatpush1.xpose.msra.mxu0 0.0
        %1410 = vmatprep.subr.mxu0 0.0
        %1411 = vmatpush1.xpose.msra.mxu0 0.0
        %1412 = vmatprep.subr.mxu0 0.0
        %1413 = vmatpush1.xpose.msra.mxu0 0.0
        %1414 = vmatprep.subr.mxu0 0.0
        %1415 = vmatpush1.xpose.msra.mxu0 0.0
        %1416 = vmatprep.subr.mxu0 0.0
        %1417 = vmatpush1.xpose.msra.mxu0 0.0
        %1418 = vmatprep.subr.mxu0 0.0
        %1419 = vmatpush1.xpose.msra.mxu0 0.0
        %1420 = vmatprep.subr.mxu0 0.0
        %1421 = vmatpush1.xpose.msra.mxu0 0.0
        %1422 = vmatprep.subr.mxu0 0.0
        %1423 = vmatpush1.xpose.msra.mxu0 0.0
        %1424 = vmatprep.subr.mxu0 0.0
        %1425 = vmatpush1.xpose.msra.mxu0 0.0
        %1426 = vmatprep.subr.mxu0 0.0
        %1427 = vmatpush1.xpose.msra.mxu0 0.0
        %1428 = vmatprep.subr.mxu0 0.0
        %1429 = vmatpush1.xpose.msra.mxu0 0.0
        %1430 = vmatprep.subr.mxu0 0.0
        %1431 = vmatpush1.xpose.msra.mxu0 0.0
        %1432 = vmatprep.subr.mxu0 0.0
        %1433 = vmatpush1.xpose.msra.mxu0 0.0
        %1434 = vmatprep.subr.mxu0 0.0
        %1435 = vmatpush1.xpose.msra.mxu0 0.0
        %1436 = vmatprep.subr.mxu0 0.0
        %1437 = vmatpush1.xpose.msra.mxu0 0.0
        %1438 = vmatprep.subr.mxu0 0.0
        %1439 = vmatpush1.xpose.msra.mxu0 0.0
        %1440 = vmatprep.mubr.f32.mxu0 0.0
        %1441 = vmatmul.mubr.f32.gmra.mrb[0].mxu0 %v1371
        %v1442 = vpop.f32.mrb[0].mxu0
        %v1443 = vadd.f32 0.0, %v1442
        %v1444 = vpop.f32.mrb[0].mxu0
        %1445 = vdwg.mxu0
        %v1446 = vmul.f32 %v1443, 0.35355338
        %v1447 = vsel %vm679, %v1446, -inf
        %1448 = vmax.xlane.f32.xlu0 %v1447
        %v1449 = vpop.xlane.xlu0 %1448
        %v1450 = vsub.f32 %v1446, %v1449
        %v1451 = vmul.f32 %v1450, 1.442695
        %v1452 = vpow.pop %v1451
        %v1453 = vsel %vm679, %v1452, 0.0
        %1454 = vadd.xlane.f32.xlu0 %v1453
        %v1455 = vpop.xlane.xlu0 %1454
        %v1456 = vrcp.pop %v1455
        %v1457 = vmul.f32 %v1452, %v1456
        %1458 = vrot.lane.b32.xlu0 %v1367, 112
        %v1459 = vpop.permute.xlu0 %1458
        %v1462 = vsel %vm679, %v1457, 0
        %1464 = vmatprep.subr.mxu0 0.0
        %1465 = vmatpush1.msra.mxu0 %v1459
        %1466 = vmatprep.subr.mxu0 0.0
        %1467 = vmatpush1.msra.mxu0 0.0
        %1468 = vmatprep.subr.mxu0 0.0
        %1469 = vmatpush1.msra.mxu0 0.0
        %1470 = vmatprep.subr.mxu0 0.0
        %1471 = vmatpush1.msra.mxu0 0.0
        %1472 = vmatprep.subr.mxu0 0.0
        %1473 = vmatpush1.msra.mxu0 0.0
        %1474 = vmatprep.subr.mxu0 0.0
        %1475 = vmatpush1.msra.mxu0 0.0
        %1476 = vmatprep.subr.mxu0 0.0
        %1477 = vmatpush1.msra.mxu0 0.0
        %1478 = vmatprep.subr.mxu0 0.0
        %1479 = vmatpush1.msra.mxu0 0.0
        %1480 = vmatprep.subr.mxu0 0.0
        %1481 = vmatpush1.msra.mxu0 0.0
        %1482 = vmatprep.subr.mxu0 0.0
        %1483 = vmatpush1.msra.mxu0 0.0
        %1484 = vmatprep.subr.mxu0 0.0
        %1485 = vmatpush1.msra.mxu0 0.0
        %1486 = vmatprep.subr.mxu0 0.0
        %1487 = vmatpush1.msra.mxu0 0.0
        %1488 = vmatprep.subr.mxu0 0.0
        %1489 = vmatpush1.msra.mxu0 0.0
        %1490 = vmatprep.subr.mxu0 0.0
        %1491 = vmatpush1.msra.mxu0 0.0
        %1492 = vmatprep.subr.mxu0 0.0
        %1493 = vmatpush1.msra.mxu0 0.0
        %1494 = vmatprep.subr.mxu0 0.0
        %1495 = vmatpush1.msra.mxu0 0.0
        %1496 = vmatprep.subr.mxu0 0.0
        %1497 = vmatpush1.msra.mxu0 0.0
        %1498 = vmatprep.subr.mxu0 0.0
        %1499 = vmatpush1.msra.mxu0 0.0
        %1500 = vmatprep.subr.mxu0 0.0
        %1501 = vmatpush1.msra.mxu0 0.0
        %1502 = vmatprep.subr.mxu0 0.0
        %1503 = vmatpush1.msra.mxu0 0.0
        %1504 = vmatprep.subr.mxu0 0.0
        %1505 = vmatpush1.msra.mxu0 0.0
        %1506 = vmatprep.subr.mxu0 0.0
        %1507 = vmatpush1.msra.mxu0 0.0
        %1508 = vmatprep.subr.mxu0 0.0
        %1509 = vmatpush1.msra.mxu0 0.0
        %1510 = vmatprep.subr.mxu0 0.0
        %1511 = vmatpush1.msra.mxu0 0.0
        %1512 = vmatprep.subr.mxu0 0.0
        %1513 = vmatpush1.msra.mxu0 0.0
        %1514 = vmatprep.subr.mxu0 0.0
        %1515 = vmatpush1.msra.mxu0 0.0
        %1516 = vmatprep.subr.mxu0 0.0
        %1517 = vmatpush1.msra.mxu0 0.0
        %1518 = vmatprep.subr.mxu0 0.0
        %1519 = vmatpush1.msra.mxu0 0.0
        %1520 = vmatprep.subr.mxu0 0.0
        %1521 = vmatpush1.msra.mxu0 0.0
        %1522 = vmatprep.subr.mxu0 0.0
        %1523 = vmatpush1.msra.mxu0 0.0
        %1524 = vmatprep.subr.mxu0 0.0
        %1525 = vmatpush1.msra.mxu0 0.0
        %1526 = vmatprep.subr.mxu0 0.0
        %1527 = vmatpush1.msra.mxu0 0.0
        %1528 = vmatprep.mubr.f32.mxu0 0.0
        %1529 = vmatmul.mubr.f32.gmra.mrb[0].mxu0 %v1462
        %v1530 = vpop.f32.mrb[0].mxu0
        %v1531 = vadd.f32 0.0, %v1530
        %v1532 = vpop.f32.mrb[0].mxu0
        %1533 = vdwg.mxu0
        %1534 = vrot.lane.b32.xlu0 %v1283, 120
        %v1535 = vpop.permute.xlu0 %1534
        %1536 = vrot.lane.b32.xlu0 %v1367, 120
        %v1537 = vpop.permute.xlu0 %1536
        %v1538 = vsel %vm679, %v1535, 0
        %v1540 = vsel %vm679, %v1537, 0
        %1542 = vmatprep.subr.mxu0 0.0
        %1543 = vmatpush1.xpose.msra.mxu0 %v1540
        %1544 = vmatprep.subr.mxu0 0.0
        %1545 = vmatpush1.xpose.msra.mxu0 0.0
        %1546 = vmatprep.subr.mxu0 0.0
        %1547 = vmatpush1.xpose.msra.mxu0 0.0
        %1548 = vmatprep.subr.mxu0 0.0
        %1549 = vmatpush1.xpose.msra.mxu0 0.0
        %1550 = vmatprep.subr.mxu0 0.0
        %1551 = vmatpush1.xpose.msra.mxu0 0.0
        %1552 = vmatprep.subr.mxu0 0.0
        %1553 = vmatpush1.xpose.msra.mxu0 0.0
        %1554 = vmatprep.subr.mxu0 0.0
        %1555 = vmatpush1.xpose.msra.mxu0 0.0
        %1556 = vmatprep.subr.mxu0 0.0
        %1557 = vmatpush1.xpose.msra.mxu0 0.0
        %1558 = vmatprep.subr.mxu0 0.0
        %1559 = vmatpush1.xpose.msra.mxu0 0.0
        %1560 = vmatprep.subr.mxu0 0.0
        %1561 = vmatpush1.xpose.msra.mxu0 0.0
        %1562 = vmatprep.subr.mxu0 0.0
        %1563 = vmatpush1.xpose.msra.mxu0 0.0
        %1564 = vmatprep.subr.mxu0 0.0
        %1565 = vmatpush1.xpose.msra.mxu0 0.0
        %1566 = vmatprep.subr.mxu0 0.0
        %1567 = vmatpush1.xpose.msra.mxu0 0.0
        %1568 = vmatprep.subr.mxu0 0.0
        %1569 = vmatpush1.xpose.msra.mxu0 0.0
        %1570 = vmatprep.subr.mxu0 0.0
        %1571 = vmatpush1.xpose.msra.mxu0 0.0
        %1572 = vmatprep.subr.mxu0 0.0
        %1573 = vmatpush1.xpose.msra.mxu0 0.0
        %1574 = vmatprep.subr.mxu0 0.0
        %1575 = vmatpush1.xpose.msra.mxu0 0.0
        %1576 = vmatprep.subr.mxu0 0.0
        %1577 = vmatpush1.xpose.msra.mxu0 0.0
        %1578 = vmatprep.subr.mxu0 0.0
        %1579 = vmatpush1.xpose.msra.mxu0 0.0
        %1580 = vmatprep.subr.mxu0 0.0
        %1581 = vmatpush1.xpose.msra.mxu0 0.0
        %1582 = vmatprep.subr.mxu0 0.0
        %1583 = vmatpush1.xpose.msra.mxu0 0.0
        %1584 = vmatprep.subr.mxu0 0.0
        %1585 = vmatpush1.xpose.msra.mxu0 0.0
        %1586 = vmatprep.subr.mxu0 0.0
        %1587 = vmatpush1.xpose.msra.mxu0 0.0
        %1588 = vmatprep.subr.mxu0 0.0
        %1589 = vmatpush1.xpose.msra.mxu0 0.0
        %1590 = vmatprep.subr.mxu0 0.0
        %1591 = vmatpush1.xpose.msra.mxu0 0.0
        %1592 = vmatprep.subr.mxu0 0.0
        %1593 = vmatpush1.xpose.msra.mxu0 0.0
        %1594 = vmatprep.subr.mxu0 0.0
        %1595 = vmatpush1.xpose.msra.mxu0 0.0
        %1596 = vmatprep.subr.mxu0 0.0
        %1597 = vmatpush1.xpose.msra.mxu0 0.0
        %1598 = vmatprep.subr.mxu0 0.0
        %1599 = vmatpush1.xpose.msra.mxu0 0.0
        %1600 = vmatprep.subr.mxu0 0.0
        %1601 = vmatpush1.xpose.msra.mxu0 0.0
        %1602 = vmatprep.subr.mxu0 0.0
        %1603 = vmatpush1.xpose.msra.mxu0 0.0
        %1604 = vmatprep.subr.mxu0 0.0
        %1605 = vmatpush1.xpose.msra.mxu0 0.0
        %1606 = vmatprep.mubr.f32.mxu0 0.0
        %1607 = vmatmul.mubr.f32.gmra.mrb[0].mxu0 %v1538
        %v1608 = vpop.f32.mrb[0].mxu0
        %v1609 = vadd.f32 0.0, %v1608
        %v1610 = vpop.f32.mrb[0].mxu0
        %1611 = vdwg.mxu0
        %v1612 = vmul.f32 %v1609, 0.35355338
        %v1613 = vsel %vm679, %v1612, -inf
        %1614 = vmax.xlane.f32.xlu0 %v1613
        %v1615 = vpop.xlane.xlu0 %1614
        %v1616 = vsub.f32 %v1612, %v1615
        %v1617 = vmul.f32 %v1616, 1.442695
        %v1618 = vpow.pop %v1617
        %v1619 = vsel %vm679, %v1618, 0.0
        %1620 = vadd.xlane.f32.xlu0 %v1619
        %v1621 = vpop.xlane.xlu0 %1620
        %v1622 = vrcp.pop %v1621
        %v1623 = vmul.f32 %v1618, %v1622
        %1624 = vrot.lane.b32.xlu0 %v1367, 104
        %v1625 = vpop.permute.xlu0 %1624
        %v1628 = vsel %vm679, %v1623, 0
        %1630 = vmatprep.subr.mxu0 0.0
        %1631 = vmatpush1.msra.mxu0 %v1625
        %1632 = vmatprep.subr.mxu0 0.0
        %1633 = vmatpush1.msra.mxu0 0.0
        %1634 = vmatprep.subr.mxu0 0.0
        %1635 = vmatpush1.msra.mxu0 0.0
        %1636 = vmatprep.subr.mxu0 0.0
        %1637 = vmatpush1.msra.mxu0 0.0
        %1638 = vmatprep.subr.mxu0 0.0
        %1639 = vmatpush1.msra.mxu0 0.0
        %1640 = vmatprep.subr.mxu0 0.0
        %1641 = vmatpush1.msra.mxu0 0.0
        %1642 = vmatprep.subr.mxu0 0.0
        %1643 = vmatpush1.msra.mxu0 0.0
        %1644 = vmatprep.subr.mxu0 0.0
        %1645 = vmatpush1.msra.mxu0 0.0
        %1646 = vmatprep.subr.mxu0 0.0
        %1647 = vmatpush1.msra.mxu0 0.0
        %1648 = vmatprep.subr.mxu0 0.0
        %1649 = vmatpush1.msra.mxu0 0.0
        %1650 = vmatprep.subr.mxu0 0.0
        %1651 = vmatpush1.msra.mxu0 0.0
        %1652 = vmatprep.subr.mxu0 0.0
        %1653 = vmatpush1.msra.mxu0 0.0
        %1654 = vmatprep.subr.mxu0 0.0
        %1655 = vmatpush1.msra.mxu0 0.0
        %1656 = vmatprep.subr.mxu0 0.0
        %1657 = vmatpush1.msra.mxu0 0.0
        %1658 = vmatprep.subr.mxu0 0.0
        %1659 = vmatpush1.msra.mxu0 0.0
        %1660 = vmatprep.subr.mxu0 0.0
        %1661 = vmatpush1.msra.mxu0 0.0
        %1662 = vmatprep.subr.mxu0 0.0
        %1663 = vmatpush1.msra.mxu0 0.0
        %1664 = vmatprep.subr.mxu0 0.0
        %1665 = vmatpush1.msra.mxu0 0.0
        %1666 = vmatprep.subr.mxu0 0.0
        %1667 = vmatpush1.msra.mxu0 0.0
        %1668 = vmatprep.subr.mxu0 0.0
        %1669 = vmatpush1.msra.mxu0 0.0
        %1670 = vmatprep.subr.mxu0 0.0
        %1671 = vmatpush1.msra.mxu0 0.0
        %1672 = vmatprep.subr.mxu0 0.0
        %1673 = vmatpush1.msra.mxu0 0.0
        %1674 = vmatprep.subr.mxu0 0.0
        %1675 = vmatpush1.msra.mxu0 0.0
        %1676 = vmatprep.subr.mxu0 0.0
        %1677 = vmatpush1.msra.mxu0 0.0
        %1678 = vmatprep.subr.mxu0 0.0
        %1679 = vmatpush1.msra.mxu0 0.0
        %1680 = vmatprep.subr.mxu0 0.0
        %1681 = vmatpush1.msra.mxu0 0.0
        %1682 = vmatprep.subr.mxu0 0.0
        %1683 = vmatpush1.msra.mxu0 0.0
        %1684 = vmatprep.subr.mxu0 0.0
        %1685 = vmatpush1.msra.mxu0 0.0
        %1686 = vmatprep.subr.mxu0 0.0
        %1687 = vmatpush1.msra.mxu0 0.0
        %1688 = vmatprep.subr.mxu0 0.0
        %1689 = vmatpush1.msra.mxu0 0.0
        %1690 = vmatprep.subr.mxu0 0.0
        %1691 = vmatpush1.msra.mxu0 0.0
        %1692 = vmatprep.subr.mxu0 0.0
        %1693 = vmatpush1.msra.mxu0 0.0
        %1694 = vmatprep.mubr.f32.mxu0 0.0
        %1695 = vmatmul.mubr.f32.gmra.mrb[0].mxu0 %v1628
        %v1696 = vpop.f32.mrb[0].mxu0
        %v1697 = vadd.f32 0.0, %v1696
        %v1698 = vpop.f32.mrb[0].mxu0
        %1699 = vdwg.mxu0
        %v1701 = vsel %vm679, %v1697, 0
        %1703 = vmatprep.subr.mxu0 0.0
        %1704 = vmatpush1.msra.mxu0 %v1205
        %1705 = vmatprep.subr.mxu0 0.0
        %1706 = vmatpush1.msra.mxu0 0.0
        %1707 = vmatprep.subr.mxu0 0.0
        %1708 = vmatpush1.msra.mxu0 0.0
        %1709 = vmatprep.subr.mxu0 0.0
        %1710 = vmatpush1.msra.mxu0 0.0
        %1711 = vmatprep.subr.mxu0 0.0
        %1712 = vmatpush1.msra.mxu0 0.0
        %1713 = vmatprep.subr.mxu0 0.0
        %1714 = vmatpush1.msra.mxu0 0.0
        %1715 = vmatprep.subr.mxu0 0.0
        %1716 = vmatpush1.msra.mxu0 0.0
        %1717 = vmatprep.subr.mxu0 0.0
        %1718 = vmatpush1.msra.mxu0 0.0
        %1719 = vmatprep.subr.mxu0 0.0
        %1720 = vmatpush1.msra.mxu0 0.0
        %1721 = vmatprep.subr.mxu0 0.0
        %1722 = vmatpush1.msra.mxu0 0.0
        %1723 = vmatprep.subr.mxu0 0.0
        %1724 = vmatpush1.msra.mxu0 0.0
        %1725 = vmatprep.subr.mxu0 0.0
        %1726 = vmatpush1.msra.mxu0 0.0
        %1727 = vmatprep.subr.mxu0 0.0
        %1728 = vmatpush1.msra.mxu0 0.0
        %1729 = vmatprep.subr.mxu0 0.0
        %1730 = vmatpush1.msra.mxu0 0.0
        %1731 = vmatprep.subr.mxu0 0.0
        %1732 = vmatpush1.msra.mxu0 0.0
        %1733 = vmatprep.subr.mxu0 0.0
        %1734 = vmatpush1.msra.mxu0 0.0
        %1735 = vmatprep.subr.mxu0 0.0
        %1736 = vmatpush1.msra.mxu0 0.0
        %1737 = vmatprep.subr.mxu0 0.0
        %1738 = vmatpush1.msra.mxu0 0.0
        %1739 = vmatprep.subr.mxu0 0.0
        %1740 = vmatpush1.msra.mxu0 0.0
        %1741 = vmatprep.subr.mxu0 0.0
        %1742 = vmatpush1.msra.mxu0 0.0
        %1743 = vmatprep.subr.mxu0 0.0
        %1744 = vmatpush1.msra.mxu0 0.0
        %1745 = vmatprep.subr.mxu0 0.0
        %1746 = vmatpush1.msra.mxu0 0.0
        %1747 = vmatprep.subr.mxu0 0.0
        %1748 = vmatpush1.msra.mxu0 0.0
        %1749 = vmatprep.subr.mxu0 0.0
        %1750 = vmatpush1.msra.mxu0 0.0
        %1751 = vmatprep.subr.mxu0 0.0
        %1752 = vmatpush1.msra.mxu0 0.0
        %1753 = vmatprep.subr.mxu0 0.0
        %1754 = vmatpush1.msra.mxu0 0.0
        %1755 = vmatprep.subr.mxu0 0.0
        %1756 = vmatpush1.msra.mxu0 0.0
        %1757 = vmatprep.subr.mxu0 0.0
        %1758 = vmatpush1.msra.mxu0 0.0
        %1759 = vmatprep.subr.mxu0 0.0
        %1760 = vmatpush1.msra.mxu0 0.0
        %1761 = vmatprep.subr.mxu0 0.0
        %1762 = vmatpush1.msra.mxu0 0.0
        %1763 = vmatprep.subr.mxu0 0.0
        %1764 = vmatpush1.msra.mxu0 0.0
        %1765 = vmatprep.subr.mxu0 0.0
        %1766 = vmatpush1.msra.mxu0 0.0
        %1767 = vmatprep.mubr.f32.mxu0 0.0
        %1768 = vmatmul.mubr.f32.gmra.mrb[0].mxu0 %v1701
        %v1769 = vpop.f32.mrb[0].mxu0
        %v1770 = vadd.f32 0.0, %v1769
        %v1771 = vpop.f32.mrb[0].mxu0
        %1772 = vdwg.mxu0
        %v1774 = vsel %vm679, %v1531, 0
        %1776 = vmatprep.subr.mxu0 0.0
        %1777 = vmatpush1.msra.mxu0 %v1204
        %1778 = vmatprep.subr.mxu0 0.0
        %1779 = vmatpush1.msra.mxu0 0.0
        %1780 = vmatprep.subr.mxu0 0.0
        %1781 = vmatpush1.msra.mxu0 0.0
        %1782 = vmatprep.subr.mxu0 0.0
        %1783 = vmatpush1.msra.mxu0 0.0
        %1784 = vmatprep.subr.mxu0 0.0
        %1785 = vmatpush1.msra.mxu0 0.0
        %1786 = vmatprep.subr.mxu0 0.0
        %1787 = vmatpush1.msra.mxu0 0.0
        %1788 = vmatprep.subr.mxu0 0.0
        %1789 = vmatpush1.msra.mxu0 0.0
        %1790 = vmatprep.subr.mxu0 0.0
        %1791 = vmatpush1.msra.mxu0 0.0
        %1792 = vmatprep.subr.mxu0 0.0
        %1793 = vmatpush1.msra.mxu0 0.0
        %1794 = vmatprep.subr.mxu0 0.0
        %1795 = vmatpush1.msra.mxu0 0.0
        %1796 = vmatprep.subr.mxu0 0.0
        %1797 = vmatpush1.msra.mxu0 0.0
        %1798 = vmatprep.subr.mxu0 0.0
        %1799 = vmatpush1.msra.mxu0 0.0
        %1800 = vmatprep.subr.mxu0 0.0
        %1801 = vmatpush1.msra.mxu0 0.0
        %1802 = vmatprep.subr.mxu0 0.0
        %1803 = vmatpush1.msra.mxu0 0.0
        %1804 = vmatprep.subr.mxu0 0.0
        %1805 = vmatpush1.msra.mxu0 0.0
        %1806 = vmatprep.subr.mxu0 0.0
        %1807 = vmatpush1.msra.mxu0 0.0
        %1808 = vmatprep.subr.mxu0 0.0
        %1809 = vmatpush1.msra.mxu0 0.0
        %1810 = vmatprep.subr.mxu0 0.0
        %1811 = vmatpush1.msra.mxu0 0.0
        %1812 = vmatprep.subr.mxu0 0.0
        %1813 = vmatpush1.msra.mxu0 0.0
        %1814 = vmatprep.subr.mxu0 0.0
        %1815 = vmatpush1.msra.mxu0 0.0
        %1816 = vmatprep.subr.mxu0 0.0
        %1817 = vmatpush1.msra.mxu0 0.0
        %1818 = vmatprep.subr.mxu0 0.0
        %1819 = vmatpush1.msra.mxu0 0.0
        %1820 = vmatprep.subr.mxu0 0.0
        %1821 = vmatpush1.msra.mxu0 0.0
        %1822 = vmatprep.subr.mxu0 0.0
        %1823 = vmatpush1.msra.mxu0 0.0
        %1824 = vmatprep.subr.mxu0 0.0
        %1825 = vmatpush1.msra.mxu0 0.0
        %1826 = vmatprep.subr.mxu0 0.0
        %1827 = vmatpush1.msra.mxu0 0.0
        %1828 = vmatprep.subr.mxu0 0.0
        %1829 = vmatpush1.msra.mxu0 0.0
        %1830 = vmatprep.subr.mxu0 0.0
        %1831 = vmatpush1.msra.mxu0 0.0
        %1832 = vmatprep.subr.mxu0 0.0
        %1833 = vmatpush1.msra.mxu0 0.0
        %1834 = vmatprep.subr.mxu0 0.0
        %1835 = vmatpush1.msra.mxu0 0.0
        %1836 = vmatprep.subr.mxu0 0.0
        %1837 = vmatpush1.msra.mxu0 0.0
        %1838 = vmatprep.subr.mxu0 0.0
        %1839 = vmatpush1.msra.mxu0 0.0
        %1840 = vmatprep.mubr.f32.mxu0 0.0
        %1841 = vmatmul.mubr.f32.gmra.mrb[0].mxu0 %v1774
        %v1842 = vpop.f32.mrb[0].mxu0
        %v1843 = vadd.f32 %v1770, %v1842
        %v1844 = vpop.f32.mrb[0].mxu0
        %1845 = vdwg.mxu0
        %v1847 = vlaneseq
        %v1848 = vshrl.u32 %v1847, 7
        %v1849 = vsub.s32 0, %v1848
        %v1850 = vrot.slane %v1206, %v1849
        %v1852 = vadd.f32 %v1843, %v1850
        %v1853 = vadd.f32 %v1200, %v1852
        %v1854 = vld [vmem:[%s12] sm:$0xff]
        %v1855 = vld [vmem:[%s13] sm:$0xff]
        %v1856 = vsel %vm602, %v1853, 0.0
        %1857 = vadd.xlane.f32.xlu0 %v1856
        %v1858 = vpop.xlane.xlu0 %1857
        %v1859 = vrot.slane %v1858, 4
        %v1860 = vadd.f32 %v1858, %v1859
        %v1861 = vrot.slane %v1860, 2
        %v1862 = vadd.f32 %v1860, %v1861
        %v1863 = vrot.slane %v1862, 1
        %v1864 = vadd.f32 %v1862, %v1863
        %s1865 = vtos %v1864
        %v1866 = vrcp.pop 128.0
        %s1867 = vtos %v1866
        %s1868 = smul.f32 %s1865, %s1867
        %v1869 = vstv %s1868
        %v1870 = vsub.f32 %v1853, %v1869
        %v1871 = vmul.f32 %v1870, %v1870
        %v1872 = vsel %vm602, %v1871, 0.0
        %1873 = vadd.xlane.f32.xlu0 %v1872
        %v1874 = vpop.xlane.xlu0 %1873
        %v1875 = vrot.slane %v1874, 4
        %v1876 = vadd.f32 %v1874, %v1875
        %v1877 = vrot.slane %v1876, 2
        %v1878 = vadd.f32 %v1876, %v1877
        %v1879 = vrot.slane %v1878, 1
        %v1880 = vadd.f32 %v1878, %v1879
        %s1881 = vtos %v1880
        %v1882 = vrcp.pop 128.0
        %s1883 = vtos %v1882
        %s1884 = smul.f32 %s1881, %s1883
        %s1885 = sadd.f32 %s1884, 1e-05
        %v1886 = vstv %s1885
        %v1887 = vrsqrt.pop %v1886
        %s1888 = vtos %v1887
        %v1889 = vstv %s1888
        %v1890 = vmul.f32 %v1870, %v1889
        %v1891 = vmul.f32 %v1890, %v1854
        %v1892 = vadd.f32 %v1891, %v1855
        %v1893 = vld [vmem:[%s14] sm:$0xff]
        %v1894 = vld [vmem:[%s14 + $0x8] sm:$0xff]
        %v1895 = vld [vmem:[%s15] sm:$0x1]
        %v1897 = vlaneseq
        %v1898 = vshrl.u32 %v1897, 7
        %v1899 = vsub.s32 0, %v1898
        %v1900 = vrot.slane %v1895, %v1899
        %v1903 = vsel %vm602, %v1892, 0
        %1905 = vmatprep.subr.mxu0 0.0
        %1906 = vmatpush1.msra.mxu0 %v1893
        %1907 = vmatprep.subr.mxu0 0.0
        %1908 = vmatpush1.msra.mxu0 %v1894
        %1909 = vmatprep.subr.mxu0 0.0
        %1910 = vmatpush1.msra.mxu0 0.0
        %1911 = vmatprep.subr.mxu0 0.0
        %1912 = vmatpush1.msra.mxu0 0.0
        %1913 = vmatprep.subr.mxu0 0.0
        %1914 = vmatpush1.msra.mxu0 0.0
        %1915 = vmatprep.subr.mxu0 0.0
        %1916 = vmatpush1.msra.mxu0 0.0
        %1917 = vmatprep.subr.mxu0 0.0
        %1918 = vmatpush1.msra.mxu0 0.0
        %1919 = vmatprep.subr.mxu0 0.0
        %1920 = vmatpush1.msra.mxu0 0.0
        %1921 = vmatprep.subr.mxu0 0.0
        %1922 = vmatpush1.msra.mxu0 0.0
        %1923 = vmatprep.subr.mxu0 0.0
        %1924 = vmatpush1.msra.mxu0 0.0
        %1925 = vmatprep.subr.mxu0 0.0
        %1926 = vmatpush1.msra.mxu0 0.0
        %1927 = vmatprep.subr.mxu0 0.0
        %1928 = vmatpush1.msra.mxu0 0.0
        %1929 = vmatprep.subr.mxu0 0.0
        %1930 = vmatpush1.msra.mxu0 0.0
        %1931 = vmatprep.subr.mxu0 0.0
        %1932 = vmatpush1.msra.mxu0 0.0
        %1933 = vmatprep.subr.mxu0 0.0
        %1934 = vmatpush1.msra.mxu0 0.0
        %1935 = vmatprep.subr.mxu0 0.0
        %1936 = vmatpush1.msra.mxu0 0.0
        %1937 = vmatprep.subr.mxu0 0.0
        %1938 = vmatpush1.msra.mxu0 0.0
        %1939 = vmatprep.subr.mxu0 0.0
        %1940 = vmatpush1.msra.mxu0 0.0
        %1941 = vmatprep.subr.mxu0 0.0
        %1942 = vmatpush1.msra.mxu0 0.0
        %1943 = vmatprep.subr.mxu0 0.0
        %1944 = vmatpush1.msra.mxu0 0.0
        %1945 = vmatprep.subr.mxu0 0.0
        %1946 = vmatpush1.msra.mxu0 0.0
        %1947 = vmatprep.subr.mxu0 0.0
        %1948 = vmatpush1.msra.mxu0 0.0
        %1949 = vmatprep.subr.mxu0 0.0
        %1950 = vmatpush1.msra.mxu0 0.0
        %1951 = vmatprep.subr.mxu0 0.0
        %1952 = vmatpush1.msra.mxu0 0.0
        %1953 = vmatprep.subr.mxu0 0.0
        %1954 = vmatpush1.msra.mxu0 0.0
        %1955 = vmatprep.subr.mxu0 0.0
        %1956 = vmatpush1.msra.mxu0 0.0
        %1957 = vmatprep.subr.mxu0 0.0
        %1958 = vmatpush1.msra.mxu0 0.0
        %1959 = vmatprep.subr.mxu0 0.0
        %1960 = vmatpush1.msra.mxu0 0.0
        %1961 = vmatprep.subr.mxu0 0.0
        %1962 = vmatpush1.msra.mxu0 0.0
        %1963 = vmatprep.subr.mxu0 0.0
        %1964 = vmatpush1.msra.mxu0 0.0
        %1965 = vmatprep.subr.mxu0 0.0
        %1966 = vmatpush1.msra.mxu0 0.0
        %1967 = vmatprep.subr.mxu0 0.0
        %1968 = vmatpush1.msra.mxu0 0.0
        %1969 = vmatprep.mubr.f32.mxu0 0.0
        %1970 = vmatmul.mubr.f32.gmra.mrb[0].mxu0 %v1903
        %v1971 = vpop.f32.mrb[0].mxu0
        %v1972 = vadd.f32 %v1900, %v1971
        %v1973 = vpop.f32.mrb[0].mxu0
        %1974 = vdwg.mxu0
        %v1975 = vadd.f32 %v1892, %v1972
        %v1976 = vld [vmem:[%s16] sm:$0xff]
        %v1977 = vld [vmem:[%s17] sm:$0xff]
        %v1978 = vsel %vm602, %v1975, 0.0
        %1979 = vadd.xlane.f32.xlu0 %v1978
        %v1980 = vpop.xlane.xlu0 %1979
        %v1981 = vrot.slane %v1980, 4
        %v1982 = vadd.f32 %v1980, %v1981
        %v1983 = vrot.slane %v1982, 2
        %v1984 = vadd.f32 %v1982, %v1983
        %v1985 = vrot.slane %v1984, 1
        %v1986 = vadd.f32 %v1984, %v1985
        %s1987 = vtos %v1986
        %v1988 = vrcp.pop 128.0
        %s1989 = vtos %v1988
        %s1990 = smul.f32 %s1987, %s1989
        %v1991 = vstv %s1990
        %v1992 = vsub.f32 %v1975, %v1991
        %v1993 = vmul.f32 %v1992, %v1992
        %v1994 = vsel %vm602, %v1993, 0.0
        %1995 = vadd.xlane.f32.xlu0 %v1994
        %v1996 = vpop.xlane.xlu0 %1995
        %v1997 = vrot.slane %v1996, 4
        %v1998 = vadd.f32 %v1996, %v1997
        %v1999 = vrot.slane %v1998, 2
        %v2000 = vadd.f32 %v1998, %v1999
        %v2001 = vrot.slane %v2000, 1
        %v2002 = vadd.f32 %v2000, %v2001
        %s2003 = vtos %v2002
        %v2004 = vrcp.pop 128.0
        %s2005 = vtos %v2004
        %s2006 = smul.f32 %s2003, %s2005
        %s2007 = sadd.f32 %s2006, 1e-05
        %v2008 = vstv %s2007
        %v2009 = vrsqrt.pop %v2008
        %s2010 = vtos %v2009
        %v2011 = vstv %s2010
        %v2012 = vmul.f32 %v1992, %v2011
        %v2013 = vmul.f32 %v2012, %v1976
        %v2014 = vadd.f32 %v2013, %v1977
        %2015 = vst.msk [vmem:[%s579] sm:$0xff] %vm602, %v2014
        %s2016 = sand.u32 %s428, 1
        %s2017 = scalar_lea.sflag [#allocation3], %s2016
        %s2018 = sand.u32 %s428, 1
        %s2019 = smul.addr %s2018, 8
        %s2020 = scalar_lea.vmem [#allocation2], %s2019
        // Predicated region
        $region93: #{liner_ae_fwd.9} parent=91 // pred_check
          %p2021 = pneg %p438
        $region94: #{liner_ae_fwd.9} parent=91 // pred_check_branch
          %2023 = sbr.rel (%p2021) target = $region96
        $region95: #{liner_ae_fwd.9} parent=91 // pred_region
          %s2025 = ssub.s32 128, 128
          %2026 = vsyncadd %s2017, %s2025
          %s2027 = smul.addr %s32, 128
          %s2028 = scalar_lea.hbm %s18, %s2027
          %s2030 = sshll.u32 %s2020, 4
          %s2031 = int_to_ptr.vmem [resolvable:$true] %s2030
          %2033 = dma.vmem_to_hbm [thread:$0]  %s2031, 128, %s2028, %s2017
        $region96: #{liner_ae_fwd.9} parent=91 // pred_fallthru
          _
      $region92: #{liner_ae_fwd.9} parent=5 // pred_fallthru
        _
      %p2034 = scmp.le.s32.totalorder 2, %s27
      // Predicated region
      $region97: #{liner_ae_fwd.9} parent=5 // pred_check
        %p2035 = pneg %p2034
      $region98: #{liner_ae_fwd.9} parent=5 // pred_check_branch
        %2037 = sbr.rel (%p2035) target = $region100
      $region99: #{liner_ae_fwd.9} parent=5 // pred_region
        %s2038 = ssub.s32 %s27, 2
        // Predicated region
        $region101: #{liner_ae_fwd.9} parent=99 // pred_check
          %p2039 = pneg %p444
        $region102: #{liner_ae_fwd.9} parent=99 // pred_check_branch
          %2041 = sbr.rel (%p2039) target = $region104
        $region103: #{liner_ae_fwd.9} parent=99 // pred_region
          %s2042 = sand.u32 %s429, 1
          %s2043 = scalar_lea.sflag [#allocation3], %s2042
          %s2044 = sand.u32 %s429, 1
          %s2045 = smul.addr %s2044, 8
          %s2046 = scalar_lea.vmem [#allocation2], %s2045
          %2047 = dma.done %s2043, 128
        $region104: #{liner_ae_fwd.9} parent=99 // pred_fallthru
          _
      $region100: #{liner_ae_fwd.9} parent=5 // pred_fallthru
        _
    $region6: #{liner_ae_fwd.9} parent=1 // loop_footer
      %s31 = sadd.s32 1, %s27
    $region7: #{liner_ae_fwd.9} parent=1 // loop_footer_branch
      %26 = sbr.rel target = $region3
    $region8: #{liner_ae_fwd.9} parent=1 // loop_exit
      _
    %2048 = vsyncpa [#allocation3], 1
    %s2049 = scalar_lea.sflag [#allocation3], 1
    %2050 = vsyncpa %s2049, 1

</llo_original>
